<compile_context>
chip_gen: v7x
topology: tpu7x:2x2x1
jax: 0.10.0
libtpu: 0.0.40
codegen_flags: <defaults>
</compile_context>

<pallas_src>
import math

import jax
import jax.numpy as jnp
from jax.experimental import pallas as pl
from jax.experimental.pallas import tpu as pltpu

# ---- small synthetic config (GPT-2-like, scaled down) -----------------------
N_LAYER = 6          # "final 6 layers"
N_HEAD = 4
N_EMBD = 32
HEAD_DIM = N_EMBD // N_HEAD
SEQ = 8
BATCH = 2
EPS = 1e-5
SCALE = 1.0 / math.sqrt(HEAD_DIM)
NEG_INF = -1e30


# ---------------------------- shared math helpers -----------------------------
def _gelu_new(x):
    # GPT-2 "gelu_new" (tanh approximation)
    c = math.sqrt(2.0 / math.pi)
    return 0.5 * x * (1.0 + jnp.tanh(c * (x + 0.044715 * x * x * x)))


def _layer_norm(x, g, b):
    mu = jnp.mean(x, axis=-1, keepdims=True)
    xc = x - mu
    var = jnp.mean(xc * xc, axis=-1, keepdims=True)
    return xc * jax.lax.rsqrt(var + EPS) * g + b


# ---------------------------- fused Pallas kernel -----------------------------
def _gpt_node2_kernel(x_ref, mask_ref,
                      ln1_g_ref, ln1_b_ref,
                      attn_w_ref, attn_b_ref,
                      proj_w_ref, proj_b_ref,
                      ln2_g_ref, ln2_b_ref,
                      fc_w_ref, fc_b_ref,
                      mlp_w_ref, mlp_b_ref,
                      lnf_g_ref, lnf_b_ref,
                      o_ref):
    xf = x_ref[...]             # [N, H]   residual stream, stays resident
    bias = mask_ref[...]        # [N, N]   additive mask: causal + batch-block

    for l in range(N_LAYER):    # fully unrolled; all weights already in VMEM
        # ---- attention sub-block -------------------------------------------
        h = _layer_norm(xf, ln1_g_ref[l:l + 1, :], ln1_b_ref[l:l + 1, :])
        qkv = (jnp.dot(h, attn_w_ref[l], preferred_element_type=jnp.float32)
               + attn_b_ref[l:l + 1, :])                      # [N, 3H]

        heads = []
        for hd in range(N_HEAD):                              # head split via lane slices
            lo = hd * HEAD_DIM
            q = qkv[:, lo:lo + HEAD_DIM]
            k = qkv[:, N_EMBD + lo:N_EMBD + lo + HEAD_DIM]
            v = qkv[:, 2 * N_EMBD + lo:2 * N_EMBD + lo + HEAD_DIM]
            # q @ k^T without an explicit transpose
            s = jax.lax.dot_general(q, k, (((1,), (1,)), ((), ())),
                                    preferred_element_type=jnp.float32)
            s = s * SCALE + bias
            s = s - jnp.max(s, axis=-1, keepdims=True)
            p = jnp.exp(s)
            p = p * pl.reciprocal(jnp.sum(p, axis=-1, keepdims=True), approx=True)
            heads.append(jnp.dot(p, v, preferred_element_type=jnp.float32))
        a = jnp.concatenate(heads, axis=-1)                   # [N, H] merge heads

        attn_out = (jnp.dot(a, proj_w_ref[l], preferred_element_type=jnp.float32)
                    + proj_b_ref[l:l + 1, :])
        xf = xf + attn_out                                    # residual

        # ---- MLP sub-block ---------------------------------------------------
        h2 = _layer_norm(xf, ln2_g_ref[l:l + 1, :], ln2_b_ref[l:l + 1, :])
        m = (jnp.dot(h2, fc_w_ref[l], preferred_element_type=jnp.float32)
             + fc_b_ref[l:l + 1, :])
        m = _gelu_new(m)
        m = (jnp.dot(m, mlp_w_ref[l], preferred_element_type=jnp.float32)
             + mlp_b_ref[l:l + 1, :])
        xf = xf + m                                           # residual

    # final LayerNorm (ln_f)
    o_ref[...] = _layer_norm(xf, lnf_g_ref[...], lnf_b_ref[...]).astype(o_ref.dtype)


def _vmem_spec():
    return pl.BlockSpec(memory_space=pltpu.MemorySpace.VMEM)


@jax.jit
def gpt_node2_forward(x, params):
    # x: [B, S, H] hidden states entering layer 6
    b, s, h = x.shape
    n = b * s
    xf = x.reshape(n, h)
    n_inputs = 16
    out = pl.pallas_call(
        _gpt_node2_kernel,
        out_shape=jax.ShapeDtypeStruct((n, h), jnp.float32),
        in_specs=[_vmem_spec() for _ in range(n_inputs)],
        out_specs=_vmem_spec(),
    )(xf, params["mask_bias"],
      params["ln1_g"], params["ln1_b"],
      params["attn_w"], params["attn_b"],
      params["attn_proj_w"], params["attn_proj_b"],
      params["ln2_g"], params["ln2_b"],
      params["fc_w"], params["fc_b"],
      params["mlp_proj_w"], params["mlp_proj_b"],
      params["ln_f_g"], params["ln_f_b"])
    return out.reshape(b, s, h)


# ---------------------------- deterministic init ------------------------------
def _build_mask_bias(batch, seq):
    n = batch * seq
    tok = jnp.arange(n)
    same_batch = (tok[:, None] // seq) == (tok[None, :] // seq)
    causal = tok[None, :] <= tok[:, None]
    allowed = jnp.logical_and(same_batch, causal)
    return jnp.where(allowed, 0.0, NEG_INF).astype(jnp.float32)


def init_params(key):
    std = 0.02

    def nrm(k, shape):
        return (jax.random.normal(k, shape) * std).astype(jnp.float32)

    ln1_g, ln1_b, attn_w, attn_b = [], [], [], []
    proj_w, proj_b, ln2_g, ln2_b = [], [], [], []
    fc_w, fc_b, mlp_w, mlp_b = [], [], [], []
    for l in range(N_LAYER):
        k0, k1, k2, k3 = jax.random.split(jax.random.fold_in(key, l), 4)
        ln1_g.append(jnp.ones((N_EMBD,), jnp.float32))
        ln1_b.append(jnp.zeros((N_EMBD,), jnp.float32))
        attn_w.append(nrm(k0, (N_EMBD, 3 * N_EMBD)))
        attn_b.append(jnp.zeros((3 * N_EMBD,), jnp.float32))
        proj_w.append(nrm(k1, (N_EMBD, N_EMBD)))
        proj_b.append(jnp.zeros((N_EMBD,), jnp.float32))
        ln2_g.append(jnp.ones((N_EMBD,), jnp.float32))
        ln2_b.append(jnp.zeros((N_EMBD,), jnp.float32))
        fc_w.append(nrm(k2, (N_EMBD, 4 * N_EMBD)))
        fc_b.append(jnp.zeros((4 * N_EMBD,), jnp.float32))
        mlp_w.append(nrm(k3, (4 * N_EMBD, N_EMBD)))
        mlp_b.append(jnp.zeros((N_EMBD,), jnp.float32))

    stack = lambda xs: jnp.stack(xs, axis=0)
    return dict(
        ln1_g=stack(ln1_g), ln1_b=stack(ln1_b),
        attn_w=stack(attn_w), attn_b=stack(attn_b),
        attn_proj_w=stack(proj_w), attn_proj_b=stack(proj_b),
        ln2_g=stack(ln2_g), ln2_b=stack(ln2_b),
        fc_w=stack(fc_w), fc_b=stack(fc_b),
        mlp_proj_w=stack(mlp_w), mlp_proj_b=stack(mlp_b),
        ln_f_g=jnp.ones((1, N_EMBD), jnp.float32),
        ln_f_b=jnp.zeros((1, N_EMBD), jnp.float32),
        mask_bias=_build_mask_bias(BATCH, SEQ),
    )


# ---------------------------- pure-JAX reference ------------------------------
def gpt_node2_reference(x, params):
    b, s, h = x.shape
    xf = x.reshape(b * s, h)
    for l in range(N_LAYER):
        hid = _layer_norm(xf, params["ln1_g"][l], params["ln1_b"][l])
        qkv = hid @ params["attn_w"][l] + params["attn_b"][l]
        q, k, v = jnp.split(qkv, 3, axis=-1)

        def to_heads(t):
            return t.reshape(b, s, N_HEAD, HEAD_DIM).transpose(0, 2, 1, 3)

        qh, kh, vh = to_heads(q), to_heads(k), to_heads(v)
        scores = jnp.einsum('bhqd,bhkd->bhqk', qh, kh) * SCALE
        causal = jnp.tril(jnp.ones((s, s), dtype=bool))
        scores = jnp.where(causal, scores, NEG_INF)
        probs = jax.nn.softmax(scores, axis=-1)
        a = jnp.einsum('bhqk,bhkd->bhqd', probs, vh)
        a = a.transpose(0, 2, 1, 3).reshape(b * s, h)
        xf = xf + a @ params["attn_proj_w"][l] + params["attn_proj_b"][l]

        h2 = _layer_norm(xf, params["ln2_g"][l], params["ln2_b"][l])
        m = _gelu_new(h2 @ params["fc_w"][l] + params["fc_b"][l])
        xf = xf + m @ params["mlp_proj_w"][l] + params["mlp_proj_b"][l]
    xf = _layer_norm(xf, params["ln_f_g"][0], params["ln_f_b"][0])
    return xf.reshape(b, s, h)


if __name__ == "__main__":
    key = jax.random.PRNGKey(0)
    kx, kp = jax.random.split(key)
    x = jax.random.normal(kx, (BATCH, SEQ, N_EMBD), dtype=jnp.float32)
    params = init_params(kp)

    out = gpt_node2_forward(x, params)
    jax.block_until_ready(out)

    assert out.shape == (BATCH, SEQ, N_EMBD)
    assert bool(jnp.all(jnp.isfinite(out)))

    # correctness check against a plain-JAX reference of the same module
    ref = gpt_node2_reference(x, params)
    assert bool(jnp.allclose(out, ref, atol=2e-3, rtol=2e-3))

    print("KERNEL_OK")
</pallas_src>

<mosaic_0001>
module attributes {stable_mosaic.version = 11 : i64} {
  func.func @_gpt_node2_kernel(%arg0: memref<16x32xf32, #tpu.memory_space<vmem>>, %arg1: memref<16x16xf32, #tpu.memory_space<vmem>>, %arg2: memref<6x32xf32, #tpu.memory_space<vmem>>, %arg3: memref<6x32xf32, #tpu.memory_space<vmem>>, %arg4: memref<6x32x96xf32, #tpu.memory_space<vmem>>, %arg5: memref<6x96xf32, #tpu.memory_space<vmem>>, %arg6: memref<6x32x32xf32, #tpu.memory_space<vmem>>, %arg7: memref<6x32xf32, #tpu.memory_space<vmem>>, %arg8: memref<6x32xf32, #tpu.memory_space<vmem>>, %arg9: memref<6x32xf32, #tpu.memory_space<vmem>>, %arg10: memref<6x32x128xf32, #tpu.memory_space<vmem>>, %arg11: memref<6x128xf32, #tpu.memory_space<vmem>>, %arg12: memref<6x128x32xf32, #tpu.memory_space<vmem>>, %arg13: memref<6x32xf32, #tpu.memory_space<vmem>>, %arg14: memref<1x32xf32, #tpu.memory_space<vmem>>, %arg15: memref<1x32xf32, #tpu.memory_space<vmem>>, %arg16: memref<16x32xf32, #tpu.memory_space<vmem>>) attributes {dimension_semantics = [], scalar_prefetch = 0 : i64, scratch_operands = 0 : i64, tpu.core_type = #tpu.core_type<tc>} {
    %c0 = arith.constant 0 : index
    %c0_0 = arith.constant 0 : index
    %0 = vector.load %arg0[%c0, %c0_0] : memref<16x32xf32, #tpu.memory_space<vmem>>, vector<16x32xf32>
    %c0_1 = arith.constant 0 : index
    %c0_2 = arith.constant 0 : index
    %1 = vector.load %arg1[%c0_1, %c0_2] : memref<16x16xf32, #tpu.memory_space<vmem>>, vector<16x16xf32>
    %c0_3 = arith.constant 0 : index
    %c0_4 = arith.constant 0 : index
    %2 = vector.load %arg2[%c0_3, %c0_4] : memref<6x32xf32, #tpu.memory_space<vmem>>, vector<1x32xf32>
    %c0_5 = arith.constant 0 : index
    %c0_6 = arith.constant 0 : index
    %3 = vector.load %arg3[%c0_5, %c0_6] : memref<6x32xf32, #tpu.memory_space<vmem>>, vector<1x32xf32>
    %cst = arith.constant dense<0.000000e+00> : vector<16xf32>
    %4 = vector.multi_reduction <add>, %0, %cst [1] : vector<16x32xf32> to vector<16xf32>
    %5 = vector.shape_cast %4 : vector<16xf32> to vector<16x1xf32>
    %cst_7 = arith.constant 3.200000e+01 : f32
    %6 = vector.broadcast %cst_7 : f32 to vector<16x1xf32>
    %7 = arith.divf %5, %6 : vector<16x1xf32>
    %8 = vector.broadcast %7 : vector<16x1xf32> to vector<16x32xf32>
    %9 = arith.subf %0, %8 : vector<16x32xf32>
    %10 = arith.mulf %9, %9 : vector<16x32xf32>
    %cst_8 = arith.constant dense<0.000000e+00> : vector<16xf32>
    %11 = vector.multi_reduction <add>, %10, %cst_8 [1] : vector<16x32xf32> to vector<16xf32>
    %12 = vector.shape_cast %11 : vector<16xf32> to vector<16x1xf32>
    %cst_9 = arith.constant 3.200000e+01 : f32
    %13 = vector.broadcast %cst_9 : f32 to vector<16x1xf32>
    %14 = arith.divf %12, %13 : vector<16x1xf32>
    %cst_10 = arith.constant 9.99999974E-6 : f32
    %15 = vector.broadcast %cst_10 : f32 to vector<16x1xf32>
    %16 = arith.addf %14, %15 : vector<16x1xf32>
    %17 = math.rsqrt %16 : vector<16x1xf32>
    %18 = vector.broadcast %17 : vector<16x1xf32> to vector<16x32xf32>
    %19 = arith.mulf %9, %18 : vector<16x32xf32>
    %20 = vector.broadcast %2 : vector<1x32xf32> to vector<16x32xf32>
    %21 = arith.mulf %19, %20 : vector<16x32xf32>
    %22 = vector.broadcast %3 : vector<1x32xf32> to vector<16x32xf32>
    %23 = arith.addf %21, %22 : vector<16x32xf32>
    %c0_11 = arith.constant 0 : index
    %c0_12 = arith.constant 0 : index
    %c0_13 = arith.constant 0 : index
    %24 = vector.load %arg4[%c0_11, %c0_12, %c0_13] : memref<6x32x96xf32, #tpu.memory_space<vmem>>, vector<1x32x96xf32>
    %25 = vector.shape_cast %24 : vector<1x32x96xf32> to vector<32x96xf32>
    %cst_14 = arith.constant dense<0.000000e+00> : vector<16x96xf32>
    %26 = tpu.matmul %23, %25, %cst_14 {dimension_numbers = #tpu.dot_dimension_numbers<[1], [0], [0], [1], [0, 0, 1, 1], [], []>} : vector<16x32xf32>, vector<32x96xf32>, vector<16x96xf32> -> vector<16x96xf32>
    %c0_15 = arith.constant 0 : index
    %c0_16 = arith.constant 0 : index
    %27 = vector.load %arg5[%c0_15, %c0_16] : memref<6x96xf32, #tpu.memory_space<vmem>>, vector<1x96xf32>
    %28 = vector.broadcast %27 : vector<1x96xf32> to vector<16x96xf32>
    %29 = arith.addf %26, %28 : vector<16x96xf32>
    %30 = vector.extract_strided_slice %29 {offsets = [0, 0], sizes = [16, 8], strides = [1, 1]} : vector<16x96xf32> to vector<16x8xf32>
    %31 = vector.extract_strided_slice %29 {offsets = [0, 32], sizes = [16, 8], strides = [1, 1]} : vector<16x96xf32> to vector<16x8xf32>
    %32 = vector.extract_strided_slice %29 {offsets = [0, 64], sizes = [16, 8], strides = [1, 1]} : vector<16x96xf32> to vector<16x8xf32>
    %cst_17 = arith.constant dense<0.000000e+00> : vector<16x16xf32>
    %33 = tpu.matmul %30, %31, %cst_17 {dimension_numbers = #tpu.dot_dimension_numbers<[1], [1], [0], [0], [0, 0, 1, 0], [], []>} : vector<16x8xf32>, vector<16x8xf32>, vector<16x16xf32> -> vector<16x16xf32>
    %cst_18 = arith.constant 0.353553385 : f32
    %34 = vector.broadcast %cst_18 : f32 to vector<16x16xf32>
    %35 = arith.mulf %33, %34 : vector<16x16xf32>
    %36 = arith.addf %35, %1 : vector<16x16xf32>
    %cst_19 = arith.constant dense<0xFF800000> : vector<16xf32>
    %37 = vector.multi_reduction <maximumf>, %36, %cst_19 [1] : vector<16x16xf32> to vector<16xf32>
    %38 = vector.shape_cast %37 : vector<16xf32> to vector<16x1xf32>
    %39 = vector.broadcast %38 : vector<16x1xf32> to vector<16x16xf32>
    %40 = arith.subf %36, %39 : vector<16x16xf32>
    %41 = math.exp %40 : vector<16x16xf32>
    %cst_20 = arith.constant dense<0.000000e+00> : vector<16xf32>
    %42 = vector.multi_reduction <add>, %41, %cst_20 [1] : vector<16x16xf32> to vector<16xf32>
    %43 = vector.shape_cast %42 : vector<16xf32> to vector<16x1xf32>
    %44 = tpu.reciprocal %43 {approx = true} : vector<16x1xf32> -> vector<16x1xf32>
    %45 = vector.broadcast %44 : vector<16x1xf32> to vector<16x16xf32>
    %46 = arith.mulf %41, %45 : vector<16x16xf32>
    %cst_21 = arith.constant dense<0.000000e+00> : vector<16x8xf32>
    %47 = tpu.matmul %46, %32, %cst_21 {dimension_numbers = #tpu.dot_dimension_numbers<[1], [0], [0], [1], [0, 0, 1, 1], [], []>} : vector<16x16xf32>, vector<16x8xf32>, vector<16x8xf32> -> vector<16x8xf32>
    %48 = vector.extract_strided_slice %29 {offsets = [0, 8], sizes = [16, 8], strides = [1, 1]} : vector<16x96xf32> to vector<16x8xf32>
    %49 = vector.extract_strided_slice %29 {offsets = [0, 40], sizes = [16, 8], strides = [1, 1]} : vector<16x96xf32> to vector<16x8xf32>
    %50 = vector.extract_strided_slice %29 {offsets = [0, 72], sizes = [16, 8], strides = [1, 1]} : vector<16x96xf32> to vector<16x8xf32>
    %cst_22 = arith.constant dense<0.000000e+00> : vector<16x16xf32>
    %51 = tpu.matmul %48, %49, %cst_22 {dimension_numbers = #tpu.dot_dimension_numbers<[1], [1], [0], [0], [0, 0, 1, 0], [], []>} : vector<16x8xf32>, vector<16x8xf32>, vector<16x16xf32> -> vector<16x16xf32>
    %cst_23 = arith.constant 0.353553385 : f32
    %52 = vector.broadcast %cst_23 : f32 to vector<16x16xf32>
    %53 = arith.mulf %51, %52 : vector<16x16xf32>
    %54 = arith.addf %53, %1 : vector<16x16xf32>
    %cst_24 = arith.constant dense<0xFF800000> : vector<16xf32>
    %55 = vector.multi_reduction <maximumf>, %54, %cst_24 [1] : vector<16x16xf32> to vector<16xf32>
    %56 = vector.shape_cast %55 : vector<16xf32> to vector<16x1xf32>
    %57 = vector.broadcast %56 : vector<16x1xf32> to vector<16x16xf32>
    %58 = arith.subf %54, %57 : vector<16x16xf32>
    %59 = math.exp %58 : vector<16x16xf32>
    %cst_25 = arith.constant dense<0.000000e+00> : vector<16xf32>
    %60 = vector.multi_reduction <add>, %59, %cst_25 [1] : vector<16x16xf32> to vector<16xf32>
    %61 = vector.shape_cast %60 : vector<16xf32> to vector<16x1xf32>
    %62 = tpu.reciprocal %61 {approx = true} : vector<16x1xf32> -> vector<16x1xf32>
    %63 = vector.broadcast %62 : vector<16x1xf32> to vector<16x16xf32>
    %64 = arith.mulf %59, %63 : vector<16x16xf32>
    %cst_26 = arith.constant dense<0.000000e+00> : vector<16x8xf32>
    %65 = tpu.matmul %64, %50, %cst_26 {dimension_numbers = #tpu.dot_dimension_numbers<[1], [0], [0], [1], [0, 0, 1, 1], [], []>} : vector<16x16xf32>, vector<16x8xf32>, vector<16x8xf32> -> vector<16x8xf32>
    %66 = vector.extract_strided_slice %29 {offsets = [0, 16], sizes = [16, 8], strides = [1, 1]} : vector<16x96xf32> to vector<16x8xf32>
    %67 = vector.extract_strided_slice %29 {offsets = [0, 48], sizes = [16, 8], strides = [1, 1]} : vector<16x96xf32> to vector<16x8xf32>
    %68 = vector.extract_strided_slice %29 {offsets = [0, 80], sizes = [16, 8], strides = [1, 1]} : vector<16x96xf32> to vector<16x8xf32>
    %cst_27 = arith.constant dense<0.000000e+00> : vector<16x16xf32>
    %69 = tpu.matmul %66, %67, %cst_27 {dimension_numbers = #tpu.dot_dimension_numbers<[1], [1], [0], [0], [0, 0, 1, 0], [], []>} : vector<16x8xf32>, vector<16x8xf32>, vector<16x16xf32> -> vector<16x16xf32>
    %cst_28 = arith.constant 0.353553385 : f32
    %70 = vector.broadcast %cst_28 : f32 to vector<16x16xf32>
    %71 = arith.mulf %69, %70 : vector<16x16xf32>
    %72 = arith.addf %71, %1 : vector<16x16xf32>
    %cst_29 = arith.constant dense<0xFF800000> : vector<16xf32>
    %73 = vector.multi_reduction <maximumf>, %72, %cst_29 [1] : vector<16x16xf32> to vector<16xf32>
    %74 = vector.shape_cast %73 : vector<16xf32> to vector<16x1xf32>
    %75 = vector.broadcast %74 : vector<16x1xf32> to vector<16x16xf32>
    %76 = arith.subf %72, %75 : vector<16x16xf32>
    %77 = math.exp %76 : vector<16x16xf32>
    %cst_30 = arith.constant dense<0.000000e+00> : vector<16xf32>
    %78 = vector.multi_reduction <add>, %77, %cst_30 [1] : vector<16x16xf32> to vector<16xf32>
    %79 = vector.shape_cast %78 : vector<16xf32> to vector<16x1xf32>
    %80 = tpu.reciprocal %79 {approx = true} : vector<16x1xf32> -> vector<16x1xf32>
    %81 = vector.broadcast %80 : vector<16x1xf32> to vector<16x16xf32>
    %82 = arith.mulf %77, %81 : vector<16x16xf32>
    %cst_31 = arith.constant dense<0.000000e+00> : vector<16x8xf32>
    %83 = tpu.matmul %82, %68, %cst_31 {dimension_numbers = #tpu.dot_dimension_numbers<[1], [0], [0], [1], [0, 0, 1, 1], [], []>} : vector<16x16xf32>, vector<16x8xf32>, vector<16x8xf32> -> vector<16x8xf32>
    %84 = vector.extract_strided_slice %29 {offsets = [0, 24], sizes = [16, 8], strides = [1, 1]} : vector<16x96xf32> to vector<16x8xf32>
    %85 = vector.extract_strided_slice %29 {offsets = [0, 56], sizes = [16, 8], strides = [1, 1]} : vector<16x96xf32> to vector<16x8xf32>
    %86 = vector.extract_strided_slice %29 {offsets = [0, 88], sizes = [16, 8], strides = [1, 1]} : vector<16x96xf32> to vector<16x8xf32>
    %cst_32 = arith.constant dense<0.000000e+00> : vector<16x16xf32>
    %87 = tpu.matmul %84, %85, %cst_32 {dimension_numbers = #tpu.dot_dimension_numbers<[1], [1], [0], [0], [0, 0, 1, 0], [], []>} : vector<16x8xf32>, vector<16x8xf32>, vector<16x16xf32> -> vector<16x16xf32>
    %cst_33 = arith.constant 0.353553385 : f32
    %88 = vector.broadcast %cst_33 : f32 to vector<16x16xf32>
    %89 = arith.mulf %87, %88 : vector<16x16xf32>
    %90 = arith.addf %89, %1 : vector<16x16xf32>
    %cst_34 = arith.constant dense<0xFF800000> : vector<16xf32>
    %91 = vector.multi_reduction <maximumf>, %90, %cst_34 [1] : vector<16x16xf32> to vector<16xf32>
    %92 = vector.shape_cast %91 : vector<16xf32> to vector<16x1xf32>
    %93 = vector.broadcast %92 : vector<16x1xf32> to vector<16x16xf32>
    %94 = arith.subf %90, %93 : vector<16x16xf32>
    %95 = math.exp %94 : vector<16x16xf32>
    %cst_35 = arith.constant dense<0.000000e+00> : vector<16xf32>
    %96 = vector.multi_reduction <add>, %95, %cst_35 [1] : vector<16x16xf32> to vector<16xf32>
    %97 = vector.shape_cast %96 : vector<16xf32> to vector<16x1xf32>
    %98 = tpu.reciprocal %97 {approx = true} : vector<16x1xf32> -> vector<16x1xf32>
    %99 = vector.broadcast %98 : vector<16x1xf32> to vector<16x16xf32>
    %100 = arith.mulf %95, %99 : vector<16x16xf32>
    %cst_36 = arith.constant dense<0.000000e+00> : vector<16x8xf32>
    %101 = tpu.matmul %100, %86, %cst_36 {dimension_numbers = #tpu.dot_dimension_numbers<[1], [0], [0], [1], [0, 0, 1, 1], [], []>} : vector<16x16xf32>, vector<16x8xf32>, vector<16x8xf32> -> vector<16x8xf32>
    %102 = tpu.concatenate %47, %65, %83, %101 in 1 : vector<16x8xf32>, vector<16x8xf32>, vector<16x8xf32>, vector<16x8xf32> -> vector<16x32xf32>
    %c0_37 = arith.constant 0 : index
    %c0_38 = arith.constant 0 : index
    %c0_39 = arith.constant 0 : index
    %103 = vector.load %arg6[%c0_37, %c0_38, %c0_39] : memref<6x32x32xf32, #tpu.memory_space<vmem>>, vector<1x32x32xf32>
    %104 = vector.shape_cast %103 : vector<1x32x32xf32> to vector<32x32xf32>
    %cst_40 = arith.constant dense<0.000000e+00> : vector<16x32xf32>
    %105 = tpu.matmul %102, %104, %cst_40 {dimension_numbers = #tpu.dot_dimension_numbers<[1], [0], [0], [1], [0, 0, 1, 1], [], []>} : vector<16x32xf32>, vector<32x32xf32>, vector<16x32xf32> -> vector<16x32xf32>
    %c0_41 = arith.constant 0 : index
    %c0_42 = arith.constant 0 : index
    %106 = vector.load %arg7[%c0_41, %c0_42] : memref<6x32xf32, #tpu.memory_space<vmem>>, vector<1x32xf32>
    %107 = vector.broadcast %106 : vector<1x32xf32> to vector<16x32xf32>
    %108 = arith.addf %105, %107 : vector<16x32xf32>
    %109 = arith.addf %0, %108 : vector<16x32xf32>
    %c0_43 = arith.constant 0 : index
    %c0_44 = arith.constant 0 : index
    %110 = vector.load %arg8[%c0_43, %c0_44] : memref<6x32xf32, #tpu.memory_space<vmem>>, vector<1x32xf32>
    %c0_45 = arith.constant 0 : index
    %c0_46 = arith.constant 0 : index
    %111 = vector.load %arg9[%c0_45, %c0_46] : memref<6x32xf32, #tpu.memory_space<vmem>>, vector<1x32xf32>
    %cst_47 = arith.constant dense<0.000000e+00> : vector<16xf32>
    %112 = vector.multi_reduction <add>, %109, %cst_47 [1] : vector<16x32xf32> to vector<16xf32>
    %113 = vector.shape_cast %112 : vector<16xf32> to vector<16x1xf32>
    %cst_48 = arith.constant 3.200000e+01 : f32
    %114 = vector.broadcast %cst_48 : f32 to vector<16x1xf32>
    %115 = arith.divf %113, %114 : vector<16x1xf32>
    %116 = vector.broadcast %115 : vector<16x1xf32> to vector<16x32xf32>
    %117 = arith.subf %109, %116 : vector<16x32xf32>
    %118 = arith.mulf %117, %117 : vector<16x32xf32>
    %cst_49 = arith.constant dense<0.000000e+00> : vector<16xf32>
    %119 = vector.multi_reduction <add>, %118, %cst_49 [1] : vector<16x32xf32> to vector<16xf32>
    %120 = vector.shape_cast %119 : vector<16xf32> to vector<16x1xf32>
    %cst_50 = arith.constant 3.200000e+01 : f32
    %121 = vector.broadcast %cst_50 : f32 to vector<16x1xf32>
    %122 = arith.divf %120, %121 : vector<16x1xf32>
    %cst_51 = arith.constant 9.99999974E-6 : f32
    %123 = vector.broadcast %cst_51 : f32 to vector<16x1xf32>
    %124 = arith.addf %122, %123 : vector<16x1xf32>
    %125 = math.rsqrt %124 : vector<16x1xf32>
    %126 = vector.broadcast %125 : vector<16x1xf32> to vector<16x32xf32>
    %127 = arith.mulf %117, %126 : vector<16x32xf32>
    %128 = vector.broadcast %110 : vector<1x32xf32> to vector<16x32xf32>
    %129 = arith.mulf %127, %128 : vector<16x32xf32>
    %130 = vector.broadcast %111 : vector<1x32xf32> to vector<16x32xf32>
    %131 = arith.addf %129, %130 : vector<16x32xf32>
    %c0_52 = arith.constant 0 : index
    %c0_53 = arith.constant 0 : index
    %c0_54 = arith.constant 0 : index
    %132 = vector.load %arg10[%c0_52, %c0_53, %c0_54] : memref<6x32x128xf32, #tpu.memory_space<vmem>>, vector<1x32x128xf32>
    %133 = vector.shape_cast %132 : vector<1x32x128xf32> to vector<32x128xf32>
    %cst_55 = arith.constant dense<0.000000e+00> : vector<16x128xf32>
    %134 = tpu.matmul %131, %133, %cst_55 {dimension_numbers = #tpu.dot_dimension_numbers<[1], [0], [0], [1], [0, 0, 1, 1], [], []>} : vector<16x32xf32>, vector<32x128xf32>, vector<16x128xf32> -> vector<16x128xf32>
    %c0_56 = arith.constant 0 : index
    %c0_57 = arith.constant 0 : index
    %135 = vector.load %arg11[%c0_56, %c0_57] : memref<6x128xf32, #tpu.memory_space<vmem>>, vector<1x128xf32>
    %136 = vector.broadcast %135 : vector<1x128xf32> to vector<16x128xf32>
    %137 = arith.addf %134, %136 : vector<16x128xf32>
    %cst_58 = arith.constant 5.000000e-01 : f32
    %138 = vector.broadcast %cst_58 : f32 to vector<16x128xf32>
    %139 = arith.mulf %138, %137 : vector<16x128xf32>
    %cst_59 = arith.constant 4.471500e-02 : f32
    %140 = vector.broadcast %cst_59 : f32 to vector<16x128xf32>
    %141 = arith.mulf %140, %137 : vector<16x128xf32>
    %142 = arith.mulf %141, %137 : vector<16x128xf32>
    %143 = arith.mulf %142, %137 : vector<16x128xf32>
    %144 = arith.addf %137, %143 : vector<16x128xf32>
    %cst_60 = arith.constant 0.797884583 : f32
    %145 = vector.broadcast %cst_60 : f32 to vector<16x128xf32>
    %146 = arith.mulf %145, %144 : vector<16x128xf32>
    %147 = math.tanh %146 : vector<16x128xf32>
    %cst_61 = arith.constant 1.000000e+00 : f32
    %148 = vector.broadcast %cst_61 : f32 to vector<16x128xf32>
    %149 = arith.addf %148, %147 : vector<16x128xf32>
    %150 = arith.mulf %139, %149 : vector<16x128xf32>
    %c0_62 = arith.constant 0 : index
    %c0_63 = arith.constant 0 : index
    %c0_64 = arith.constant 0 : index
    %151 = vector.load %arg12[%c0_62, %c0_63, %c0_64] : memref<6x128x32xf32, #tpu.memory_space<vmem>>, vector<1x128x32xf32>
    %152 = vector.shape_cast %151 : vector<1x128x32xf32> to vector<128x32xf32>
    %cst_65 = arith.constant dense<0.000000e+00> : vector<16x32xf32>
    %153 = tpu.matmul %150, %152, %cst_65 {dimension_numbers = #tpu.dot_dimension_numbers<[1], [0], [0], [1], [0, 0, 1, 1], [], []>} : vector<16x128xf32>, vector<128x32xf32>, vector<16x32xf32> -> vector<16x32xf32>
    %c0_66 = arith.constant 0 : index
    %c0_67 = arith.constant 0 : index
    %154 = vector.load %arg13[%c0_66, %c0_67] : memref<6x32xf32, #tpu.memory_space<vmem>>, vector<1x32xf32>
    %155 = vector.broadcast %154 : vector<1x32xf32> to vector<16x32xf32>
    %156 = arith.addf %153, %155 : vector<16x32xf32>
    %157 = arith.addf %109, %156 : vector<16x32xf32>
    %c1 = arith.constant 1 : index
    %c0_68 = arith.constant 0 : index
    %158 = vector.load %arg2[%c1, %c0_68] : memref<6x32xf32, #tpu.memory_space<vmem>>, vector<1x32xf32>
    %c1_69 = arith.constant 1 : index
    %c0_70 = arith.constant 0 : index
    %159 = vector.load %arg3[%c1_69, %c0_70] : memref<6x32xf32, #tpu.memory_space<vmem>>, vector<1x32xf32>
    %cst_71 = arith.constant dense<0.000000e+00> : vector<16xf32>
    %160 = vector.multi_reduction <add>, %157, %cst_71 [1] : vector<16x32xf32> to vector<16xf32>
    %161 = vector.shape_cast %160 : vector<16xf32> to vector<16x1xf32>
    %cst_72 = arith.constant 3.200000e+01 : f32
    %162 = vector.broadcast %cst_72 : f32 to vector<16x1xf32>
    %163 = arith.divf %161, %162 : vector<16x1xf32>
    %164 = vector.broadcast %163 : vector<16x1xf32> to vector<16x32xf32>
    %165 = arith.subf %157, %164 : vector<16x32xf32>
    %166 = arith.mulf %165, %165 : vector<16x32xf32>
    %cst_73 = arith.constant dense<0.000000e+00> : vector<16xf32>
    %167 = vector.multi_reduction <add>, %166, %cst_73 [1] : vector<16x32xf32> to vector<16xf32>
    %168 = vector.shape_cast %167 : vector<16xf32> to vector<16x1xf32>
    %cst_74 = arith.constant 3.200000e+01 : f32
    %169 = vector.broadcast %cst_74 : f32 to vector<16x1xf32>
    %170 = arith.divf %168, %169 : vector<16x1xf32>
    %cst_75 = arith.constant 9.99999974E-6 : f32
    %171 = vector.broadcast %cst_75 : f32 to vector<16x1xf32>
    %172 = arith.addf %170, %171 : vector<16x1xf32>
    %173 = math.rsqrt %172 : vector<16x1xf32>
    %174 = vector.broadcast %173 : vector<16x1xf32> to vector<16x32xf32>
    %175 = arith.mulf %165, %174 : vector<16x32xf32>
    %176 = vector.broadcast %158 : vector<1x32xf32> to vector<16x32xf32>
    %177 = arith.mulf %175, %176 : vector<16x32xf32>
    %178 = vector.broadcast %159 : vector<1x32xf32> to vector<16x32xf32>
    %179 = arith.addf %177, %178 : vector<16x32xf32>
    %c1_76 = arith.constant 1 : index
    %c0_77 = arith.constant 0 : index
    %c0_78 = arith.constant 0 : index
    %180 = vector.load %arg4[%c1_76, %c0_77, %c0_78] : memref<6x32x96xf32, #tpu.memory_space<vmem>>, vector<1x32x96xf32>
    %181 = vector.shape_cast %180 : vector<1x32x96xf32> to vector<32x96xf32>
    %cst_79 = arith.constant dense<0.000000e+00> : vector<16x96xf32>
    %182 = tpu.matmul %179, %181, %cst_79 {dimension_numbers = #tpu.dot_dimension_numbers<[1], [0], [0], [1], [0, 0, 1, 1], [], []>} : vector<16x32xf32>, vector<32x96xf32>, vector<16x96xf32> -> vector<16x96xf32>
    %c1_80 = arith.constant 1 : index
    %c0_81 = arith.constant 0 : index
    %183 = vector.load %arg5[%c1_80, %c0_81] : memref<6x96xf32, #tpu.memory_space<vmem>>, vector<1x96xf32>
    %184 = vector.broadcast %183 : vector<1x96xf32> to vector<16x96xf32>
    %185 = arith.addf %182, %184 : vector<16x96xf32>
    %186 = vector.extract_strided_slice %185 {offsets = [0, 0], sizes = [16, 8], strides = [1, 1]} : vector<16x96xf32> to vector<16x8xf32>
    %187 = vector.extract_strided_slice %185 {offsets = [0, 32], sizes = [16, 8], strides = [1, 1]} : vector<16x96xf32> to vector<16x8xf32>
    %188 = vector.extract_strided_slice %185 {offsets = [0, 64], sizes = [16, 8], strides = [1, 1]} : vector<16x96xf32> to vector<16x8xf32>
    %cst_82 = arith.constant dense<0.000000e+00> : vector<16x16xf32>
    %189 = tpu.matmul %186, %187, %cst_82 {dimension_numbers = #tpu.dot_dimension_numbers<[1], [1], [0], [0], [0, 0, 1, 0], [], []>} : vector<16x8xf32>, vector<16x8xf32>, vector<16x16xf32> -> vector<16x16xf32>
    %cst_83 = arith.constant 0.353553385 : f32
    %190 = vector.broadcast %cst_83 : f32 to vector<16x16xf32>
    %191 = arith.mulf %189, %190 : vector<16x16xf32>
    %192 = arith.addf %191, %1 : vector<16x16xf32>
    %cst_84 = arith.constant dense<0xFF800000> : vector<16xf32>
    %193 = vector.multi_reduction <maximumf>, %192, %cst_84 [1] : vector<16x16xf32> to vector<16xf32>
    %194 = vector.shape_cast %193 : vector<16xf32> to vector<16x1xf32>
    %195 = vector.broadcast %194 : vector<16x1xf32> to vector<16x16xf32>
    %196 = arith.subf %192, %195 : vector<16x16xf32>
    %197 = math.exp %196 : vector<16x16xf32>
    %cst_85 = arith.constant dense<0.000000e+00> : vector<16xf32>
    %198 = vector.multi_reduction <add>, %197, %cst_85 [1] : vector<16x16xf32> to vector<16xf32>
    %199 = vector.shape_cast %198 : vector<16xf32> to vector<16x1xf32>
    %200 = tpu.reciprocal %199 {approx = true} : vector<16x1xf32> -> vector<16x1xf32>
    %201 = vector.broadcast %200 : vector<16x1xf32> to vector<16x16xf32>
    %202 = arith.mulf %197, %201 : vector<16x16xf32>
    %cst_86 = arith.constant dense<0.000000e+00> : vector<16x8xf32>
    %203 = tpu.matmul %202, %188, %cst_86 {dimension_numbers = #tpu.dot_dimension_numbers<[1], [0], [0], [1], [0, 0, 1, 1], [], []>} : vector<16x16xf32>, vector<16x8xf32>, vector<16x8xf32> -> vector<16x8xf32>
    %204 = vector.extract_strided_slice %185 {offsets = [0, 8], sizes = [16, 8], strides = [1, 1]} : vector<16x96xf32> to vector<16x8xf32>
    %205 = vector.extract_strided_slice %185 {offsets = [0, 40], sizes = [16, 8], strides = [1, 1]} : vector<16x96xf32> to vector<16x8xf32>
    %206 = vector.extract_strided_slice %185 {offsets = [0, 72], sizes = [16, 8], strides = [1, 1]} : vector<16x96xf32> to vector<16x8xf32>
    %cst_87 = arith.constant dense<0.000000e+00> : vector<16x16xf32>
    %207 = tpu.matmul %204, %205, %cst_87 {dimension_numbers = #tpu.dot_dimension_numbers<[1], [1], [0], [0], [0, 0, 1, 0], [], []>} : vector<16x8xf32>, vector<16x8xf32>, vector<16x16xf32> -> vector<16x16xf32>
    %cst_88 = arith.constant 0.353553385 : f32
    %208 = vector.broadcast %cst_88 : f32 to vector<16x16xf32>
    %209 = arith.mulf %207, %208 : vector<16x16xf32>
    %210 = arith.addf %209, %1 : vector<16x16xf32>
    %cst_89 = arith.constant dense<0xFF800000> : vector<16xf32>
    %211 = vector.multi_reduction <maximumf>, %210, %cst_89 [1] : vector<16x16xf32> to vector<16xf32>
    %212 = vector.shape_cast %211 : vector<16xf32> to vector<16x1xf32>
    %213 = vector.broadcast %212 : vector<16x1xf32> to vector<16x16xf32>
    %214 = arith.subf %210, %213 : vector<16x16xf32>
    %215 = math.exp %214 : vector<16x16xf32>
    %cst_90 = arith.constant dense<0.000000e+00> : vector<16xf32>
    %216 = vector.multi_reduction <add>, %215, %cst_90 [1] : vector<16x16xf32> to vector<16xf32>
    %217 = vector.shape_cast %216 : vector<16xf32> to vector<16x1xf32>
    %218 = tpu.reciprocal %217 {approx = true} : vector<16x1xf32> -> vector<16x1xf32>
    %219 = vector.broadcast %218 : vector<16x1xf32> to vector<16x16xf32>
    %220 = arith.mulf %215, %219 : vector<16x16xf32>
    %cst_91 = arith.constant dense<0.000000e+00> : vector<16x8xf32>
    %221 = tpu.matmul %220, %206, %cst_91 {dimension_numbers = #tpu.dot_dimension_numbers<[1], [0], [0], [1], [0, 0, 1, 1], [], []>} : vector<16x16xf32>, vector<16x8xf32>, vector<16x8xf32> -> vector<16x8xf32>
    %222 = vector.extract_strided_slice %185 {offsets = [0, 16], sizes = [16, 8], strides = [1, 1]} : vector<16x96xf32> to vector<16x8xf32>
    %223 = vector.extract_strided_slice %185 {offsets = [0, 48], sizes = [16, 8], strides = [1, 1]} : vector<16x96xf32> to vector<16x8xf32>
    %224 = vector.extract_strided_slice %185 {offsets = [0, 80], sizes = [16, 8], strides = [1, 1]} : vector<16x96xf32> to vector<16x8xf32>
    %cst_92 = arith.constant dense<0.000000e+00> : vector<16x16xf32>
    %225 = tpu.matmul %222, %223, %cst_92 {dimension_numbers = #tpu.dot_dimension_numbers<[1], [1], [0], [0], [0, 0, 1, 0], [], []>} : vector<16x8xf32>, vector<16x8xf32>, vector<16x16xf32> -> vector<16x16xf32>
    %cst_93 = arith.constant 0.353553385 : f32
    %226 = vector.broadcast %cst_93 : f32 to vector<16x16xf32>
    %227 = arith.mulf %225, %226 : vector<16x16xf32>
    %228 = arith.addf %227, %1 : vector<16x16xf32>
    %cst_94 = arith.constant dense<0xFF800000> : vector<16xf32>
    %229 = vector.multi_reduction <maximumf>, %228, %cst_94 [1] : vector<16x16xf32> to vector<16xf32>
    %230 = vector.shape_cast %229 : vector<16xf32> to vector<16x1xf32>
    %231 = vector.broadcast %230 : vector<16x1xf32> to vector<16x16xf32>
    %232 = arith.subf %228, %231 : vector<16x16xf32>
    %233 = math.exp %232 : vector<16x16xf32>
    %cst_95 = arith.constant dense<0.000000e+00> : vector<16xf32>
    %234 = vector.multi_reduction <add>, %233, %cst_95 [1] : vector<16x16xf32> to vector<16xf32>
    %235 = vector.shape_cast %234 : vector<16xf32> to vector<16x1xf32>
    %236 = tpu.reciprocal %235 {approx = true} : vector<16x1xf32> -> vector<16x1xf32>
    %237 = vector.broadcast %236 : vector<16x1xf32> to vector<16x16xf32>
    %238 = arith.mulf %233, %237 : vector<16x16xf32>
    %cst_96 = arith.constant dense<0.000000e+00> : vector<16x8xf32>
    %239 = tpu.matmul %238, %224, %cst_96 {dimension_numbers = #tpu.dot_dimension_numbers<[1], [0], [0], [1], [0, 0, 1, 1], [], []>} : vector<16x16xf32>, vector<16x8xf32>, vector<16x8xf32> -> vector<16x8xf32>
    %240 = vector.extract_strided_slice %185 {offsets = [0, 24], sizes = [16, 8], strides = [1, 1]} : vector<16x96xf32> to vector<16x8xf32>
    %241 = vector.extract_strided_slice %185 {offsets = [0, 56], sizes = [16, 8], strides = [1, 1]} : vector<16x96xf32> to vector<16x8xf32>
    %242 = vector.extract_strided_slice %185 {offsets = [0, 88], sizes = [16, 8], strides = [1, 1]} : vector<16x96xf32> to vector<16x8xf32>
    %cst_97 = arith.constant dense<0.000000e+00> : vector<16x16xf32>
    %243 = tpu.matmul %240, %241, %cst_97 {dimension_numbers = #tpu.dot_dimension_numbers<[1], [1], [0], [0], [0, 0, 1, 0], [], []>} : vector<16x8xf32>, vector<16x8xf32>, vector<16x16xf32> -> vector<16x16xf32>
    %cst_98 = arith.constant 0.353553385 : f32
    %244 = vector.broadcast %cst_98 : f32 to vector<16x16xf32>
    %245 = arith.mulf %243, %244 : vector<16x16xf32>
    %246 = arith.addf %245, %1 : vector<16x16xf32>
    %cst_99 = arith.constant dense<0xFF800000> : vector<16xf32>
    %247 = vector.multi_reduction <maximumf>, %246, %cst_99 [1] : vector<16x16xf32> to vector<16xf32>
    %248 = vector.shape_cast %247 : vector<16xf32> to vector<16x1xf32>
    %249 = vector.broadcast %248 : vector<16x1xf32> to vector<16x16xf32>
    %250 = arith.subf %246, %249 : vector<16x16xf32>
    %251 = math.exp %250 : vector<16x16xf32>
    %cst_100 = arith.constant dense<0.000000e+00> : vector<16xf32>
    %252 = vector.multi_reduction <add>, %251, %cst_100 [1] : vector<16x16xf32> to vector<16xf32>
    %253 = vector.shape_cast %252 : vector<16xf32> to vector<16x1xf32>
    %254 = tpu.reciprocal %253 {approx = true} : vector<16x1xf32> -> vector<16x1xf32>
    %255 = vector.broadcast %254 : vector<16x1xf32> to vector<16x16xf32>
    %256 = arith.mulf %251, %255 : vector<16x16xf32>
    %cst_101 = arith.constant dense<0.000000e+00> : vector<16x8xf32>
    %257 = tpu.matmul %256, %242, %cst_101 {dimension_numbers = #tpu.dot_dimension_numbers<[1], [0], [0], [1], [0, 0, 1, 1], [], []>} : vector<16x16xf32>, vector<16x8xf32>, vector<16x8xf32> -> vector<16x8xf32>
    %258 = tpu.concatenate %203, %221, %239, %257 in 1 : vector<16x8xf32>, vector<16x8xf32>, vector<16x8xf32>, vector<16x8xf32> -> vector<16x32xf32>
    %c1_102 = arith.constant 1 : index
    %c0_103 = arith.constant 0 : index
    %c0_104 = arith.constant 0 : index
    %259 = vector.load %arg6[%c1_102, %c0_103, %c0_104] : memref<6x32x32xf32, #tpu.memory_space<vmem>>, vector<1x32x32xf32>
    %260 = vector.shape_cast %259 : vector<1x32x32xf32> to vector<32x32xf32>
    %cst_105 = arith.constant dense<0.000000e+00> : vector<16x32xf32>
    %261 = tpu.matmul %258, %260, %cst_105 {dimension_numbers = #tpu.dot_dimension_numbers<[1], [0], [0], [1], [0, 0, 1, 1], [], []>} : vector<16x32xf32>, vector<32x32xf32>, vector<16x32xf32> -> vector<16x32xf32>
    %c1_106 = arith.constant 1 : index
    %c0_107 = arith.constant 0 : index
    %262 = vector.load %arg7[%c1_106, %c0_107] : memref<6x32xf32, #tpu.memory_space<vmem>>, vector<1x32xf32>
    %263 = vector.broadcast %262 : vector<1x32xf32> to vector<16x32xf32>
    %264 = arith.addf %261, %263 : vector<16x32xf32>
    %265 = arith.addf %157, %264 : vector<16x32xf32>
    %c1_108 = arith.constant 1 : index
    %c0_109 = arith.constant 0 : index
    %266 = vector.load %arg8[%c1_108, %c0_109] : memref<6x32xf32, #tpu.memory_space<vmem>>, vector<1x32xf32>
    %c1_110 = arith.constant 1 : index
    %c0_111 = arith.constant 0 : index
    %267 = vector.load %arg9[%c1_110, %c0_111] : memref<6x32xf32, #tpu.memory_space<vmem>>, vector<1x32xf32>
    %cst_112 = arith.constant dense<0.000000e+00> : vector<16xf32>
    %268 = vector.multi_reduction <add>, %265, %cst_112 [1] : vector<16x32xf32> to vector<16xf32>
    %269 = vector.shape_cast %268 : vector<16xf32> to vector<16x1xf32>
    %cst_113 = arith.constant 3.200000e+01 : f32
    %270 = vector.broadcast %cst_113 : f32 to vector<16x1xf32>
    %271 = arith.divf %269, %270 : vector<16x1xf32>
    %272 = vector.broadcast %271 : vector<16x1xf32> to vector<16x32xf32>
    %273 = arith.subf %265, %272 : vector<16x32xf32>
    %274 = arith.mulf %273, %273 : vector<16x32xf32>
    %cst_114 = arith.constant dense<0.000000e+00> : vector<16xf32>
    %275 = vector.multi_reduction <add>, %274, %cst_114 [1] : vector<16x32xf32> to vector<16xf32>
    %276 = vector.shape_cast %275 : vector<16xf32> to vector<16x1xf32>
    %cst_115 = arith.constant 3.200000e+01 : f32
    %277 = vector.broadcast %cst_115 : f32 to vector<16x1xf32>
    %278 = arith.divf %276, %277 : vector<16x1xf32>
    %cst_116 = arith.constant 9.99999974E-6 : f32
    %279 = vector.broadcast %cst_116 : f32 to vector<16x1xf32>
    %280 = arith.addf %278, %279 : vector<16x1xf32>
    %281 = math.rsqrt %280 : vector<16x1xf32>
    %282 = vector.broadcast %281 : vector<16x1xf32> to vector<16x32xf32>
    %283 = arith.mulf %273, %282 : vector<16x32xf32>
    %284 = vector.broadcast %266 : vector<1x32xf32> to vector<16x32xf32>
    %285 = arith.mulf %283, %284 : vector<16x32xf32>
    %286 = vector.broadcast %267 : vector<1x32xf32> to vector<16x32xf32>
    %287 = arith.addf %285, %286 : vector<16x32xf32>
    %c1_117 = arith.constant 1 : index
    %c0_118 = arith.constant 0 : index
    %c0_119 = arith.constant 0 : index
    %288 = vector.load %arg10[%c1_117, %c0_118, %c0_119] : memref<6x32x128xf32, #tpu.memory_space<vmem>>, vector<1x32x128xf32>
    %289 = vector.shape_cast %288 : vector<1x32x128xf32> to vector<32x128xf32>
    %cst_120 = arith.constant dense<0.000000e+00> : vector<16x128xf32>
    %290 = tpu.matmul %287, %289, %cst_120 {dimension_numbers = #tpu.dot_dimension_numbers<[1], [0], [0], [1], [0, 0, 1, 1], [], []>} : vector<16x32xf32>, vector<32x128xf32>, vector<16x128xf32> -> vector<16x128xf32>
    %c1_121 = arith.constant 1 : index
    %c0_122 = arith.constant 0 : index
    %291 = vector.load %arg11[%c1_121, %c0_122] : memref<6x128xf32, #tpu.memory_space<vmem>>, vector<1x128xf32>
    %292 = vector.broadcast %291 : vector<1x128xf32> to vector<16x128xf32>
    %293 = arith.addf %290, %292 : vector<16x128xf32>
    %cst_123 = arith.constant 5.000000e-01 : f32
    %294 = vector.broadcast %cst_123 : f32 to vector<16x128xf32>
    %295 = arith.mulf %294, %293 : vector<16x128xf32>
    %cst_124 = arith.constant 4.471500e-02 : f32
    %296 = vector.broadcast %cst_124 : f32 to vector<16x128xf32>
    %297 = arith.mulf %296, %293 : vector<16x128xf32>
    %298 = arith.mulf %297, %293 : vector<16x128xf32>
    %299 = arith.mulf %298, %293 : vector<16x128xf32>
    %300 = arith.addf %293, %299 : vector<16x128xf32>
    %cst_125 = arith.constant 0.797884583 : f32
    %301 = vector.broadcast %cst_125 : f32 to vector<16x128xf32>
    %302 = arith.mulf %301, %300 : vector<16x128xf32>
    %303 = math.tanh %302 : vector<16x128xf32>
    %cst_126 = arith.constant 1.000000e+00 : f32
    %304 = vector.broadcast %cst_126 : f32 to vector<16x128xf32>
    %305 = arith.addf %304, %303 : vector<16x128xf32>
    %306 = arith.mulf %295, %305 : vector<16x128xf32>
    %c1_127 = arith.constant 1 : index
    %c0_128 = arith.constant 0 : index
    %c0_129 = arith.constant 0 : index
    %307 = vector.load %arg12[%c1_127, %c0_128, %c0_129] : memref<6x128x32xf32, #tpu.memory_space<vmem>>, vector<1x128x32xf32>
    %308 = vector.shape_cast %307 : vector<1x128x32xf32> to vector<128x32xf32>
    %cst_130 = arith.constant dense<0.000000e+00> : vector<16x32xf32>
    %309 = tpu.matmul %306, %308, %cst_130 {dimension_numbers = #tpu.dot_dimension_numbers<[1], [0], [0], [1], [0, 0, 1, 1], [], []>} : vector<16x128xf32>, vector<128x32xf32>, vector<16x32xf32> -> vector<16x32xf32>
    %c1_131 = arith.constant 1 : index
    %c0_132 = arith.constant 0 : index
    %310 = vector.load %arg13[%c1_131, %c0_132] : memref<6x32xf32, #tpu.memory_space<vmem>>, vector<1x32xf32>
    %311 = vector.broadcast %310 : vector<1x32xf32> to vector<16x32xf32>
    %312 = arith.addf %309, %311 : vector<16x32xf32>
    %313 = arith.addf %265, %312 : vector<16x32xf32>
    %c2 = arith.constant 2 : index
    %c0_133 = arith.constant 0 : index
    %314 = vector.load %arg2[%c2, %c0_133] : memref<6x32xf32, #tpu.memory_space<vmem>>, vector<1x32xf32>
    %c2_134 = arith.constant 2 : index
    %c0_135 = arith.constant 0 : index
    %315 = vector.load %arg3[%c2_134, %c0_135] : memref<6x32xf32, #tpu.memory_space<vmem>>, vector<1x32xf32>
    %cst_136 = arith.constant dense<0.000000e+00> : vector<16xf32>
    %316 = vector.multi_reduction <add>, %313, %cst_136 [1] : vector<16x32xf32> to vector<16xf32>
    %317 = vector.shape_cast %316 : vector<16xf32> to vector<16x1xf32>
    %cst_137 = arith.constant 3.200000e+01 : f32
    %318 = vector.broadcast %cst_137 : f32 to vector<16x1xf32>
    %319 = arith.divf %317, %318 : vector<16x1xf32>
    %320 = vector.broadcast %319 : vector<16x1xf32> to vector<16x32xf32>
    %321 = arith.subf %313, %320 : vector<16x32xf32>
    %322 = arith.mulf %321, %321 : vector<16x32xf32>
    %cst_138 = arith.constant dense<0.000000e+00> : vector<16xf32>
    %323 = vector.multi_reduction <add>, %322, %cst_138 [1] : vector<16x32xf32> to vector<16xf32>
    %324 = vector.shape_cast %323 : vector<16xf32> to vector<16x1xf32>
    %cst_139 = arith.constant 3.200000e+01 : f32
    %325 = vector.broadcast %cst_139 : f32 to vector<16x1xf32>
    %326 = arith.divf %324, %325 : vector<16x1xf32>
    %cst_140 = arith.constant 9.99999974E-6 : f32
    %327 = vector.broadcast %cst_140 : f32 to vector<16x1xf32>
    %328 = arith.addf %326, %327 : vector<16x1xf32>
    %329 = math.rsqrt %328 : vector<16x1xf32>
    %330 = vector.broadcast %329 : vector<16x1xf32> to vector<16x32xf32>
    %331 = arith.mulf %321, %330 : vector<16x32xf32>
    %332 = vector.broadcast %314 : vector<1x32xf32> to vector<16x32xf32>
    %333 = arith.mulf %331, %332 : vector<16x32xf32>
    %334 = vector.broadcast %315 : vector<1x32xf32> to vector<16x32xf32>
    %335 = arith.addf %333, %334 : vector<16x32xf32>
    %c2_141 = arith.constant 2 : index
    %c0_142 = arith.constant 0 : index
    %c0_143 = arith.constant 0 : index
    %336 = vector.load %arg4[%c2_141, %c0_142, %c0_143] : memref<6x32x96xf32, #tpu.memory_space<vmem>>, vector<1x32x96xf32>
    %337 = vector.shape_cast %336 : vector<1x32x96xf32> to vector<32x96xf32>
    %cst_144 = arith.constant dense<0.000000e+00> : vector<16x96xf32>
    %338 = tpu.matmul %335, %337, %cst_144 {dimension_numbers = #tpu.dot_dimension_numbers<[1], [0], [0], [1], [0, 0, 1, 1], [], []>} : vector<16x32xf32>, vector<32x96xf32>, vector<16x96xf32> -> vector<16x96xf32>
    %c2_145 = arith.constant 2 : index
    %c0_146 = arith.constant 0 : index
    %339 = vector.load %arg5[%c2_145, %c0_146] : memref<6x96xf32, #tpu.memory_space<vmem>>, vector<1x96xf32>
    %340 = vector.broadcast %339 : vector<1x96xf32> to vector<16x96xf32>
    %341 = arith.addf %338, %340 : vector<16x96xf32>
    %342 = vector.extract_strided_slice %341 {offsets = [0, 0], sizes = [16, 8], strides = [1, 1]} : vector<16x96xf32> to vector<16x8xf32>
    %343 = vector.extract_strided_slice %341 {offsets = [0, 32], sizes = [16, 8], strides = [1, 1]} : vector<16x96xf32> to vector<16x8xf32>
    %344 = vector.extract_strided_slice %341 {offsets = [0, 64], sizes = [16, 8], strides = [1, 1]} : vector<16x96xf32> to vector<16x8xf32>
    %cst_147 = arith.constant dense<0.000000e+00> : vector<16x16xf32>
    %345 = tpu.matmul %342, %343, %cst_147 {dimension_numbers = #tpu.dot_dimension_numbers<[1], [1], [0], [0], [0, 0, 1, 0], [], []>} : vector<16x8xf32>, vector<16x8xf32>, vector<16x16xf32> -> vector<16x16xf32>
    %cst_148 = arith.constant 0.353553385 : f32
    %346 = vector.broadcast %cst_148 : f32 to vector<16x16xf32>
    %347 = arith.mulf %345, %346 : vector<16x16xf32>
    %348 = arith.addf %347, %1 : vector<16x16xf32>
    %cst_149 = arith.constant dense<0xFF800000> : vector<16xf32>
    %349 = vector.multi_reduction <maximumf>, %348, %cst_149 [1] : vector<16x16xf32> to vector<16xf32>
    %350 = vector.shape_cast %349 : vector<16xf32> to vector<16x1xf32>
    %351 = vector.broadcast %350 : vector<16x1xf32> to vector<16x16xf32>
    %352 = arith.subf %348, %351 : vector<16x16xf32>
    %353 = math.exp %352 : vector<16x16xf32>
    %cst_150 = arith.constant dense<0.000000e+00> : vector<16xf32>
    %354 = vector.multi_reduction <add>, %353, %cst_150 [1] : vector<16x16xf32> to vector<16xf32>
    %355 = vector.shape_cast %354 : vector<16xf32> to vector<16x1xf32>
    %356 = tpu.reciprocal %355 {approx = true} : vector<16x1xf32> -> vector<16x1xf32>
    %357 = vector.broadcast %356 : vector<16x1xf32> to vector<16x16xf32>
    %358 = arith.mulf %353, %357 : vector<16x16xf32>
    %cst_151 = arith.constant dense<0.000000e+00> : vector<16x8xf32>
    %359 = tpu.matmul %358, %344, %cst_151 {dimension_numbers = #tpu.dot_dimension_numbers<[1], [0], [0], [1], [0, 0, 1, 1], [], []>} : vector<16x16xf32>, vector<16x8xf32>, vector<16x8xf32> -> vector<16x8xf32>
    %360 = vector.extract_strided_slice %341 {offsets = [0, 8], sizes = [16, 8], strides = [1, 1]} : vector<16x96xf32> to vector<16x8xf32>
    %361 = vector.extract_strided_slice %341 {offsets = [0, 40], sizes = [16, 8], strides = [1, 1]} : vector<16x96xf32> to vector<16x8xf32>
    %362 = vector.extract_strided_slice %341 {offsets = [0, 72], sizes = [16, 8], strides = [1, 1]} : vector<16x96xf32> to vector<16x8xf32>
    %cst_152 = arith.constant dense<0.000000e+00> : vector<16x16xf32>
    %363 = tpu.matmul %360, %361, %cst_152 {dimension_numbers = #tpu.dot_dimension_numbers<[1], [1], [0], [0], [0, 0, 1, 0], [], []>} : vector<16x8xf32>, vector<16x8xf32>, vector<16x16xf32> -> vector<16x16xf32>
    %cst_153 = arith.constant 0.353553385 : f32
    %364 = vector.broadcast %cst_153 : f32 to vector<16x16xf32>
    %365 = arith.mulf %363, %364 : vector<16x16xf32>
    %366 = arith.addf %365, %1 : vector<16x16xf32>
    %cst_154 = arith.constant dense<0xFF800000> : vector<16xf32>
    %367 = vector.multi_reduction <maximumf>, %366, %cst_154 [1] : vector<16x16xf32> to vector<16xf32>
    %368 = vector.shape_cast %367 : vector<16xf32> to vector<16x1xf32>
    %369 = vector.broadcast %368 : vector<16x1xf32> to vector<16x16xf32>
    %370 = arith.subf %366, %369 : vector<16x16xf32>
    %371 = math.exp %370 : vector<16x16xf32>
    %cst_155 = arith.constant dense<0.000000e+00> : vector<16xf32>
    %372 = vector.multi_reduction <add>, %371, %cst_155 [1] : vector<16x16xf32> to vector<16xf32>
    %373 = vector.shape_cast %372 : vector<16xf32> to vector<16x1xf32>
    %374 = tpu.reciprocal %373 {approx = true} : vector<16x1xf32> -> vector<16x1xf32>
    %375 = vector.broadcast %374 : vector<16x1xf32> to vector<16x16xf32>
    %376 = arith.mulf %371, %375 : vector<16x16xf32>
    %cst_156 = arith.constant dense<0.000000e+00> : vector<16x8xf32>
    %377 = tpu.matmul %376, %362, %cst_156 {dimension_numbers = #tpu.dot_dimension_numbers<[1], [0], [0], [1], [0, 0, 1, 1], [], []>} : vector<16x16xf32>, vector<16x8xf32>, vector<16x8xf32> -> vector<16x8xf32>
    %378 = vector.extract_strided_slice %341 {offsets = [0, 16], sizes = [16, 8], strides = [1, 1]} : vector<16x96xf32> to vector<16x8xf32>
    %379 = vector.extract_strided_slice %341 {offsets = [0, 48], sizes = [16, 8], strides = [1, 1]} : vector<16x96xf32> to vector<16x8xf32>
    %380 = vector.extract_strided_slice %341 {offsets = [0, 80], sizes = [16, 8], strides = [1, 1]} : vector<16x96xf32> to vector<16x8xf32>
    %cst_157 = arith.constant dense<0.000000e+00> : vector<16x16xf32>
    %381 = tpu.matmul %378, %379, %cst_157 {dimension_numbers = #tpu.dot_dimension_numbers<[1], [1], [0], [0], [0, 0, 1, 0], [], []>} : vector<16x8xf32>, vector<16x8xf32>, vector<16x16xf32> -> vector<16x16xf32>
    %cst_158 = arith.constant 0.353553385 : f32
    %382 = vector.broadcast %cst_158 : f32 to vector<16x16xf32>
    %383 = arith.mulf %381, %382 : vector<16x16xf32>
    %384 = arith.addf %383, %1 : vector<16x16xf32>
    %cst_159 = arith.constant dense<0xFF800000> : vector<16xf32>
    %385 = vector.multi_reduction <maximumf>, %384, %cst_159 [1] : vector<16x16xf32> to vector<16xf32>
    %386 = vector.shape_cast %385 : vector<16xf32> to vector<16x1xf32>
    %387 = vector.broadcast %386 : vector<16x1xf32> to vector<16x16xf32>
    %388 = arith.subf %384, %387 : vector<16x16xf32>
    %389 = math.exp %388 : vector<16x16xf32>
    %cst_160 = arith.constant dense<0.000000e+00> : vector<16xf32>
    %390 = vector.multi_reduction <add>, %389, %cst_160 [1] : vector<16x16xf32> to vector<16xf32>
    %391 = vector.shape_cast %390 : vector<16xf32> to vector<16x1xf32>
    %392 = tpu.reciprocal %391 {approx = true} : vector<16x1xf32> -> vector<16x1xf32>
    %393 = vector.broadcast %392 : vector<16x1xf32> to vector<16x16xf32>
    %394 = arith.mulf %389, %393 : vector<16x16xf32>
    %cst_161 = arith.constant dense<0.000000e+00> : vector<16x8xf32>
    %395 = tpu.matmul %394, %380, %cst_161 {dimension_numbers = #tpu.dot_dimension_numbers<[1], [0], [0], [1], [0, 0, 1, 1], [], []>} : vector<16x16xf32>, vector<16x8xf32>, vector<16x8xf32> -> vector<16x8xf32>
    %396 = vector.extract_strided_slice %341 {offsets = [0, 24], sizes = [16, 8], strides = [1, 1]} : vector<16x96xf32> to vector<16x8xf32>
    %397 = vector.extract_strided_slice %341 {offsets = [0, 56], sizes = [16, 8], strides = [1, 1]} : vector<16x96xf32> to vector<16x8xf32>
    %398 = vector.extract_strided_slice %341 {offsets = [0, 88], sizes = [16, 8], strides = [1, 1]} : vector<16x96xf32> to vector<16x8xf32>
    %cst_162 = arith.constant dense<0.000000e+00> : vector<16x16xf32>
    %399 = tpu.matmul %396, %397, %cst_162 {dimension_numbers = #tpu.dot_dimension_numbers<[1], [1], [0], [0], [0, 0, 1, 0], [], []>} : vector<16x8xf32>, vector<16x8xf32>, vector<16x16xf32> -> vector<16x16xf32>
    %cst_163 = arith.constant 0.353553385 : f32
    %400 = vector.broadcast %cst_163 : f32 to vector<16x16xf32>
    %401 = arith.mulf %399, %400 : vector<16x16xf32>
    %402 = arith.addf %401, %1 : vector<16x16xf32>
    %cst_164 = arith.constant dense<0xFF800000> : vector<16xf32>
    %403 = vector.multi_reduction <maximumf>, %402, %cst_164 [1] : vector<16x16xf32> to vector<16xf32>
    %404 = vector.shape_cast %403 : vector<16xf32> to vector<16x1xf32>
    %405 = vector.broadcast %404 : vector<16x1xf32> to vector<16x16xf32>
    %406 = arith.subf %402, %405 : vector<16x16xf32>
    %407 = math.exp %406 : vector<16x16xf32>
    %cst_165 = arith.constant dense<0.000000e+00> : vector<16xf32>
    %408 = vector.multi_reduction <add>, %407, %cst_165 [1] : vector<16x16xf32> to vector<16xf32>
    %409 = vector.shape_cast %408 : vector<16xf32> to vector<16x1xf32>
    %410 = tpu.reciprocal %409 {approx = true} : vector<16x1xf32> -> vector<16x1xf32>
    %411 = vector.broadcast %410 : vector<16x1xf32> to vector<16x16xf32>
    %412 = arith.mulf %407, %411 : vector<16x16xf32>
    %cst_166 = arith.constant dense<0.000000e+00> : vector<16x8xf32>
    %413 = tpu.matmul %412, %398, %cst_166 {dimension_numbers = #tpu.dot_dimension_numbers<[1], [0], [0], [1], [0, 0, 1, 1], [], []>} : vector<16x16xf32>, vector<16x8xf32>, vector<16x8xf32> -> vector<16x8xf32>
    %414 = tpu.concatenate %359, %377, %395, %413 in 1 : vector<16x8xf32>, vector<16x8xf32>, vector<16x8xf32>, vector<16x8xf32> -> vector<16x32xf32>
    %c2_167 = arith.constant 2 : index
    %c0_168 = arith.constant 0 : index
    %c0_169 = arith.constant 0 : index
    %415 = vector.load %arg6[%c2_167, %c0_168, %c0_169] : memref<6x32x32xf32, #tpu.memory_space<vmem>>, vector<1x32x32xf32>
    %416 = vector.shape_cast %415 : vector<1x32x32xf32> to vector<32x32xf32>
    %cst_170 = arith.constant dense<0.000000e+00> : vector<16x32xf32>
    %417 = tpu.matmul %414, %416, %cst_170 {dimension_numbers = #tpu.dot_dimension_numbers<[1], [0], [0], [1], [0, 0, 1, 1], [], []>} : vector<16x32xf32>, vector<32x32xf32>, vector<16x32xf32> -> vector<16x32xf32>
    %c2_171 = arith.constant 2 : index
    %c0_172 = arith.constant 0 : index
    %418 = vector.load %arg7[%c2_171, %c0_172] : memref<6x32xf32, #tpu.memory_space<vmem>>, vector<1x32xf32>
    %419 = vector.broadcast %418 : vector<1x32xf32> to vector<16x32xf32>
    %420 = arith.addf %417, %419 : vector<16x32xf32>
    %421 = arith.addf %313, %420 : vector<16x32xf32>
    %c2_173 = arith.constant 2 : index
    %c0_174 = arith.constant 0 : index
    %422 = vector.load %arg8[%c2_173, %c0_174] : memref<6x32xf32, #tpu.memory_space<vmem>>, vector<1x32xf32>
    %c2_175 = arith.constant 2 : index
    %c0_176 = arith.constant 0 : index
    %423 = vector.load %arg9[%c2_175, %c0_176] : memref<6x32xf32, #tpu.memory_space<vmem>>, vector<1x32xf32>
    %cst_177 = arith.constant dense<0.000000e+00> : vector<16xf32>
    %424 = vector.multi_reduction <add>, %421, %cst_177 [1] : vector<16x32xf32> to vector<16xf32>
    %425 = vector.shape_cast %424 : vector<16xf32> to vector<16x1xf32>
    %cst_178 = arith.constant 3.200000e+01 : f32
    %426 = vector.broadcast %cst_178 : f32 to vector<16x1xf32>
    %427 = arith.divf %425, %426 : vector<16x1xf32>
    %428 = vector.broadcast %427 : vector<16x1xf32> to vector<16x32xf32>
    %429 = arith.subf %421, %428 : vector<16x32xf32>
    %430 = arith.mulf %429, %429 : vector<16x32xf32>
    %cst_179 = arith.constant dense<0.000000e+00> : vector<16xf32>
    %431 = vector.multi_reduction <add>, %430, %cst_179 [1] : vector<16x32xf32> to vector<16xf32>
    %432 = vector.shape_cast %431 : vector<16xf32> to vector<16x1xf32>
    %cst_180 = arith.constant 3.200000e+01 : f32
    %433 = vector.broadcast %cst_180 : f32 to vector<16x1xf32>
    %434 = arith.divf %432, %433 : vector<16x1xf32>
    %cst_181 = arith.constant 9.99999974E-6 : f32
    %435 = vector.broadcast %cst_181 : f32 to vector<16x1xf32>
    %436 = arith.addf %434, %435 : vector<16x1xf32>
    %437 = math.rsqrt %436 : vector<16x1xf32>
    %438 = vector.broadcast %437 : vector<16x1xf32> to vector<16x32xf32>
    %439 = arith.mulf %429, %438 : vector<16x32xf32>
    %440 = vector.broadcast %422 : vector<1x32xf32> to vector<16x32xf32>
    %441 = arith.mulf %439, %440 : vector<16x32xf32>
    %442 = vector.broadcast %423 : vector<1x32xf32> to vector<16x32xf32>
    %443 = arith.addf %441, %442 : vector<16x32xf32>
    %c2_182 = arith.constant 2 : index
    %c0_183 = arith.constant 0 : index
    %c0_184 = arith.constant 0 : index
    %444 = vector.load %arg10[%c2_182, %c0_183, %c0_184] : memref<6x32x128xf32, #tpu.memory_space<vmem>>, vector<1x32x128xf32>
    %445 = vector.shape_cast %444 : vector<1x32x128xf32> to vector<32x128xf32>
    %cst_185 = arith.constant dense<0.000000e+00> : vector<16x128xf32>
    %446 = tpu.matmul %443, %445, %cst_185 {dimension_numbers = #tpu.dot_dimension_numbers<[1], [0], [0], [1], [0, 0, 1, 1], [], []>} : vector<16x32xf32>, vector<32x128xf32>, vector<16x128xf32> -> vector<16x128xf32>
    %c2_186 = arith.constant 2 : index
    %c0_187 = arith.constant 0 : index
    %447 = vector.load %arg11[%c2_186, %c0_187] : memref<6x128xf32, #tpu.memory_space<vmem>>, vector<1x128xf32>
    %448 = vector.broadcast %447 : vector<1x128xf32> to vector<16x128xf32>
    %449 = arith.addf %446, %448 : vector<16x128xf32>
    %cst_188 = arith.constant 5.000000e-01 : f32
    %450 = vector.broadcast %cst_188 : f32 to vector<16x128xf32>
    %451 = arith.mulf %450, %449 : vector<16x128xf32>
    %cst_189 = arith.constant 4.471500e-02 : f32
    %452 = vector.broadcast %cst_189 : f32 to vector<16x128xf32>
    %453 = arith.mulf %452, %449 : vector<16x128xf32>
    %454 = arith.mulf %453, %449 : vector<16x128xf32>
    %455 = arith.mulf %454, %449 : vector<16x128xf32>
    %456 = arith.addf %449, %455 : vector<16x128xf32>
    %cst_190 = arith.constant 0.797884583 : f32
    %457 = vector.broadcast %cst_190 : f32 to vector<16x128xf32>
    %458 = arith.mulf %457, %456 : vector<16x128xf32>
    %459 = math.tanh %458 : vector<16x128xf32>
    %cst_191 = arith.constant 1.000000e+00 : f32
    %460 = vector.broadcast %cst_191 : f32 to vector<16x128xf32>
    %461 = arith.addf %460, %459 : vector<16x128xf32>
    %462 = arith.mulf %451, %461 : vector<16x128xf32>
    %c2_192 = arith.constant 2 : index
    %c0_193 = arith.constant 0 : index
    %c0_194 = arith.constant 0 : index
    %463 = vector.load %arg12[%c2_192, %c0_193, %c0_194] : memref<6x128x32xf32, #tpu.memory_space<vmem>>, vector<1x128x32xf32>
    %464 = vector.shape_cast %463 : vector<1x128x32xf32> to vector<128x32xf32>
    %cst_195 = arith.constant dense<0.000000e+00> : vector<16x32xf32>
    %465 = tpu.matmul %462, %464, %cst_195 {dimension_numbers = #tpu.dot_dimension_numbers<[1], [0], [0], [1], [0, 0, 1, 1], [], []>} : vector<16x128xf32>, vector<128x32xf32>, vector<16x32xf32> -> vector<16x32xf32>
    %c2_196 = arith.constant 2 : index
    %c0_197 = arith.constant 0 : index
    %466 = vector.load %arg13[%c2_196, %c0_197] : memref<6x32xf32, #tpu.memory_space<vmem>>, vector<1x32xf32>
    %467 = vector.broadcast %466 : vector<1x32xf32> to vector<16x32xf32>
    %468 = arith.addf %465, %467 : vector<16x32xf32>
    %469 = arith.addf %421, %468 : vector<16x32xf32>
    %c3 = arith.constant 3 : index
    %c0_198 = arith.constant 0 : index
    %470 = vector.load %arg2[%c3, %c0_198] : memref<6x32xf32, #tpu.memory_space<vmem>>, vector<1x32xf32>
    %c3_199 = arith.constant 3 : index
    %c0_200 = arith.constant 0 : index
    %471 = vector.load %arg3[%c3_199, %c0_200] : memref<6x32xf32, #tpu.memory_space<vmem>>, vector<1x32xf32>
    %cst_201 = arith.constant dense<0.000000e+00> : vector<16xf32>
    %472 = vector.multi_reduction <add>, %469, %cst_201 [1] : vector<16x32xf32> to vector<16xf32>
    %473 = vector.shape_cast %472 : vector<16xf32> to vector<16x1xf32>
    %cst_202 = arith.constant 3.200000e+01 : f32
    %474 = vector.broadcast %cst_202 : f32 to vector<16x1xf32>
    %475 = arith.divf %473, %474 : vector<16x1xf32>
    %476 = vector.broadcast %475 : vector<16x1xf32> to vector<16x32xf32>
    %477 = arith.subf %469, %476 : vector<16x32xf32>
    %478 = arith.mulf %477, %477 : vector<16x32xf32>
    %cst_203 = arith.constant dense<0.000000e+00> : vector<16xf32>
    %479 = vector.multi_reduction <add>, %478, %cst_203 [1] : vector<16x32xf32> to vector<16xf32>
    %480 = vector.shape_cast %479 : vector<16xf32> to vector<16x1xf32>
    %cst_204 = arith.constant 3.200000e+01 : f32
    %481 = vector.broadcast %cst_204 : f32 to vector<16x1xf32>
    %482 = arith.divf %480, %481 : vector<16x1xf32>
    %cst_205 = arith.constant 9.99999974E-6 : f32
    %483 = vector.broadcast %cst_205 : f32 to vector<16x1xf32>
    %484 = arith.addf %482, %483 : vector<16x1xf32>
    %485 = math.rsqrt %484 : vector<16x1xf32>
    %486 = vector.broadcast %485 : vector<16x1xf32> to vector<16x32xf32>
    %487 = arith.mulf %477, %486 : vector<16x32xf32>
    %488 = vector.broadcast %470 : vector<1x32xf32> to vector<16x32xf32>
    %489 = arith.mulf %487, %488 : vector<16x32xf32>
    %490 = vector.broadcast %471 : vector<1x32xf32> to vector<16x32xf32>
    %491 = arith.addf %489, %490 : vector<16x32xf32>
    %c3_206 = arith.constant 3 : index
    %c0_207 = arith.constant 0 : index
    %c0_208 = arith.constant 0 : index
    %492 = vector.load %arg4[%c3_206, %c0_207, %c0_208] : memref<6x32x96xf32, #tpu.memory_space<vmem>>, vector<1x32x96xf32>
    %493 = vector.shape_cast %492 : vector<1x32x96xf32> to vector<32x96xf32>
    %cst_209 = arith.constant dense<0.000000e+00> : vector<16x96xf32>
    %494 = tpu.matmul %491, %493, %cst_209 {dimension_numbers = #tpu.dot_dimension_numbers<[1], [0], [0], [1], [0, 0, 1, 1], [], []>} : vector<16x32xf32>, vector<32x96xf32>, vector<16x96xf32> -> vector<16x96xf32>
    %c3_210 = arith.constant 3 : index
    %c0_211 = arith.constant 0 : index
    %495 = vector.load %arg5[%c3_210, %c0_211] : memref<6x96xf32, #tpu.memory_space<vmem>>, vector<1x96xf32>
    %496 = vector.broadcast %495 : vector<1x96xf32> to vector<16x96xf32>
    %497 = arith.addf %494, %496 : vector<16x96xf32>
    %498 = vector.extract_strided_slice %497 {offsets = [0, 0], sizes = [16, 8], strides = [1, 1]} : vector<16x96xf32> to vector<16x8xf32>
    %499 = vector.extract_strided_slice %497 {offsets = [0, 32], sizes = [16, 8], strides = [1, 1]} : vector<16x96xf32> to vector<16x8xf32>
    %500 = vector.extract_strided_slice %497 {offsets = [0, 64], sizes = [16, 8], strides = [1, 1]} : vector<16x96xf32> to vector<16x8xf32>
    %cst_212 = arith.constant dense<0.000000e+00> : vector<16x16xf32>
    %501 = tpu.matmul %498, %499, %cst_212 {dimension_numbers = #tpu.dot_dimension_numbers<[1], [1], [0], [0], [0, 0, 1, 0], [], []>} : vector<16x8xf32>, vector<16x8xf32>, vector<16x16xf32> -> vector<16x16xf32>
    %cst_213 = arith.constant 0.353553385 : f32
    %502 = vector.broadcast %cst_213 : f32 to vector<16x16xf32>
    %503 = arith.mulf %501, %502 : vector<16x16xf32>
    %504 = arith.addf %503, %1 : vector<16x16xf32>
    %cst_214 = arith.constant dense<0xFF800000> : vector<16xf32>
    %505 = vector.multi_reduction <maximumf>, %504, %cst_214 [1] : vector<16x16xf32> to vector<16xf32>
    %506 = vector.shape_cast %505 : vector<16xf32> to vector<16x1xf32>
    %507 = vector.broadcast %506 : vector<16x1xf32> to vector<16x16xf32>
    %508 = arith.subf %504, %507 : vector<16x16xf32>
    %509 = math.exp %508 : vector<16x16xf32>
    %cst_215 = arith.constant dense<0.000000e+00> : vector<16xf32>
    %510 = vector.multi_reduction <add>, %509, %cst_215 [1] : vector<16x16xf32> to vector<16xf32>
    %511 = vector.shape_cast %510 : vector<16xf32> to vector<16x1xf32>
    %512 = tpu.reciprocal %511 {approx = true} : vector<16x1xf32> -> vector<16x1xf32>
    %513 = vector.broadcast %512 : vector<16x1xf32> to vector<16x16xf32>
    %514 = arith.mulf %509, %513 : vector<16x16xf32>
    %cst_216 = arith.constant dense<0.000000e+00> : vector<16x8xf32>
    %515 = tpu.matmul %514, %500, %cst_216 {dimension_numbers = #tpu.dot_dimension_numbers<[1], [0], [0], [1], [0, 0, 1, 1], [], []>} : vector<16x16xf32>, vector<16x8xf32>, vector<16x8xf32> -> vector<16x8xf32>
    %516 = vector.extract_strided_slice %497 {offsets = [0, 8], sizes = [16, 8], strides = [1, 1]} : vector<16x96xf32> to vector<16x8xf32>
    %517 = vector.extract_strided_slice %497 {offsets = [0, 40], sizes = [16, 8], strides = [1, 1]} : vector<16x96xf32> to vector<16x8xf32>
    %518 = vector.extract_strided_slice %497 {offsets = [0, 72], sizes = [16, 8], strides = [1, 1]} : vector<16x96xf32> to vector<16x8xf32>
    %cst_217 = arith.constant dense<0.000000e+00> : vector<16x16xf32>
    %519 = tpu.matmul %516, %517, %cst_217 {dimension_numbers = #tpu.dot_dimension_numbers<[1], [1], [0], [0], [0, 0, 1, 0], [], []>} : vector<16x8xf32>, vector<16x8xf32>, vector<16x16xf32> -> vector<16x16xf32>
    %cst_218 = arith.constant 0.353553385 : f32
    %520 = vector.broadcast %cst_218 : f32 to vector<16x16xf32>
    %521 = arith.mulf %519, %520 : vector<16x16xf32>
    %522 = arith.addf %521, %1 : vector<16x16xf32>
    %cst_219 = arith.constant dense<0xFF800000> : vector<16xf32>
    %523 = vector.multi_reduction <maximumf>, %522, %cst_219 [1] : vector<16x16xf32> to vector<16xf32>
    %524 = vector.shape_cast %523 : vector<16xf32> to vector<16x1xf32>
    %525 = vector.broadcast %524 : vector<16x1xf32> to vector<16x16xf32>
    %526 = arith.subf %522, %525 : vector<16x16xf32>
    %527 = math.exp %526 : vector<16x16xf32>
    %cst_220 = arith.constant dense<0.000000e+00> : vector<16xf32>
    %528 = vector.multi_reduction <add>, %527, %cst_220 [1] : vector<16x16xf32> to vector<16xf32>
    %529 = vector.shape_cast %528 : vector<16xf32> to vector<16x1xf32>
    %530 = tpu.reciprocal %529 {approx = true} : vector<16x1xf32> -> vector<16x1xf32>
    %531 = vector.broadcast %530 : vector<16x1xf32> to vector<16x16xf32>
    %532 = arith.mulf %527, %531 : vector<16x16xf32>
    %cst_221 = arith.constant dense<0.000000e+00> : vector<16x8xf32>
    %533 = tpu.matmul %532, %518, %cst_221 {dimension_numbers = #tpu.dot_dimension_numbers<[1], [0], [0], [1], [0, 0, 1, 1], [], []>} : vector<16x16xf32>, vector<16x8xf32>, vector<16x8xf32> -> vector<16x8xf32>
    %534 = vector.extract_strided_slice %497 {offsets = [0, 16], sizes = [16, 8], strides = [1, 1]} : vector<16x96xf32> to vector<16x8xf32>
    %535 = vector.extract_strided_slice %497 {offsets = [0, 48], sizes = [16, 8], strides = [1, 1]} : vector<16x96xf32> to vector<16x8xf32>
    %536 = vector.extract_strided_slice %497 {offsets = [0, 80], sizes = [16, 8], strides = [1, 1]} : vector<16x96xf32> to vector<16x8xf32>
    %cst_222 = arith.constant dense<0.000000e+00> : vector<16x16xf32>
    %537 = tpu.matmul %534, %535, %cst_222 {dimension_numbers = #tpu.dot_dimension_numbers<[1], [1], [0], [0], [0, 0, 1, 0], [], []>} : vector<16x8xf32>, vector<16x8xf32>, vector<16x16xf32> -> vector<16x16xf32>
    %cst_223 = arith.constant 0.353553385 : f32
    %538 = vector.broadcast %cst_223 : f32 to vector<16x16xf32>
    %539 = arith.mulf %537, %538 : vector<16x16xf32>
    %540 = arith.addf %539, %1 : vector<16x16xf32>
    %cst_224 = arith.constant dense<0xFF800000> : vector<16xf32>
    %541 = vector.multi_reduction <maximumf>, %540, %cst_224 [1] : vector<16x16xf32> to vector<16xf32>
    %542 = vector.shape_cast %541 : vector<16xf32> to vector<16x1xf32>
    %543 = vector.broadcast %542 : vector<16x1xf32> to vector<16x16xf32>
    %544 = arith.subf %540, %543 : vector<16x16xf32>
    %545 = math.exp %544 : vector<16x16xf32>
    %cst_225 = arith.constant dense<0.000000e+00> : vector<16xf32>
    %546 = vector.multi_reduction <add>, %545, %cst_225 [1] : vector<16x16xf32> to vector<16xf32>
    %547 = vector.shape_cast %546 : vector<16xf32> to vector<16x1xf32>
    %548 = tpu.reciprocal %547 {approx = true} : vector<16x1xf32> -> vector<16x1xf32>
    %549 = vector.broadcast %548 : vector<16x1xf32> to vector<16x16xf32>
    %550 = arith.mulf %545, %549 : vector<16x16xf32>
    %cst_226 = arith.constant dense<0.000000e+00> : vector<16x8xf32>
    %551 = tpu.matmul %550, %536, %cst_226 {dimension_numbers = #tpu.dot_dimension_numbers<[1], [0], [0], [1], [0, 0, 1, 1], [], []>} : vector<16x16xf32>, vector<16x8xf32>, vector<16x8xf32> -> vector<16x8xf32>
    %552 = vector.extract_strided_slice %497 {offsets = [0, 24], sizes = [16, 8], strides = [1, 1]} : vector<16x96xf32> to vector<16x8xf32>
    %553 = vector.extract_strided_slice %497 {offsets = [0, 56], sizes = [16, 8], strides = [1, 1]} : vector<16x96xf32> to vector<16x8xf32>
    %554 = vector.extract_strided_slice %497 {offsets = [0, 88], sizes = [16, 8], strides = [1, 1]} : vector<16x96xf32> to vector<16x8xf32>
    %cst_227 = arith.constant dense<0.000000e+00> : vector<16x16xf32>
    %555 = tpu.matmul %552, %553, %cst_227 {dimension_numbers = #tpu.dot_dimension_numbers<[1], [1], [0], [0], [0, 0, 1, 0], [], []>} : vector<16x8xf32>, vector<16x8xf32>, vector<16x16xf32> -> vector<16x16xf32>
    %cst_228 = arith.constant 0.353553385 : f32
    %556 = vector.broadcast %cst_228 : f32 to vector<16x16xf32>
    %557 = arith.mulf %555, %556 : vector<16x16xf32>
    %558 = arith.addf %557, %1 : vector<16x16xf32>
    %cst_229 = arith.constant dense<0xFF800000> : vector<16xf32>
    %559 = vector.multi_reduction <maximumf>, %558, %cst_229 [1] : vector<16x16xf32> to vector<16xf32>
    %560 = vector.shape_cast %559 : vector<16xf32> to vector<16x1xf32>
    %561 = vector.broadcast %560 : vector<16x1xf32> to vector<16x16xf32>
    %562 = arith.subf %558, %561 : vector<16x16xf32>
    %563 = math.exp %562 : vector<16x16xf32>
    %cst_230 = arith.constant dense<0.000000e+00> : vector<16xf32>
    %564 = vector.multi_reduction <add>, %563, %cst_230 [1] : vector<16x16xf32> to vector<16xf32>
    %565 = vector.shape_cast %564 : vector<16xf32> to vector<16x1xf32>
    %566 = tpu.reciprocal %565 {approx = true} : vector<16x1xf32> -> vector<16x1xf32>
    %567 = vector.broadcast %566 : vector<16x1xf32> to vector<16x16xf32>
    %568 = arith.mulf %563, %567 : vector<16x16xf32>
    %cst_231 = arith.constant dense<0.000000e+00> : vector<16x8xf32>
    %569 = tpu.matmul %568, %554, %cst_231 {dimension_numbers = #tpu.dot_dimension_numbers<[1], [0], [0], [1], [0, 0, 1, 1], [], []>} : vector<16x16xf32>, vector<16x8xf32>, vector<16x8xf32> -> vector<16x8xf32>
    %570 = tpu.concatenate %515, %533, %551, %569 in 1 : vector<16x8xf32>, vector<16x8xf32>, vector<16x8xf32>, vector<16x8xf32> -> vector<16x32xf32>
    %c3_232 = arith.constant 3 : index
    %c0_233 = arith.constant 0 : index
    %c0_234 = arith.constant 0 : index
    %571 = vector.load %arg6[%c3_232, %c0_233, %c0_234] : memref<6x32x32xf32, #tpu.memory_space<vmem>>, vector<1x32x32xf32>
    %572 = vector.shape_cast %571 : vector<1x32x32xf32> to vector<32x32xf32>
    %cst_235 = arith.constant dense<0.000000e+00> : vector<16x32xf32>
    %573 = tpu.matmul %570, %572, %cst_235 {dimension_numbers = #tpu.dot_dimension_numbers<[1], [0], [0], [1], [0, 0, 1, 1], [], []>} : vector<16x32xf32>, vector<32x32xf32>, vector<16x32xf32> -> vector<16x32xf32>
    %c3_236 = arith.constant 3 : index
    %c0_237 = arith.constant 0 : index
    %574 = vector.load %arg7[%c3_236, %c0_237] : memref<6x32xf32, #tpu.memory_space<vmem>>, vector<1x32xf32>
    %575 = vector.broadcast %574 : vector<1x32xf32> to vector<16x32xf32>
    %576 = arith.addf %573, %575 : vector<16x32xf32>
    %577 = arith.addf %469, %576 : vector<16x32xf32>
    %c3_238 = arith.constant 3 : index
    %c0_239 = arith.constant 0 : index
    %578 = vector.load %arg8[%c3_238, %c0_239] : memref<6x32xf32, #tpu.memory_space<vmem>>, vector<1x32xf32>
    %c3_240 = arith.constant 3 : index
    %c0_241 = arith.constant 0 : index
    %579 = vector.load %arg9[%c3_240, %c0_241] : memref<6x32xf32, #tpu.memory_space<vmem>>, vector<1x32xf32>
    %cst_242 = arith.constant dense<0.000000e+00> : vector<16xf32>
    %580 = vector.multi_reduction <add>, %577, %cst_242 [1] : vector<16x32xf32> to vector<16xf32>
    %581 = vector.shape_cast %580 : vector<16xf32> to vector<16x1xf32>
    %cst_243 = arith.constant 3.200000e+01 : f32
    %582 = vector.broadcast %cst_243 : f32 to vector<16x1xf32>
    %583 = arith.divf %581, %582 : vector<16x1xf32>
    %584 = vector.broadcast %583 : vector<16x1xf32> to vector<16x32xf32>
    %585 = arith.subf %577, %584 : vector<16x32xf32>
    %586 = arith.mulf %585, %585 : vector<16x32xf32>
    %cst_244 = arith.constant dense<0.000000e+00> : vector<16xf32>
    %587 = vector.multi_reduction <add>, %586, %cst_244 [1] : vector<16x32xf32> to vector<16xf32>
    %588 = vector.shape_cast %587 : vector<16xf32> to vector<16x1xf32>
    %cst_245 = arith.constant 3.200000e+01 : f32
    %589 = vector.broadcast %cst_245 : f32 to vector<16x1xf32>
    %590 = arith.divf %588, %589 : vector<16x1xf32>
    %cst_246 = arith.constant 9.99999974E-6 : f32
    %591 = vector.broadcast %cst_246 : f32 to vector<16x1xf32>
    %592 = arith.addf %590, %591 : vector<16x1xf32>
    %593 = math.rsqrt %592 : vector<16x1xf32>
    %594 = vector.broadcast %593 : vector<16x1xf32> to vector<16x32xf32>
    %595 = arith.mulf %585, %594 : vector<16x32xf32>
    %596 = vector.broadcast %578 : vector<1x32xf32> to vector<16x32xf32>
    %597 = arith.mulf %595, %596 : vector<16x32xf32>
    %598 = vector.broadcast %579 : vector<1x32xf32> to vector<16x32xf32>
    %599 = arith.addf %597, %598 : vector<16x32xf32>
    %c3_247 = arith.constant 3 : index
    %c0_248 = arith.constant 0 : index
    %c0_249 = arith.constant 0 : index
    %600 = vector.load %arg10[%c3_247, %c0_248, %c0_249] : memref<6x32x128xf32, #tpu.memory_space<vmem>>, vector<1x32x128xf32>
    %601 = vector.shape_cast %600 : vector<1x32x128xf32> to vector<32x128xf32>
    %cst_250 = arith.constant dense<0.000000e+00> : vector<16x128xf32>
    %602 = tpu.matmul %599, %601, %cst_250 {dimension_numbers = #tpu.dot_dimension_numbers<[1], [0], [0], [1], [0, 0, 1, 1], [], []>} : vector<16x32xf32>, vector<32x128xf32>, vector<16x128xf32> -> vector<16x128xf32>
    %c3_251 = arith.constant 3 : index
    %c0_252 = arith.constant 0 : index
    %603 = vector.load %arg11[%c3_251, %c0_252] : memref<6x128xf32, #tpu.memory_space<vmem>>, vector<1x128xf32>
    %604 = vector.broadcast %603 : vector<1x128xf32> to vector<16x128xf32>
    %605 = arith.addf %602, %604 : vector<16x128xf32>
    %cst_253 = arith.constant 5.000000e-01 : f32
    %606 = vector.broadcast %cst_253 : f32 to vector<16x128xf32>
    %607 = arith.mulf %606, %605 : vector<16x128xf32>
    %cst_254 = arith.constant 4.471500e-02 : f32
    %608 = vector.broadcast %cst_254 : f32 to vector<16x128xf32>
    %609 = arith.mulf %608, %605 : vector<16x128xf32>
    %610 = arith.mulf %609, %605 : vector<16x128xf32>
    %611 = arith.mulf %610, %605 : vector<16x128xf32>
    %612 = arith.addf %605, %611 : vector<16x128xf32>
    %cst_255 = arith.constant 0.797884583 : f32
    %613 = vector.broadcast %cst_255 : f32 to vector<16x128xf32>
    %614 = arith.mulf %613, %612 : vector<16x128xf32>
    %615 = math.tanh %614 : vector<16x128xf32>
    %cst_256 = arith.constant 1.000000e+00 : f32
    %616 = vector.broadcast %cst_256 : f32 to vector<16x128xf32>
    %617 = arith.addf %616, %615 : vector<16x128xf32>
    %618 = arith.mulf %607, %617 : vector<16x128xf32>
    %c3_257 = arith.constant 3 : index
    %c0_258 = arith.constant 0 : index
    %c0_259 = arith.constant 0 : index
    %619 = vector.load %arg12[%c3_257, %c0_258, %c0_259] : memref<6x128x32xf32, #tpu.memory_space<vmem>>, vector<1x128x32xf32>
    %620 = vector.shape_cast %619 : vector<1x128x32xf32> to vector<128x32xf32>
    %cst_260 = arith.constant dense<0.000000e+00> : vector<16x32xf32>
    %621 = tpu.matmul %618, %620, %cst_260 {dimension_numbers = #tpu.dot_dimension_numbers<[1], [0], [0], [1], [0, 0, 1, 1], [], []>} : vector<16x128xf32>, vector<128x32xf32>, vector<16x32xf32> -> vector<16x32xf32>
    %c3_261 = arith.constant 3 : index
    %c0_262 = arith.constant 0 : index
    %622 = vector.load %arg13[%c3_261, %c0_262] : memref<6x32xf32, #tpu.memory_space<vmem>>, vector<1x32xf32>
    %623 = vector.broadcast %622 : vector<1x32xf32> to vector<16x32xf32>
    %624 = arith.addf %621, %623 : vector<16x32xf32>
    %625 = arith.addf %577, %624 : vector<16x32xf32>
    %c4 = arith.constant 4 : index
    %c0_263 = arith.constant 0 : index
    %626 = vector.load %arg2[%c4, %c0_263] : memref<6x32xf32, #tpu.memory_space<vmem>>, vector<1x32xf32>
    %c4_264 = arith.constant 4 : index
    %c0_265 = arith.constant 0 : index
    %627 = vector.load %arg3[%c4_264, %c0_265] : memref<6x32xf32, #tpu.memory_space<vmem>>, vector<1x32xf32>
    %cst_266 = arith.constant dense<0.000000e+00> : vector<16xf32>
    %628 = vector.multi_reduction <add>, %625, %cst_266 [1] : vector<16x32xf32> to vector<16xf32>
    %629 = vector.shape_cast %628 : vector<16xf32> to vector<16x1xf32>
    %cst_267 = arith.constant 3.200000e+01 : f32
    %630 = vector.broadcast %cst_267 : f32 to vector<16x1xf32>
    %631 = arith.divf %629, %630 : vector<16x1xf32>
    %632 = vector.broadcast %631 : vector<16x1xf32> to vector<16x32xf32>
    %633 = arith.subf %625, %632 : vector<16x32xf32>
    %634 = arith.mulf %633, %633 : vector<16x32xf32>
    %cst_268 = arith.constant dense<0.000000e+00> : vector<16xf32>
    %635 = vector.multi_reduction <add>, %634, %cst_268 [1] : vector<16x32xf32> to vector<16xf32>
    %636 = vector.shape_cast %635 : vector<16xf32> to vector<16x1xf32>
    %cst_269 = arith.constant 3.200000e+01 : f32
    %637 = vector.broadcast %cst_269 : f32 to vector<16x1xf32>
    %638 = arith.divf %636, %637 : vector<16x1xf32>
    %cst_270 = arith.constant 9.99999974E-6 : f32
    %639 = vector.broadcast %cst_270 : f32 to vector<16x1xf32>
    %640 = arith.addf %638, %639 : vector<16x1xf32>
    %641 = math.rsqrt %640 : vector<16x1xf32>
    %642 = vector.broadcast %641 : vector<16x1xf32> to vector<16x32xf32>
    %643 = arith.mulf %633, %642 : vector<16x32xf32>
    %644 = vector.broadcast %626 : vector<1x32xf32> to vector<16x32xf32>
    %645 = arith.mulf %643, %644 : vector<16x32xf32>
    %646 = vector.broadcast %627 : vector<1x32xf32> to vector<16x32xf32>
    %647 = arith.addf %645, %646 : vector<16x32xf32>
    %c4_271 = arith.constant 4 : index
    %c0_272 = arith.constant 0 : index
    %c0_273 = arith.constant 0 : index
    %648 = vector.load %arg4[%c4_271, %c0_272, %c0_273] : memref<6x32x96xf32, #tpu.memory_space<vmem>>, vector<1x32x96xf32>
    %649 = vector.shape_cast %648 : vector<1x32x96xf32> to vector<32x96xf32>
    %cst_274 = arith.constant dense<0.000000e+00> : vector<16x96xf32>
    %650 = tpu.matmul %647, %649, %cst_274 {dimension_numbers = #tpu.dot_dimension_numbers<[1], [0], [0], [1], [0, 0, 1, 1], [], []>} : vector<16x32xf32>, vector<32x96xf32>, vector<16x96xf32> -> vector<16x96xf32>
    %c4_275 = arith.constant 4 : index
    %c0_276 = arith.constant 0 : index
    %651 = vector.load %arg5[%c4_275, %c0_276] : memref<6x96xf32, #tpu.memory_space<vmem>>, vector<1x96xf32>
    %652 = vector.broadcast %651 : vector<1x96xf32> to vector<16x96xf32>
    %653 = arith.addf %650, %652 : vector<16x96xf32>
    %654 = vector.extract_strided_slice %653 {offsets = [0, 0], sizes = [16, 8], strides = [1, 1]} : vector<16x96xf32> to vector<16x8xf32>
    %655 = vector.extract_strided_slice %653 {offsets = [0, 32], sizes = [16, 8], strides = [1, 1]} : vector<16x96xf32> to vector<16x8xf32>
    %656 = vector.extract_strided_slice %653 {offsets = [0, 64], sizes = [16, 8], strides = [1, 1]} : vector<16x96xf32> to vector<16x8xf32>
    %cst_277 = arith.constant dense<0.000000e+00> : vector<16x16xf32>
    %657 = tpu.matmul %654, %655, %cst_277 {dimension_numbers = #tpu.dot_dimension_numbers<[1], [1], [0], [0], [0, 0, 1, 0], [], []>} : vector<16x8xf32>, vector<16x8xf32>, vector<16x16xf32> -> vector<16x16xf32>
    %cst_278 = arith.constant 0.353553385 : f32
    %658 = vector.broadcast %cst_278 : f32 to vector<16x16xf32>
    %659 = arith.mulf %657, %658 : vector<16x16xf32>
    %660 = arith.addf %659, %1 : vector<16x16xf32>
    %cst_279 = arith.constant dense<0xFF800000> : vector<16xf32>
    %661 = vector.multi_reduction <maximumf>, %660, %cst_279 [1] : vector<16x16xf32> to vector<16xf32>
    %662 = vector.shape_cast %661 : vector<16xf32> to vector<16x1xf32>
    %663 = vector.broadcast %662 : vector<16x1xf32> to vector<16x16xf32>
    %664 = arith.subf %660, %663 : vector<16x16xf32>
    %665 = math.exp %664 : vector<16x16xf32>
    %cst_280 = arith.constant dense<0.000000e+00> : vector<16xf32>
    %666 = vector.multi_reduction <add>, %665, %cst_280 [1] : vector<16x16xf32> to vector<16xf32>
    %667 = vector.shape_cast %666 : vector<16xf32> to vector<16x1xf32>
    %668 = tpu.reciprocal %667 {approx = true} : vector<16x1xf32> -> vector<16x1xf32>
    %669 = vector.broadcast %668 : vector<16x1xf32> to vector<16x16xf32>
    %670 = arith.mulf %665, %669 : vector<16x16xf32>
    %cst_281 = arith.constant dense<0.000000e+00> : vector<16x8xf32>
    %671 = tpu.matmul %670, %656, %cst_281 {dimension_numbers = #tpu.dot_dimension_numbers<[1], [0], [0], [1], [0, 0, 1, 1], [], []>} : vector<16x16xf32>, vector<16x8xf32>, vector<16x8xf32> -> vector<16x8xf32>
    %672 = vector.extract_strided_slice %653 {offsets = [0, 8], sizes = [16, 8], strides = [1, 1]} : vector<16x96xf32> to vector<16x8xf32>
    %673 = vector.extract_strided_slice %653 {offsets = [0, 40], sizes = [16, 8], strides = [1, 1]} : vector<16x96xf32> to vector<16x8xf32>
    %674 = vector.extract_strided_slice %653 {offsets = [0, 72], sizes = [16, 8], strides = [1, 1]} : vector<16x96xf32> to vector<16x8xf32>
    %cst_282 = arith.constant dense<0.000000e+00> : vector<16x16xf32>
    %675 = tpu.matmul %672, %673, %cst_282 {dimension_numbers = #tpu.dot_dimension_numbers<[1], [1], [0], [0], [0, 0, 1, 0], [], []>} : vector<16x8xf32>, vector<16x8xf32>, vector<16x16xf32> -> vector<16x16xf32>
    %cst_283 = arith.constant 0.353553385 : f32
    %676 = vector.broadcast %cst_283 : f32 to vector<16x16xf32>
    %677 = arith.mulf %675, %676 : vector<16x16xf32>
    %678 = arith.addf %677, %1 : vector<16x16xf32>
    %cst_284 = arith.constant dense<0xFF800000> : vector<16xf32>
    %679 = vector.multi_reduction <maximumf>, %678, %cst_284 [1] : vector<16x16xf32> to vector<16xf32>
    %680 = vector.shape_cast %679 : vector<16xf32> to vector<16x1xf32>
    %681 = vector.broadcast %680 : vector<16x1xf32> to vector<16x16xf32>
    %682 = arith.subf %678, %681 : vector<16x16xf32>
    %683 = math.exp %682 : vector<16x16xf32>
    %cst_285 = arith.constant dense<0.000000e+00> : vector<16xf32>
    %684 = vector.multi_reduction <add>, %683, %cst_285 [1] : vector<16x16xf32> to vector<16xf32>
    %685 = vector.shape_cast %684 : vector<16xf32> to vector<16x1xf32>
    %686 = tpu.reciprocal %685 {approx = true} : vector<16x1xf32> -> vector<16x1xf32>
    %687 = vector.broadcast %686 : vector<16x1xf32> to vector<16x16xf32>
    %688 = arith.mulf %683, %687 : vector<16x16xf32>
    %cst_286 = arith.constant dense<0.000000e+00> : vector<16x8xf32>
    %689 = tpu.matmul %688, %674, %cst_286 {dimension_numbers = #tpu.dot_dimension_numbers<[1], [0], [0], [1], [0, 0, 1, 1], [], []>} : vector<16x16xf32>, vector<16x8xf32>, vector<16x8xf32> -> vector<16x8xf32>
    %690 = vector.extract_strided_slice %653 {offsets = [0, 16], sizes = [16, 8], strides = [1, 1]} : vector<16x96xf32> to vector<16x8xf32>
    %691 = vector.extract_strided_slice %653 {offsets = [0, 48], sizes = [16, 8], strides = [1, 1]} : vector<16x96xf32> to vector<16x8xf32>
    %692 = vector.extract_strided_slice %653 {offsets = [0, 80], sizes = [16, 8], strides = [1, 1]} : vector<16x96xf32> to vector<16x8xf32>
    %cst_287 = arith.constant dense<0.000000e+00> : vector<16x16xf32>
    %693 = tpu.matmul %690, %691, %cst_287 {dimension_numbers = #tpu.dot_dimension_numbers<[1], [1], [0], [0], [0, 0, 1, 0], [], []>} : vector<16x8xf32>, vector<16x8xf32>, vector<16x16xf32> -> vector<16x16xf32>
    %cst_288 = arith.constant 0.353553385 : f32
    %694 = vector.broadcast %cst_288 : f32 to vector<16x16xf32>
    %695 = arith.mulf %693, %694 : vector<16x16xf32>
    %696 = arith.addf %695, %1 : vector<16x16xf32>
    %cst_289 = arith.constant dense<0xFF800000> : vector<16xf32>
    %697 = vector.multi_reduction <maximumf>, %696, %cst_289 [1] : vector<16x16xf32> to vector<16xf32>
    %698 = vector.shape_cast %697 : vector<16xf32> to vector<16x1xf32>
    %699 = vector.broadcast %698 : vector<16x1xf32> to vector<16x16xf32>
    %700 = arith.subf %696, %699 : vector<16x16xf32>
    %701 = math.exp %700 : vector<16x16xf32>
    %cst_290 = arith.constant dense<0.000000e+00> : vector<16xf32>
    %702 = vector.multi_reduction <add>, %701, %cst_290 [1] : vector<16x16xf32> to vector<16xf32>
    %703 = vector.shape_cast %702 : vector<16xf32> to vector<16x1xf32>
    %704 = tpu.reciprocal %703 {approx = true} : vector<16x1xf32> -> vector<16x1xf32>
    %705 = vector.broadcast %704 : vector<16x1xf32> to vector<16x16xf32>
    %706 = arith.mulf %701, %705 : vector<16x16xf32>
    %cst_291 = arith.constant dense<0.000000e+00> : vector<16x8xf32>
    %707 = tpu.matmul %706, %692, %cst_291 {dimension_numbers = #tpu.dot_dimension_numbers<[1], [0], [0], [1], [0, 0, 1, 1], [], []>} : vector<16x16xf32>, vector<16x8xf32>, vector<16x8xf32> -> vector<16x8xf32>
    %708 = vector.extract_strided_slice %653 {offsets = [0, 24], sizes = [16, 8], strides = [1, 1]} : vector<16x96xf32> to vector<16x8xf32>
    %709 = vector.extract_strided_slice %653 {offsets = [0, 56], sizes = [16, 8], strides = [1, 1]} : vector<16x96xf32> to vector<16x8xf32>
    %710 = vector.extract_strided_slice %653 {offsets = [0, 88], sizes = [16, 8], strides = [1, 1]} : vector<16x96xf32> to vector<16x8xf32>
    %cst_292 = arith.constant dense<0.000000e+00> : vector<16x16xf32>
    %711 = tpu.matmul %708, %709, %cst_292 {dimension_numbers = #tpu.dot_dimension_numbers<[1], [1], [0], [0], [0, 0, 1, 0], [], []>} : vector<16x8xf32>, vector<16x8xf32>, vector<16x16xf32> -> vector<16x16xf32>
    %cst_293 = arith.constant 0.353553385 : f32
    %712 = vector.broadcast %cst_293 : f32 to vector<16x16xf32>
    %713 = arith.mulf %711, %712 : vector<16x16xf32>
    %714 = arith.addf %713, %1 : vector<16x16xf32>
    %cst_294 = arith.constant dense<0xFF800000> : vector<16xf32>
    %715 = vector.multi_reduction <maximumf>, %714, %cst_294 [1] : vector<16x16xf32> to vector<16xf32>
    %716 = vector.shape_cast %715 : vector<16xf32> to vector<16x1xf32>
    %717 = vector.broadcast %716 : vector<16x1xf32> to vector<16x16xf32>
    %718 = arith.subf %714, %717 : vector<16x16xf32>
    %719 = math.exp %718 : vector<16x16xf32>
    %cst_295 = arith.constant dense<0.000000e+00> : vector<16xf32>
    %720 = vector.multi_reduction <add>, %719, %cst_295 [1] : vector<16x16xf32> to vector<16xf32>
    %721 = vector.shape_cast %720 : vector<16xf32> to vector<16x1xf32>
    %722 = tpu.reciprocal %721 {approx = true} : vector<16x1xf32> -> vector<16x1xf32>
    %723 = vector.broadcast %722 : vector<16x1xf32> to vector<16x16xf32>
    %724 = arith.mulf %719, %723 : vector<16x16xf32>
    %cst_296 = arith.constant dense<0.000000e+00> : vector<16x8xf32>
    %725 = tpu.matmul %724, %710, %cst_296 {dimension_numbers = #tpu.dot_dimension_numbers<[1], [0], [0], [1], [0, 0, 1, 1], [], []>} : vector<16x16xf32>, vector<16x8xf32>, vector<16x8xf32> -> vector<16x8xf32>
    %726 = tpu.concatenate %671, %689, %707, %725 in 1 : vector<16x8xf32>, vector<16x8xf32>, vector<16x8xf32>, vector<16x8xf32> -> vector<16x32xf32>
    %c4_297 = arith.constant 4 : index
    %c0_298 = arith.constant 0 : index
    %c0_299 = arith.constant 0 : index
    %727 = vector.load %arg6[%c4_297, %c0_298, %c0_299] : memref<6x32x32xf32, #tpu.memory_space<vmem>>, vector<1x32x32xf32>
    %728 = vector.shape_cast %727 : vector<1x32x32xf32> to vector<32x32xf32>
    %cst_300 = arith.constant dense<0.000000e+00> : vector<16x32xf32>
    %729 = tpu.matmul %726, %728, %cst_300 {dimension_numbers = #tpu.dot_dimension_numbers<[1], [0], [0], [1], [0, 0, 1, 1], [], []>} : vector<16x32xf32>, vector<32x32xf32>, vector<16x32xf32> -> vector<16x32xf32>
    %c4_301 = arith.constant 4 : index
    %c0_302 = arith.constant 0 : index
    %730 = vector.load %arg7[%c4_301, %c0_302] : memref<6x32xf32, #tpu.memory_space<vmem>>, vector<1x32xf32>
    %731 = vector.broadcast %730 : vector<1x32xf32> to vector<16x32xf32>
    %732 = arith.addf %729, %731 : vector<16x32xf32>
    %733 = arith.addf %625, %732 : vector<16x32xf32>
    %c4_303 = arith.constant 4 : index
    %c0_304 = arith.constant 0 : index
    %734 = vector.load %arg8[%c4_303, %c0_304] : memref<6x32xf32, #tpu.memory_space<vmem>>, vector<1x32xf32>
    %c4_305 = arith.constant 4 : index
    %c0_306 = arith.constant 0 : index
    %735 = vector.load %arg9[%c4_305, %c0_306] : memref<6x32xf32, #tpu.memory_space<vmem>>, vector<1x32xf32>
    %cst_307 = arith.constant dense<0.000000e+00> : vector<16xf32>
    %736 = vector.multi_reduction <add>, %733, %cst_307 [1] : vector<16x32xf32> to vector<16xf32>
    %737 = vector.shape_cast %736 : vector<16xf32> to vector<16x1xf32>
    %cst_308 = arith.constant 3.200000e+01 : f32
    %738 = vector.broadcast %cst_308 : f32 to vector<16x1xf32>
    %739 = arith.divf %737, %738 : vector<16x1xf32>
    %740 = vector.broadcast %739 : vector<16x1xf32> to vector<16x32xf32>
    %741 = arith.subf %733, %740 : vector<16x32xf32>
    %742 = arith.mulf %741, %741 : vector<16x32xf32>
    %cst_309 = arith.constant dense<0.000000e+00> : vector<16xf32>
    %743 = vector.multi_reduction <add>, %742, %cst_309 [1] : vector<16x32xf32> to vector<16xf32>
    %744 = vector.shape_cast %743 : vector<16xf32> to vector<16x1xf32>
    %cst_310 = arith.constant 3.200000e+01 : f32
    %745 = vector.broadcast %cst_310 : f32 to vector<16x1xf32>
    %746 = arith.divf %744, %745 : vector<16x1xf32>
    %cst_311 = arith.constant 9.99999974E-6 : f32
    %747 = vector.broadcast %cst_311 : f32 to vector<16x1xf32>
    %748 = arith.addf %746, %747 : vector<16x1xf32>
    %749 = math.rsqrt %748 : vector<16x1xf32>
    %750 = vector.broadcast %749 : vector<16x1xf32> to vector<16x32xf32>
    %751 = arith.mulf %741, %750 : vector<16x32xf32>
    %752 = vector.broadcast %734 : vector<1x32xf32> to vector<16x32xf32>
    %753 = arith.mulf %751, %752 : vector<16x32xf32>
    %754 = vector.broadcast %735 : vector<1x32xf32> to vector<16x32xf32>
    %755 = arith.addf %753, %754 : vector<16x32xf32>
    %c4_312 = arith.constant 4 : index
    %c0_313 = arith.constant 0 : index
    %c0_314 = arith.constant 0 : index
    %756 = vector.load %arg10[%c4_312, %c0_313, %c0_314] : memref<6x32x128xf32, #tpu.memory_space<vmem>>, vector<1x32x128xf32>
    %757 = vector.shape_cast %756 : vector<1x32x128xf32> to vector<32x128xf32>
    %cst_315 = arith.constant dense<0.000000e+00> : vector<16x128xf32>
    %758 = tpu.matmul %755, %757, %cst_315 {dimension_numbers = #tpu.dot_dimension_numbers<[1], [0], [0], [1], [0, 0, 1, 1], [], []>} : vector<16x32xf32>, vector<32x128xf32>, vector<16x128xf32> -> vector<16x128xf32>
    %c4_316 = arith.constant 4 : index
    %c0_317 = arith.constant 0 : index
    %759 = vector.load %arg11[%c4_316, %c0_317] : memref<6x128xf32, #tpu.memory_space<vmem>>, vector<1x128xf32>
    %760 = vector.broadcast %759 : vector<1x128xf32> to vector<16x128xf32>
    %761 = arith.addf %758, %760 : vector<16x128xf32>
    %cst_318 = arith.constant 5.000000e-01 : f32
    %762 = vector.broadcast %cst_318 : f32 to vector<16x128xf32>
    %763 = arith.mulf %762, %761 : vector<16x128xf32>
    %cst_319 = arith.constant 4.471500e-02 : f32
    %764 = vector.broadcast %cst_319 : f32 to vector<16x128xf32>
    %765 = arith.mulf %764, %761 : vector<16x128xf32>
    %766 = arith.mulf %765, %761 : vector<16x128xf32>
    %767 = arith.mulf %766, %761 : vector<16x128xf32>
    %768 = arith.addf %761, %767 : vector<16x128xf32>
    %cst_320 = arith.constant 0.797884583 : f32
    %769 = vector.broadcast %cst_320 : f32 to vector<16x128xf32>
    %770 = arith.mulf %769, %768 : vector<16x128xf32>
    %771 = math.tanh %770 : vector<16x128xf32>
    %cst_321 = arith.constant 1.000000e+00 : f32
    %772 = vector.broadcast %cst_321 : f32 to vector<16x128xf32>
    %773 = arith.addf %772, %771 : vector<16x128xf32>
    %774 = arith.mulf %763, %773 : vector<16x128xf32>
    %c4_322 = arith.constant 4 : index
    %c0_323 = arith.constant 0 : index
    %c0_324 = arith.constant 0 : index
    %775 = vector.load %arg12[%c4_322, %c0_323, %c0_324] : memref<6x128x32xf32, #tpu.memory_space<vmem>>, vector<1x128x32xf32>
    %776 = vector.shape_cast %775 : vector<1x128x32xf32> to vector<128x32xf32>
    %cst_325 = arith.constant dense<0.000000e+00> : vector<16x32xf32>
    %777 = tpu.matmul %774, %776, %cst_325 {dimension_numbers = #tpu.dot_dimension_numbers<[1], [0], [0], [1], [0, 0, 1, 1], [], []>} : vector<16x128xf32>, vector<128x32xf32>, vector<16x32xf32> -> vector<16x32xf32>
    %c4_326 = arith.constant 4 : index
    %c0_327 = arith.constant 0 : index
    %778 = vector.load %arg13[%c4_326, %c0_327] : memref<6x32xf32, #tpu.memory_space<vmem>>, vector<1x32xf32>
    %779 = vector.broadcast %778 : vector<1x32xf32> to vector<16x32xf32>
    %780 = arith.addf %777, %779 : vector<16x32xf32>
    %781 = arith.addf %733, %780 : vector<16x32xf32>
    %c5 = arith.constant 5 : index
    %c0_328 = arith.constant 0 : index
    %782 = vector.load %arg2[%c5, %c0_328] : memref<6x32xf32, #tpu.memory_space<vmem>>, vector<1x32xf32>
    %c5_329 = arith.constant 5 : index
    %c0_330 = arith.constant 0 : index
    %783 = vector.load %arg3[%c5_329, %c0_330] : memref<6x32xf32, #tpu.memory_space<vmem>>, vector<1x32xf32>
    %cst_331 = arith.constant dense<0.000000e+00> : vector<16xf32>
    %784 = vector.multi_reduction <add>, %781, %cst_331 [1] : vector<16x32xf32> to vector<16xf32>
    %785 = vector.shape_cast %784 : vector<16xf32> to vector<16x1xf32>
    %cst_332 = arith.constant 3.200000e+01 : f32
    %786 = vector.broadcast %cst_332 : f32 to vector<16x1xf32>
    %787 = arith.divf %785, %786 : vector<16x1xf32>
    %788 = vector.broadcast %787 : vector<16x1xf32> to vector<16x32xf32>
    %789 = arith.subf %781, %788 : vector<16x32xf32>
    %790 = arith.mulf %789, %789 : vector<16x32xf32>
    %cst_333 = arith.constant dense<0.000000e+00> : vector<16xf32>
    %791 = vector.multi_reduction <add>, %790, %cst_333 [1] : vector<16x32xf32> to vector<16xf32>
    %792 = vector.shape_cast %791 : vector<16xf32> to vector<16x1xf32>
    %cst_334 = arith.constant 3.200000e+01 : f32
    %793 = vector.broadcast %cst_334 : f32 to vector<16x1xf32>
    %794 = arith.divf %792, %793 : vector<16x1xf32>
    %cst_335 = arith.constant 9.99999974E-6 : f32
    %795 = vector.broadcast %cst_335 : f32 to vector<16x1xf32>
    %796 = arith.addf %794, %795 : vector<16x1xf32>
    %797 = math.rsqrt %796 : vector<16x1xf32>
    %798 = vector.broadcast %797 : vector<16x1xf32> to vector<16x32xf32>
    %799 = arith.mulf %789, %798 : vector<16x32xf32>
    %800 = vector.broadcast %782 : vector<1x32xf32> to vector<16x32xf32>
    %801 = arith.mulf %799, %800 : vector<16x32xf32>
    %802 = vector.broadcast %783 : vector<1x32xf32> to vector<16x32xf32>
    %803 = arith.addf %801, %802 : vector<16x32xf32>
    %c5_336 = arith.constant 5 : index
    %c0_337 = arith.constant 0 : index
    %c0_338 = arith.constant 0 : index
    %804 = vector.load %arg4[%c5_336, %c0_337, %c0_338] : memref<6x32x96xf32, #tpu.memory_space<vmem>>, vector<1x32x96xf32>
    %805 = vector.shape_cast %804 : vector<1x32x96xf32> to vector<32x96xf32>
    %cst_339 = arith.constant dense<0.000000e+00> : vector<16x96xf32>
    %806 = tpu.matmul %803, %805, %cst_339 {dimension_numbers = #tpu.dot_dimension_numbers<[1], [0], [0], [1], [0, 0, 1, 1], [], []>} : vector<16x32xf32>, vector<32x96xf32>, vector<16x96xf32> -> vector<16x96xf32>
    %c5_340 = arith.constant 5 : index
    %c0_341 = arith.constant 0 : index
    %807 = vector.load %arg5[%c5_340, %c0_341] : memref<6x96xf32, #tpu.memory_space<vmem>>, vector<1x96xf32>
    %808 = vector.broadcast %807 : vector<1x96xf32> to vector<16x96xf32>
    %809 = arith.addf %806, %808 : vector<16x96xf32>
    %810 = vector.extract_strided_slice %809 {offsets = [0, 0], sizes = [16, 8], strides = [1, 1]} : vector<16x96xf32> to vector<16x8xf32>
    %811 = vector.extract_strided_slice %809 {offsets = [0, 32], sizes = [16, 8], strides = [1, 1]} : vector<16x96xf32> to vector<16x8xf32>
    %812 = vector.extract_strided_slice %809 {offsets = [0, 64], sizes = [16, 8], strides = [1, 1]} : vector<16x96xf32> to vector<16x8xf32>
    %cst_342 = arith.constant dense<0.000000e+00> : vector<16x16xf32>
    %813 = tpu.matmul %810, %811, %cst_342 {dimension_numbers = #tpu.dot_dimension_numbers<[1], [1], [0], [0], [0, 0, 1, 0], [], []>} : vector<16x8xf32>, vector<16x8xf32>, vector<16x16xf32> -> vector<16x16xf32>
    %cst_343 = arith.constant 0.353553385 : f32
    %814 = vector.broadcast %cst_343 : f32 to vector<16x16xf32>
    %815 = arith.mulf %813, %814 : vector<16x16xf32>
    %816 = arith.addf %815, %1 : vector<16x16xf32>
    %cst_344 = arith.constant dense<0xFF800000> : vector<16xf32>
    %817 = vector.multi_reduction <maximumf>, %816, %cst_344 [1] : vector<16x16xf32> to vector<16xf32>
    %818 = vector.shape_cast %817 : vector<16xf32> to vector<16x1xf32>
    %819 = vector.broadcast %818 : vector<16x1xf32> to vector<16x16xf32>
    %820 = arith.subf %816, %819 : vector<16x16xf32>
    %821 = math.exp %820 : vector<16x16xf32>
    %cst_345 = arith.constant dense<0.000000e+00> : vector<16xf32>
    %822 = vector.multi_reduction <add>, %821, %cst_345 [1] : vector<16x16xf32> to vector<16xf32>
    %823 = vector.shape_cast %822 : vector<16xf32> to vector<16x1xf32>
    %824 = tpu.reciprocal %823 {approx = true} : vector<16x1xf32> -> vector<16x1xf32>
    %825 = vector.broadcast %824 : vector<16x1xf32> to vector<16x16xf32>
    %826 = arith.mulf %821, %825 : vector<16x16xf32>
    %cst_346 = arith.constant dense<0.000000e+00> : vector<16x8xf32>
    %827 = tpu.matmul %826, %812, %cst_346 {dimension_numbers = #tpu.dot_dimension_numbers<[1], [0], [0], [1], [0, 0, 1, 1], [], []>} : vector<16x16xf32>, vector<16x8xf32>, vector<16x8xf32> -> vector<16x8xf32>
    %828 = vector.extract_strided_slice %809 {offsets = [0, 8], sizes = [16, 8], strides = [1, 1]} : vector<16x96xf32> to vector<16x8xf32>
    %829 = vector.extract_strided_slice %809 {offsets = [0, 40], sizes = [16, 8], strides = [1, 1]} : vector<16x96xf32> to vector<16x8xf32>
    %830 = vector.extract_strided_slice %809 {offsets = [0, 72], sizes = [16, 8], strides = [1, 1]} : vector<16x96xf32> to vector<16x8xf32>
    %cst_347 = arith.constant dense<0.000000e+00> : vector<16x16xf32>
    %831 = tpu.matmul %828, %829, %cst_347 {dimension_numbers = #tpu.dot_dimension_numbers<[1], [1], [0], [0], [0, 0, 1, 0], [], []>} : vector<16x8xf32>, vector<16x8xf32>, vector<16x16xf32> -> vector<16x16xf32>
    %cst_348 = arith.constant 0.353553385 : f32
    %832 = vector.broadcast %cst_348 : f32 to vector<16x16xf32>
    %833 = arith.mulf %831, %832 : vector<16x16xf32>
    %834 = arith.addf %833, %1 : vector<16x16xf32>
    %cst_349 = arith.constant dense<0xFF800000> : vector<16xf32>
    %835 = vector.multi_reduction <maximumf>, %834, %cst_349 [1] : vector<16x16xf32> to vector<16xf32>
    %836 = vector.shape_cast %835 : vector<16xf32> to vector<16x1xf32>
    %837 = vector.broadcast %836 : vector<16x1xf32> to vector<16x16xf32>
    %838 = arith.subf %834, %837 : vector<16x16xf32>
    %839 = math.exp %838 : vector<16x16xf32>
    %cst_350 = arith.constant dense<0.000000e+00> : vector<16xf32>
    %840 = vector.multi_reduction <add>, %839, %cst_350 [1] : vector<16x16xf32> to vector<16xf32>
    %841 = vector.shape_cast %840 : vector<16xf32> to vector<16x1xf32>
    %842 = tpu.reciprocal %841 {approx = true} : vector<16x1xf32> -> vector<16x1xf32>
    %843 = vector.broadcast %842 : vector<16x1xf32> to vector<16x16xf32>
    %844 = arith.mulf %839, %843 : vector<16x16xf32>
    %cst_351 = arith.constant dense<0.000000e+00> : vector<16x8xf32>
    %845 = tpu.matmul %844, %830, %cst_351 {dimension_numbers = #tpu.dot_dimension_numbers<[1], [0], [0], [1], [0, 0, 1, 1], [], []>} : vector<16x16xf32>, vector<16x8xf32>, vector<16x8xf32> -> vector<16x8xf32>
    %846 = vector.extract_strided_slice %809 {offsets = [0, 16], sizes = [16, 8], strides = [1, 1]} : vector<16x96xf32> to vector<16x8xf32>
    %847 = vector.extract_strided_slice %809 {offsets = [0, 48], sizes = [16, 8], strides = [1, 1]} : vector<16x96xf32> to vector<16x8xf32>
    %848 = vector.extract_strided_slice %809 {offsets = [0, 80], sizes = [16, 8], strides = [1, 1]} : vector<16x96xf32> to vector<16x8xf32>
    %cst_352 = arith.constant dense<0.000000e+00> : vector<16x16xf32>
    %849 = tpu.matmul %846, %847, %cst_352 {dimension_numbers = #tpu.dot_dimension_numbers<[1], [1], [0], [0], [0, 0, 1, 0], [], []>} : vector<16x8xf32>, vector<16x8xf32>, vector<16x16xf32> -> vector<16x16xf32>
    %cst_353 = arith.constant 0.353553385 : f32
    %850 = vector.broadcast %cst_353 : f32 to vector<16x16xf32>
    %851 = arith.mulf %849, %850 : vector<16x16xf32>
    %852 = arith.addf %851, %1 : vector<16x16xf32>
    %cst_354 = arith.constant dense<0xFF800000> : vector<16xf32>
    %853 = vector.multi_reduction <maximumf>, %852, %cst_354 [1] : vector<16x16xf32> to vector<16xf32>
    %854 = vector.shape_cast %853 : vector<16xf32> to vector<16x1xf32>
    %855 = vector.broadcast %854 : vector<16x1xf32> to vector<16x16xf32>
    %856 = arith.subf %852, %855 : vector<16x16xf32>
    %857 = math.exp %856 : vector<16x16xf32>
    %cst_355 = arith.constant dense<0.000000e+00> : vector<16xf32>
    %858 = vector.multi_reduction <add>, %857, %cst_355 [1] : vector<16x16xf32> to vector<16xf32>
    %859 = vector.shape_cast %858 : vector<16xf32> to vector<16x1xf32>
    %860 = tpu.reciprocal %859 {approx = true} : vector<16x1xf32> -> vector<16x1xf32>
    %861 = vector.broadcast %860 : vector<16x1xf32> to vector<16x16xf32>
    %862 = arith.mulf %857, %861 : vector<16x16xf32>
    %cst_356 = arith.constant dense<0.000000e+00> : vector<16x8xf32>
    %863 = tpu.matmul %862, %848, %cst_356 {dimension_numbers = #tpu.dot_dimension_numbers<[1], [0], [0], [1], [0, 0, 1, 1], [], []>} : vector<16x16xf32>, vector<16x8xf32>, vector<16x8xf32> -> vector<16x8xf32>
    %864 = vector.extract_strided_slice %809 {offsets = [0, 24], sizes = [16, 8], strides = [1, 1]} : vector<16x96xf32> to vector<16x8xf32>
    %865 = vector.extract_strided_slice %809 {offsets = [0, 56], sizes = [16, 8], strides = [1, 1]} : vector<16x96xf32> to vector<16x8xf32>
    %866 = vector.extract_strided_slice %809 {offsets = [0, 88], sizes = [16, 8], strides = [1, 1]} : vector<16x96xf32> to vector<16x8xf32>
    %cst_357 = arith.constant dense<0.000000e+00> : vector<16x16xf32>
    %867 = tpu.matmul %864, %865, %cst_357 {dimension_numbers = #tpu.dot_dimension_numbers<[1], [1], [0], [0], [0, 0, 1, 0], [], []>} : vector<16x8xf32>, vector<16x8xf32>, vector<16x16xf32> -> vector<16x16xf32>
    %cst_358 = arith.constant 0.353553385 : f32
    %868 = vector.broadcast %cst_358 : f32 to vector<16x16xf32>
    %869 = arith.mulf %867, %868 : vector<16x16xf32>
    %870 = arith.addf %869, %1 : vector<16x16xf32>
    %cst_359 = arith.constant dense<0xFF800000> : vector<16xf32>
    %871 = vector.multi_reduction <maximumf>, %870, %cst_359 [1] : vector<16x16xf32> to vector<16xf32>
    %872 = vector.shape_cast %871 : vector<16xf32> to vector<16x1xf32>
    %873 = vector.broadcast %872 : vector<16x1xf32> to vector<16x16xf32>
    %874 = arith.subf %870, %873 : vector<16x16xf32>
    %875 = math.exp %874 : vector<16x16xf32>
    %cst_360 = arith.constant dense<0.000000e+00> : vector<16xf32>
    %876 = vector.multi_reduction <add>, %875, %cst_360 [1] : vector<16x16xf32> to vector<16xf32>
    %877 = vector.shape_cast %876 : vector<16xf32> to vector<16x1xf32>
    %878 = tpu.reciprocal %877 {approx = true} : vector<16x1xf32> -> vector<16x1xf32>
    %879 = vector.broadcast %878 : vector<16x1xf32> to vector<16x16xf32>
    %880 = arith.mulf %875, %879 : vector<16x16xf32>
    %cst_361 = arith.constant dense<0.000000e+00> : vector<16x8xf32>
    %881 = tpu.matmul %880, %866, %cst_361 {dimension_numbers = #tpu.dot_dimension_numbers<[1], [0], [0], [1], [0, 0, 1, 1], [], []>} : vector<16x16xf32>, vector<16x8xf32>, vector<16x8xf32> -> vector<16x8xf32>
    %882 = tpu.concatenate %827, %845, %863, %881 in 1 : vector<16x8xf32>, vector<16x8xf32>, vector<16x8xf32>, vector<16x8xf32> -> vector<16x32xf32>
    %c5_362 = arith.constant 5 : index
    %c0_363 = arith.constant 0 : index
    %c0_364 = arith.constant 0 : index
    %883 = vector.load %arg6[%c5_362, %c0_363, %c0_364] : memref<6x32x32xf32, #tpu.memory_space<vmem>>, vector<1x32x32xf32>
    %884 = vector.shape_cast %883 : vector<1x32x32xf32> to vector<32x32xf32>
    %cst_365 = arith.constant dense<0.000000e+00> : vector<16x32xf32>
    %885 = tpu.matmul %882, %884, %cst_365 {dimension_numbers = #tpu.dot_dimension_numbers<[1], [0], [0], [1], [0, 0, 1, 1], [], []>} : vector<16x32xf32>, vector<32x32xf32>, vector<16x32xf32> -> vector<16x32xf32>
    %c5_366 = arith.constant 5 : index
    %c0_367 = arith.constant 0 : index
    %886 = vector.load %arg7[%c5_366, %c0_367] : memref<6x32xf32, #tpu.memory_space<vmem>>, vector<1x32xf32>
    %887 = vector.broadcast %886 : vector<1x32xf32> to vector<16x32xf32>
    %888 = arith.addf %885, %887 : vector<16x32xf32>
    %889 = arith.addf %781, %888 : vector<16x32xf32>
    %c5_368 = arith.constant 5 : index
    %c0_369 = arith.constant 0 : index
    %890 = vector.load %arg8[%c5_368, %c0_369] : memref<6x32xf32, #tpu.memory_space<vmem>>, vector<1x32xf32>
    %c5_370 = arith.constant 5 : index
    %c0_371 = arith.constant 0 : index
    %891 = vector.load %arg9[%c5_370, %c0_371] : memref<6x32xf32, #tpu.memory_space<vmem>>, vector<1x32xf32>
    %cst_372 = arith.constant dense<0.000000e+00> : vector<16xf32>
    %892 = vector.multi_reduction <add>, %889, %cst_372 [1] : vector<16x32xf32> to vector<16xf32>
    %893 = vector.shape_cast %892 : vector<16xf32> to vector<16x1xf32>
    %cst_373 = arith.constant 3.200000e+01 : f32
    %894 = vector.broadcast %cst_373 : f32 to vector<16x1xf32>
    %895 = arith.divf %893, %894 : vector<16x1xf32>
    %896 = vector.broadcast %895 : vector<16x1xf32> to vector<16x32xf32>
    %897 = arith.subf %889, %896 : vector<16x32xf32>
    %898 = arith.mulf %897, %897 : vector<16x32xf32>
    %cst_374 = arith.constant dense<0.000000e+00> : vector<16xf32>
    %899 = vector.multi_reduction <add>, %898, %cst_374 [1] : vector<16x32xf32> to vector<16xf32>
    %900 = vector.shape_cast %899 : vector<16xf32> to vector<16x1xf32>
    %cst_375 = arith.constant 3.200000e+01 : f32
    %901 = vector.broadcast %cst_375 : f32 to vector<16x1xf32>
    %902 = arith.divf %900, %901 : vector<16x1xf32>
    %cst_376 = arith.constant 9.99999974E-6 : f32
    %903 = vector.broadcast %cst_376 : f32 to vector<16x1xf32>
    %904 = arith.addf %902, %903 : vector<16x1xf32>
    %905 = math.rsqrt %904 : vector<16x1xf32>
    %906 = vector.broadcast %905 : vector<16x1xf32> to vector<16x32xf32>
    %907 = arith.mulf %897, %906 : vector<16x32xf32>
    %908 = vector.broadcast %890 : vector<1x32xf32> to vector<16x32xf32>
    %909 = arith.mulf %907, %908 : vector<16x32xf32>
    %910 = vector.broadcast %891 : vector<1x32xf32> to vector<16x32xf32>
    %911 = arith.addf %909, %910 : vector<16x32xf32>
    %c5_377 = arith.constant 5 : index
    %c0_378 = arith.constant 0 : index
    %c0_379 = arith.constant 0 : index
    %912 = vector.load %arg10[%c5_377, %c0_378, %c0_379] : memref<6x32x128xf32, #tpu.memory_space<vmem>>, vector<1x32x128xf32>
    %913 = vector.shape_cast %912 : vector<1x32x128xf32> to vector<32x128xf32>
    %cst_380 = arith.constant dense<0.000000e+00> : vector<16x128xf32>
    %914 = tpu.matmul %911, %913, %cst_380 {dimension_numbers = #tpu.dot_dimension_numbers<[1], [0], [0], [1], [0, 0, 1, 1], [], []>} : vector<16x32xf32>, vector<32x128xf32>, vector<16x128xf32> -> vector<16x128xf32>
    %c5_381 = arith.constant 5 : index
    %c0_382 = arith.constant 0 : index
    %915 = vector.load %arg11[%c5_381, %c0_382] : memref<6x128xf32, #tpu.memory_space<vmem>>, vector<1x128xf32>
    %916 = vector.broadcast %915 : vector<1x128xf32> to vector<16x128xf32>
    %917 = arith.addf %914, %916 : vector<16x128xf32>
    %cst_383 = arith.constant 5.000000e-01 : f32
    %918 = vector.broadcast %cst_383 : f32 to vector<16x128xf32>
    %919 = arith.mulf %918, %917 : vector<16x128xf32>
    %cst_384 = arith.constant 4.471500e-02 : f32
    %920 = vector.broadcast %cst_384 : f32 to vector<16x128xf32>
    %921 = arith.mulf %920, %917 : vector<16x128xf32>
    %922 = arith.mulf %921, %917 : vector<16x128xf32>
    %923 = arith.mulf %922, %917 : vector<16x128xf32>
    %924 = arith.addf %917, %923 : vector<16x128xf32>
    %cst_385 = arith.constant 0.797884583 : f32
    %925 = vector.broadcast %cst_385 : f32 to vector<16x128xf32>
    %926 = arith.mulf %925, %924 : vector<16x128xf32>
    %927 = math.tanh %926 : vector<16x128xf32>
    %cst_386 = arith.constant 1.000000e+00 : f32
    %928 = vector.broadcast %cst_386 : f32 to vector<16x128xf32>
    %929 = arith.addf %928, %927 : vector<16x128xf32>
    %930 = arith.mulf %919, %929 : vector<16x128xf32>
    %c5_387 = arith.constant 5 : index
    %c0_388 = arith.constant 0 : index
    %c0_389 = arith.constant 0 : index
    %931 = vector.load %arg12[%c5_387, %c0_388, %c0_389] : memref<6x128x32xf32, #tpu.memory_space<vmem>>, vector<1x128x32xf32>
    %932 = vector.shape_cast %931 : vector<1x128x32xf32> to vector<128x32xf32>
    %cst_390 = arith.constant dense<0.000000e+00> : vector<16x32xf32>
    %933 = tpu.matmul %930, %932, %cst_390 {dimension_numbers = #tpu.dot_dimension_numbers<[1], [0], [0], [1], [0, 0, 1, 1], [], []>} : vector<16x128xf32>, vector<128x32xf32>, vector<16x32xf32> -> vector<16x32xf32>
    %c5_391 = arith.constant 5 : index
    %c0_392 = arith.constant 0 : index
    %934 = vector.load %arg13[%c5_391, %c0_392] : memref<6x32xf32, #tpu.memory_space<vmem>>, vector<1x32xf32>
    %935 = vector.broadcast %934 : vector<1x32xf32> to vector<16x32xf32>
    %936 = arith.addf %933, %935 : vector<16x32xf32>
    %937 = arith.addf %889, %936 : vector<16x32xf32>
    %c0_393 = arith.constant 0 : index
    %c0_394 = arith.constant 0 : index
    %938 = vector.load %arg14[%c0_393, %c0_394] : memref<1x32xf32, #tpu.memory_space<vmem>>, vector<1x32xf32>
    %c0_395 = arith.constant 0 : index
    %c0_396 = arith.constant 0 : index
    %939 = vector.load %arg15[%c0_395, %c0_396] : memref<1x32xf32, #tpu.memory_space<vmem>>, vector<1x32xf32>
    %cst_397 = arith.constant dense<0.000000e+00> : vector<16xf32>
    %940 = vector.multi_reduction <add>, %937, %cst_397 [1] : vector<16x32xf32> to vector<16xf32>
    %941 = vector.shape_cast %940 : vector<16xf32> to vector<16x1xf32>
    %cst_398 = arith.constant 3.200000e+01 : f32
    %942 = vector.broadcast %cst_398 : f32 to vector<16x1xf32>
    %943 = arith.divf %941, %942 : vector<16x1xf32>
    %944 = vector.broadcast %943 : vector<16x1xf32> to vector<16x32xf32>
    %945 = arith.subf %937, %944 : vector<16x32xf32>
    %946 = arith.mulf %945, %945 : vector<16x32xf32>
    %cst_399 = arith.constant dense<0.000000e+00> : vector<16xf32>
    %947 = vector.multi_reduction <add>, %946, %cst_399 [1] : vector<16x32xf32> to vector<16xf32>
    %948 = vector.shape_cast %947 : vector<16xf32> to vector<16x1xf32>
    %cst_400 = arith.constant 3.200000e+01 : f32
    %949 = vector.broadcast %cst_400 : f32 to vector<16x1xf32>
    %950 = arith.divf %948, %949 : vector<16x1xf32>
    %cst_401 = arith.constant 9.99999974E-6 : f32
    %951 = vector.broadcast %cst_401 : f32 to vector<16x1xf32>
    %952 = arith.addf %950, %951 : vector<16x1xf32>
    %953 = math.rsqrt %952 : vector<16x1xf32>
    %954 = vector.broadcast %953 : vector<16x1xf32> to vector<16x32xf32>
    %955 = arith.mulf %945, %954 : vector<16x32xf32>
    %956 = vector.broadcast %938 : vector<1x32xf32> to vector<16x32xf32>
    %957 = arith.mulf %955, %956 : vector<16x32xf32>
    %958 = vector.broadcast %939 : vector<1x32xf32> to vector<16x32xf32>
    %959 = arith.addf %957, %958 : vector<16x32xf32>
    %c0_402 = arith.constant 0 : index
    %c0_403 = arith.constant 0 : index
    %960 = vector.load %arg16[%c0_402, %c0_403] : memref<16x32xf32, #tpu.memory_space<vmem>>, vector<16x32xf32>
    tpu.vector_store %arg16[%c0_402, %c0_403], %959 {strides = array<i32>} : memref<16x32xf32, #tpu.memory_space<vmem>>, vector<16x32xf32>,
    return
  }
}

</mosaic_0001>

<llo_original>
// kernel: gpt_node2_forward.1
$region0: #{gpt_node2_forward.1}
  #allocation0 [shape = 'u32[]', space=smem, size = 0x4, offset = 0x4, fixed_abs, tag = 'smem constant byte address 0x4 - core index']
  #allocation1 [shape = 'u32[144,128]{1,0:T(1,128)}', space=vmem, size = 0x12000, scoped, tag = 'internal scratch']
  %s0 = inlined_call_operand.vmem [shape: f32[16,32], index: 0, kind: input, shape index: {}]
  %s1 = inlined_call_operand.vmem [shape: f32[16,16], index: 1, kind: input, shape index: {}]
  %s2 = inlined_call_operand.vmem [shape: f32[6,32], index: 2, kind: input, shape index: {}]
  %s3 = inlined_call_operand.vmem [shape: f32[6,32], index: 3, kind: input, shape index: {}]
  %s4 = inlined_call_operand.vmem [shape: f32[6,32,96], index: 4, kind: input, shape index: {}]
  %s5 = inlined_call_operand.vmem [shape: f32[6,96], index: 5, kind: input, shape index: {}]
  %s6 = inlined_call_operand.vmem [shape: f32[6,32,32], index: 6, kind: input, shape index: {}]
  %s7 = inlined_call_operand.vmem [shape: f32[6,32], index: 7, kind: input, shape index: {}]
  %s8 = inlined_call_operand.vmem [shape: f32[6,32], index: 8, kind: input, shape index: {}]
  %s9 = inlined_call_operand.vmem [shape: f32[6,32], index: 9, kind: input, shape index: {}]
  %s10 = inlined_call_operand.vmem [shape: f32[6,32,128], index: 10, kind: input, shape index: {}]
  %s11 = inlined_call_operand.vmem [shape: f32[6,128], index: 11, kind: input, shape index: {}]
  %s12 = inlined_call_operand.vmem [shape: f32[6,128,32], index: 12, kind: input, shape index: {}]
  %s13 = inlined_call_operand.vmem [shape: f32[6,32], index: 13, kind: input, shape index: {}]
  %s14 = inlined_call_operand.vmem [shape: f32[1,32], index: 14, kind: input, shape index: {}]
  %s15 = inlined_call_operand.vmem [shape: f32[1,32], index: 15, kind: input, shape index: {}]
  %s16 = inlined_call_operand.hbm [shape: f32[16,32], index: 16, kind: output, shape index: {}]
  %s17 = sld [smem:[#allocation0]]
  $region74: #{gpt_node2_forward.1} parent=0
    _
  %s19 = ssub.s32 1, %s17
  %s20 = scalar_select 0, %s19, %s17
  $region1: #{gpt_node2_forward.1} parent=0
    #allocation2 [shape = 'u8[8192]{0}', space=vmem, size = 0x2000, scoped, tag = 'output window, operand 0, single buffered']
    #allocation3 [shape = 's32[1]{0}', space=sflag, size = 0x4, scoped, tag = 'scoped memory for gpt_node2_forward.1']
    %21 = vsyncpa [#allocation3], 0
    // Predicated region
    $region2: #{gpt_node2_forward.1} parent=1 // pred_check
      _
    $region3: #{gpt_node2_forward.1} parent=1 // pred_check_branch
      %23 = sbr.rel (0) target = $region5
    $region4: #{gpt_node2_forward.1} parent=1 // pred_region
      _
    $region5: #{gpt_node2_forward.1} parent=1 // pred_fallthru
      _
    // Predicated region
    $region6: #{gpt_node2_forward.1} parent=1 // pred_check
      _
    $region7: #{gpt_node2_forward.1} parent=1 // pred_check_branch
      %25 = sbr.rel (0) target = $region9
    $region8: #{gpt_node2_forward.1} parent=1 // pred_region
      _
    $region9: #{gpt_node2_forward.1} parent=1 // pred_fallthru
      _
    // Predicated region
    $region10: #{gpt_node2_forward.1} parent=1 // pred_check
      _
    $region11: #{gpt_node2_forward.1} parent=1 // pred_check_branch
      %27 = sbr.rel (0) target = $region13
    $region12: #{gpt_node2_forward.1} parent=1 // pred_region
      _
    $region13: #{gpt_node2_forward.1} parent=1 // pred_fallthru
      _
    // Predicated region
    $region14: #{gpt_node2_forward.1} parent=1 // pred_check
      _
    $region15: #{gpt_node2_forward.1} parent=1 // pred_check_branch
      %29 = sbr.rel (0) target = $region17
    $region16: #{gpt_node2_forward.1} parent=1 // pred_region
      _
    $region17: #{gpt_node2_forward.1} parent=1 // pred_fallthru
      _
    // Predicated region
    $region18: #{gpt_node2_forward.1} parent=1 // pred_check
      _
    $region19: #{gpt_node2_forward.1} parent=1 // pred_check_branch
      %31 = sbr.rel (0) target = $region21
    $region20: #{gpt_node2_forward.1} parent=1 // pred_region
      _
    $region21: #{gpt_node2_forward.1} parent=1 // pred_fallthru
      _
    // Predicated region
    $region22: #{gpt_node2_forward.1} parent=1 // pred_check
      _
    $region23: #{gpt_node2_forward.1} parent=1 // pred_check_branch
      %33 = sbr.rel (0) target = $region25
    $region24: #{gpt_node2_forward.1} parent=1 // pred_region
      _
    $region25: #{gpt_node2_forward.1} parent=1 // pred_fallthru
      _
    // Predicated region
    $region26: #{gpt_node2_forward.1} parent=1 // pred_check
      _
    $region27: #{gpt_node2_forward.1} parent=1 // pred_check_branch
      %35 = sbr.rel (0) target = $region29
    $region28: #{gpt_node2_forward.1} parent=1 // pred_region
      _
    $region29: #{gpt_node2_forward.1} parent=1 // pred_fallthru
      _
    // Predicated region
    $region30: #{gpt_node2_forward.1} parent=1 // pred_check
      _
    $region31: #{gpt_node2_forward.1} parent=1 // pred_check_branch
      %37 = sbr.rel (0) target = $region33
    $region32: #{gpt_node2_forward.1} parent=1 // pred_region
      _
    $region33: #{gpt_node2_forward.1} parent=1 // pred_fallthru
      _
    // Predicated region
    $region34: #{gpt_node2_forward.1} parent=1 // pred_check
      _
    $region35: #{gpt_node2_forward.1} parent=1 // pred_check_branch
      %39 = sbr.rel (0) target = $region37
    $region36: #{gpt_node2_forward.1} parent=1 // pred_region
      _
    $region37: #{gpt_node2_forward.1} parent=1 // pred_fallthru
      _
    // Predicated region
    $region38: #{gpt_node2_forward.1} parent=1 // pred_check
      _
    $region39: #{gpt_node2_forward.1} parent=1 // pred_check_branch
      %41 = sbr.rel (0) target = $region41
    $region40: #{gpt_node2_forward.1} parent=1 // pred_region
      _
    $region41: #{gpt_node2_forward.1} parent=1 // pred_fallthru
      _
    // Predicated region
    $region42: #{gpt_node2_forward.1} parent=1 // pred_check
      _
    $region43: #{gpt_node2_forward.1} parent=1 // pred_check_branch
      %43 = sbr.rel (0) target = $region45
    $region44: #{gpt_node2_forward.1} parent=1 // pred_region
      _
    $region45: #{gpt_node2_forward.1} parent=1 // pred_fallthru
      _
    // Predicated region
    $region46: #{gpt_node2_forward.1} parent=1 // pred_check
      _
    $region47: #{gpt_node2_forward.1} parent=1 // pred_check_branch
      %45 = sbr.rel (0) target = $region49
    $region48: #{gpt_node2_forward.1} parent=1 // pred_region
      _
    $region49: #{gpt_node2_forward.1} parent=1 // pred_fallthru
      _
    // Predicated region
    $region50: #{gpt_node2_forward.1} parent=1 // pred_check
      _
    $region51: #{gpt_node2_forward.1} parent=1 // pred_check_branch
      %47 = sbr.rel (0) target = $region53
    $region52: #{gpt_node2_forward.1} parent=1 // pred_region
      _
    $region53: #{gpt_node2_forward.1} parent=1 // pred_fallthru
      _
    // Predicated region
    $region54: #{gpt_node2_forward.1} parent=1 // pred_check
      _
    $region55: #{gpt_node2_forward.1} parent=1 // pred_check_branch
      %49 = sbr.rel (0) target = $region57
    $region56: #{gpt_node2_forward.1} parent=1 // pred_region
      _
    $region57: #{gpt_node2_forward.1} parent=1 // pred_fallthru
      _
    // Predicated region
    $region58: #{gpt_node2_forward.1} parent=1 // pred_check
      _
    $region59: #{gpt_node2_forward.1} parent=1 // pred_check_branch
      %51 = sbr.rel (0) target = $region61
    $region60: #{gpt_node2_forward.1} parent=1 // pred_region
      _
    $region61: #{gpt_node2_forward.1} parent=1 // pred_fallthru
      _
    // Predicated region
    $region62: #{gpt_node2_forward.1} parent=1 // pred_check
      _
    $region63: #{gpt_node2_forward.1} parent=1 // pred_check_branch
      %53 = sbr.rel (0) target = $region65
    $region64: #{gpt_node2_forward.1} parent=1 // pred_region
      _
    $region65: #{gpt_node2_forward.1} parent=1 // pred_fallthru
      _
    %v54 = vld [vmem:[%s0] sm:$0xff]
    %v55 = vld [vmem:[%s0 + $0x8] sm:$0xff]
    %v56 = vld [vmem:[%s1] sm:$0xff]
    %v57 = vld [vmem:[%s1 + $0x8] sm:$0xff]
    %v58 = vld [vmem:[%s2] sm:$0x1]
    %v59 = vld [vmem:[%s3] sm:$0x1]
    %vm60 = vcmask 261120
    %v61 = vsel %vm60, %v54, 0.0
    %62 = vadd.xlane.f32.xlu0 %v61
    %v63 = vpop.xlane.xlu0 %62
    %v64 = vsel %vm60, %v55, 0.0
    %65 = vadd.xlane.f32.xlu0 %v64
    %v66 = vpop.xlane.xlu0 %65
    %v67 = vrcp.pop 32.0
    %v68 = vmul.f32 %v63, %v67
    %v69 = vmul.f32 %v66, %v67
    %v70 = vsub.f32 %v54, %v68
    %v71 = vsub.f32 %v55, %v69
    %v72 = vmul.f32 %v70, %v70
    %v73 = vmul.f32 %v71, %v71
    %v74 = vsel %vm60, %v72, 0.0
    %75 = vadd.xlane.f32.xlu0 %v74
    %v76 = vpop.xlane.xlu0 %75
    %v77 = vsel %vm60, %v73, 0.0
    %78 = vadd.xlane.f32.xlu0 %v77
    %v79 = vpop.xlane.xlu0 %78
    %v80 = vmul.f32 %v76, %v67
    %v81 = vmul.f32 %v79, %v67
    %v82 = vadd.f32 %v80, 1e-05
    %v83 = vadd.f32 %v81, 1e-05
    %v84 = vrsqrt.pop %v82
    %v85 = vrsqrt.pop %v83
    %v86 = vmul.f32 %v70, %v84
    %v87 = vmul.f32 %v71, %v85
    %v88 = vlaneseq
    %v89 = vshrl.u32 %v88, 7
    %v90 = vsub.s32 0, %v89
    %v91 = vrot.slane %v58, %v90
    %v92 = vmul.f32 %v86, %v91
    %v93 = vmul.f32 %v87, %v91
    %v94 = vlaneseq
    %v95 = vshrl.u32 %v94, 7
    %v96 = vsub.s32 0, %v95
    %v97 = vrot.slane %v59, %v96
    %v98 = vadd.f32 %v92, %v97
    %v99 = vadd.f32 %v93, %v97
    %v100 = vld [vmem:[%s4] sm:$0xff]
    %v101 = vld [vmem:[%s4 + $0x8] sm:$0xff]
    %v102 = vld [vmem:[%s4 + $0x10] sm:$0xff]
    %v103 = vld [vmem:[%s4 + $0x18] sm:$0xff]
    %v104 = vld [vmem:[%s5] sm:$0x1]
    %v105 = vlaneseq
    %v106 = vshrl.u32 %v105, 7
    %v107 = vsub.s32 0, %v106
    %v108 = vrot.slane %v104, %v107
    %v110 = vsel %vm60, %v98, 0
    %v113 = vsel %vm60, %v99, 0
    %115 = vmatprep.subr.mxu0 0.0
    %116 = vmatpush1.msra.mxu0 %v100
    %117 = vmatprep.subr.mxu0 0.0
    %118 = vmatpush1.msra.mxu0 %v101
    %119 = vmatprep.subr.mxu0 0.0
    %120 = vmatpush1.msra.mxu0 %v102
    %121 = vmatprep.subr.mxu0 0.0
    %122 = vmatpush1.msra.mxu0 %v103
    %123 = vmatprep.subr.mxu0 0.0
    %124 = vmatpush1.msra.mxu0 0.0
    %125 = vmatprep.subr.mxu0 0.0
    %126 = vmatpush1.msra.mxu0 0.0
    %127 = vmatprep.subr.mxu0 0.0
    %128 = vmatpush1.msra.mxu0 0.0
    %129 = vmatprep.subr.mxu0 0.0
    %130 = vmatpush1.msra.mxu0 0.0
    %131 = vmatprep.subr.mxu0 0.0
    %132 = vmatpush1.msra.mxu0 0.0
    %133 = vmatprep.subr.mxu0 0.0
    %134 = vmatpush1.msra.mxu0 0.0
    %135 = vmatprep.subr.mxu0 0.0
    %136 = vmatpush1.msra.mxu0 0.0
    %137 = vmatprep.subr.mxu0 0.0
    %138 = vmatpush1.msra.mxu0 0.0
    %139 = vmatprep.subr.mxu0 0.0
    %140 = vmatpush1.msra.mxu0 0.0
    %141 = vmatprep.subr.mxu0 0.0
    %142 = vmatpush1.msra.mxu0 0.0
    %143 = vmatprep.subr.mxu0 0.0
    %144 = vmatpush1.msra.mxu0 0.0
    %145 = vmatprep.subr.mxu0 0.0
    %146 = vmatpush1.msra.mxu0 0.0
    %147 = vmatprep.subr.mxu0 0.0
    %148 = vmatpush1.msra.mxu0 0.0
    %149 = vmatprep.subr.mxu0 0.0
    %150 = vmatpush1.msra.mxu0 0.0
    %151 = vmatprep.subr.mxu0 0.0
    %152 = vmatpush1.msra.mxu0 0.0
    %153 = vmatprep.subr.mxu0 0.0
    %154 = vmatpush1.msra.mxu0 0.0
    %155 = vmatprep.subr.mxu0 0.0
    %156 = vmatpush1.msra.mxu0 0.0
    %157 = vmatprep.subr.mxu0 0.0
    %158 = vmatpush1.msra.mxu0 0.0
    %159 = vmatprep.subr.mxu0 0.0
    %160 = vmatpush1.msra.mxu0 0.0
    %161 = vmatprep.subr.mxu0 0.0
    %162 = vmatpush1.msra.mxu0 0.0
    %163 = vmatprep.subr.mxu0 0.0
    %164 = vmatpush1.msra.mxu0 0.0
    %165 = vmatprep.subr.mxu0 0.0
    %166 = vmatpush1.msra.mxu0 0.0
    %167 = vmatprep.subr.mxu0 0.0
    %168 = vmatpush1.msra.mxu0 0.0
    %169 = vmatprep.subr.mxu0 0.0
    %170 = vmatpush1.msra.mxu0 0.0
    %171 = vmatprep.subr.mxu0 0.0
    %172 = vmatpush1.msra.mxu0 0.0
    %173 = vmatprep.subr.mxu0 0.0
    %174 = vmatpush1.msra.mxu0 0.0
    %175 = vmatprep.subr.mxu0 0.0
    %176 = vmatpush1.msra.mxu0 0.0
    %177 = vmatprep.subr.mxu0 0.0
    %178 = vmatpush1.msra.mxu0 0.0
    %179 = vmatprep.mubr.f32.mxu0 0.0
    %180 = vmatmul.mubr.f32.gmra.mrb[0].mxu0 %v110
    %v181 = vpop.f32.mrb[0].mxu0
    %v182 = vadd.f32 %v108, %v181
    %v183 = vpop.f32.mrb[0].mxu0
    %184 = vmatprep.mubr.f32.mxu0 0.0
    %185 = vmatmul.mubr.f32.gmra.mrb[0].mxu0 %v113
    %v186 = vpop.f32.mrb[0].mxu0
    %v187 = vadd.f32 %v108, %v186
    %v188 = vpop.f32.mrb[0].mxu0
    %189 = vdwg.mxu0
    %192 = vrot.lane.b32.xlu0 %v182, 96
    %v193 = vpop.permute.xlu0 %192
    %194 = vrot.lane.b32.xlu0 %v187, 96
    %v195 = vpop.permute.xlu0 %194
    %vm196 = vcmask 64512
    %v197 = vsel %vm196, %v182, 0
    %v199 = vsel %vm196, %v187, 0
    %v201 = vsel %vm196, %v193, 0
    %v203 = vsel %vm196, %v195, 0
    %205 = vmatprep.subr.mxu0 0.0
    %206 = vmatpush1.xpose.msra.mxu0 %v201
    %207 = vmatprep.subr.mxu0 0.0
    %208 = vmatpush1.xpose.msra.mxu0 %v203
    %209 = vmatprep.subr.mxu0 0.0
    %210 = vmatpush1.xpose.msra.mxu0 0.0
    %211 = vmatprep.subr.mxu0 0.0
    %212 = vmatpush1.xpose.msra.mxu0 0.0
    %213 = vmatprep.subr.mxu0 0.0
    %214 = vmatpush1.xpose.msra.mxu0 0.0
    %215 = vmatprep.subr.mxu0 0.0
    %216 = vmatpush1.xpose.msra.mxu0 0.0
    %217 = vmatprep.subr.mxu0 0.0
    %218 = vmatpush1.xpose.msra.mxu0 0.0
    %219 = vmatprep.subr.mxu0 0.0
    %220 = vmatpush1.xpose.msra.mxu0 0.0
    %221 = vmatprep.subr.mxu0 0.0
    %222 = vmatpush1.xpose.msra.mxu0 0.0
    %223 = vmatprep.subr.mxu0 0.0
    %224 = vmatpush1.xpose.msra.mxu0 0.0
    %225 = vmatprep.subr.mxu0 0.0
    %226 = vmatpush1.xpose.msra.mxu0 0.0
    %227 = vmatprep.subr.mxu0 0.0
    %228 = vmatpush1.xpose.msra.mxu0 0.0
    %229 = vmatprep.subr.mxu0 0.0
    %230 = vmatpush1.xpose.msra.mxu0 0.0
    %231 = vmatprep.subr.mxu0 0.0
    %232 = vmatpush1.xpose.msra.mxu0 0.0
    %233 = vmatprep.subr.mxu0 0.0
    %234 = vmatpush1.xpose.msra.mxu0 0.0
    %235 = vmatprep.subr.mxu0 0.0
    %236 = vmatpush1.xpose.msra.mxu0 0.0
    %237 = vmatprep.subr.mxu0 0.0
    %238 = vmatpush1.xpose.msra.mxu0 0.0
    %239 = vmatprep.subr.mxu0 0.0
    %240 = vmatpush1.xpose.msra.mxu0 0.0
    %241 = vmatprep.subr.mxu0 0.0
    %242 = vmatpush1.xpose.msra.mxu0 0.0
    %243 = vmatprep.subr.mxu0 0.0
    %244 = vmatpush1.xpose.msra.mxu0 0.0
    %245 = vmatprep.subr.mxu0 0.0
    %246 = vmatpush1.xpose.msra.mxu0 0.0
    %247 = vmatprep.subr.mxu0 0.0
    %248 = vmatpush1.xpose.msra.mxu0 0.0
    %249 = vmatprep.subr.mxu0 0.0
    %250 = vmatpush1.xpose.msra.mxu0 0.0
    %251 = vmatprep.subr.mxu0 0.0
    %252 = vmatpush1.xpose.msra.mxu0 0.0
    %253 = vmatprep.subr.mxu0 0.0
    %254 = vmatpush1.xpose.msra.mxu0 0.0
    %255 = vmatprep.subr.mxu0 0.0
    %256 = vmatpush1.xpose.msra.mxu0 0.0
    %257 = vmatprep.subr.mxu0 0.0
    %258 = vmatpush1.xpose.msra.mxu0 0.0
    %259 = vmatprep.subr.mxu0 0.0
    %260 = vmatpush1.xpose.msra.mxu0 0.0
    %261 = vmatprep.subr.mxu0 0.0
    %262 = vmatpush1.xpose.msra.mxu0 0.0
    %263 = vmatprep.subr.mxu0 0.0
    %264 = vmatpush1.xpose.msra.mxu0 0.0
    %265 = vmatprep.subr.mxu0 0.0
    %266 = vmatpush1.xpose.msra.mxu0 0.0
    %267 = vmatprep.subr.mxu0 0.0
    %268 = vmatpush1.xpose.msra.mxu0 0.0
    %269 = vmatprep.mubr.f32.mxu0 0.0
    %270 = vmatmul.mubr.f32.gmra.mrb[0].mxu0 %v197
    %v271 = vpop.f32.mrb[0].mxu0
    %v272 = vadd.f32 0.0, %v271
    %v273 = vpop.f32.mrb[0].mxu0
    %274 = vmatprep.mubr.f32.mxu0 0.0
    %275 = vmatmul.mubr.f32.gmra.mrb[0].mxu0 %v199
    %v276 = vpop.f32.mrb[0].mxu0
    %v277 = vadd.f32 0.0, %v276
    %v278 = vpop.f32.mrb[0].mxu0
    %279 = vdwg.mxu0
    %v280 = vmul.f32 %v272, 0.35355338
    %v281 = vmul.f32 %v277, 0.35355338
    %v282 = vadd.f32 %v280, %v56
    %v283 = vadd.f32 %v281, %v57
    %vm284 = vcmask 130048
    %v285 = vsel %vm284, %v282, -inf
    %286 = vmax.xlane.f32.xlu0 %v285
    %v287 = vpop.xlane.xlu0 %286
    %v288 = vsel %vm284, %v283, -inf
    %289 = vmax.xlane.f32.xlu0 %v288
    %v290 = vpop.xlane.xlu0 %289
    %v291 = vsub.f32 %v282, %v287
    %v292 = vsub.f32 %v283, %v290
    %v293 = vmul.f32 %v291, 1.442695
    %v294 = vpow.pop %v293
    %v295 = vmul.f32 %v292, 1.442695
    %v296 = vpow.pop %v295
    %v297 = vsel %vm284, %v294, 0.0
    %298 = vadd.xlane.f32.xlu0 %v297
    %v299 = vpop.xlane.xlu0 %298
    %v300 = vsel %vm284, %v296, 0.0
    %301 = vadd.xlane.f32.xlu0 %v300
    %v302 = vpop.xlane.xlu0 %301
    %v303 = vrcp.pop %v299
    %v304 = vrcp.pop %v302
    %v305 = vmul.f32 %v294, %v303
    %v306 = vmul.f32 %v296, %v304
    %307 = vrot.lane.b32.xlu0 %v182, 64
    %v308 = vpop.permute.xlu0 %307
    %309 = vrot.lane.b32.xlu0 %v187, 64
    %v310 = vpop.permute.xlu0 %309
    %v314 = vsel %vm284, %v305, 0
    %v317 = vsel %vm284, %v306, 0
    %319 = vmatprep.subr.mxu0 0.0
    %320 = vmatpush1.msra.mxu0 %v308
    %321 = vmatprep.subr.mxu0 0.0
    %322 = vmatpush1.msra.mxu0 %v310
    %323 = vmatprep.subr.mxu0 0.0
    %324 = vmatpush1.msra.mxu0 0.0
    %325 = vmatprep.subr.mxu0 0.0
    %326 = vmatpush1.msra.mxu0 0.0
    %327 = vmatprep.subr.mxu0 0.0
    %328 = vmatpush1.msra.mxu0 0.0
    %329 = vmatprep.subr.mxu0 0.0
    %330 = vmatpush1.msra.mxu0 0.0
    %331 = vmatprep.subr.mxu0 0.0
    %332 = vmatpush1.msra.mxu0 0.0
    %333 = vmatprep.subr.mxu0 0.0
    %334 = vmatpush1.msra.mxu0 0.0
    %335 = vmatprep.subr.mxu0 0.0
    %336 = vmatpush1.msra.mxu0 0.0
    %337 = vmatprep.subr.mxu0 0.0
    %338 = vmatpush1.msra.mxu0 0.0
    %339 = vmatprep.subr.mxu0 0.0
    %340 = vmatpush1.msra.mxu0 0.0
    %341 = vmatprep.subr.mxu0 0.0
    %342 = vmatpush1.msra.mxu0 0.0
    %343 = vmatprep.subr.mxu0 0.0
    %344 = vmatpush1.msra.mxu0 0.0
    %345 = vmatprep.subr.mxu0 0.0
    %346 = vmatpush1.msra.mxu0 0.0
    %347 = vmatprep.subr.mxu0 0.0
    %348 = vmatpush1.msra.mxu0 0.0
    %349 = vmatprep.subr.mxu0 0.0
    %350 = vmatpush1.msra.mxu0 0.0
    %351 = vmatprep.subr.mxu0 0.0
    %352 = vmatpush1.msra.mxu0 0.0
    %353 = vmatprep.subr.mxu0 0.0
    %354 = vmatpush1.msra.mxu0 0.0
    %355 = vmatprep.subr.mxu0 0.0
    %356 = vmatpush1.msra.mxu0 0.0
    %357 = vmatprep.subr.mxu0 0.0
    %358 = vmatpush1.msra.mxu0 0.0
    %359 = vmatprep.subr.mxu0 0.0
    %360 = vmatpush1.msra.mxu0 0.0
    %361 = vmatprep.subr.mxu0 0.0
    %362 = vmatpush1.msra.mxu0 0.0
    %363 = vmatprep.subr.mxu0 0.0
    %364 = vmatpush1.msra.mxu0 0.0
    %365 = vmatprep.subr.mxu0 0.0
    %366 = vmatpush1.msra.mxu0 0.0
    %367 = vmatprep.subr.mxu0 0.0
    %368 = vmatpush1.msra.mxu0 0.0
    %369 = vmatprep.subr.mxu0 0.0
    %370 = vmatpush1.msra.mxu0 0.0
    %371 = vmatprep.subr.mxu0 0.0
    %372 = vmatpush1.msra.mxu0 0.0
    %373 = vmatprep.subr.mxu0 0.0
    %374 = vmatpush1.msra.mxu0 0.0
    %375 = vmatprep.subr.mxu0 0.0
    %376 = vmatpush1.msra.mxu0 0.0
    %377 = vmatprep.subr.mxu0 0.0
    %378 = vmatpush1.msra.mxu0 0.0
    %379 = vmatprep.subr.mxu0 0.0
    %380 = vmatpush1.msra.mxu0 0.0
    %381 = vmatprep.subr.mxu0 0.0
    %382 = vmatpush1.msra.mxu0 0.0
    %383 = vmatprep.mubr.f32.mxu0 0.0
    %384 = vmatmul.mubr.f32.gmra.mrb[0].mxu0 %v314
    %v385 = vpop.f32.mrb[0].mxu0
    %v386 = vadd.f32 0.0, %v385
    %v387 = vpop.f32.mrb[0].mxu0
    %388 = vmatprep.mubr.f32.mxu0 0.0
    %389 = vmatmul.mubr.f32.gmra.mrb[0].mxu0 %v317
    %v390 = vpop.f32.mrb[0].mxu0
    %v391 = vadd.f32 0.0, %v390
    %v392 = vpop.f32.mrb[0].mxu0
    %393 = vdwg.mxu0
    %394 = vrot.lane.b32.xlu0 %v182, 120
    %v395 = vpop.permute.xlu0 %394
    %396 = vrot.lane.b32.xlu0 %v187, 120
    %v397 = vpop.permute.xlu0 %396
    %398 = vrot.lane.b32.xlu0 %v182, 88
    %v399 = vpop.permute.xlu0 %398
    %400 = vrot.lane.b32.xlu0 %v187, 88
    %v401 = vpop.permute.xlu0 %400
    %v402 = vsel %vm196, %v395, 0
    %v404 = vsel %vm196, %v397, 0
    %v406 = vsel %vm196, %v399, 0
    %v408 = vsel %vm196, %v401, 0
    %410 = vmatprep.subr.mxu0 0.0
    %411 = vmatpush1.xpose.msra.mxu0 %v406
    %412 = vmatprep.subr.mxu0 0.0
    %413 = vmatpush1.xpose.msra.mxu0 %v408
    %414 = vmatprep.subr.mxu0 0.0
    %415 = vmatpush1.xpose.msra.mxu0 0.0
    %416 = vmatprep.subr.mxu0 0.0
    %417 = vmatpush1.xpose.msra.mxu0 0.0
    %418 = vmatprep.subr.mxu0 0.0
    %419 = vmatpush1.xpose.msra.mxu0 0.0
    %420 = vmatprep.subr.mxu0 0.0
    %421 = vmatpush1.xpose.msra.mxu0 0.0
    %422 = vmatprep.subr.mxu0 0.0
    %423 = vmatpush1.xpose.msra.mxu0 0.0
    %424 = vmatprep.subr.mxu0 0.0
    %425 = vmatpush1.xpose.msra.mxu0 0.0
    %426 = vmatprep.subr.mxu0 0.0
    %427 = vmatpush1.xpose.msra.mxu0 0.0
    %428 = vmatprep.subr.mxu0 0.0
    %429 = vmatpush1.xpose.msra.mxu0 0.0
    %430 = vmatprep.subr.mxu0 0.0
    %431 = vmatpush1.xpose.msra.mxu0 0.0
    %432 = vmatprep.subr.mxu0 0.0
    %433 = vmatpush1.xpose.msra.mxu0 0.0
    %434 = vmatprep.subr.mxu0 0.0
    %435 = vmatpush1.xpose.msra.mxu0 0.0
    %436 = vmatprep.subr.mxu0 0.0
    %437 = vmatpush1.xpose.msra.mxu0 0.0
    %438 = vmatprep.subr.mxu0 0.0
    %439 = vmatpush1.xpose.msra.mxu0 0.0
    %440 = vmatprep.subr.mxu0 0.0
    %441 = vmatpush1.xpose.msra.mxu0 0.0
    %442 = vmatprep.subr.mxu0 0.0
    %443 = vmatpush1.xpose.msra.mxu0 0.0
    %444 = vmatprep.subr.mxu0 0.0
    %445 = vmatpush1.xpose.msra.mxu0 0.0
    %446 = vmatprep.subr.mxu0 0.0
    %447 = vmatpush1.xpose.msra.mxu0 0.0
    %448 = vmatprep.subr.mxu0 0.0
    %449 = vmatpush1.xpose.msra.mxu0 0.0
    %450 = vmatprep.subr.mxu0 0.0
    %451 = vmatpush1.xpose.msra.mxu0 0.0
    %452 = vmatprep.subr.mxu0 0.0
    %453 = vmatpush1.xpose.msra.mxu0 0.0
    %454 = vmatprep.subr.mxu0 0.0
    %455 = vmatpush1.xpose.msra.mxu0 0.0
    %456 = vmatprep.subr.mxu0 0.0
    %457 = vmatpush1.xpose.msra.mxu0 0.0
    %458 = vmatprep.subr.mxu0 0.0
    %459 = vmatpush1.xpose.msra.mxu0 0.0
    %460 = vmatprep.subr.mxu0 0.0
    %461 = vmatpush1.xpose.msra.mxu0 0.0
    %462 = vmatprep.subr.mxu0 0.0
    %463 = vmatpush1.xpose.msra.mxu0 0.0
    %464 = vmatprep.subr.mxu0 0.0
    %465 = vmatpush1.xpose.msra.mxu0 0.0
    %466 = vmatprep.subr.mxu0 0.0
    %467 = vmatpush1.xpose.msra.mxu0 0.0
    %468 = vmatprep.subr.mxu0 0.0
    %469 = vmatpush1.xpose.msra.mxu0 0.0
    %470 = vmatprep.subr.mxu0 0.0
    %471 = vmatpush1.xpose.msra.mxu0 0.0
    %472 = vmatprep.subr.mxu0 0.0
    %473 = vmatpush1.xpose.msra.mxu0 0.0
    %474 = vmatprep.mubr.f32.mxu0 0.0
    %475 = vmatmul.mubr.f32.gmra.mrb[0].mxu0 %v402
    %v476 = vpop.f32.mrb[0].mxu0
    %v477 = vadd.f32 0.0, %v476
    %v478 = vpop.f32.mrb[0].mxu0
    %479 = vmatprep.mubr.f32.mxu0 0.0
    %480 = vmatmul.mubr.f32.gmra.mrb[0].mxu0 %v404
    %v481 = vpop.f32.mrb[0].mxu0
    %v482 = vadd.f32 0.0, %v481
    %v483 = vpop.f32.mrb[0].mxu0
    %484 = vdwg.mxu0
    %v485 = vmul.f32 %v477, 0.35355338
    %v486 = vmul.f32 %v482, 0.35355338
    %v487 = vadd.f32 %v485, %v56
    %v488 = vadd.f32 %v486, %v57
    %v489 = vsel %vm284, %v487, -inf
    %490 = vmax.xlane.f32.xlu0 %v489
    %v491 = vpop.xlane.xlu0 %490
    %v492 = vsel %vm284, %v488, -inf
    %493 = vmax.xlane.f32.xlu0 %v492
    %v494 = vpop.xlane.xlu0 %493
    %v495 = vsub.f32 %v487, %v491
    %v496 = vsub.f32 %v488, %v494
    %v497 = vmul.f32 %v495, 1.442695
    %v498 = vpow.pop %v497
    %v499 = vmul.f32 %v496, 1.442695
    %v500 = vpow.pop %v499
    %v501 = vsel %vm284, %v498, 0.0
    %502 = vadd.xlane.f32.xlu0 %v501
    %v503 = vpop.xlane.xlu0 %502
    %v504 = vsel %vm284, %v500, 0.0
    %505 = vadd.xlane.f32.xlu0 %v504
    %v506 = vpop.xlane.xlu0 %505
    %v507 = vrcp.pop %v503
    %v508 = vrcp.pop %v506
    %v509 = vmul.f32 %v498, %v507
    %v510 = vmul.f32 %v500, %v508
    %511 = vrot.lane.b32.xlu0 %v182, 56
    %v512 = vpop.permute.xlu0 %511
    %513 = vrot.lane.b32.xlu0 %v187, 56
    %v514 = vpop.permute.xlu0 %513
    %v518 = vsel %vm284, %v509, 0
    %v521 = vsel %vm284, %v510, 0
    %523 = vmatprep.subr.mxu0 0.0
    %524 = vmatpush1.msra.mxu0 %v512
    %525 = vmatprep.subr.mxu0 0.0
    %526 = vmatpush1.msra.mxu0 %v514
    %527 = vmatprep.subr.mxu0 0.0
    %528 = vmatpush1.msra.mxu0 0.0
    %529 = vmatprep.subr.mxu0 0.0
    %530 = vmatpush1.msra.mxu0 0.0
    %531 = vmatprep.subr.mxu0 0.0
    %532 = vmatpush1.msra.mxu0 0.0
    %533 = vmatprep.subr.mxu0 0.0
    %534 = vmatpush1.msra.mxu0 0.0
    %535 = vmatprep.subr.mxu0 0.0
    %536 = vmatpush1.msra.mxu0 0.0
    %537 = vmatprep.subr.mxu0 0.0
    %538 = vmatpush1.msra.mxu0 0.0
    %539 = vmatprep.subr.mxu0 0.0
    %540 = vmatpush1.msra.mxu0 0.0
    %541 = vmatprep.subr.mxu0 0.0
    %542 = vmatpush1.msra.mxu0 0.0
    %543 = vmatprep.subr.mxu0 0.0
    %544 = vmatpush1.msra.mxu0 0.0
    %545 = vmatprep.subr.mxu0 0.0
    %546 = vmatpush1.msra.mxu0 0.0
    %547 = vmatprep.subr.mxu0 0.0
    %548 = vmatpush1.msra.mxu0 0.0
    %549 = vmatprep.subr.mxu0 0.0
    %550 = vmatpush1.msra.mxu0 0.0
    %551 = vmatprep.subr.mxu0 0.0
    %552 = vmatpush1.msra.mxu0 0.0
    %553 = vmatprep.subr.mxu0 0.0
    %554 = vmatpush1.msra.mxu0 0.0
    %555 = vmatprep.subr.mxu0 0.0
    %556 = vmatpush1.msra.mxu0 0.0
    %557 = vmatprep.subr.mxu0 0.0
    %558 = vmatpush1.msra.mxu0 0.0
    %559 = vmatprep.subr.mxu0 0.0
    %560 = vmatpush1.msra.mxu0 0.0
    %561 = vmatprep.subr.mxu0 0.0
    %562 = vmatpush1.msra.mxu0 0.0
    %563 = vmatprep.subr.mxu0 0.0
    %564 = vmatpush1.msra.mxu0 0.0
    %565 = vmatprep.subr.mxu0 0.0
    %566 = vmatpush1.msra.mxu0 0.0
    %567 = vmatprep.subr.mxu0 0.0
    %568 = vmatpush1.msra.mxu0 0.0
    %569 = vmatprep.subr.mxu0 0.0
    %570 = vmatpush1.msra.mxu0 0.0
    %571 = vmatprep.subr.mxu0 0.0
    %572 = vmatpush1.msra.mxu0 0.0
    %573 = vmatprep.subr.mxu0 0.0
    %574 = vmatpush1.msra.mxu0 0.0
    %575 = vmatprep.subr.mxu0 0.0
    %576 = vmatpush1.msra.mxu0 0.0
    %577 = vmatprep.subr.mxu0 0.0
    %578 = vmatpush1.msra.mxu0 0.0
    %579 = vmatprep.subr.mxu0 0.0
    %580 = vmatpush1.msra.mxu0 0.0
    %581 = vmatprep.subr.mxu0 0.0
    %582 = vmatpush1.msra.mxu0 0.0
    %583 = vmatprep.subr.mxu0 0.0
    %584 = vmatpush1.msra.mxu0 0.0
    %585 = vmatprep.subr.mxu0 0.0
    %586 = vmatpush1.msra.mxu0 0.0
    %587 = vmatprep.mubr.f32.mxu0 0.0
    %588 = vmatmul.mubr.f32.gmra.mrb[0].mxu0 %v518
    %v589 = vpop.f32.mrb[0].mxu0
    %v590 = vadd.f32 0.0, %v589
    %v591 = vpop.f32.mrb[0].mxu0
    %592 = vmatprep.mubr.f32.mxu0 0.0
    %593 = vmatmul.mubr.f32.gmra.mrb[0].mxu0 %v521
    %v594 = vpop.f32.mrb[0].mxu0
    %v595 = vadd.f32 0.0, %v594
    %v596 = vpop.f32.mrb[0].mxu0
    %597 = vdwg.mxu0
    %598 = vrot.lane.b32.xlu0 %v182, 112
    %v599 = vpop.permute.xlu0 %598
    %600 = vrot.lane.b32.xlu0 %v187, 112
    %v601 = vpop.permute.xlu0 %600
    %602 = vrot.lane.b32.xlu0 %v182, 80
    %v603 = vpop.permute.xlu0 %602
    %604 = vrot.lane.b32.xlu0 %v187, 80
    %v605 = vpop.permute.xlu0 %604
    %v606 = vsel %vm196, %v599, 0
    %v608 = vsel %vm196, %v601, 0
    %v610 = vsel %vm196, %v603, 0
    %v612 = vsel %vm196, %v605, 0
    %614 = vmatprep.subr.mxu0 0.0
    %615 = vmatpush1.xpose.msra.mxu0 %v610
    %616 = vmatprep.subr.mxu0 0.0
    %617 = vmatpush1.xpose.msra.mxu0 %v612
    %618 = vmatprep.subr.mxu0 0.0
    %619 = vmatpush1.xpose.msra.mxu0 0.0
    %620 = vmatprep.subr.mxu0 0.0
    %621 = vmatpush1.xpose.msra.mxu0 0.0
    %622 = vmatprep.subr.mxu0 0.0
    %623 = vmatpush1.xpose.msra.mxu0 0.0
    %624 = vmatprep.subr.mxu0 0.0
    %625 = vmatpush1.xpose.msra.mxu0 0.0
    %626 = vmatprep.subr.mxu0 0.0
    %627 = vmatpush1.xpose.msra.mxu0 0.0
    %628 = vmatprep.subr.mxu0 0.0
    %629 = vmatpush1.xpose.msra.mxu0 0.0
    %630 = vmatprep.subr.mxu0 0.0
    %631 = vmatpush1.xpose.msra.mxu0 0.0
    %632 = vmatprep.subr.mxu0 0.0
    %633 = vmatpush1.xpose.msra.mxu0 0.0
    %634 = vmatprep.subr.mxu0 0.0
    %635 = vmatpush1.xpose.msra.mxu0 0.0
    %636 = vmatprep.subr.mxu0 0.0
    %637 = vmatpush1.xpose.msra.mxu0 0.0
    %638 = vmatprep.subr.mxu0 0.0
    %639 = vmatpush1.xpose.msra.mxu0 0.0
    %640 = vmatprep.subr.mxu0 0.0
    %641 = vmatpush1.xpose.msra.mxu0 0.0
    %642 = vmatprep.subr.mxu0 0.0
    %643 = vmatpush1.xpose.msra.mxu0 0.0
    %644 = vmatprep.subr.mxu0 0.0
    %645 = vmatpush1.xpose.msra.mxu0 0.0
    %646 = vmatprep.subr.mxu0 0.0
    %647 = vmatpush1.xpose.msra.mxu0 0.0
    %648 = vmatprep.subr.mxu0 0.0
    %649 = vmatpush1.xpose.msra.mxu0 0.0
    %650 = vmatprep.subr.mxu0 0.0
    %651 = vmatpush1.xpose.msra.mxu0 0.0
    %652 = vmatprep.subr.mxu0 0.0
    %653 = vmatpush1.xpose.msra.mxu0 0.0
    %654 = vmatprep.subr.mxu0 0.0
    %655 = vmatpush1.xpose.msra.mxu0 0.0
    %656 = vmatprep.subr.mxu0 0.0
    %657 = vmatpush1.xpose.msra.mxu0 0.0
    %658 = vmatprep.subr.mxu0 0.0
    %659 = vmatpush1.xpose.msra.mxu0 0.0
    %660 = vmatprep.subr.mxu0 0.0
    %661 = vmatpush1.xpose.msra.mxu0 0.0
    %662 = vmatprep.subr.mxu0 0.0
    %663 = vmatpush1.xpose.msra.mxu0 0.0
    %664 = vmatprep.subr.mxu0 0.0
    %665 = vmatpush1.xpose.msra.mxu0 0.0
    %666 = vmatprep.subr.mxu0 0.0
    %667 = vmatpush1.xpose.msra.mxu0 0.0
    %668 = vmatprep.subr.mxu0 0.0
    %669 = vmatpush1.xpose.msra.mxu0 0.0
    %670 = vmatprep.subr.mxu0 0.0
    %671 = vmatpush1.xpose.msra.mxu0 0.0
    %672 = vmatprep.subr.mxu0 0.0
    %673 = vmatpush1.xpose.msra.mxu0 0.0
    %674 = vmatprep.subr.mxu0 0.0
    %675 = vmatpush1.xpose.msra.mxu0 0.0
    %676 = vmatprep.subr.mxu0 0.0
    %677 = vmatpush1.xpose.msra.mxu0 0.0
    %678 = vmatprep.mubr.f32.mxu0 0.0
    %679 = vmatmul.mubr.f32.gmra.mrb[0].mxu0 %v606
    %v680 = vpop.f32.mrb[0].mxu0
    %v681 = vadd.f32 0.0, %v680
    %v682 = vpop.f32.mrb[0].mxu0
    %683 = vmatprep.mubr.f32.mxu0 0.0
    %684 = vmatmul.mubr.f32.gmra.mrb[0].mxu0 %v608
    %v685 = vpop.f32.mrb[0].mxu0
    %v686 = vadd.f32 0.0, %v685
    %v687 = vpop.f32.mrb[0].mxu0
    %688 = vdwg.mxu0
    %v689 = vmul.f32 %v681, 0.35355338
    %v690 = vmul.f32 %v686, 0.35355338
    %v691 = vadd.f32 %v689, %v56
    %v692 = vadd.f32 %v690, %v57
    %v693 = vsel %vm284, %v691, -inf
    %694 = vmax.xlane.f32.xlu0 %v693
    %v695 = vpop.xlane.xlu0 %694
    %v696 = vsel %vm284, %v692, -inf
    %697 = vmax.xlane.f32.xlu0 %v696
    %v698 = vpop.xlane.xlu0 %697
    %v699 = vsub.f32 %v691, %v695
    %v700 = vsub.f32 %v692, %v698
    %v701 = vmul.f32 %v699, 1.442695
    %v702 = vpow.pop %v701
    %v703 = vmul.f32 %v700, 1.442695
    %v704 = vpow.pop %v703
    %v705 = vsel %vm284, %v702, 0.0
    %706 = vadd.xlane.f32.xlu0 %v705
    %v707 = vpop.xlane.xlu0 %706
    %v708 = vsel %vm284, %v704, 0.0
    %709 = vadd.xlane.f32.xlu0 %v708
    %v710 = vpop.xlane.xlu0 %709
    %v711 = vrcp.pop %v707
    %v712 = vrcp.pop %v710
    %v713 = vmul.f32 %v702, %v711
    %v714 = vmul.f32 %v704, %v712
    %715 = vrot.lane.b32.xlu0 %v182, 48
    %v716 = vpop.permute.xlu0 %715
    %717 = vrot.lane.b32.xlu0 %v187, 48
    %v718 = vpop.permute.xlu0 %717
    %v722 = vsel %vm284, %v713, 0
    %v725 = vsel %vm284, %v714, 0
    %727 = vmatprep.subr.mxu0 0.0
    %728 = vmatpush1.msra.mxu0 %v716
    %729 = vmatprep.subr.mxu0 0.0
    %730 = vmatpush1.msra.mxu0 %v718
    %731 = vmatprep.subr.mxu0 0.0
    %732 = vmatpush1.msra.mxu0 0.0
    %733 = vmatprep.subr.mxu0 0.0
    %734 = vmatpush1.msra.mxu0 0.0
    %735 = vmatprep.subr.mxu0 0.0
    %736 = vmatpush1.msra.mxu0 0.0
    %737 = vmatprep.subr.mxu0 0.0
    %738 = vmatpush1.msra.mxu0 0.0
    %739 = vmatprep.subr.mxu0 0.0
    %740 = vmatpush1.msra.mxu0 0.0
    %741 = vmatprep.subr.mxu0 0.0
    %742 = vmatpush1.msra.mxu0 0.0
    %743 = vmatprep.subr.mxu0 0.0
    %744 = vmatpush1.msra.mxu0 0.0
    %745 = vmatprep.subr.mxu0 0.0
    %746 = vmatpush1.msra.mxu0 0.0
    %747 = vmatprep.subr.mxu0 0.0
    %748 = vmatpush1.msra.mxu0 0.0
    %749 = vmatprep.subr.mxu0 0.0
    %750 = vmatpush1.msra.mxu0 0.0
    %751 = vmatprep.subr.mxu0 0.0
    %752 = vmatpush1.msra.mxu0 0.0
    %753 = vmatprep.subr.mxu0 0.0
    %754 = vmatpush1.msra.mxu0 0.0
    %755 = vmatprep.subr.mxu0 0.0
    %756 = vmatpush1.msra.mxu0 0.0
    %757 = vmatprep.subr.mxu0 0.0
    %758 = vmatpush1.msra.mxu0 0.0
    %759 = vmatprep.subr.mxu0 0.0
    %760 = vmatpush1.msra.mxu0 0.0
    %761 = vmatprep.subr.mxu0 0.0
    %762 = vmatpush1.msra.mxu0 0.0
    %763 = vmatprep.subr.mxu0 0.0
    %764 = vmatpush1.msra.mxu0 0.0
    %765 = vmatprep.subr.mxu0 0.0
    %766 = vmatpush1.msra.mxu0 0.0
    %767 = vmatprep.subr.mxu0 0.0
    %768 = vmatpush1.msra.mxu0 0.0
    %769 = vmatprep.subr.mxu0 0.0
    %770 = vmatpush1.msra.mxu0 0.0
    %771 = vmatprep.subr.mxu0 0.0
    %772 = vmatpush1.msra.mxu0 0.0
    %773 = vmatprep.subr.mxu0 0.0
    %774 = vmatpush1.msra.mxu0 0.0
    %775 = vmatprep.subr.mxu0 0.0
    %776 = vmatpush1.msra.mxu0 0.0
    %777 = vmatprep.subr.mxu0 0.0
    %778 = vmatpush1.msra.mxu0 0.0
    %779 = vmatprep.subr.mxu0 0.0
    %780 = vmatpush1.msra.mxu0 0.0
    %781 = vmatprep.subr.mxu0 0.0
    %782 = vmatpush1.msra.mxu0 0.0
    %783 = vmatprep.subr.mxu0 0.0
    %784 = vmatpush1.msra.mxu0 0.0
    %785 = vmatprep.subr.mxu0 0.0
    %786 = vmatpush1.msra.mxu0 0.0
    %787 = vmatprep.subr.mxu0 0.0
    %788 = vmatpush1.msra.mxu0 0.0
    %789 = vmatprep.subr.mxu0 0.0
    %790 = vmatpush1.msra.mxu0 0.0
    %791 = vmatprep.mubr.f32.mxu0 0.0
    %792 = vmatmul.mubr.f32.gmra.mrb[0].mxu0 %v722
    %v793 = vpop.f32.mrb[0].mxu0
    %v794 = vadd.f32 0.0, %v793
    %v795 = vpop.f32.mrb[0].mxu0
    %796 = vmatprep.mubr.f32.mxu0 0.0
    %797 = vmatmul.mubr.f32.gmra.mrb[0].mxu0 %v725
    %v798 = vpop.f32.mrb[0].mxu0
    %v799 = vadd.f32 0.0, %v798
    %v800 = vpop.f32.mrb[0].mxu0
    %801 = vdwg.mxu0
    %802 = vrot.lane.b32.xlu0 %v182, 104
    %v803 = vpop.permute.xlu0 %802
    %804 = vrot.lane.b32.xlu0 %v187, 104
    %v805 = vpop.permute.xlu0 %804
    %806 = vrot.lane.b32.xlu0 %v182, 72
    %v807 = vpop.permute.xlu0 %806
    %808 = vrot.lane.b32.xlu0 %v187, 72
    %v809 = vpop.permute.xlu0 %808
    %v810 = vsel %vm196, %v803, 0
    %v812 = vsel %vm196, %v805, 0
    %v814 = vsel %vm196, %v807, 0
    %v816 = vsel %vm196, %v809, 0
    %818 = vmatprep.subr.mxu0 0.0
    %819 = vmatpush1.xpose.msra.mxu0 %v814
    %820 = vmatprep.subr.mxu0 0.0
    %821 = vmatpush1.xpose.msra.mxu0 %v816
    %822 = vmatprep.subr.mxu0 0.0
    %823 = vmatpush1.xpose.msra.mxu0 0.0
    %824 = vmatprep.subr.mxu0 0.0
    %825 = vmatpush1.xpose.msra.mxu0 0.0
    %826 = vmatprep.subr.mxu0 0.0
    %827 = vmatpush1.xpose.msra.mxu0 0.0
    %828 = vmatprep.subr.mxu0 0.0
    %829 = vmatpush1.xpose.msra.mxu0 0.0
    %830 = vmatprep.subr.mxu0 0.0
    %831 = vmatpush1.xpose.msra.mxu0 0.0
    %832 = vmatprep.subr.mxu0 0.0
    %833 = vmatpush1.xpose.msra.mxu0 0.0
    %834 = vmatprep.subr.mxu0 0.0
    %835 = vmatpush1.xpose.msra.mxu0 0.0
    %836 = vmatprep.subr.mxu0 0.0
    %837 = vmatpush1.xpose.msra.mxu0 0.0
    %838 = vmatprep.subr.mxu0 0.0
    %839 = vmatpush1.xpose.msra.mxu0 0.0
    %840 = vmatprep.subr.mxu0 0.0
    %841 = vmatpush1.xpose.msra.mxu0 0.0
    %842 = vmatprep.subr.mxu0 0.0
    %843 = vmatpush1.xpose.msra.mxu0 0.0
    %844 = vmatprep.subr.mxu0 0.0
    %845 = vmatpush1.xpose.msra.mxu0 0.0
    %846 = vmatprep.subr.mxu0 0.0
    %847 = vmatpush1.xpose.msra.mxu0 0.0
    %848 = vmatprep.subr.mxu0 0.0
    %849 = vmatpush1.xpose.msra.mxu0 0.0
    %850 = vmatprep.subr.mxu0 0.0
    %851 = vmatpush1.xpose.msra.mxu0 0.0
    %852 = vmatprep.subr.mxu0 0.0
    %853 = vmatpush1.xpose.msra.mxu0 0.0
    %854 = vmatprep.subr.mxu0 0.0
    %855 = vmatpush1.xpose.msra.mxu0 0.0
    %856 = vmatprep.subr.mxu0 0.0
    %857 = vmatpush1.xpose.msra.mxu0 0.0
    %858 = vmatprep.subr.mxu0 0.0
    %859 = vmatpush1.xpose.msra.mxu0 0.0
    %860 = vmatprep.subr.mxu0 0.0
    %861 = vmatpush1.xpose.msra.mxu0 0.0
    %862 = vmatprep.subr.mxu0 0.0
    %863 = vmatpush1.xpose.msra.mxu0 0.0
    %864 = vmatprep.subr.mxu0 0.0
    %865 = vmatpush1.xpose.msra.mxu0 0.0
    %866 = vmatprep.subr.mxu0 0.0
    %867 = vmatpush1.xpose.msra.mxu0 0.0
    %868 = vmatprep.subr.mxu0 0.0
    %869 = vmatpush1.xpose.msra.mxu0 0.0
    %870 = vmatprep.subr.mxu0 0.0
    %871 = vmatpush1.xpose.msra.mxu0 0.0
    %872 = vmatprep.subr.mxu0 0.0
    %873 = vmatpush1.xpose.msra.mxu0 0.0
    %874 = vmatprep.subr.mxu0 0.0
    %875 = vmatpush1.xpose.msra.mxu0 0.0
    %876 = vmatprep.subr.mxu0 0.0
    %877 = vmatpush1.xpose.msra.mxu0 0.0
    %878 = vmatprep.subr.mxu0 0.0
    %879 = vmatpush1.xpose.msra.mxu0 0.0
    %880 = vmatprep.subr.mxu0 0.0
    %881 = vmatpush1.xpose.msra.mxu0 0.0
    %882 = vmatprep.mubr.f32.mxu0 0.0
    %883 = vmatmul.mubr.f32.gmra.mrb[0].mxu0 %v810
    %v884 = vpop.f32.mrb[0].mxu0
    %v885 = vadd.f32 0.0, %v884
    %v886 = vpop.f32.mrb[0].mxu0
    %887 = vmatprep.mubr.f32.mxu0 0.0
    %888 = vmatmul.mubr.f32.gmra.mrb[0].mxu0 %v812
    %v889 = vpop.f32.mrb[0].mxu0
    %v890 = vadd.f32 0.0, %v889
    %v891 = vpop.f32.mrb[0].mxu0
    %892 = vdwg.mxu0
    %v893 = vmul.f32 %v885, 0.35355338
    %v894 = vmul.f32 %v890, 0.35355338
    %v895 = vadd.f32 %v893, %v56
    %v896 = vadd.f32 %v894, %v57
    %v897 = vsel %vm284, %v895, -inf
    %898 = vmax.xlane.f32.xlu0 %v897
    %v899 = vpop.xlane.xlu0 %898
    %v900 = vsel %vm284, %v896, -inf
    %901 = vmax.xlane.f32.xlu0 %v900
    %v902 = vpop.xlane.xlu0 %901
    %v903 = vsub.f32 %v895, %v899
    %v904 = vsub.f32 %v896, %v902
    %v905 = vmul.f32 %v903, 1.442695
    %v906 = vpow.pop %v905
    %v907 = vmul.f32 %v904, 1.442695
    %v908 = vpow.pop %v907
    %v909 = vsel %vm284, %v906, 0.0
    %910 = vadd.xlane.f32.xlu0 %v909
    %v911 = vpop.xlane.xlu0 %910
    %v912 = vsel %vm284, %v908, 0.0
    %913 = vadd.xlane.f32.xlu0 %v912
    %v914 = vpop.xlane.xlu0 %913
    %v915 = vrcp.pop %v911
    %v916 = vrcp.pop %v914
    %v917 = vmul.f32 %v906, %v915
    %v918 = vmul.f32 %v908, %v916
    %919 = vrot.lane.b32.xlu0 %v182, 40
    %v920 = vpop.permute.xlu0 %919
    %921 = vrot.lane.b32.xlu0 %v187, 40
    %v922 = vpop.permute.xlu0 %921
    %v926 = vsel %vm284, %v917, 0
    %v929 = vsel %vm284, %v918, 0
    %931 = vmatprep.subr.mxu0 0.0
    %932 = vmatpush1.msra.mxu0 %v920
    %933 = vmatprep.subr.mxu0 0.0
    %934 = vmatpush1.msra.mxu0 %v922
    %935 = vmatprep.subr.mxu0 0.0
    %936 = vmatpush1.msra.mxu0 0.0
    %937 = vmatprep.subr.mxu0 0.0
    %938 = vmatpush1.msra.mxu0 0.0
    %939 = vmatprep.subr.mxu0 0.0
    %940 = vmatpush1.msra.mxu0 0.0
    %941 = vmatprep.subr.mxu0 0.0
    %942 = vmatpush1.msra.mxu0 0.0
    %943 = vmatprep.subr.mxu0 0.0
    %944 = vmatpush1.msra.mxu0 0.0
    %945 = vmatprep.subr.mxu0 0.0
    %946 = vmatpush1.msra.mxu0 0.0
    %947 = vmatprep.subr.mxu0 0.0
    %948 = vmatpush1.msra.mxu0 0.0
    %949 = vmatprep.subr.mxu0 0.0
    %950 = vmatpush1.msra.mxu0 0.0
    %951 = vmatprep.subr.mxu0 0.0
    %952 = vmatpush1.msra.mxu0 0.0
    %953 = vmatprep.subr.mxu0 0.0
    %954 = vmatpush1.msra.mxu0 0.0
    %955 = vmatprep.subr.mxu0 0.0
    %956 = vmatpush1.msra.mxu0 0.0
    %957 = vmatprep.subr.mxu0 0.0
    %958 = vmatpush1.msra.mxu0 0.0
    %959 = vmatprep.subr.mxu0 0.0
    %960 = vmatpush1.msra.mxu0 0.0
    %961 = vmatprep.subr.mxu0 0.0
    %962 = vmatpush1.msra.mxu0 0.0
    %963 = vmatprep.subr.mxu0 0.0
    %964 = vmatpush1.msra.mxu0 0.0
    %965 = vmatprep.subr.mxu0 0.0
    %966 = vmatpush1.msra.mxu0 0.0
    %967 = vmatprep.subr.mxu0 0.0
    %968 = vmatpush1.msra.mxu0 0.0
    %969 = vmatprep.subr.mxu0 0.0
    %970 = vmatpush1.msra.mxu0 0.0
    %971 = vmatprep.subr.mxu0 0.0
    %972 = vmatpush1.msra.mxu0 0.0
    %973 = vmatprep.subr.mxu0 0.0
    %974 = vmatpush1.msra.mxu0 0.0
    %975 = vmatprep.subr.mxu0 0.0
    %976 = vmatpush1.msra.mxu0 0.0
    %977 = vmatprep.subr.mxu0 0.0
    %978 = vmatpush1.msra.mxu0 0.0
    %979 = vmatprep.subr.mxu0 0.0
    %980 = vmatpush1.msra.mxu0 0.0
    %981 = vmatprep.subr.mxu0 0.0
    %982 = vmatpush1.msra.mxu0 0.0
    %983 = vmatprep.subr.mxu0 0.0
    %984 = vmatpush1.msra.mxu0 0.0
    %985 = vmatprep.subr.mxu0 0.0
    %986 = vmatpush1.msra.mxu0 0.0
    %987 = vmatprep.subr.mxu0 0.0
    %988 = vmatpush1.msra.mxu0 0.0
    %989 = vmatprep.subr.mxu0 0.0
    %990 = vmatpush1.msra.mxu0 0.0
    %991 = vmatprep.subr.mxu0 0.0
    %992 = vmatpush1.msra.mxu0 0.0
    %993 = vmatprep.subr.mxu0 0.0
    %994 = vmatpush1.msra.mxu0 0.0
    %995 = vmatprep.mubr.f32.mxu0 0.0
    %996 = vmatmul.mubr.f32.gmra.mrb[0].mxu0 %v926
    %v997 = vpop.f32.mrb[0].mxu0
    %v998 = vadd.f32 0.0, %v997
    %v999 = vpop.f32.mrb[0].mxu0
    %1000 = vmatprep.mubr.f32.mxu0 0.0
    %1001 = vmatmul.mubr.f32.gmra.mrb[0].mxu0 %v929
    %v1002 = vpop.f32.mrb[0].mxu0
    %v1003 = vadd.f32 0.0, %v1002
    %v1004 = vpop.f32.mrb[0].mxu0
    %1005 = vdwg.mxu0
    %1008 = vrot.lane.b32.xlu0 %v590, 8
    %v1009 = vpop.permute.xlu0 %1008
    %1010 = vrot.lane.b32.xlu0 %v595, 8
    %v1011 = vpop.permute.xlu0 %1010
    %1016 = vrot.lane.b32.xlu0 %v794, 16
    %v1017 = vpop.permute.xlu0 %1016
    %1018 = vrot.lane.b32.xlu0 %v799, 16
    %v1019 = vpop.permute.xlu0 %1018
    %1024 = vrot.lane.b32.xlu0 %v998, 24
    %v1025 = vpop.permute.xlu0 %1024
    %1026 = vrot.lane.b32.xlu0 %v1003, 24
    %v1027 = vpop.permute.xlu0 %1026
    %v1030 = vsel %vm196, %v386, %v1009
    %v1031 = vsel %vm196, %v391, %v1011
    %v1032 = vsel %vm284, %v1030, %v1017
    %v1033 = vsel %vm284, %v1031, %v1019
    %vm1034 = vcmask 195584
    %v1035 = vsel %vm1034, %v1032, %v1025
    %v1036 = vsel %vm1034, %v1033, %v1027
    %v1037 = vld [vmem:[%s6] sm:$0xff]
    %v1038 = vld [vmem:[%s6 + $0x8] sm:$0xff]
    %v1039 = vld [vmem:[%s6 + $0x10] sm:$0xff]
    %v1040 = vld [vmem:[%s6 + $0x18] sm:$0xff]
    %v1041 = vld [vmem:[%s7] sm:$0x1]
    %v1042 = vlaneseq
    %v1043 = vshrl.u32 %v1042, 7
    %v1044 = vsub.s32 0, %v1043
    %v1045 = vrot.slane %v1041, %v1044
    %v1047 = vsel %vm60, %v1035, 0
    %v1050 = vsel %vm60, %v1036, 0
    %1052 = vmatprep.subr.mxu0 0.0
    %1053 = vmatpush1.msra.mxu0 %v1037
    %1054 = vmatprep.subr.mxu0 0.0
    %1055 = vmatpush1.msra.mxu0 %v1038
    %1056 = vmatprep.subr.mxu0 0.0
    %1057 = vmatpush1.msra.mxu0 %v1039
    %1058 = vmatprep.subr.mxu0 0.0
    %1059 = vmatpush1.msra.mxu0 %v1040
    %1060 = vmatprep.subr.mxu0 0.0
    %1061 = vmatpush1.msra.mxu0 0.0
    %1062 = vmatprep.subr.mxu0 0.0
    %1063 = vmatpush1.msra.mxu0 0.0
    %1064 = vmatprep.subr.mxu0 0.0
    %1065 = vmatpush1.msra.mxu0 0.0
    %1066 = vmatprep.subr.mxu0 0.0
    %1067 = vmatpush1.msra.mxu0 0.0
    %1068 = vmatprep.subr.mxu0 0.0
    %1069 = vmatpush1.msra.mxu0 0.0
    %1070 = vmatprep.subr.mxu0 0.0
    %1071 = vmatpush1.msra.mxu0 0.0
    %1072 = vmatprep.subr.mxu0 0.0
    %1073 = vmatpush1.msra.mxu0 0.0
    %1074 = vmatprep.subr.mxu0 0.0
    %1075 = vmatpush1.msra.mxu0 0.0
    %1076 = vmatprep.subr.mxu0 0.0
    %1077 = vmatpush1.msra.mxu0 0.0
    %1078 = vmatprep.subr.mxu0 0.0
    %1079 = vmatpush1.msra.mxu0 0.0
    %1080 = vmatprep.subr.mxu0 0.0
    %1081 = vmatpush1.msra.mxu0 0.0
    %1082 = vmatprep.subr.mxu0 0.0
    %1083 = vmatpush1.msra.mxu0 0.0
    %1084 = vmatprep.subr.mxu0 0.0
    %1085 = vmatpush1.msra.mxu0 0.0
    %1086 = vmatprep.subr.mxu0 0.0
    %1087 = vmatpush1.msra.mxu0 0.0
    %1088 = vmatprep.subr.mxu0 0.0
    %1089 = vmatpush1.msra.mxu0 0.0
    %1090 = vmatprep.subr.mxu0 0.0
    %1091 = vmatpush1.msra.mxu0 0.0
    %1092 = vmatprep.subr.mxu0 0.0
    %1093 = vmatpush1.msra.mxu0 0.0
    %1094 = vmatprep.subr.mxu0 0.0
    %1095 = vmatpush1.msra.mxu0 0.0
    %1096 = vmatprep.subr.mxu0 0.0
    %1097 = vmatpush1.msra.mxu0 0.0
    %1098 = vmatprep.subr.mxu0 0.0
    %1099 = vmatpush1.msra.mxu0 0.0
    %1100 = vmatprep.subr.mxu0 0.0
    %1101 = vmatpush1.msra.mxu0 0.0
    %1102 = vmatprep.subr.mxu0 0.0
    %1103 = vmatpush1.msra.mxu0 0.0
    %1104 = vmatprep.subr.mxu0 0.0
    %1105 = vmatpush1.msra.mxu0 0.0
    %1106 = vmatprep.subr.mxu0 0.0
    %1107 = vmatpush1.msra.mxu0 0.0
    %1108 = vmatprep.subr.mxu0 0.0
    %1109 = vmatpush1.msra.mxu0 0.0
    %1110 = vmatprep.subr.mxu0 0.0
    %1111 = vmatpush1.msra.mxu0 0.0
    %1112 = vmatprep.subr.mxu0 0.0
    %1113 = vmatpush1.msra.mxu0 0.0
    %1114 = vmatprep.subr.mxu0 0.0
    %1115 = vmatpush1.msra.mxu0 0.0
    %1116 = vmatprep.mubr.f32.mxu0 0.0
    %1117 = vmatmul.mubr.f32.gmra.mrb[0].mxu0 %v1047
    %v1118 = vpop.f32.mrb[0].mxu0
    %v1119 = vadd.f32 %v1045, %v1118
    %v1120 = vpop.f32.mrb[0].mxu0
    %1121 = vmatprep.mubr.f32.mxu0 0.0
    %1122 = vmatmul.mubr.f32.gmra.mrb[0].mxu0 %v1050
    %v1123 = vpop.f32.mrb[0].mxu0
    %v1124 = vadd.f32 %v1045, %v1123
    %v1125 = vpop.f32.mrb[0].mxu0
    %1126 = vdwg.mxu0
    %v1127 = vadd.f32 %v54, %v1119
    %v1128 = vadd.f32 %v55, %v1124
    %v1129 = vld [vmem:[%s8] sm:$0x1]
    %v1130 = vld [vmem:[%s9] sm:$0x1]
    %v1131 = vsel %vm60, %v1127, 0.0
    %1132 = vadd.xlane.f32.xlu0 %v1131
    %v1133 = vpop.xlane.xlu0 %1132
    %v1134 = vsel %vm60, %v1128, 0.0
    %1135 = vadd.xlane.f32.xlu0 %v1134
    %v1136 = vpop.xlane.xlu0 %1135
    %v1137 = vmul.f32 %v1133, %v67
    %v1138 = vmul.f32 %v1136, %v67
    %v1139 = vsub.f32 %v1127, %v1137
    %v1140 = vsub.f32 %v1128, %v1138
    %v1141 = vmul.f32 %v1139, %v1139
    %v1142 = vmul.f32 %v1140, %v1140
    %v1143 = vsel %vm60, %v1141, 0.0
    %1144 = vadd.xlane.f32.xlu0 %v1143
    %v1145 = vpop.xlane.xlu0 %1144
    %v1146 = vsel %vm60, %v1142, 0.0
    %1147 = vadd.xlane.f32.xlu0 %v1146
    %v1148 = vpop.xlane.xlu0 %1147
    %v1149 = vmul.f32 %v1145, %v67
    %v1150 = vmul.f32 %v1148, %v67
    %v1151 = vadd.f32 %v1149, 1e-05
    %v1152 = vadd.f32 %v1150, 1e-05
    %v1153 = vrsqrt.pop %v1151
    %v1154 = vrsqrt.pop %v1152
    %v1155 = vmul.f32 %v1139, %v1153
    %v1156 = vmul.f32 %v1140, %v1154
    %v1157 = vlaneseq
    %v1158 = vshrl.u32 %v1157, 7
    %v1159 = vsub.s32 0, %v1158
    %v1160 = vrot.slane %v1129, %v1159
    %v1161 = vmul.f32 %v1155, %v1160
    %v1162 = vmul.f32 %v1156, %v1160
    %v1163 = vlaneseq
    %v1164 = vshrl.u32 %v1163, 7
    %v1165 = vsub.s32 0, %v1164
    %v1166 = vrot.slane %v1130, %v1165
    %v1167 = vadd.f32 %v1161, %v1166
    %v1168 = vadd.f32 %v1162, %v1166
    %v1169 = vld [vmem:[%s10] sm:$0xff]
    %v1170 = vld [vmem:[%s10 + $0x8] sm:$0xff]
    %v1171 = vld [vmem:[%s10 + $0x10] sm:$0xff]
    %v1172 = vld [vmem:[%s10 + $0x18] sm:$0xff]
    %v1173 = vld [vmem:[%s11] sm:$0x1]
    %v1174 = vlaneseq
    %v1175 = vshrl.u32 %v1174, 7
    %v1176 = vsub.s32 0, %v1175
    %v1177 = vrot.slane %v1173, %v1176
    %v1179 = vsel %vm60, %v1167, 0
    %v1182 = vsel %vm60, %v1168, 0
    %1184 = vmatprep.subr.mxu0 0.0
    %1185 = vmatpush1.msra.mxu0 %v1169
    %1186 = vmatprep.subr.mxu0 0.0
    %1187 = vmatpush1.msra.mxu0 %v1170
    %1188 = vmatprep.subr.mxu0 0.0
    %1189 = vmatpush1.msra.mxu0 %v1171
    %1190 = vmatprep.subr.mxu0 0.0
    %1191 = vmatpush1.msra.mxu0 %v1172
    %1192 = vmatprep.subr.mxu0 0.0
    %1193 = vmatpush1.msra.mxu0 0.0
    %1194 = vmatprep.subr.mxu0 0.0
    %1195 = vmatpush1.msra.mxu0 0.0
    %1196 = vmatprep.subr.mxu0 0.0
    %1197 = vmatpush1.msra.mxu0 0.0
    %1198 = vmatprep.subr.mxu0 0.0
    %1199 = vmatpush1.msra.mxu0 0.0
    %1200 = vmatprep.subr.mxu0 0.0
    %1201 = vmatpush1.msra.mxu0 0.0
    %1202 = vmatprep.subr.mxu0 0.0
    %1203 = vmatpush1.msra.mxu0 0.0
    %1204 = vmatprep.subr.mxu0 0.0
    %1205 = vmatpush1.msra.mxu0 0.0
    %1206 = vmatprep.subr.mxu0 0.0
    %1207 = vmatpush1.msra.mxu0 0.0
    %1208 = vmatprep.subr.mxu0 0.0
    %1209 = vmatpush1.msra.mxu0 0.0
    %1210 = vmatprep.subr.mxu0 0.0
    %1211 = vmatpush1.msra.mxu0 0.0
    %1212 = vmatprep.subr.mxu0 0.0
    %1213 = vmatpush1.msra.mxu0 0.0
    %1214 = vmatprep.subr.mxu0 0.0
    %1215 = vmatpush1.msra.mxu0 0.0
    %1216 = vmatprep.subr.mxu0 0.0
    %1217 = vmatpush1.msra.mxu0 0.0
    %1218 = vmatprep.subr.mxu0 0.0
    %1219 = vmatpush1.msra.mxu0 0.0
    %1220 = vmatprep.subr.mxu0 0.0
    %1221 = vmatpush1.msra.mxu0 0.0
    %1222 = vmatprep.subr.mxu0 0.0
    %1223 = vmatpush1.msra.mxu0 0.0
    %1224 = vmatprep.subr.mxu0 0.0
    %1225 = vmatpush1.msra.mxu0 0.0
    %1226 = vmatprep.subr.mxu0 0.0
    %1227 = vmatpush1.msra.mxu0 0.0
    %1228 = vmatprep.subr.mxu0 0.0
    %1229 = vmatpush1.msra.mxu0 0.0
    %1230 = vmatprep.subr.mxu0 0.0
    %1231 = vmatpush1.msra.mxu0 0.0
    %1232 = vmatprep.subr.mxu0 0.0
    %1233 = vmatpush1.msra.mxu0 0.0
    %1234 = vmatprep.subr.mxu0 0.0
    %1235 = vmatpush1.msra.mxu0 0.0
    %1236 = vmatprep.subr.mxu0 0.0
    %1237 = vmatpush1.msra.mxu0 0.0
    %1238 = vmatprep.subr.mxu0 0.0
    %1239 = vmatpush1.msra.mxu0 0.0
    %1240 = vmatprep.subr.mxu0 0.0
    %1241 = vmatpush1.msra.mxu0 0.0
    %1242 = vmatprep.subr.mxu0 0.0
    %1243 = vmatpush1.msra.mxu0 0.0
    %1244 = vmatprep.subr.mxu0 0.0
    %1245 = vmatpush1.msra.mxu0 0.0
    %1246 = vmatprep.subr.mxu0 0.0
    %1247 = vmatpush1.msra.mxu0 0.0
    %1248 = vmatprep.mubr.f32.mxu0 0.0
    %1249 = vmatmul.mubr.f32.gmra.mrb[0].mxu0 %v1179
    %v1250 = vpop.f32.mrb[0].mxu0
    %v1251 = vadd.f32 %v1177, %v1250
    %v1252 = vpop.f32.mrb[0].mxu0
    %1253 = vmatprep.mubr.f32.mxu0 0.0
    %1254 = vmatmul.mubr.f32.gmra.mrb[0].mxu0 %v1182
    %v1255 = vpop.f32.mrb[0].mxu0
    %v1256 = vadd.f32 %v1177, %v1255
    %v1257 = vpop.f32.mrb[0].mxu0
    %1258 = vdwg.mxu0
    %v1259 = vmul.f32 %v1251, 0.5
    %v1260 = vmul.f32 %v1256, 0.5
    %v1261 = vmul.f32 %v1251, 0.044715
    %v1262 = vmul.f32 %v1256, 0.044715
    %v1263 = vmul.f32 %v1261, %v1251
    %v1264 = vmul.f32 %v1262, %v1256
    %v1265 = vmul.f32 %v1263, %v1251
    %v1266 = vmul.f32 %v1264, %v1256
    %v1267 = vadd.f32 %v1251, %v1265
    %v1268 = vadd.f32 %v1256, %v1266
    %v1269 = vmul.f32 %v1267, 0.7978846
    %v1270 = vmul.f32 %v1268, 0.7978846
    %v1271 = vtanh.pop %v1269
    %v1272 = vtanh.pop %v1270
    %v1273 = vadd.f32 %v1271, 1.0
    %v1274 = vadd.f32 %v1272, 1.0
    %v1275 = vmul.f32 %v1259, %v1273
    %v1276 = vmul.f32 %v1260, %v1274
    %v1277 = vld [vmem:[%s12] sm:$0xff]
    %v1278 = vld [vmem:[%s12 + $0x8] sm:$0xff]
    %v1279 = vld [vmem:[%s12 + $0x10] sm:$0xff]
    %v1280 = vld [vmem:[%s12 + $0x18] sm:$0xff]
    %v1281 = vld [vmem:[%s12 + $0x20] sm:$0xff]
    %v1282 = vld [vmem:[%s12 + $0x28] sm:$0xff]
    %v1283 = vld [vmem:[%s12 + $0x30] sm:$0xff]
    %v1284 = vld [vmem:[%s12 + $0x38] sm:$0xff]
    %v1285 = vld [vmem:[%s12 + $0x40] sm:$0xff]
    %v1286 = vld [vmem:[%s12 + $0x48] sm:$0xff]
    %v1287 = vld [vmem:[%s12 + $0x50] sm:$0xff]
    %v1288 = vld [vmem:[%s12 + $0x58] sm:$0xff]
    %v1289 = vld [vmem:[%s12 + $0x60] sm:$0xff]
    %v1290 = vld [vmem:[%s12 + $0x68] sm:$0xff]
    %v1291 = vld [vmem:[%s12 + $0x70] sm:$0xff]
    %v1292 = vld [vmem:[%s12 + $0x78] sm:$0xff]
    %v1293 = vld [vmem:[%s13] sm:$0x1]
    %v1294 = vlaneseq
    %v1295 = vshrl.u32 %v1294, 7
    %v1296 = vsub.s32 0, %v1295
    %v1297 = vrot.slane %v1293, %v1296
    %1298 = vmatprep.subr.mxu0 0.0
    %1299 = vmatpush1.msra.mxu0 %v1277
    %1300 = vmatprep.subr.mxu0 0.0
    %1301 = vmatpush1.msra.mxu0 %v1278
    %1302 = vmatprep.subr.mxu0 0.0
    %1303 = vmatpush1.msra.mxu0 %v1279
    %1304 = vmatprep.subr.mxu0 0.0
    %1305 = vmatpush1.msra.mxu0 %v1280
    %1306 = vmatprep.subr.mxu0 0.0
    %1307 = vmatpush1.msra.mxu0 %v1281
    %1308 = vmatprep.subr.mxu0 0.0
    %1309 = vmatpush1.msra.mxu0 %v1282
    %1310 = vmatprep.subr.mxu0 0.0
    %1311 = vmatpush1.msra.mxu0 %v1283
    %1312 = vmatprep.subr.mxu0 0.0
    %1313 = vmatpush1.msra.mxu0 %v1284
    %1314 = vmatprep.subr.mxu0 0.0
    %1315 = vmatpush1.msra.mxu0 %v1285
    %1316 = vmatprep.subr.mxu0 0.0
    %1317 = vmatpush1.msra.mxu0 %v1286
    %1318 = vmatprep.subr.mxu0 0.0
    %1319 = vmatpush1.msra.mxu0 %v1287
    %1320 = vmatprep.subr.mxu0 0.0
    %1321 = vmatpush1.msra.mxu0 %v1288
    %1322 = vmatprep.subr.mxu0 0.0
    %1323 = vmatpush1.msra.mxu0 %v1289
    %1324 = vmatprep.subr.mxu0 0.0
    %1325 = vmatpush1.msra.mxu0 %v1290
    %1326 = vmatprep.subr.mxu0 0.0
    %1327 = vmatpush1.msra.mxu0 %v1291
    %1328 = vmatprep.subr.mxu0 0.0
    %1329 = vmatpush1.msra.mxu0 %v1292
    %1330 = vmatprep.subr.mxu0 0.0
    %1331 = vmatpush1.msra.mxu0 0.0
    %1332 = vmatprep.subr.mxu0 0.0
    %1333 = vmatpush1.msra.mxu0 0.0
    %1334 = vmatprep.subr.mxu0 0.0
    %1335 = vmatpush1.msra.mxu0 0.0
    %1336 = vmatprep.subr.mxu0 0.0
    %1337 = vmatpush1.msra.mxu0 0.0
    %1338 = vmatprep.subr.mxu0 0.0
    %1339 = vmatpush1.msra.mxu0 0.0
    %1340 = vmatprep.subr.mxu0 0.0
    %1341 = vmatpush1.msra.mxu0 0.0
    %1342 = vmatprep.subr.mxu0 0.0
    %1343 = vmatpush1.msra.mxu0 0.0
    %1344 = vmatprep.subr.mxu0 0.0
    %1345 = vmatpush1.msra.mxu0 0.0
    %1346 = vmatprep.subr.mxu0 0.0
    %1347 = vmatpush1.msra.mxu0 0.0
    %1348 = vmatprep.subr.mxu0 0.0
    %1349 = vmatpush1.msra.mxu0 0.0
    %1350 = vmatprep.subr.mxu0 0.0
    %1351 = vmatpush1.msra.mxu0 0.0
    %1352 = vmatprep.subr.mxu0 0.0
    %1353 = vmatpush1.msra.mxu0 0.0
    %1354 = vmatprep.subr.mxu0 0.0
    %1355 = vmatpush1.msra.mxu0 0.0
    %1356 = vmatprep.subr.mxu0 0.0
    %1357 = vmatpush1.msra.mxu0 0.0
    %1358 = vmatprep.subr.mxu0 0.0
    %1359 = vmatpush1.msra.mxu0 0.0
    %1360 = vmatprep.subr.mxu0 0.0
    %1361 = vmatpush1.msra.mxu0 0.0
    %1362 = vmatprep.mubr.f32.mxu0 0.0
    %1363 = vmatmul.mubr.f32.gmra.mrb[0].mxu0 %v1275
    %v1364 = vpop.f32.mrb[0].mxu0
    %v1365 = vadd.f32 %v1297, %v1364
    %v1366 = vpop.f32.mrb[0].mxu0
    %1367 = vmatprep.mubr.f32.mxu0 0.0
    %1368 = vmatmul.mubr.f32.gmra.mrb[0].mxu0 %v1276
    %v1369 = vpop.f32.mrb[0].mxu0
    %v1370 = vadd.f32 %v1297, %v1369
    %v1371 = vpop.f32.mrb[0].mxu0
    %1372 = vdwg.mxu0
    %v1373 = vadd.f32 %v1127, %v1365
    %v1374 = vadd.f32 %v1128, %v1370
    %v1375 = vld [vmem:[%s2 + $0x1] sm:$0x1]
    %v1376 = vld [vmem:[%s3 + $0x1] sm:$0x1]
    %v1377 = vsel %vm60, %v1373, 0.0
    %1378 = vadd.xlane.f32.xlu0 %v1377
    %v1379 = vpop.xlane.xlu0 %1378
    %v1380 = vsel %vm60, %v1374, 0.0
    %1381 = vadd.xlane.f32.xlu0 %v1380
    %v1382 = vpop.xlane.xlu0 %1381
    %v1383 = vmul.f32 %v1379, %v67
    %v1384 = vmul.f32 %v1382, %v67
    %v1385 = vsub.f32 %v1373, %v1383
    %v1386 = vsub.f32 %v1374, %v1384
    %v1387 = vmul.f32 %v1385, %v1385
    %v1388 = vmul.f32 %v1386, %v1386
    %v1389 = vsel %vm60, %v1387, 0.0
    %1390 = vadd.xlane.f32.xlu0 %v1389
    %v1391 = vpop.xlane.xlu0 %1390
    %v1392 = vsel %vm60, %v1388, 0.0
    %1393 = vadd.xlane.f32.xlu0 %v1392
    %v1394 = vpop.xlane.xlu0 %1393
    %v1395 = vmul.f32 %v1391, %v67
    %v1396 = vmul.f32 %v1394, %v67
    %v1397 = vadd.f32 %v1395, 1e-05
    %v1398 = vadd.f32 %v1396, 1e-05
    %v1399 = vrsqrt.pop %v1397
    %v1400 = vrsqrt.pop %v1398
    %v1401 = vmul.f32 %v1385, %v1399
    %v1402 = vmul.f32 %v1386, %v1400
    %v1403 = vlaneseq
    %v1404 = vshrl.u32 %v1403, 7
    %v1405 = vsub.s32 0, %v1404
    %v1406 = vrot.slane %v1375, %v1405
    %v1407 = vmul.f32 %v1401, %v1406
    %v1408 = vmul.f32 %v1402, %v1406
    %v1409 = vlaneseq
    %v1410 = vshrl.u32 %v1409, 7
    %v1411 = vsub.s32 0, %v1410
    %v1412 = vrot.slane %v1376, %v1411
    %v1413 = vadd.f32 %v1407, %v1412
    %v1414 = vadd.f32 %v1408, %v1412
    %s1415 = scalar_lea.vmem %s4, 32
    %v1416 = vld [vmem:[%s1415] sm:$0xff]
    %v1417 = vld [vmem:[%s1415 + $0x8] sm:$0xff]
    %v1418 = vld [vmem:[%s1415 + $0x10] sm:$0xff]
    %v1419 = vld [vmem:[%s1415 + $0x18] sm:$0xff]
    %v1420 = vld [vmem:[%s5 + $0x1] sm:$0x1]
    %v1421 = vlaneseq
    %v1422 = vshrl.u32 %v1421, 7
    %v1423 = vsub.s32 0, %v1422
    %v1424 = vrot.slane %v1420, %v1423
    %v1426 = vsel %vm60, %v1413, 0
    %v1429 = vsel %vm60, %v1414, 0
    %1431 = vmatprep.subr.mxu0 0.0
    %1432 = vmatpush1.msra.mxu0 %v1416
    %1433 = vmatprep.subr.mxu0 0.0
    %1434 = vmatpush1.msra.mxu0 %v1417
    %1435 = vmatprep.subr.mxu0 0.0
    %1436 = vmatpush1.msra.mxu0 %v1418
    %1437 = vmatprep.subr.mxu0 0.0
    %1438 = vmatpush1.msra.mxu0 %v1419
    %1439 = vmatprep.subr.mxu0 0.0
    %1440 = vmatpush1.msra.mxu0 0.0
    %1441 = vmatprep.subr.mxu0 0.0
    %1442 = vmatpush1.msra.mxu0 0.0
    %1443 = vmatprep.subr.mxu0 0.0
    %1444 = vmatpush1.msra.mxu0 0.0
    %1445 = vmatprep.subr.mxu0 0.0
    %1446 = vmatpush1.msra.mxu0 0.0
    %1447 = vmatprep.subr.mxu0 0.0
    %1448 = vmatpush1.msra.mxu0 0.0
    %1449 = vmatprep.subr.mxu0 0.0
    %1450 = vmatpush1.msra.mxu0 0.0
    %1451 = vmatprep.subr.mxu0 0.0
    %1452 = vmatpush1.msra.mxu0 0.0
    %1453 = vmatprep.subr.mxu0 0.0
    %1454 = vmatpush1.msra.mxu0 0.0
    %1455 = vmatprep.subr.mxu0 0.0
    %1456 = vmatpush1.msra.mxu0 0.0
    %1457 = vmatprep.subr.mxu0 0.0
    %1458 = vmatpush1.msra.mxu0 0.0
    %1459 = vmatprep.subr.mxu0 0.0
    %1460 = vmatpush1.msra.mxu0 0.0
    %1461 = vmatprep.subr.mxu0 0.0
    %1462 = vmatpush1.msra.mxu0 0.0
    %1463 = vmatprep.subr.mxu0 0.0
    %1464 = vmatpush1.msra.mxu0 0.0
    %1465 = vmatprep.subr.mxu0 0.0
    %1466 = vmatpush1.msra.mxu0 0.0
    %1467 = vmatprep.subr.mxu0 0.0
    %1468 = vmatpush1.msra.mxu0 0.0
    %1469 = vmatprep.subr.mxu0 0.0
    %1470 = vmatpush1.msra.mxu0 0.0
    %1471 = vmatprep.subr.mxu0 0.0
    %1472 = vmatpush1.msra.mxu0 0.0
    %1473 = vmatprep.subr.mxu0 0.0
    %1474 = vmatpush1.msra.mxu0 0.0
    %1475 = vmatprep.subr.mxu0 0.0
    %1476 = vmatpush1.msra.mxu0 0.0
    %1477 = vmatprep.subr.mxu0 0.0
    %1478 = vmatpush1.msra.mxu0 0.0
    %1479 = vmatprep.subr.mxu0 0.0
    %1480 = vmatpush1.msra.mxu0 0.0
    %1481 = vmatprep.subr.mxu0 0.0
    %1482 = vmatpush1.msra.mxu0 0.0
    %1483 = vmatprep.subr.mxu0 0.0
    %1484 = vmatpush1.msra.mxu0 0.0
    %1485 = vmatprep.subr.mxu0 0.0
    %1486 = vmatpush1.msra.mxu0 0.0
    %1487 = vmatprep.subr.mxu0 0.0
    %1488 = vmatpush1.msra.mxu0 0.0
    %1489 = vmatprep.subr.mxu0 0.0
    %1490 = vmatpush1.msra.mxu0 0.0
    %1491 = vmatprep.subr.mxu0 0.0
    %1492 = vmatpush1.msra.mxu0 0.0
    %1493 = vmatprep.subr.mxu0 0.0
    %1494 = vmatpush1.msra.mxu0 0.0
    %1495 = vmatprep.mubr.f32.mxu0 0.0
    %1496 = vmatmul.mubr.f32.gmra.mrb[0].mxu0 %v1426
    %v1497 = vpop.f32.mrb[0].mxu0
    %v1498 = vadd.f32 %v1424, %v1497
    %v1499 = vpop.f32.mrb[0].mxu0
    %1500 = vmatprep.mubr.f32.mxu0 0.0
    %1501 = vmatmul.mubr.f32.gmra.mrb[0].mxu0 %v1429
    %v1502 = vpop.f32.mrb[0].mxu0
    %v1503 = vadd.f32 %v1424, %v1502
    %v1504 = vpop.f32.mrb[0].mxu0
    %1505 = vdwg.mxu0
    %1508 = vrot.lane.b32.xlu0 %v1498, 96
    %v1509 = vpop.permute.xlu0 %1508
    %1510 = vrot.lane.b32.xlu0 %v1503, 96
    %v1511 = vpop.permute.xlu0 %1510
    %v1512 = vsel %vm196, %v1498, 0
    %v1514 = vsel %vm196, %v1503, 0
    %v1516 = vsel %vm196, %v1509, 0
    %v1518 = vsel %vm196, %v1511, 0
    %1520 = vmatprep.subr.mxu0 0.0
    %1521 = vmatpush1.xpose.msra.mxu0 %v1516
    %1522 = vmatprep.subr.mxu0 0.0
    %1523 = vmatpush1.xpose.msra.mxu0 %v1518
    %1524 = vmatprep.subr.mxu0 0.0
    %1525 = vmatpush1.xpose.msra.mxu0 0.0
    %1526 = vmatprep.subr.mxu0 0.0
    %1527 = vmatpush1.xpose.msra.mxu0 0.0
    %1528 = vmatprep.subr.mxu0 0.0
    %1529 = vmatpush1.xpose.msra.mxu0 0.0
    %1530 = vmatprep.subr.mxu0 0.0
    %1531 = vmatpush1.xpose.msra.mxu0 0.0
    %1532 = vmatprep.subr.mxu0 0.0
    %1533 = vmatpush1.xpose.msra.mxu0 0.0
    %1534 = vmatprep.subr.mxu0 0.0
    %1535 = vmatpush1.xpose.msra.mxu0 0.0
    %1536 = vmatprep.subr.mxu0 0.0
    %1537 = vmatpush1.xpose.msra.mxu0 0.0
    %1538 = vmatprep.subr.mxu0 0.0
    %1539 = vmatpush1.xpose.msra.mxu0 0.0
    %1540 = vmatprep.subr.mxu0 0.0
    %1541 = vmatpush1.xpose.msra.mxu0 0.0
    %1542 = vmatprep.subr.mxu0 0.0
    %1543 = vmatpush1.xpose.msra.mxu0 0.0
    %1544 = vmatprep.subr.mxu0 0.0
    %1545 = vmatpush1.xpose.msra.mxu0 0.0
    %1546 = vmatprep.subr.mxu0 0.0
    %1547 = vmatpush1.xpose.msra.mxu0 0.0
    %1548 = vmatprep.subr.mxu0 0.0
    %1549 = vmatpush1.xpose.msra.mxu0 0.0
    %1550 = vmatprep.subr.mxu0 0.0
    %1551 = vmatpush1.xpose.msra.mxu0 0.0
    %1552 = vmatprep.subr.mxu0 0.0
    %1553 = vmatpush1.xpose.msra.mxu0 0.0
    %1554 = vmatprep.subr.mxu0 0.0
    %1555 = vmatpush1.xpose.msra.mxu0 0.0
    %1556 = vmatprep.subr.mxu0 0.0
    %1557 = vmatpush1.xpose.msra.mxu0 0.0
    %1558 = vmatprep.subr.mxu0 0.0
    %1559 = vmatpush1.xpose.msra.mxu0 0.0
    %1560 = vmatprep.subr.mxu0 0.0
    %1561 = vmatpush1.xpose.msra.mxu0 0.0
    %1562 = vmatprep.subr.mxu0 0.0
    %1563 = vmatpush1.xpose.msra.mxu0 0.0
    %1564 = vmatprep.subr.mxu0 0.0
    %1565 = vmatpush1.xpose.msra.mxu0 0.0
    %1566 = vmatprep.subr.mxu0 0.0
    %1567 = vmatpush1.xpose.msra.mxu0 0.0
    %1568 = vmatprep.subr.mxu0 0.0
    %1569 = vmatpush1.xpose.msra.mxu0 0.0
    %1570 = vmatprep.subr.mxu0 0.0
    %1571 = vmatpush1.xpose.msra.mxu0 0.0
    %1572 = vmatprep.subr.mxu0 0.0
    %1573 = vmatpush1.xpose.msra.mxu0 0.0
    %1574 = vmatprep.subr.mxu0 0.0
    %1575 = vmatpush1.xpose.msra.mxu0 0.0
    %1576 = vmatprep.subr.mxu0 0.0
    %1577 = vmatpush1.xpose.msra.mxu0 0.0
    %1578 = vmatprep.subr.mxu0 0.0
    %1579 = vmatpush1.xpose.msra.mxu0 0.0
    %1580 = vmatprep.subr.mxu0 0.0
    %1581 = vmatpush1.xpose.msra.mxu0 0.0
    %1582 = vmatprep.subr.mxu0 0.0
    %1583 = vmatpush1.xpose.msra.mxu0 0.0
    %1584 = vmatprep.mubr.f32.mxu0 0.0
    %1585 = vmatmul.mubr.f32.gmra.mrb[0].mxu0 %v1512
    %v1586 = vpop.f32.mrb[0].mxu0
    %v1587 = vadd.f32 0.0, %v1586
    %v1588 = vpop.f32.mrb[0].mxu0
    %1589 = vmatprep.mubr.f32.mxu0 0.0
    %1590 = vmatmul.mubr.f32.gmra.mrb[0].mxu0 %v1514
    %v1591 = vpop.f32.mrb[0].mxu0
    %v1592 = vadd.f32 0.0, %v1591
    %v1593 = vpop.f32.mrb[0].mxu0
    %1594 = vdwg.mxu0
    %v1595 = vmul.f32 %v1587, 0.35355338
    %v1596 = vmul.f32 %v1592, 0.35355338
    %v1597 = vadd.f32 %v1595, %v56
    %v1598 = vadd.f32 %v1596, %v57
    %v1599 = vsel %vm284, %v1597, -inf
    %1600 = vmax.xlane.f32.xlu0 %v1599
    %v1601 = vpop.xlane.xlu0 %1600
    %v1602 = vsel %vm284, %v1598, -inf
    %1603 = vmax.xlane.f32.xlu0 %v1602
    %v1604 = vpop.xlane.xlu0 %1603
    %v1605 = vsub.f32 %v1597, %v1601
    %v1606 = vsub.f32 %v1598, %v1604
    %v1607 = vmul.f32 %v1605, 1.442695
    %v1608 = vpow.pop %v1607
    %v1609 = vmul.f32 %v1606, 1.442695
    %v1610 = vpow.pop %v1609
    %v1611 = vsel %vm284, %v1608, 0.0
    %1612 = vadd.xlane.f32.xlu0 %v1611
    %v1613 = vpop.xlane.xlu0 %1612
    %v1614 = vsel %vm284, %v1610, 0.0
    %1615 = vadd.xlane.f32.xlu0 %v1614
    %v1616 = vpop.xlane.xlu0 %1615
    %v1617 = vrcp.pop %v1613
    %v1618 = vrcp.pop %v1616
    %v1619 = vmul.f32 %v1608, %v1617
    %v1620 = vmul.f32 %v1610, %v1618
    %1621 = vrot.lane.b32.xlu0 %v1498, 64
    %v1622 = vpop.permute.xlu0 %1621
    %1623 = vrot.lane.b32.xlu0 %v1503, 64
    %v1624 = vpop.permute.xlu0 %1623
    %v1628 = vsel %vm284, %v1619, 0
    %v1631 = vsel %vm284, %v1620, 0
    %1633 = vmatprep.subr.mxu0 0.0
    %1634 = vmatpush1.msra.mxu0 %v1622
    %1635 = vmatprep.subr.mxu0 0.0
    %1636 = vmatpush1.msra.mxu0 %v1624
    %1637 = vmatprep.subr.mxu0 0.0
    %1638 = vmatpush1.msra.mxu0 0.0
    %1639 = vmatprep.subr.mxu0 0.0
    %1640 = vmatpush1.msra.mxu0 0.0
    %1641 = vmatprep.subr.mxu0 0.0
    %1642 = vmatpush1.msra.mxu0 0.0
    %1643 = vmatprep.subr.mxu0 0.0
    %1644 = vmatpush1.msra.mxu0 0.0
    %1645 = vmatprep.subr.mxu0 0.0
    %1646 = vmatpush1.msra.mxu0 0.0
    %1647 = vmatprep.subr.mxu0 0.0
    %1648 = vmatpush1.msra.mxu0 0.0
    %1649 = vmatprep.subr.mxu0 0.0
    %1650 = vmatpush1.msra.mxu0 0.0
    %1651 = vmatprep.subr.mxu0 0.0
    %1652 = vmatpush1.msra.mxu0 0.0
    %1653 = vmatprep.subr.mxu0 0.0
    %1654 = vmatpush1.msra.mxu0 0.0
    %1655 = vmatprep.subr.mxu0 0.0
    %1656 = vmatpush1.msra.mxu0 0.0
    %1657 = vmatprep.subr.mxu0 0.0
    %1658 = vmatpush1.msra.mxu0 0.0
    %1659 = vmatprep.subr.mxu0 0.0
    %1660 = vmatpush1.msra.mxu0 0.0
    %1661 = vmatprep.subr.mxu0 0.0
    %1662 = vmatpush1.msra.mxu0 0.0
    %1663 = vmatprep.subr.mxu0 0.0
    %1664 = vmatpush1.msra.mxu0 0.0
    %1665 = vmatprep.subr.mxu0 0.0
    %1666 = vmatpush1.msra.mxu0 0.0
    %1667 = vmatprep.subr.mxu0 0.0
    %1668 = vmatpush1.msra.mxu0 0.0
    %1669 = vmatprep.subr.mxu0 0.0
    %1670 = vmatpush1.msra.mxu0 0.0
    %1671 = vmatprep.subr.mxu0 0.0
    %1672 = vmatpush1.msra.mxu0 0.0
    %1673 = vmatprep.subr.mxu0 0.0
    %1674 = vmatpush1.msra.mxu0 0.0
    %1675 = vmatprep.subr.mxu0 0.0
    %1676 = vmatpush1.msra.mxu0 0.0
    %1677 = vmatprep.subr.mxu0 0.0
    %1678 = vmatpush1.msra.mxu0 0.0
    %1679 = vmatprep.subr.mxu0 0.0
    %1680 = vmatpush1.msra.mxu0 0.0
    %1681 = vmatprep.subr.mxu0 0.0
    %1682 = vmatpush1.msra.mxu0 0.0
    %1683 = vmatprep.subr.mxu0 0.0
    %1684 = vmatpush1.msra.mxu0 0.0
    %1685 = vmatprep.subr.mxu0 0.0
    %1686 = vmatpush1.msra.mxu0 0.0
    %1687 = vmatprep.subr.mxu0 0.0
    %1688 = vmatpush1.msra.mxu0 0.0
    %1689 = vmatprep.subr.mxu0 0.0
    %1690 = vmatpush1.msra.mxu0 0.0
    %1691 = vmatprep.subr.mxu0 0.0
    %1692 = vmatpush1.msra.mxu0 0.0
    %1693 = vmatprep.subr.mxu0 0.0
    %1694 = vmatpush1.msra.mxu0 0.0
    %1695 = vmatprep.subr.mxu0 0.0
    %1696 = vmatpush1.msra.mxu0 0.0
    %1697 = vmatprep.mubr.f32.mxu0 0.0
    %1698 = vmatmul.mubr.f32.gmra.mrb[0].mxu0 %v1628
    %v1699 = vpop.f32.mrb[0].mxu0
    %v1700 = vadd.f32 0.0, %v1699
    %v1701 = vpop.f32.mrb[0].mxu0
    %1702 = vmatprep.mubr.f32.mxu0 0.0
    %1703 = vmatmul.mubr.f32.gmra.mrb[0].mxu0 %v1631
    %v1704 = vpop.f32.mrb[0].mxu0
    %v1705 = vadd.f32 0.0, %v1704
    %v1706 = vpop.f32.mrb[0].mxu0
    %1707 = vdwg.mxu0
    %1708 = vrot.lane.b32.xlu0 %v1498, 120
    %v1709 = vpop.permute.xlu0 %1708
    %1710 = vrot.lane.b32.xlu0 %v1503, 120
    %v1711 = vpop.permute.xlu0 %1710
    %1712 = vrot.lane.b32.xlu0 %v1498, 88
    %v1713 = vpop.permute.xlu0 %1712
    %1714 = vrot.lane.b32.xlu0 %v1503, 88
    %v1715 = vpop.permute.xlu0 %1714
    %v1716 = vsel %vm196, %v1709, 0
    %v1718 = vsel %vm196, %v1711, 0
    %v1720 = vsel %vm196, %v1713, 0
    %v1722 = vsel %vm196, %v1715, 0
    %1724 = vmatprep.subr.mxu0 0.0
    %1725 = vmatpush1.xpose.msra.mxu0 %v1720
    %1726 = vmatprep.subr.mxu0 0.0
    %1727 = vmatpush1.xpose.msra.mxu0 %v1722
    %1728 = vmatprep.subr.mxu0 0.0
    %1729 = vmatpush1.xpose.msra.mxu0 0.0
    %1730 = vmatprep.subr.mxu0 0.0
    %1731 = vmatpush1.xpose.msra.mxu0 0.0
    %1732 = vmatprep.subr.mxu0 0.0
    %1733 = vmatpush1.xpose.msra.mxu0 0.0
    %1734 = vmatprep.subr.mxu0 0.0
    %1735 = vmatpush1.xpose.msra.mxu0 0.0
    %1736 = vmatprep.subr.mxu0 0.0
    %1737 = vmatpush1.xpose.msra.mxu0 0.0
    %1738 = vmatprep.subr.mxu0 0.0
    %1739 = vmatpush1.xpose.msra.mxu0 0.0
    %1740 = vmatprep.subr.mxu0 0.0
    %1741 = vmatpush1.xpose.msra.mxu0 0.0
    %1742 = vmatprep.subr.mxu0 0.0
    %1743 = vmatpush1.xpose.msra.mxu0 0.0
    %1744 = vmatprep.subr.mxu0 0.0
    %1745 = vmatpush1.xpose.msra.mxu0 0.0
    %1746 = vmatprep.subr.mxu0 0.0
    %1747 = vmatpush1.xpose.msra.mxu0 0.0
    %1748 = vmatprep.subr.mxu0 0.0
    %1749 = vmatpush1.xpose.msra.mxu0 0.0
    %1750 = vmatprep.subr.mxu0 0.0
    %1751 = vmatpush1.xpose.msra.mxu0 0.0
    %1752 = vmatprep.subr.mxu0 0.0
    %1753 = vmatpush1.xpose.msra.mxu0 0.0
    %1754 = vmatprep.subr.mxu0 0.0
    %1755 = vmatpush1.xpose.msra.mxu0 0.0
    %1756 = vmatprep.subr.mxu0 0.0
    %1757 = vmatpush1.xpose.msra.mxu0 0.0
    %1758 = vmatprep.subr.mxu0 0.0
    %1759 = vmatpush1.xpose.msra.mxu0 0.0
    %1760 = vmatprep.subr.mxu0 0.0
    %1761 = vmatpush1.xpose.msra.mxu0 0.0
    %1762 = vmatprep.subr.mxu0 0.0
    %1763 = vmatpush1.xpose.msra.mxu0 0.0
    %1764 = vmatprep.subr.mxu0 0.0
    %1765 = vmatpush1.xpose.msra.mxu0 0.0
    %1766 = vmatprep.subr.mxu0 0.0
    %1767 = vmatpush1.xpose.msra.mxu0 0.0
    %1768 = vmatprep.subr.mxu0 0.0
    %1769 = vmatpush1.xpose.msra.mxu0 0.0
    %1770 = vmatprep.subr.mxu0 0.0
    %1771 = vmatpush1.xpose.msra.mxu0 0.0
    %1772 = vmatprep.subr.mxu0 0.0
    %1773 = vmatpush1.xpose.msra.mxu0 0.0
    %1774 = vmatprep.subr.mxu0 0.0
    %1775 = vmatpush1.xpose.msra.mxu0 0.0
    %1776 = vmatprep.subr.mxu0 0.0
    %1777 = vmatpush1.xpose.msra.mxu0 0.0
    %1778 = vmatprep.subr.mxu0 0.0
    %1779 = vmatpush1.xpose.msra.mxu0 0.0
    %1780 = vmatprep.subr.mxu0 0.0
    %1781 = vmatpush1.xpose.msra.mxu0 0.0
    %1782 = vmatprep.subr.mxu0 0.0
    %1783 = vmatpush1.xpose.msra.mxu0 0.0
    %1784 = vmatprep.subr.mxu0 0.0
    %1785 = vmatpush1.xpose.msra.mxu0 0.0
    %1786 = vmatprep.subr.mxu0 0.0
    %1787 = vmatpush1.xpose.msra.mxu0 0.0
    %1788 = vmatprep.mubr.f32.mxu0 0.0
    %1789 = vmatmul.mubr.f32.gmra.mrb[0].mxu0 %v1716
    %v1790 = vpop.f32.mrb[0].mxu0
    %v1791 = vadd.f32 0.0, %v1790
    %v1792 = vpop.f32.mrb[0].mxu0
    %1793 = vmatprep.mubr.f32.mxu0 0.0
    %1794 = vmatmul.mubr.f32.gmra.mrb[0].mxu0 %v1718
    %v1795 = vpop.f32.mrb[0].mxu0
    %v1796 = vadd.f32 0.0, %v1795
    %v1797 = vpop.f32.mrb[0].mxu0
    %1798 = vdwg.mxu0
    %v1799 = vmul.f32 %v1791, 0.35355338
    %v1800 = vmul.f32 %v1796, 0.35355338
    %v1801 = vadd.f32 %v1799, %v56
    %v1802 = vadd.f32 %v1800, %v57
    %v1803 = vsel %vm284, %v1801, -inf
    %1804 = vmax.xlane.f32.xlu0 %v1803
    %v1805 = vpop.xlane.xlu0 %1804
    %v1806 = vsel %vm284, %v1802, -inf
    %1807 = vmax.xlane.f32.xlu0 %v1806
    %v1808 = vpop.xlane.xlu0 %1807
    %v1809 = vsub.f32 %v1801, %v1805
    %v1810 = vsub.f32 %v1802, %v1808
    %v1811 = vmul.f32 %v1809, 1.442695
    %v1812 = vpow.pop %v1811
    %v1813 = vmul.f32 %v1810, 1.442695
    %v1814 = vpow.pop %v1813
    %v1815 = vsel %vm284, %v1812, 0.0
    %1816 = vadd.xlane.f32.xlu0 %v1815
    %v1817 = vpop.xlane.xlu0 %1816
    %v1818 = vsel %vm284, %v1814, 0.0
    %1819 = vadd.xlane.f32.xlu0 %v1818
    %v1820 = vpop.xlane.xlu0 %1819
    %v1821 = vrcp.pop %v1817
    %v1822 = vrcp.pop %v1820
    %v1823 = vmul.f32 %v1812, %v1821
    %v1824 = vmul.f32 %v1814, %v1822
    %1825 = vrot.lane.b32.xlu0 %v1498, 56
    %v1826 = vpop.permute.xlu0 %1825
    %1827 = vrot.lane.b32.xlu0 %v1503, 56
    %v1828 = vpop.permute.xlu0 %1827
    %v1832 = vsel %vm284, %v1823, 0
    %v1835 = vsel %vm284, %v1824, 0
    %1837 = vmatprep.subr.mxu0 0.0
    %1838 = vmatpush1.msra.mxu0 %v1826
    %1839 = vmatprep.subr.mxu0 0.0
    %1840 = vmatpush1.msra.mxu0 %v1828
    %1841 = vmatprep.subr.mxu0 0.0
    %1842 = vmatpush1.msra.mxu0 0.0
    %1843 = vmatprep.subr.mxu0 0.0
    %1844 = vmatpush1.msra.mxu0 0.0
    %1845 = vmatprep.subr.mxu0 0.0
    %1846 = vmatpush1.msra.mxu0 0.0
    %1847 = vmatprep.subr.mxu0 0.0
    %1848 = vmatpush1.msra.mxu0 0.0
    %1849 = vmatprep.subr.mxu0 0.0
    %1850 = vmatpush1.msra.mxu0 0.0
    %1851 = vmatprep.subr.mxu0 0.0
    %1852 = vmatpush1.msra.mxu0 0.0
    %1853 = vmatprep.subr.mxu0 0.0
    %1854 = vmatpush1.msra.mxu0 0.0
    %1855 = vmatprep.subr.mxu0 0.0
    %1856 = vmatpush1.msra.mxu0 0.0
    %1857 = vmatprep.subr.mxu0 0.0
    %1858 = vmatpush1.msra.mxu0 0.0
    %1859 = vmatprep.subr.mxu0 0.0
    %1860 = vmatpush1.msra.mxu0 0.0
    %1861 = vmatprep.subr.mxu0 0.0
    %1862 = vmatpush1.msra.mxu0 0.0
    %1863 = vmatprep.subr.mxu0 0.0
    %1864 = vmatpush1.msra.mxu0 0.0
    %1865 = vmatprep.subr.mxu0 0.0
    %1866 = vmatpush1.msra.mxu0 0.0
    %1867 = vmatprep.subr.mxu0 0.0
    %1868 = vmatpush1.msra.mxu0 0.0
    %1869 = vmatprep.subr.mxu0 0.0
    %1870 = vmatpush1.msra.mxu0 0.0
    %1871 = vmatprep.subr.mxu0 0.0
    %1872 = vmatpush1.msra.mxu0 0.0
    %1873 = vmatprep.subr.mxu0 0.0
    %1874 = vmatpush1.msra.mxu0 0.0
    %1875 = vmatprep.subr.mxu0 0.0
    %1876 = vmatpush1.msra.mxu0 0.0
    %1877 = vmatprep.subr.mxu0 0.0
    %1878 = vmatpush1.msra.mxu0 0.0
    %1879 = vmatprep.subr.mxu0 0.0
    %1880 = vmatpush1.msra.mxu0 0.0
    %1881 = vmatprep.subr.mxu0 0.0
    %1882 = vmatpush1.msra.mxu0 0.0
    %1883 = vmatprep.subr.mxu0 0.0
    %1884 = vmatpush1.msra.mxu0 0.0
    %1885 = vmatprep.subr.mxu0 0.0
    %1886 = vmatpush1.msra.mxu0 0.0
    %1887 = vmatprep.subr.mxu0 0.0
    %1888 = vmatpush1.msra.mxu0 0.0
    %1889 = vmatprep.subr.mxu0 0.0
    %1890 = vmatpush1.msra.mxu0 0.0
    %1891 = vmatprep.subr.mxu0 0.0
    %1892 = vmatpush1.msra.mxu0 0.0
    %1893 = vmatprep.subr.mxu0 0.0
    %1894 = vmatpush1.msra.mxu0 0.0
    %1895 = vmatprep.subr.mxu0 0.0
    %1896 = vmatpush1.msra.mxu0 0.0
    %1897 = vmatprep.subr.mxu0 0.0
    %1898 = vmatpush1.msra.mxu0 0.0
    %1899 = vmatprep.subr.mxu0 0.0
    %1900 = vmatpush1.msra.mxu0 0.0
    %1901 = vmatprep.mubr.f32.mxu0 0.0
    %1902 = vmatmul.mubr.f32.gmra.mrb[0].mxu0 %v1832
    %v1903 = vpop.f32.mrb[0].mxu0
    %v1904 = vadd.f32 0.0, %v1903
    %v1905 = vpop.f32.mrb[0].mxu0
    %1906 = vmatprep.mubr.f32.mxu0 0.0
    %1907 = vmatmul.mubr.f32.gmra.mrb[0].mxu0 %v1835
    %v1908 = vpop.f32.mrb[0].mxu0
    %v1909 = vadd.f32 0.0, %v1908
    %v1910 = vpop.f32.mrb[0].mxu0
    %1911 = vdwg.mxu0
    %1912 = vrot.lane.b32.xlu0 %v1498, 112
    %v1913 = vpop.permute.xlu0 %1912
    %1914 = vrot.lane.b32.xlu0 %v1503, 112
    %v1915 = vpop.permute.xlu0 %1914
    %1916 = vrot.lane.b32.xlu0 %v1498, 80
    %v1917 = vpop.permute.xlu0 %1916
    %1918 = vrot.lane.b32.xlu0 %v1503, 80
    %v1919 = vpop.permute.xlu0 %1918
    %v1920 = vsel %vm196, %v1913, 0
    %v1922 = vsel %vm196, %v1915, 0
    %v1924 = vsel %vm196, %v1917, 0
    %v1926 = vsel %vm196, %v1919, 0
    %1928 = vmatprep.subr.mxu0 0.0
    %1929 = vmatpush1.xpose.msra.mxu0 %v1924
    %1930 = vmatprep.subr.mxu0 0.0
    %1931 = vmatpush1.xpose.msra.mxu0 %v1926
    %1932 = vmatprep.subr.mxu0 0.0
    %1933 = vmatpush1.xpose.msra.mxu0 0.0
    %1934 = vmatprep.subr.mxu0 0.0
    %1935 = vmatpush1.xpose.msra.mxu0 0.0
    %1936 = vmatprep.subr.mxu0 0.0
    %1937 = vmatpush1.xpose.msra.mxu0 0.0
    %1938 = vmatprep.subr.mxu0 0.0
    %1939 = vmatpush1.xpose.msra.mxu0 0.0
    %1940 = vmatprep.subr.mxu0 0.0
    %1941 = vmatpush1.xpose.msra.mxu0 0.0
    %1942 = vmatprep.subr.mxu0 0.0
    %1943 = vmatpush1.xpose.msra.mxu0 0.0
    %1944 = vmatprep.subr.mxu0 0.0
    %1945 = vmatpush1.xpose.msra.mxu0 0.0
    %1946 = vmatprep.subr.mxu0 0.0
    %1947 = vmatpush1.xpose.msra.mxu0 0.0
    %1948 = vmatprep.subr.mxu0 0.0
    %1949 = vmatpush1.xpose.msra.mxu0 0.0
    %1950 = vmatprep.subr.mxu0 0.0
    %1951 = vmatpush1.xpose.msra.mxu0 0.0
    %1952 = vmatprep.subr.mxu0 0.0
    %1953 = vmatpush1.xpose.msra.mxu0 0.0
    %1954 = vmatprep.subr.mxu0 0.0
    %1955 = vmatpush1.xpose.msra.mxu0 0.0
    %1956 = vmatprep.subr.mxu0 0.0
    %1957 = vmatpush1.xpose.msra.mxu0 0.0
    %1958 = vmatprep.subr.mxu0 0.0
    %1959 = vmatpush1.xpose.msra.mxu0 0.0
    %1960 = vmatprep.subr.mxu0 0.0
    %1961 = vmatpush1.xpose.msra.mxu0 0.0
    %1962 = vmatprep.subr.mxu0 0.0
    %1963 = vmatpush1.xpose.msra.mxu0 0.0
    %1964 = vmatprep.subr.mxu0 0.0
    %1965 = vmatpush1.xpose.msra.mxu0 0.0
    %1966 = vmatprep.subr.mxu0 0.0
    %1967 = vmatpush1.xpose.msra.mxu0 0.0
    %1968 = vmatprep.subr.mxu0 0.0
    %1969 = vmatpush1.xpose.msra.mxu0 0.0
    %1970 = vmatprep.subr.mxu0 0.0
    %1971 = vmatpush1.xpose.msra.mxu0 0.0
    %1972 = vmatprep.subr.mxu0 0.0
    %1973 = vmatpush1.xpose.msra.mxu0 0.0
    %1974 = vmatprep.subr.mxu0 0.0
    %1975 = vmatpush1.xpose.msra.mxu0 0.0
    %1976 = vmatprep.subr.mxu0 0.0
    %1977 = vmatpush1.xpose.msra.mxu0 0.0
    %1978 = vmatprep.subr.mxu0 0.0
    %1979 = vmatpush1.xpose.msra.mxu0 0.0
    %1980 = vmatprep.subr.mxu0 0.0
    %1981 = vmatpush1.xpose.msra.mxu0 0.0
    %1982 = vmatprep.subr.mxu0 0.0
    %1983 = vmatpush1.xpose.msra.mxu0 0.0
    %1984 = vmatprep.subr.mxu0 0.0
    %1985 = vmatpush1.xpose.msra.mxu0 0.0
    %1986 = vmatprep.subr.mxu0 0.0
    %1987 = vmatpush1.xpose.msra.mxu0 0.0
    %1988 = vmatprep.subr.mxu0 0.0
    %1989 = vmatpush1.xpose.msra.mxu0 0.0
    %1990 = vmatprep.subr.mxu0 0.0
    %1991 = vmatpush1.xpose.msra.mxu0 0.0
    %1992 = vmatprep.mubr.f32.mxu0 0.0
    %1993 = vmatmul.mubr.f32.gmra.mrb[0].mxu0 %v1920
    %v1994 = vpop.f32.mrb[0].mxu0
    %v1995 = vadd.f32 0.0, %v1994
    %v1996 = vpop.f32.mrb[0].mxu0
    %1997 = vmatprep.mubr.f32.mxu0 0.0
    %1998 = vmatmul.mubr.f32.gmra.mrb[0].mxu0 %v1922
    %v1999 = vpop.f32.mrb[0].mxu0
    %v2000 = vadd.f32 0.0, %v1999
    %v2001 = vpop.f32.mrb[0].mxu0
    %2002 = vdwg.mxu0
    %v2003 = vmul.f32 %v1995, 0.35355338
    %v2004 = vmul.f32 %v2000, 0.35355338
    %v2005 = vadd.f32 %v2003, %v56
    %v2006 = vadd.f32 %v2004, %v57
    %v2007 = vsel %vm284, %v2005, -inf
    %2008 = vmax.xlane.f32.xlu0 %v2007
    %v2009 = vpop.xlane.xlu0 %2008
    %v2010 = vsel %vm284, %v2006, -inf
    %2011 = vmax.xlane.f32.xlu0 %v2010
    %v2012 = vpop.xlane.xlu0 %2011
    %v2013 = vsub.f32 %v2005, %v2009
    %v2014 = vsub.f32 %v2006, %v2012
    %v2015 = vmul.f32 %v2013, 1.442695
    %v2016 = vpow.pop %v2015
    %v2017 = vmul.f32 %v2014, 1.442695
    %v2018 = vpow.pop %v2017
    %v2019 = vsel %vm284, %v2016, 0.0
    %2020 = vadd.xlane.f32.xlu0 %v2019
    %v2021 = vpop.xlane.xlu0 %2020
    %v2022 = vsel %vm284, %v2018, 0.0
    %2023 = vadd.xlane.f32.xlu0 %v2022
    %v2024 = vpop.xlane.xlu0 %2023
    %v2025 = vrcp.pop %v2021
    %v2026 = vrcp.pop %v2024
    %v2027 = vmul.f32 %v2016, %v2025
    %v2028 = vmul.f32 %v2018, %v2026
    %2029 = vrot.lane.b32.xlu0 %v1498, 48
    %v2030 = vpop.permute.xlu0 %2029
    %2031 = vrot.lane.b32.xlu0 %v1503, 48
    %v2032 = vpop.permute.xlu0 %2031
    %v2036 = vsel %vm284, %v2027, 0
    %v2039 = vsel %vm284, %v2028, 0
    %2041 = vmatprep.subr.mxu0 0.0
    %2042 = vmatpush1.msra.mxu0 %v2030
    %2043 = vmatprep.subr.mxu0 0.0
    %2044 = vmatpush1.msra.mxu0 %v2032
    %2045 = vmatprep.subr.mxu0 0.0
    %2046 = vmatpush1.msra.mxu0 0.0
    %2047 = vmatprep.subr.mxu0 0.0
    %2048 = vmatpush1.msra.mxu0 0.0
    %2049 = vmatprep.subr.mxu0 0.0
    %2050 = vmatpush1.msra.mxu0 0.0
    %2051 = vmatprep.subr.mxu0 0.0
    %2052 = vmatpush1.msra.mxu0 0.0
    %2053 = vmatprep.subr.mxu0 0.0
    %2054 = vmatpush1.msra.mxu0 0.0
    %2055 = vmatprep.subr.mxu0 0.0
    %2056 = vmatpush1.msra.mxu0 0.0
    %2057 = vmatprep.subr.mxu0 0.0
    %2058 = vmatpush1.msra.mxu0 0.0
    %2059 = vmatprep.subr.mxu0 0.0
    %2060 = vmatpush1.msra.mxu0 0.0
    %2061 = vmatprep.subr.mxu0 0.0
    %2062 = vmatpush1.msra.mxu0 0.0
    %2063 = vmatprep.subr.mxu0 0.0
    %2064 = vmatpush1.msra.mxu0 0.0
    %2065 = vmatprep.subr.mxu0 0.0
    %2066 = vmatpush1.msra.mxu0 0.0
    %2067 = vmatprep.subr.mxu0 0.0
    %2068 = vmatpush1.msra.mxu0 0.0
    %2069 = vmatprep.subr.mxu0 0.0
    %2070 = vmatpush1.msra.mxu0 0.0
    %2071 = vmatprep.subr.mxu0 0.0
    %2072 = vmatpush1.msra.mxu0 0.0
    %2073 = vmatprep.subr.mxu0 0.0
    %2074 = vmatpush1.msra.mxu0 0.0
    %2075 = vmatprep.subr.mxu0 0.0
    %2076 = vmatpush1.msra.mxu0 0.0
    %2077 = vmatprep.subr.mxu0 0.0
    %2078 = vmatpush1.msra.mxu0 0.0
    %2079 = vmatprep.subr.mxu0 0.0
    %2080 = vmatpush1.msra.mxu0 0.0
    %2081 = vmatprep.subr.mxu0 0.0
    %2082 = vmatpush1.msra.mxu0 0.0
    %2083 = vmatprep.subr.mxu0 0.0
    %2084 = vmatpush1.msra.mxu0 0.0
    %2085 = vmatprep.subr.mxu0 0.0
    %2086 = vmatpush1.msra.mxu0 0.0
    %2087 = vmatprep.subr.mxu0 0.0
    %2088 = vmatpush1.msra.mxu0 0.0
    %2089 = vmatprep.subr.mxu0 0.0
    %2090 = vmatpush1.msra.mxu0 0.0
    %2091 = vmatprep.subr.mxu0 0.0
    %2092 = vmatpush1.msra.mxu0 0.0
    %2093 = vmatprep.subr.mxu0 0.0
    %2094 = vmatpush1.msra.mxu0 0.0
    %2095 = vmatprep.subr.mxu0 0.0
    %2096 = vmatpush1.msra.mxu0 0.0
    %2097 = vmatprep.subr.mxu0 0.0
    %2098 = vmatpush1.msra.mxu0 0.0
    %2099 = vmatprep.subr.mxu0 0.0
    %2100 = vmatpush1.msra.mxu0 0.0
    %2101 = vmatprep.subr.mxu0 0.0
    %2102 = vmatpush1.msra.mxu0 0.0
    %2103 = vmatprep.subr.mxu0 0.0
    %2104 = vmatpush1.msra.mxu0 0.0
    %2105 = vmatprep.mubr.f32.mxu0 0.0
    %2106 = vmatmul.mubr.f32.gmra.mrb[0].mxu0 %v2036
    %v2107 = vpop.f32.mrb[0].mxu0
    %v2108 = vadd.f32 0.0, %v2107
    %v2109 = vpop.f32.mrb[0].mxu0
    %2110 = vmatprep.mubr.f32.mxu0 0.0
    %2111 = vmatmul.mubr.f32.gmra.mrb[0].mxu0 %v2039
    %v2112 = vpop.f32.mrb[0].mxu0
    %v2113 = vadd.f32 0.0, %v2112
    %v2114 = vpop.f32.mrb[0].mxu0
    %2115 = vdwg.mxu0
    %2116 = vrot.lane.b32.xlu0 %v1498, 104
    %v2117 = vpop.permute.xlu0 %2116
    %2118 = vrot.lane.b32.xlu0 %v1503, 104
    %v2119 = vpop.permute.xlu0 %2118
    %2120 = vrot.lane.b32.xlu0 %v1498, 72
    %v2121 = vpop.permute.xlu0 %2120
    %2122 = vrot.lane.b32.xlu0 %v1503, 72
    %v2123 = vpop.permute.xlu0 %2122
    %v2124 = vsel %vm196, %v2117, 0
    %v2126 = vsel %vm196, %v2119, 0
    %v2128 = vsel %vm196, %v2121, 0
    %v2130 = vsel %vm196, %v2123, 0
    %2132 = vmatprep.subr.mxu0 0.0
    %2133 = vmatpush1.xpose.msra.mxu0 %v2128
    %2134 = vmatprep.subr.mxu0 0.0
    %2135 = vmatpush1.xpose.msra.mxu0 %v2130
    %2136 = vmatprep.subr.mxu0 0.0
    %2137 = vmatpush1.xpose.msra.mxu0 0.0
    %2138 = vmatprep.subr.mxu0 0.0
    %2139 = vmatpush1.xpose.msra.mxu0 0.0
    %2140 = vmatprep.subr.mxu0 0.0
    %2141 = vmatpush1.xpose.msra.mxu0 0.0
    %2142 = vmatprep.subr.mxu0 0.0
    %2143 = vmatpush1.xpose.msra.mxu0 0.0
    %2144 = vmatprep.subr.mxu0 0.0
    %2145 = vmatpush1.xpose.msra.mxu0 0.0
    %2146 = vmatprep.subr.mxu0 0.0
    %2147 = vmatpush1.xpose.msra.mxu0 0.0
    %2148 = vmatprep.subr.mxu0 0.0
    %2149 = vmatpush1.xpose.msra.mxu0 0.0
    %2150 = vmatprep.subr.mxu0 0.0
    %2151 = vmatpush1.xpose.msra.mxu0 0.0
    %2152 = vmatprep.subr.mxu0 0.0
    %2153 = vmatpush1.xpose.msra.mxu0 0.0
    %2154 = vmatprep.subr.mxu0 0.0
    %2155 = vmatpush1.xpose.msra.mxu0 0.0
    %2156 = vmatprep.subr.mxu0 0.0
    %2157 = vmatpush1.xpose.msra.mxu0 0.0
    %2158 = vmatprep.subr.mxu0 0.0
    %2159 = vmatpush1.xpose.msra.mxu0 0.0
    %2160 = vmatprep.subr.mxu0 0.0
    %2161 = vmatpush1.xpose.msra.mxu0 0.0
    %2162 = vmatprep.subr.mxu0 0.0
    %2163 = vmatpush1.xpose.msra.mxu0 0.0
    %2164 = vmatprep.subr.mxu0 0.0
    %2165 = vmatpush1.xpose.msra.mxu0 0.0
    %2166 = vmatprep.subr.mxu0 0.0
    %2167 = vmatpush1.xpose.msra.mxu0 0.0
    %2168 = vmatprep.subr.mxu0 0.0
    %2169 = vmatpush1.xpose.msra.mxu0 0.0
    %2170 = vmatprep.subr.mxu0 0.0
    %2171 = vmatpush1.xpose.msra.mxu0 0.0
    %2172 = vmatprep.subr.mxu0 0.0
    %2173 = vmatpush1.xpose.msra.mxu0 0.0
    %2174 = vmatprep.subr.mxu0 0.0
    %2175 = vmatpush1.xpose.msra.mxu0 0.0
    %2176 = vmatprep.subr.mxu0 0.0
    %2177 = vmatpush1.xpose.msra.mxu0 0.0
    %2178 = vmatprep.subr.mxu0 0.0
    %2179 = vmatpush1.xpose.msra.mxu0 0.0
    %2180 = vmatprep.subr.mxu0 0.0
    %2181 = vmatpush1.xpose.msra.mxu0 0.0
    %2182 = vmatprep.subr.mxu0 0.0
    %2183 = vmatpush1.xpose.msra.mxu0 0.0
    %2184 = vmatprep.subr.mxu0 0.0
    %2185 = vmatpush1.xpose.msra.mxu0 0.0
    %2186 = vmatprep.subr.mxu0 0.0
    %2187 = vmatpush1.xpose.msra.mxu0 0.0
    %2188 = vmatprep.subr.mxu0 0.0
    %2189 = vmatpush1.xpose.msra.mxu0 0.0
    %2190 = vmatprep.subr.mxu0 0.0
    %2191 = vmatpush1.xpose.msra.mxu0 0.0
    %2192 = vmatprep.subr.mxu0 0.0
    %2193 = vmatpush1.xpose.msra.mxu0 0.0
    %2194 = vmatprep.subr.mxu0 0.0
    %2195 = vmatpush1.xpose.msra.mxu0 0.0
    %2196 = vmatprep.mubr.f32.mxu0 0.0
    %2197 = vmatmul.mubr.f32.gmra.mrb[0].mxu0 %v2124
    %v2198 = vpop.f32.mrb[0].mxu0
    %v2199 = vadd.f32 0.0, %v2198
    %v2200 = vpop.f32.mrb[0].mxu0
    %2201 = vmatprep.mubr.f32.mxu0 0.0
    %2202 = vmatmul.mubr.f32.gmra.mrb[0].mxu0 %v2126
    %v2203 = vpop.f32.mrb[0].mxu0
    %v2204 = vadd.f32 0.0, %v2203
    %v2205 = vpop.f32.mrb[0].mxu0
    %2206 = vdwg.mxu0
    %v2207 = vmul.f32 %v2199, 0.35355338
    %v2208 = vmul.f32 %v2204, 0.35355338
    %v2209 = vadd.f32 %v2207, %v56
    %v2210 = vadd.f32 %v2208, %v57
    %v2211 = vsel %vm284, %v2209, -inf
    %2212 = vmax.xlane.f32.xlu0 %v2211
    %v2213 = vpop.xlane.xlu0 %2212
    %v2214 = vsel %vm284, %v2210, -inf
    %2215 = vmax.xlane.f32.xlu0 %v2214
    %v2216 = vpop.xlane.xlu0 %2215
    %v2217 = vsub.f32 %v2209, %v2213
    %v2218 = vsub.f32 %v2210, %v2216
    %v2219 = vmul.f32 %v2217, 1.442695
    %v2220 = vpow.pop %v2219
    %v2221 = vmul.f32 %v2218, 1.442695
    %v2222 = vpow.pop %v2221
    %v2223 = vsel %vm284, %v2220, 0.0
    %2224 = vadd.xlane.f32.xlu0 %v2223
    %v2225 = vpop.xlane.xlu0 %2224
    %v2226 = vsel %vm284, %v2222, 0.0
    %2227 = vadd.xlane.f32.xlu0 %v2226
    %v2228 = vpop.xlane.xlu0 %2227
    %v2229 = vrcp.pop %v2225
    %v2230 = vrcp.pop %v2228
    %v2231 = vmul.f32 %v2220, %v2229
    %v2232 = vmul.f32 %v2222, %v2230
    %2233 = vrot.lane.b32.xlu0 %v1498, 40
    %v2234 = vpop.permute.xlu0 %2233
    %2235 = vrot.lane.b32.xlu0 %v1503, 40
    %v2236 = vpop.permute.xlu0 %2235
    %v2240 = vsel %vm284, %v2231, 0
    %v2243 = vsel %vm284, %v2232, 0
    %2245 = vmatprep.subr.mxu0 0.0
    %2246 = vmatpush1.msra.mxu0 %v2234
    %2247 = vmatprep.subr.mxu0 0.0
    %2248 = vmatpush1.msra.mxu0 %v2236
    %2249 = vmatprep.subr.mxu0 0.0
    %2250 = vmatpush1.msra.mxu0 0.0
    %2251 = vmatprep.subr.mxu0 0.0
    %2252 = vmatpush1.msra.mxu0 0.0
    %2253 = vmatprep.subr.mxu0 0.0
    %2254 = vmatpush1.msra.mxu0 0.0
    %2255 = vmatprep.subr.mxu0 0.0
    %2256 = vmatpush1.msra.mxu0 0.0
    %2257 = vmatprep.subr.mxu0 0.0
    %2258 = vmatpush1.msra.mxu0 0.0
    %2259 = vmatprep.subr.mxu0 0.0
    %2260 = vmatpush1.msra.mxu0 0.0
    %2261 = vmatprep.subr.mxu0 0.0
    %2262 = vmatpush1.msra.mxu0 0.0
    %2263 = vmatprep.subr.mxu0 0.0
    %2264 = vmatpush1.msra.mxu0 0.0
    %2265 = vmatprep.subr.mxu0 0.0
    %2266 = vmatpush1.msra.mxu0 0.0
    %2267 = vmatprep.subr.mxu0 0.0
    %2268 = vmatpush1.msra.mxu0 0.0
    %2269 = vmatprep.subr.mxu0 0.0
    %2270 = vmatpush1.msra.mxu0 0.0
    %2271 = vmatprep.subr.mxu0 0.0
    %2272 = vmatpush1.msra.mxu0 0.0
    %2273 = vmatprep.subr.mxu0 0.0
    %2274 = vmatpush1.msra.mxu0 0.0
    %2275 = vmatprep.subr.mxu0 0.0
    %2276 = vmatpush1.msra.mxu0 0.0
    %2277 = vmatprep.subr.mxu0 0.0
    %2278 = vmatpush1.msra.mxu0 0.0
    %2279 = vmatprep.subr.mxu0 0.0
    %2280 = vmatpush1.msra.mxu0 0.0
    %2281 = vmatprep.subr.mxu0 0.0
    %2282 = vmatpush1.msra.mxu0 0.0
    %2283 = vmatprep.subr.mxu0 0.0
    %2284 = vmatpush1.msra.mxu0 0.0
    %2285 = vmatprep.subr.mxu0 0.0
    %2286 = vmatpush1.msra.mxu0 0.0
    %2287 = vmatprep.subr.mxu0 0.0
    %2288 = vmatpush1.msra.mxu0 0.0
    %2289 = vmatprep.subr.mxu0 0.0
    %2290 = vmatpush1.msra.mxu0 0.0
    %2291 = vmatprep.subr.mxu0 0.0
    %2292 = vmatpush1.msra.mxu0 0.0
    %2293 = vmatprep.subr.mxu0 0.0
    %2294 = vmatpush1.msra.mxu0 0.0
    %2295 = vmatprep.subr.mxu0 0.0
    %2296 = vmatpush1.msra.mxu0 0.0
    %2297 = vmatprep.subr.mxu0 0.0
    %2298 = vmatpush1.msra.mxu0 0.0
    %2299 = vmatprep.subr.mxu0 0.0
    %2300 = vmatpush1.msra.mxu0 0.0
    %2301 = vmatprep.subr.mxu0 0.0
    %2302 = vmatpush1.msra.mxu0 0.0
    %2303 = vmatprep.subr.mxu0 0.0
    %2304 = vmatpush1.msra.mxu0 0.0
    %2305 = vmatprep.subr.mxu0 0.0
    %2306 = vmatpush1.msra.mxu0 0.0
    %2307 = vmatprep.subr.mxu0 0.0
    %2308 = vmatpush1.msra.mxu0 0.0
    %2309 = vmatprep.mubr.f32.mxu0 0.0
    %2310 = vmatmul.mubr.f32.gmra.mrb[0].mxu0 %v2240
    %v2311 = vpop.f32.mrb[0].mxu0
    %v2312 = vadd.f32 0.0, %v2311
    %v2313 = vpop.f32.mrb[0].mxu0
    %2314 = vmatprep.mubr.f32.mxu0 0.0
    %2315 = vmatmul.mubr.f32.gmra.mrb[0].mxu0 %v2243
    %v2316 = vpop.f32.mrb[0].mxu0
    %v2317 = vadd.f32 0.0, %v2316
    %v2318 = vpop.f32.mrb[0].mxu0
    %2319 = vdwg.mxu0
    %2322 = vrot.lane.b32.xlu0 %v1904, 8
    %v2323 = vpop.permute.xlu0 %2322
    %2324 = vrot.lane.b32.xlu0 %v1909, 8
    %v2325 = vpop.permute.xlu0 %2324
    %2330 = vrot.lane.b32.xlu0 %v2108, 16
    %v2331 = vpop.permute.xlu0 %2330
    %2332 = vrot.lane.b32.xlu0 %v2113, 16
    %v2333 = vpop.permute.xlu0 %2332
    %2338 = vrot.lane.b32.xlu0 %v2312, 24
    %v2339 = vpop.permute.xlu0 %2338
    %2340 = vrot.lane.b32.xlu0 %v2317, 24
    %v2341 = vpop.permute.xlu0 %2340
    %v2344 = vsel %vm196, %v1700, %v2323
    %v2345 = vsel %vm196, %v1705, %v2325
    %v2346 = vsel %vm284, %v2344, %v2331
    %v2347 = vsel %vm284, %v2345, %v2333
    %v2348 = vsel %vm1034, %v2346, %v2339
    %v2349 = vsel %vm1034, %v2347, %v2341
    %s2350 = scalar_lea.vmem %s6, 32
    %v2351 = vld [vmem:[%s2350] sm:$0xff]
    %v2352 = vld [vmem:[%s2350 + $0x8] sm:$0xff]
    %v2353 = vld [vmem:[%s2350 + $0x10] sm:$0xff]
    %v2354 = vld [vmem:[%s2350 + $0x18] sm:$0xff]
    %v2355 = vld [vmem:[%s7 + $0x1] sm:$0x1]
    %v2356 = vlaneseq
    %v2357 = vshrl.u32 %v2356, 7
    %v2358 = vsub.s32 0, %v2357
    %v2359 = vrot.slane %v2355, %v2358
    %v2361 = vsel %vm60, %v2348, 0
    %v2364 = vsel %vm60, %v2349, 0
    %2366 = vmatprep.subr.mxu0 0.0
    %2367 = vmatpush1.msra.mxu0 %v2351
    %2368 = vmatprep.subr.mxu0 0.0
    %2369 = vmatpush1.msra.mxu0 %v2352
    %2370 = vmatprep.subr.mxu0 0.0
    %2371 = vmatpush1.msra.mxu0 %v2353
    %2372 = vmatprep.subr.mxu0 0.0
    %2373 = vmatpush1.msra.mxu0 %v2354
    %2374 = vmatprep.subr.mxu0 0.0
    %2375 = vmatpush1.msra.mxu0 0.0
    %2376 = vmatprep.subr.mxu0 0.0
    %2377 = vmatpush1.msra.mxu0 0.0
    %2378 = vmatprep.subr.mxu0 0.0
    %2379 = vmatpush1.msra.mxu0 0.0
    %2380 = vmatprep.subr.mxu0 0.0
    %2381 = vmatpush1.msra.mxu0 0.0
    %2382 = vmatprep.subr.mxu0 0.0
    %2383 = vmatpush1.msra.mxu0 0.0
    %2384 = vmatprep.subr.mxu0 0.0
    %2385 = vmatpush1.msra.mxu0 0.0
    %2386 = vmatprep.subr.mxu0 0.0
    %2387 = vmatpush1.msra.mxu0 0.0
    %2388 = vmatprep.subr.mxu0 0.0
    %2389 = vmatpush1.msra.mxu0 0.0
    %2390 = vmatprep.subr.mxu0 0.0
    %2391 = vmatpush1.msra.mxu0 0.0
    %2392 = vmatprep.subr.mxu0 0.0
    %2393 = vmatpush1.msra.mxu0 0.0
    %2394 = vmatprep.subr.mxu0 0.0
    %2395 = vmatpush1.msra.mxu0 0.0
    %2396 = vmatprep.subr.mxu0 0.0
    %2397 = vmatpush1.msra.mxu0 0.0
    %2398 = vmatprep.subr.mxu0 0.0
    %2399 = vmatpush1.msra.mxu0 0.0
    %2400 = vmatprep.subr.mxu0 0.0
    %2401 = vmatpush1.msra.mxu0 0.0
    %2402 = vmatprep.subr.mxu0 0.0
    %2403 = vmatpush1.msra.mxu0 0.0
    %2404 = vmatprep.subr.mxu0 0.0
    %2405 = vmatpush1.msra.mxu0 0.0
    %2406 = vmatprep.subr.mxu0 0.0
    %2407 = vmatpush1.msra.mxu0 0.0
    %2408 = vmatprep.subr.mxu0 0.0
    %2409 = vmatpush1.msra.mxu0 0.0
    %2410 = vmatprep.subr.mxu0 0.0
    %2411 = vmatpush1.msra.mxu0 0.0
    %2412 = vmatprep.subr.mxu0 0.0
    %2413 = vmatpush1.msra.mxu0 0.0
    %2414 = vmatprep.subr.mxu0 0.0
    %2415 = vmatpush1.msra.mxu0 0.0
    %2416 = vmatprep.subr.mxu0 0.0
    %2417 = vmatpush1.msra.mxu0 0.0
    %2418 = vmatprep.subr.mxu0 0.0
    %2419 = vmatpush1.msra.mxu0 0.0
    %2420 = vmatprep.subr.mxu0 0.0
    %2421 = vmatpush1.msra.mxu0 0.0
    %2422 = vmatprep.subr.mxu0 0.0
    %2423 = vmatpush1.msra.mxu0 0.0
    %2424 = vmatprep.subr.mxu0 0.0
    %2425 = vmatpush1.msra.mxu0 0.0
    %2426 = vmatprep.subr.mxu0 0.0
    %2427 = vmatpush1.msra.mxu0 0.0
    %2428 = vmatprep.subr.mxu0 0.0
    %2429 = vmatpush1.msra.mxu0 0.0
    %2430 = vmatprep.mubr.f32.mxu0 0.0
    %2431 = vmatmul.mubr.f32.gmra.mrb[0].mxu0 %v2361
    %v2432 = vpop.f32.mrb[0].mxu0
    %v2433 = vadd.f32 %v2359, %v2432
    %v2434 = vpop.f32.mrb[0].mxu0
    %2435 = vmatprep.mubr.f32.mxu0 0.0
    %2436 = vmatmul.mubr.f32.gmra.mrb[0].mxu0 %v2364
    %v2437 = vpop.f32.mrb[0].mxu0
    %v2438 = vadd.f32 %v2359, %v2437
    %v2439 = vpop.f32.mrb[0].mxu0
    %2440 = vdwg.mxu0
    %v2441 = vadd.f32 %v1373, %v2433
    %v2442 = vadd.f32 %v1374, %v2438
    %v2443 = vld [vmem:[%s8 + $0x1] sm:$0x1]
    %v2444 = vld [vmem:[%s9 + $0x1] sm:$0x1]
    %v2445 = vsel %vm60, %v2441, 0.0
    %2446 = vadd.xlane.f32.xlu0 %v2445
    %v2447 = vpop.xlane.xlu0 %2446
    %v2448 = vsel %vm60, %v2442, 0.0
    %2449 = vadd.xlane.f32.xlu0 %v2448
    %v2450 = vpop.xlane.xlu0 %2449
    %v2451 = vmul.f32 %v2447, %v67
    %v2452 = vmul.f32 %v2450, %v67
    %v2453 = vsub.f32 %v2441, %v2451
    %v2454 = vsub.f32 %v2442, %v2452
    %v2455 = vmul.f32 %v2453, %v2453
    %v2456 = vmul.f32 %v2454, %v2454
    %v2457 = vsel %vm60, %v2455, 0.0
    %2458 = vadd.xlane.f32.xlu0 %v2457
    %v2459 = vpop.xlane.xlu0 %2458
    %v2460 = vsel %vm60, %v2456, 0.0
    %2461 = vadd.xlane.f32.xlu0 %v2460
    %v2462 = vpop.xlane.xlu0 %2461
    %v2463 = vmul.f32 %v2459, %v67
    %v2464 = vmul.f32 %v2462, %v67
    %v2465 = vadd.f32 %v2463, 1e-05
    %v2466 = vadd.f32 %v2464, 1e-05
    %v2467 = vrsqrt.pop %v2465
    %v2468 = vrsqrt.pop %v2466
    %v2469 = vmul.f32 %v2453, %v2467
    %v2470 = vmul.f32 %v2454, %v2468
    %v2471 = vlaneseq
    %v2472 = vshrl.u32 %v2471, 7
    %v2473 = vsub.s32 0, %v2472
    %v2474 = vrot.slane %v2443, %v2473
    %v2475 = vmul.f32 %v2469, %v2474
    %v2476 = vmul.f32 %v2470, %v2474
    %v2477 = vlaneseq
    %v2478 = vshrl.u32 %v2477, 7
    %v2479 = vsub.s32 0, %v2478
    %v2480 = vrot.slane %v2444, %v2479
    %v2481 = vadd.f32 %v2475, %v2480
    %v2482 = vadd.f32 %v2476, %v2480
    %s2483 = scalar_lea.vmem %s10, 32
    %v2484 = vld [vmem:[%s2483] sm:$0xff]
    %v2485 = vld [vmem:[%s2483 + $0x8] sm:$0xff]
    %v2486 = vld [vmem:[%s2483 + $0x10] sm:$0xff]
    %v2487 = vld [vmem:[%s2483 + $0x18] sm:$0xff]
    %v2488 = vld [vmem:[%s11 + $0x1] sm:$0x1]
    %v2489 = vlaneseq
    %v2490 = vshrl.u32 %v2489, 7
    %v2491 = vsub.s32 0, %v2490
    %v2492 = vrot.slane %v2488, %v2491
    %v2494 = vsel %vm60, %v2481, 0
    %v2497 = vsel %vm60, %v2482, 0
    %2499 = vmatprep.subr.mxu0 0.0
    %2500 = vmatpush1.msra.mxu0 %v2484
    %2501 = vmatprep.subr.mxu0 0.0
    %2502 = vmatpush1.msra.mxu0 %v2485
    %2503 = vmatprep.subr.mxu0 0.0
    %2504 = vmatpush1.msra.mxu0 %v2486
    %2505 = vmatprep.subr.mxu0 0.0
    %2506 = vmatpush1.msra.mxu0 %v2487
    %2507 = vmatprep.subr.mxu0 0.0
    %2508 = vmatpush1.msra.mxu0 0.0
    %2509 = vmatprep.subr.mxu0 0.0
    %2510 = vmatpush1.msra.mxu0 0.0
    %2511 = vmatprep.subr.mxu0 0.0
    %2512 = vmatpush1.msra.mxu0 0.0
    %2513 = vmatprep.subr.mxu0 0.0
    %2514 = vmatpush1.msra.mxu0 0.0
    %2515 = vmatprep.subr.mxu0 0.0
    %2516 = vmatpush1.msra.mxu0 0.0
    %2517 = vmatprep.subr.mxu0 0.0
    %2518 = vmatpush1.msra.mxu0 0.0
    %2519 = vmatprep.subr.mxu0 0.0
    %2520 = vmatpush1.msra.mxu0 0.0
    %2521 = vmatprep.subr.mxu0 0.0
    %2522 = vmatpush1.msra.mxu0 0.0
    %2523 = vmatprep.subr.mxu0 0.0
    %2524 = vmatpush1.msra.mxu0 0.0
    %2525 = vmatprep.subr.mxu0 0.0
    %2526 = vmatpush1.msra.mxu0 0.0
    %2527 = vmatprep.subr.mxu0 0.0
    %2528 = vmatpush1.msra.mxu0 0.0
    %2529 = vmatprep.subr.mxu0 0.0
    %2530 = vmatpush1.msra.mxu0 0.0
    %2531 = vmatprep.subr.mxu0 0.0
    %2532 = vmatpush1.msra.mxu0 0.0
    %2533 = vmatprep.subr.mxu0 0.0
    %2534 = vmatpush1.msra.mxu0 0.0
    %2535 = vmatprep.subr.mxu0 0.0
    %2536 = vmatpush1.msra.mxu0 0.0
    %2537 = vmatprep.subr.mxu0 0.0
    %2538 = vmatpush1.msra.mxu0 0.0
    %2539 = vmatprep.subr.mxu0 0.0
    %2540 = vmatpush1.msra.mxu0 0.0
    %2541 = vmatprep.subr.mxu0 0.0
    %2542 = vmatpush1.msra.mxu0 0.0
    %2543 = vmatprep.subr.mxu0 0.0
    %2544 = vmatpush1.msra.mxu0 0.0
    %2545 = vmatprep.subr.mxu0 0.0
    %2546 = vmatpush1.msra.mxu0 0.0
    %2547 = vmatprep.subr.mxu0 0.0
    %2548 = vmatpush1.msra.mxu0 0.0
    %2549 = vmatprep.subr.mxu0 0.0
    %2550 = vmatpush1.msra.mxu0 0.0
    %2551 = vmatprep.subr.mxu0 0.0
    %2552 = vmatpush1.msra.mxu0 0.0
    %2553 = vmatprep.subr.mxu0 0.0
    %2554 = vmatpush1.msra.mxu0 0.0
    %2555 = vmatprep.subr.mxu0 0.0
    %2556 = vmatpush1.msra.mxu0 0.0
    %2557 = vmatprep.subr.mxu0 0.0
    %2558 = vmatpush1.msra.mxu0 0.0
    %2559 = vmatprep.subr.mxu0 0.0
    %2560 = vmatpush1.msra.mxu0 0.0
    %2561 = vmatprep.subr.mxu0 0.0
    %2562 = vmatpush1.msra.mxu0 0.0
    %2563 = vmatprep.mubr.f32.mxu0 0.0
    %2564 = vmatmul.mubr.f32.gmra.mrb[0].mxu0 %v2494
    %v2565 = vpop.f32.mrb[0].mxu0
    %v2566 = vadd.f32 %v2492, %v2565
    %v2567 = vpop.f32.mrb[0].mxu0
    %2568 = vmatprep.mubr.f32.mxu0 0.0
    %2569 = vmatmul.mubr.f32.gmra.mrb[0].mxu0 %v2497
    %v2570 = vpop.f32.mrb[0].mxu0
    %v2571 = vadd.f32 %v2492, %v2570
    %v2572 = vpop.f32.mrb[0].mxu0
    %2573 = vdwg.mxu0
    %v2574 = vmul.f32 %v2566, 0.5
    %v2575 = vmul.f32 %v2571, 0.5
    %v2576 = vmul.f32 %v2566, 0.044715
    %v2577 = vmul.f32 %v2571, 0.044715
    %v2578 = vmul.f32 %v2576, %v2566
    %v2579 = vmul.f32 %v2577, %v2571
    %v2580 = vmul.f32 %v2578, %v2566
    %v2581 = vmul.f32 %v2579, %v2571
    %v2582 = vadd.f32 %v2566, %v2580
    %v2583 = vadd.f32 %v2571, %v2581
    %v2584 = vmul.f32 %v2582, 0.7978846
    %v2585 = vmul.f32 %v2583, 0.7978846
    %v2586 = vtanh.pop %v2584
    %v2587 = vtanh.pop %v2585
    %v2588 = vadd.f32 %v2586, 1.0
    %v2589 = vadd.f32 %v2587, 1.0
    %v2590 = vmul.f32 %v2574, %v2588
    %v2591 = vmul.f32 %v2575, %v2589
    %s2592 = scalar_lea.vmem %s12, 128
    %v2593 = vld [vmem:[%s2592] sm:$0xff]
    %v2594 = vld [vmem:[%s2592 + $0x8] sm:$0xff]
    %v2595 = vld [vmem:[%s2592 + $0x10] sm:$0xff]
    %v2596 = vld [vmem:[%s2592 + $0x18] sm:$0xff]
    %v2597 = vld [vmem:[%s2592 + $0x20] sm:$0xff]
    %v2598 = vld [vmem:[%s2592 + $0x28] sm:$0xff]
    %v2599 = vld [vmem:[%s2592 + $0x30] sm:$0xff]
    %v2600 = vld [vmem:[%s2592 + $0x38] sm:$0xff]
    %v2601 = vld [vmem:[%s2592 + $0x40] sm:$0xff]
    %v2602 = vld [vmem:[%s2592 + $0x48] sm:$0xff]
    %v2603 = vld [vmem:[%s2592 + $0x50] sm:$0xff]
    %v2604 = vld [vmem:[%s2592 + $0x58] sm:$0xff]
    %v2605 = vld [vmem:[%s2592 + $0x60] sm:$0xff]
    %v2606 = vld [vmem:[%s2592 + $0x68] sm:$0xff]
    %v2607 = vld [vmem:[%s2592 + $0x70] sm:$0xff]
    %v2608 = vld [vmem:[%s2592 + $0x78] sm:$0xff]
    %v2609 = vld [vmem:[%s13 + $0x1] sm:$0x1]
    %v2610 = vlaneseq
    %v2611 = vshrl.u32 %v2610, 7
    %v2612 = vsub.s32 0, %v2611
    %v2613 = vrot.slane %v2609, %v2612
    %2614 = vmatprep.subr.mxu0 0.0
    %2615 = vmatpush1.msra.mxu0 %v2593
    %2616 = vmatprep.subr.mxu0 0.0
    %2617 = vmatpush1.msra.mxu0 %v2594
    %2618 = vmatprep.subr.mxu0 0.0
    %2619 = vmatpush1.msra.mxu0 %v2595
    %2620 = vmatprep.subr.mxu0 0.0
    %2621 = vmatpush1.msra.mxu0 %v2596
    %2622 = vmatprep.subr.mxu0 0.0
    %2623 = vmatpush1.msra.mxu0 %v2597
    %2624 = vmatprep.subr.mxu0 0.0
    %2625 = vmatpush1.msra.mxu0 %v2598
    %2626 = vmatprep.subr.mxu0 0.0
    %2627 = vmatpush1.msra.mxu0 %v2599
    %2628 = vmatprep.subr.mxu0 0.0
    %2629 = vmatpush1.msra.mxu0 %v2600
    %2630 = vmatprep.subr.mxu0 0.0
    %2631 = vmatpush1.msra.mxu0 %v2601
    %2632 = vmatprep.subr.mxu0 0.0
    %2633 = vmatpush1.msra.mxu0 %v2602
    %2634 = vmatprep.subr.mxu0 0.0
    %2635 = vmatpush1.msra.mxu0 %v2603
    %2636 = vmatprep.subr.mxu0 0.0
    %2637 = vmatpush1.msra.mxu0 %v2604
    %2638 = vmatprep.subr.mxu0 0.0
    %2639 = vmatpush1.msra.mxu0 %v2605
    %2640 = vmatprep.subr.mxu0 0.0
    %2641 = vmatpush1.msra.mxu0 %v2606
    %2642 = vmatprep.subr.mxu0 0.0
    %2643 = vmatpush1.msra.mxu0 %v2607
    %2644 = vmatprep.subr.mxu0 0.0
    %2645 = vmatpush1.msra.mxu0 %v2608
    %2646 = vmatprep.subr.mxu0 0.0
    %2647 = vmatpush1.msra.mxu0 0.0
    %2648 = vmatprep.subr.mxu0 0.0
    %2649 = vmatpush1.msra.mxu0 0.0
    %2650 = vmatprep.subr.mxu0 0.0
    %2651 = vmatpush1.msra.mxu0 0.0
    %2652 = vmatprep.subr.mxu0 0.0
    %2653 = vmatpush1.msra.mxu0 0.0
    %2654 = vmatprep.subr.mxu0 0.0
    %2655 = vmatpush1.msra.mxu0 0.0
    %2656 = vmatprep.subr.mxu0 0.0
    %2657 = vmatpush1.msra.mxu0 0.0
    %2658 = vmatprep.subr.mxu0 0.0
    %2659 = vmatpush1.msra.mxu0 0.0
    %2660 = vmatprep.subr.mxu0 0.0
    %2661 = vmatpush1.msra.mxu0 0.0
    %2662 = vmatprep.subr.mxu0 0.0
    %2663 = vmatpush1.msra.mxu0 0.0
    %2664 = vmatprep.subr.mxu0 0.0
    %2665 = vmatpush1.msra.mxu0 0.0
    %2666 = vmatprep.subr.mxu0 0.0
    %2667 = vmatpush1.msra.mxu0 0.0
    %2668 = vmatprep.subr.mxu0 0.0
    %2669 = vmatpush1.msra.mxu0 0.0
    %2670 = vmatprep.subr.mxu0 0.0
    %2671 = vmatpush1.msra.mxu0 0.0
    %2672 = vmatprep.subr.mxu0 0.0
    %2673 = vmatpush1.msra.mxu0 0.0
    %2674 = vmatprep.subr.mxu0 0.0
    %2675 = vmatpush1.msra.mxu0 0.0
    %2676 = vmatprep.subr.mxu0 0.0
    %2677 = vmatpush1.msra.mxu0 0.0
    %2678 = vmatprep.mubr.f32.mxu0 0.0
    %2679 = vmatmul.mubr.f32.gmra.mrb[0].mxu0 %v2590
    %v2680 = vpop.f32.mrb[0].mxu0
    %v2681 = vadd.f32 %v2613, %v2680
    %v2682 = vpop.f32.mrb[0].mxu0
    %2683 = vmatprep.mubr.f32.mxu0 0.0
    %2684 = vmatmul.mubr.f32.gmra.mrb[0].mxu0 %v2591
    %v2685 = vpop.f32.mrb[0].mxu0
    %v2686 = vadd.f32 %v2613, %v2685
    %v2687 = vpop.f32.mrb[0].mxu0
    %2688 = vdwg.mxu0
    %v2689 = vadd.f32 %v2441, %v2681
    %v2690 = vadd.f32 %v2442, %v2686
    %v2691 = vld [vmem:[%s2 + $0x2] sm:$0x1]
    %v2692 = vld [vmem:[%s3 + $0x2] sm:$0x1]
    %v2693 = vsel %vm60, %v2689, 0.0
    %2694 = vadd.xlane.f32.xlu0 %v2693
    %v2695 = vpop.xlane.xlu0 %2694
    %v2696 = vsel %vm60, %v2690, 0.0
    %2697 = vadd.xlane.f32.xlu0 %v2696
    %v2698 = vpop.xlane.xlu0 %2697
    %v2699 = vmul.f32 %v2695, %v67
    %v2700 = vmul.f32 %v2698, %v67
    %v2701 = vsub.f32 %v2689, %v2699
    %v2702 = vsub.f32 %v2690, %v2700
    %v2703 = vmul.f32 %v2701, %v2701
    %v2704 = vmul.f32 %v2702, %v2702
    %v2705 = vsel %vm60, %v2703, 0.0
    %2706 = vadd.xlane.f32.xlu0 %v2705
    %v2707 = vpop.xlane.xlu0 %2706
    %v2708 = vsel %vm60, %v2704, 0.0
    %2709 = vadd.xlane.f32.xlu0 %v2708
    %v2710 = vpop.xlane.xlu0 %2709
    %v2711 = vmul.f32 %v2707, %v67
    %v2712 = vmul.f32 %v2710, %v67
    %v2713 = vadd.f32 %v2711, 1e-05
    %v2714 = vadd.f32 %v2712, 1e-05
    %v2715 = vrsqrt.pop %v2713
    %v2716 = vrsqrt.pop %v2714
    %v2717 = vmul.f32 %v2701, %v2715
    %v2718 = vmul.f32 %v2702, %v2716
    %v2719 = vlaneseq
    %v2720 = vshrl.u32 %v2719, 7
    %v2721 = vsub.s32 0, %v2720
    %v2722 = vrot.slane %v2691, %v2721
    %v2723 = vmul.f32 %v2717, %v2722
    %v2724 = vmul.f32 %v2718, %v2722
    %v2725 = vlaneseq
    %v2726 = vshrl.u32 %v2725, 7
    %v2727 = vsub.s32 0, %v2726
    %v2728 = vrot.slane %v2692, %v2727
    %v2729 = vadd.f32 %v2723, %v2728
    %v2730 = vadd.f32 %v2724, %v2728
    %s2731 = scalar_lea.vmem %s4, 64
    %v2732 = vld [vmem:[%s2731] sm:$0xff]
    %v2733 = vld [vmem:[%s2731 + $0x8] sm:$0xff]
    %v2734 = vld [vmem:[%s2731 + $0x10] sm:$0xff]
    %v2735 = vld [vmem:[%s2731 + $0x18] sm:$0xff]
    %v2736 = vld [vmem:[%s5 + $0x2] sm:$0x1]
    %v2737 = vlaneseq
    %v2738 = vshrl.u32 %v2737, 7
    %v2739 = vsub.s32 0, %v2738
    %v2740 = vrot.slane %v2736, %v2739
    %v2742 = vsel %vm60, %v2729, 0
    %v2745 = vsel %vm60, %v2730, 0
    %2747 = vmatprep.subr.mxu0 0.0
    %2748 = vmatpush1.msra.mxu0 %v2732
    %2749 = vmatprep.subr.mxu0 0.0
    %2750 = vmatpush1.msra.mxu0 %v2733
    %2751 = vmatprep.subr.mxu0 0.0
    %2752 = vmatpush1.msra.mxu0 %v2734
    %2753 = vmatprep.subr.mxu0 0.0
    %2754 = vmatpush1.msra.mxu0 %v2735
    %2755 = vmatprep.subr.mxu0 0.0
    %2756 = vmatpush1.msra.mxu0 0.0
    %2757 = vmatprep.subr.mxu0 0.0
    %2758 = vmatpush1.msra.mxu0 0.0
    %2759 = vmatprep.subr.mxu0 0.0
    %2760 = vmatpush1.msra.mxu0 0.0
    %2761 = vmatprep.subr.mxu0 0.0
    %2762 = vmatpush1.msra.mxu0 0.0
    %2763 = vmatprep.subr.mxu0 0.0
    %2764 = vmatpush1.msra.mxu0 0.0
    %2765 = vmatprep.subr.mxu0 0.0
    %2766 = vmatpush1.msra.mxu0 0.0
    %2767 = vmatprep.subr.mxu0 0.0
    %2768 = vmatpush1.msra.mxu0 0.0
    %2769 = vmatprep.subr.mxu0 0.0
    %2770 = vmatpush1.msra.mxu0 0.0
    %2771 = vmatprep.subr.mxu0 0.0
    %2772 = vmatpush1.msra.mxu0 0.0
    %2773 = vmatprep.subr.mxu0 0.0
    %2774 = vmatpush1.msra.mxu0 0.0
    %2775 = vmatprep.subr.mxu0 0.0
    %2776 = vmatpush1.msra.mxu0 0.0
    %2777 = vmatprep.subr.mxu0 0.0
    %2778 = vmatpush1.msra.mxu0 0.0
    %2779 = vmatprep.subr.mxu0 0.0
    %2780 = vmatpush1.msra.mxu0 0.0
    %2781 = vmatprep.subr.mxu0 0.0
    %2782 = vmatpush1.msra.mxu0 0.0
    %2783 = vmatprep.subr.mxu0 0.0
    %2784 = vmatpush1.msra.mxu0 0.0
    %2785 = vmatprep.subr.mxu0 0.0
    %2786 = vmatpush1.msra.mxu0 0.0
    %2787 = vmatprep.subr.mxu0 0.0
    %2788 = vmatpush1.msra.mxu0 0.0
    %2789 = vmatprep.subr.mxu0 0.0
    %2790 = vmatpush1.msra.mxu0 0.0
    %2791 = vmatprep.subr.mxu0 0.0
    %2792 = vmatpush1.msra.mxu0 0.0
    %2793 = vmatprep.subr.mxu0 0.0
    %2794 = vmatpush1.msra.mxu0 0.0
    %2795 = vmatprep.subr.mxu0 0.0
    %2796 = vmatpush1.msra.mxu0 0.0
    %2797 = vmatprep.subr.mxu0 0.0
    %2798 = vmatpush1.msra.mxu0 0.0
    %2799 = vmatprep.subr.mxu0 0.0
    %2800 = vmatpush1.msra.mxu0 0.0
    %2801 = vmatprep.subr.mxu0 0.0
    %2802 = vmatpush1.msra.mxu0 0.0
    %2803 = vmatprep.subr.mxu0 0.0
    %2804 = vmatpush1.msra.mxu0 0.0
    %2805 = vmatprep.subr.mxu0 0.0
    %2806 = vmatpush1.msra.mxu0 0.0
    %2807 = vmatprep.subr.mxu0 0.0
    %2808 = vmatpush1.msra.mxu0 0.0
    %2809 = vmatprep.subr.mxu0 0.0
    %2810 = vmatpush1.msra.mxu0 0.0
    %2811 = vmatprep.mubr.f32.mxu0 0.0
    %2812 = vmatmul.mubr.f32.gmra.mrb[0].mxu0 %v2742
    %v2813 = vpop.f32.mrb[0].mxu0
    %v2814 = vadd.f32 %v2740, %v2813
    %v2815 = vpop.f32.mrb[0].mxu0
    %2816 = vmatprep.mubr.f32.mxu0 0.0
    %2817 = vmatmul.mubr.f32.gmra.mrb[0].mxu0 %v2745
    %v2818 = vpop.f32.mrb[0].mxu0
    %v2819 = vadd.f32 %v2740, %v2818
    %v2820 = vpop.f32.mrb[0].mxu0
    %2821 = vdwg.mxu0
    %2824 = vrot.lane.b32.xlu0 %v2814, 96
    %v2825 = vpop.permute.xlu0 %2824
    %2826 = vrot.lane.b32.xlu0 %v2819, 96
    %v2827 = vpop.permute.xlu0 %2826
    %v2828 = vsel %vm196, %v2814, 0
    %v2830 = vsel %vm196, %v2819, 0
    %v2832 = vsel %vm196, %v2825, 0
    %v2834 = vsel %vm196, %v2827, 0
    %2836 = vmatprep.subr.mxu0 0.0
    %2837 = vmatpush1.xpose.msra.mxu0 %v2832
    %2838 = vmatprep.subr.mxu0 0.0
    %2839 = vmatpush1.xpose.msra.mxu0 %v2834
    %2840 = vmatprep.subr.mxu0 0.0
    %2841 = vmatpush1.xpose.msra.mxu0 0.0
    %2842 = vmatprep.subr.mxu0 0.0
    %2843 = vmatpush1.xpose.msra.mxu0 0.0
    %2844 = vmatprep.subr.mxu0 0.0
    %2845 = vmatpush1.xpose.msra.mxu0 0.0
    %2846 = vmatprep.subr.mxu0 0.0
    %2847 = vmatpush1.xpose.msra.mxu0 0.0
    %2848 = vmatprep.subr.mxu0 0.0
    %2849 = vmatpush1.xpose.msra.mxu0 0.0
    %2850 = vmatprep.subr.mxu0 0.0
    %2851 = vmatpush1.xpose.msra.mxu0 0.0
    %2852 = vmatprep.subr.mxu0 0.0
    %2853 = vmatpush1.xpose.msra.mxu0 0.0
    %2854 = vmatprep.subr.mxu0 0.0
    %2855 = vmatpush1.xpose.msra.mxu0 0.0
    %2856 = vmatprep.subr.mxu0 0.0
    %2857 = vmatpush1.xpose.msra.mxu0 0.0
    %2858 = vmatprep.subr.mxu0 0.0
    %2859 = vmatpush1.xpose.msra.mxu0 0.0
    %2860 = vmatprep.subr.mxu0 0.0
    %2861 = vmatpush1.xpose.msra.mxu0 0.0
    %2862 = vmatprep.subr.mxu0 0.0
    %2863 = vmatpush1.xpose.msra.mxu0 0.0
    %2864 = vmatprep.subr.mxu0 0.0
    %2865 = vmatpush1.xpose.msra.mxu0 0.0
    %2866 = vmatprep.subr.mxu0 0.0
    %2867 = vmatpush1.xpose.msra.mxu0 0.0
    %2868 = vmatprep.subr.mxu0 0.0
    %2869 = vmatpush1.xpose.msra.mxu0 0.0
    %2870 = vmatprep.subr.mxu0 0.0
    %2871 = vmatpush1.xpose.msra.mxu0 0.0
    %2872 = vmatprep.subr.mxu0 0.0
    %2873 = vmatpush1.xpose.msra.mxu0 0.0
    %2874 = vmatprep.subr.mxu0 0.0
    %2875 = vmatpush1.xpose.msra.mxu0 0.0
    %2876 = vmatprep.subr.mxu0 0.0
    %2877 = vmatpush1.xpose.msra.mxu0 0.0
    %2878 = vmatprep.subr.mxu0 0.0
    %2879 = vmatpush1.xpose.msra.mxu0 0.0
    %2880 = vmatprep.subr.mxu0 0.0
    %2881 = vmatpush1.xpose.msra.mxu0 0.0
    %2882 = vmatprep.subr.mxu0 0.0
    %2883 = vmatpush1.xpose.msra.mxu0 0.0
    %2884 = vmatprep.subr.mxu0 0.0
    %2885 = vmatpush1.xpose.msra.mxu0 0.0
    %2886 = vmatprep.subr.mxu0 0.0
    %2887 = vmatpush1.xpose.msra.mxu0 0.0
    %2888 = vmatprep.subr.mxu0 0.0
    %2889 = vmatpush1.xpose.msra.mxu0 0.0
    %2890 = vmatprep.subr.mxu0 0.0
    %2891 = vmatpush1.xpose.msra.mxu0 0.0
    %2892 = vmatprep.subr.mxu0 0.0
    %2893 = vmatpush1.xpose.msra.mxu0 0.0
    %2894 = vmatprep.subr.mxu0 0.0
    %2895 = vmatpush1.xpose.msra.mxu0 0.0
    %2896 = vmatprep.subr.mxu0 0.0
    %2897 = vmatpush1.xpose.msra.mxu0 0.0
    %2898 = vmatprep.subr.mxu0 0.0
    %2899 = vmatpush1.xpose.msra.mxu0 0.0
    %2900 = vmatprep.mubr.f32.mxu0 0.0
    %2901 = vmatmul.mubr.f32.gmra.mrb[0].mxu0 %v2828
    %v2902 = vpop.f32.mrb[0].mxu0
    %v2903 = vadd.f32 0.0, %v2902
    %v2904 = vpop.f32.mrb[0].mxu0
    %2905 = vmatprep.mubr.f32.mxu0 0.0
    %2906 = vmatmul.mubr.f32.gmra.mrb[0].mxu0 %v2830
    %v2907 = vpop.f32.mrb[0].mxu0
    %v2908 = vadd.f32 0.0, %v2907
    %v2909 = vpop.f32.mrb[0].mxu0
    %2910 = vdwg.mxu0
    %v2911 = vmul.f32 %v2903, 0.35355338
    %v2912 = vmul.f32 %v2908, 0.35355338
    %v2913 = vadd.f32 %v2911, %v56
    %v2914 = vadd.f32 %v2912, %v57
    %v2915 = vsel %vm284, %v2913, -inf
    %2916 = vmax.xlane.f32.xlu0 %v2915
    %v2917 = vpop.xlane.xlu0 %2916
    %v2918 = vsel %vm284, %v2914, -inf
    %2919 = vmax.xlane.f32.xlu0 %v2918
    %v2920 = vpop.xlane.xlu0 %2919
    %v2921 = vsub.f32 %v2913, %v2917
    %v2922 = vsub.f32 %v2914, %v2920
    %v2923 = vmul.f32 %v2921, 1.442695
    %v2924 = vpow.pop %v2923
    %v2925 = vmul.f32 %v2922, 1.442695
    %v2926 = vpow.pop %v2925
    %v2927 = vsel %vm284, %v2924, 0.0
    %2928 = vadd.xlane.f32.xlu0 %v2927
    %v2929 = vpop.xlane.xlu0 %2928
    %v2930 = vsel %vm284, %v2926, 0.0
    %2931 = vadd.xlane.f32.xlu0 %v2930
    %v2932 = vpop.xlane.xlu0 %2931
    %v2933 = vrcp.pop %v2929
    %v2934 = vrcp.pop %v2932
    %v2935 = vmul.f32 %v2924, %v2933
    %v2936 = vmul.f32 %v2926, %v2934
    %2937 = vrot.lane.b32.xlu0 %v2814, 64
    %v2938 = vpop.permute.xlu0 %2937
    %2939 = vrot.lane.b32.xlu0 %v2819, 64
    %v2940 = vpop.permute.xlu0 %2939
    %v2944 = vsel %vm284, %v2935, 0
    %v2947 = vsel %vm284, %v2936, 0
    %2949 = vmatprep.subr.mxu0 0.0
    %2950 = vmatpush1.msra.mxu0 %v2938
    %2951 = vmatprep.subr.mxu0 0.0
    %2952 = vmatpush1.msra.mxu0 %v2940
    %2953 = vmatprep.subr.mxu0 0.0
    %2954 = vmatpush1.msra.mxu0 0.0
    %2955 = vmatprep.subr.mxu0 0.0
    %2956 = vmatpush1.msra.mxu0 0.0
    %2957 = vmatprep.subr.mxu0 0.0
    %2958 = vmatpush1.msra.mxu0 0.0
    %2959 = vmatprep.subr.mxu0 0.0
    %2960 = vmatpush1.msra.mxu0 0.0
    %2961 = vmatprep.subr.mxu0 0.0
    %2962 = vmatpush1.msra.mxu0 0.0
    %2963 = vmatprep.subr.mxu0 0.0
    %2964 = vmatpush1.msra.mxu0 0.0
    %2965 = vmatprep.subr.mxu0 0.0
    %2966 = vmatpush1.msra.mxu0 0.0
    %2967 = vmatprep.subr.mxu0 0.0
    %2968 = vmatpush1.msra.mxu0 0.0
    %2969 = vmatprep.subr.mxu0 0.0
    %2970 = vmatpush1.msra.mxu0 0.0
    %2971 = vmatprep.subr.mxu0 0.0
    %2972 = vmatpush1.msra.mxu0 0.0
    %2973 = vmatprep.subr.mxu0 0.0
    %2974 = vmatpush1.msra.mxu0 0.0
    %2975 = vmatprep.subr.mxu0 0.0
    %2976 = vmatpush1.msra.mxu0 0.0
    %2977 = vmatprep.subr.mxu0 0.0
    %2978 = vmatpush1.msra.mxu0 0.0
    %2979 = vmatprep.subr.mxu0 0.0
    %2980 = vmatpush1.msra.mxu0 0.0
    %2981 = vmatprep.subr.mxu0 0.0
    %2982 = vmatpush1.msra.mxu0 0.0
    %2983 = vmatprep.subr.mxu0 0.0
    %2984 = vmatpush1.msra.mxu0 0.0
    %2985 = vmatprep.subr.mxu0 0.0
    %2986 = vmatpush1.msra.mxu0 0.0
    %2987 = vmatprep.subr.mxu0 0.0
    %2988 = vmatpush1.msra.mxu0 0.0
    %2989 = vmatprep.subr.mxu0 0.0
    %2990 = vmatpush1.msra.mxu0 0.0
    %2991 = vmatprep.subr.mxu0 0.0
    %2992 = vmatpush1.msra.mxu0 0.0
    %2993 = vmatprep.subr.mxu0 0.0
    %2994 = vmatpush1.msra.mxu0 0.0
    %2995 = vmatprep.subr.mxu0 0.0
    %2996 = vmatpush1.msra.mxu0 0.0
    %2997 = vmatprep.subr.mxu0 0.0
    %2998 = vmatpush1.msra.mxu0 0.0
    %2999 = vmatprep.subr.mxu0 0.0
    %3000 = vmatpush1.msra.mxu0 0.0
    %3001 = vmatprep.subr.mxu0 0.0
    %3002 = vmatpush1.msra.mxu0 0.0
    %3003 = vmatprep.subr.mxu0 0.0
    %3004 = vmatpush1.msra.mxu0 0.0
    %3005 = vmatprep.subr.mxu0 0.0
    %3006 = vmatpush1.msra.mxu0 0.0
    %3007 = vmatprep.subr.mxu0 0.0
    %3008 = vmatpush1.msra.mxu0 0.0
    %3009 = vmatprep.subr.mxu0 0.0
    %3010 = vmatpush1.msra.mxu0 0.0
    %3011 = vmatprep.subr.mxu0 0.0
    %3012 = vmatpush1.msra.mxu0 0.0
    %3013 = vmatprep.mubr.f32.mxu0 0.0
    %3014 = vmatmul.mubr.f32.gmra.mrb[0].mxu0 %v2944
    %v3015 = vpop.f32.mrb[0].mxu0
    %v3016 = vadd.f32 0.0, %v3015
    %v3017 = vpop.f32.mrb[0].mxu0
    %3018 = vmatprep.mubr.f32.mxu0 0.0
    %3019 = vmatmul.mubr.f32.gmra.mrb[0].mxu0 %v2947
    %v3020 = vpop.f32.mrb[0].mxu0
    %v3021 = vadd.f32 0.0, %v3020
    %v3022 = vpop.f32.mrb[0].mxu0
    %3023 = vdwg.mxu0
    %3024 = vrot.lane.b32.xlu0 %v2814, 120
    %v3025 = vpop.permute.xlu0 %3024
    %3026 = vrot.lane.b32.xlu0 %v2819, 120
    %v3027 = vpop.permute.xlu0 %3026
    %3028 = vrot.lane.b32.xlu0 %v2814, 88
    %v3029 = vpop.permute.xlu0 %3028
    %3030 = vrot.lane.b32.xlu0 %v2819, 88
    %v3031 = vpop.permute.xlu0 %3030
    %v3032 = vsel %vm196, %v3025, 0
    %v3034 = vsel %vm196, %v3027, 0
    %v3036 = vsel %vm196, %v3029, 0
    %v3038 = vsel %vm196, %v3031, 0
    %3040 = vmatprep.subr.mxu0 0.0
    %3041 = vmatpush1.xpose.msra.mxu0 %v3036
    %3042 = vmatprep.subr.mxu0 0.0
    %3043 = vmatpush1.xpose.msra.mxu0 %v3038
    %3044 = vmatprep.subr.mxu0 0.0
    %3045 = vmatpush1.xpose.msra.mxu0 0.0
    %3046 = vmatprep.subr.mxu0 0.0
    %3047 = vmatpush1.xpose.msra.mxu0 0.0
    %3048 = vmatprep.subr.mxu0 0.0
    %3049 = vmatpush1.xpose.msra.mxu0 0.0
    %3050 = vmatprep.subr.mxu0 0.0
    %3051 = vmatpush1.xpose.msra.mxu0 0.0
    %3052 = vmatprep.subr.mxu0 0.0
    %3053 = vmatpush1.xpose.msra.mxu0 0.0
    %3054 = vmatprep.subr.mxu0 0.0
    %3055 = vmatpush1.xpose.msra.mxu0 0.0
    %3056 = vmatprep.subr.mxu0 0.0
    %3057 = vmatpush1.xpose.msra.mxu0 0.0
    %3058 = vmatprep.subr.mxu0 0.0
    %3059 = vmatpush1.xpose.msra.mxu0 0.0
    %3060 = vmatprep.subr.mxu0 0.0
    %3061 = vmatpush1.xpose.msra.mxu0 0.0
    %3062 = vmatprep.subr.mxu0 0.0
    %3063 = vmatpush1.xpose.msra.mxu0 0.0
    %3064 = vmatprep.subr.mxu0 0.0
    %3065 = vmatpush1.xpose.msra.mxu0 0.0
    %3066 = vmatprep.subr.mxu0 0.0
    %3067 = vmatpush1.xpose.msra.mxu0 0.0
    %3068 = vmatprep.subr.mxu0 0.0
    %3069 = vmatpush1.xpose.msra.mxu0 0.0
    %3070 = vmatprep.subr.mxu0 0.0
    %3071 = vmatpush1.xpose.msra.mxu0 0.0
    %3072 = vmatprep.subr.mxu0 0.0
    %3073 = vmatpush1.xpose.msra.mxu0 0.0
    %3074 = vmatprep.subr.mxu0 0.0
    %3075 = vmatpush1.xpose.msra.mxu0 0.0
    %3076 = vmatprep.subr.mxu0 0.0
    %3077 = vmatpush1.xpose.msra.mxu0 0.0
    %3078 = vmatprep.subr.mxu0 0.0
    %3079 = vmatpush1.xpose.msra.mxu0 0.0
    %3080 = vmatprep.subr.mxu0 0.0
    %3081 = vmatpush1.xpose.msra.mxu0 0.0
    %3082 = vmatprep.subr.mxu0 0.0
    %3083 = vmatpush1.xpose.msra.mxu0 0.0
    %3084 = vmatprep.subr.mxu0 0.0
    %3085 = vmatpush1.xpose.msra.mxu0 0.0
    %3086 = vmatprep.subr.mxu0 0.0
    %3087 = vmatpush1.xpose.msra.mxu0 0.0
    %3088 = vmatprep.subr.mxu0 0.0
    %3089 = vmatpush1.xpose.msra.mxu0 0.0
    %3090 = vmatprep.subr.mxu0 0.0
    %3091 = vmatpush1.xpose.msra.mxu0 0.0
    %3092 = vmatprep.subr.mxu0 0.0
    %3093 = vmatpush1.xpose.msra.mxu0 0.0
    %3094 = vmatprep.subr.mxu0 0.0
    %3095 = vmatpush1.xpose.msra.mxu0 0.0
    %3096 = vmatprep.subr.mxu0 0.0
    %3097 = vmatpush1.xpose.msra.mxu0 0.0
    %3098 = vmatprep.subr.mxu0 0.0
    %3099 = vmatpush1.xpose.msra.mxu0 0.0
    %3100 = vmatprep.subr.mxu0 0.0
    %3101 = vmatpush1.xpose.msra.mxu0 0.0
    %3102 = vmatprep.subr.mxu0 0.0
    %3103 = vmatpush1.xpose.msra.mxu0 0.0
    %3104 = vmatprep.mubr.f32.mxu0 0.0
    %3105 = vmatmul.mubr.f32.gmra.mrb[0].mxu0 %v3032
    %v3106 = vpop.f32.mrb[0].mxu0
    %v3107 = vadd.f32 0.0, %v3106
    %v3108 = vpop.f32.mrb[0].mxu0
    %3109 = vmatprep.mubr.f32.mxu0 0.0
    %3110 = vmatmul.mubr.f32.gmra.mrb[0].mxu0 %v3034
    %v3111 = vpop.f32.mrb[0].mxu0
    %v3112 = vadd.f32 0.0, %v3111
    %v3113 = vpop.f32.mrb[0].mxu0
    %3114 = vdwg.mxu0
    %v3115 = vmul.f32 %v3107, 0.35355338
    %v3116 = vmul.f32 %v3112, 0.35355338
    %v3117 = vadd.f32 %v3115, %v56
    %v3118 = vadd.f32 %v3116, %v57
    %v3119 = vsel %vm284, %v3117, -inf
    %3120 = vmax.xlane.f32.xlu0 %v3119
    %v3121 = vpop.xlane.xlu0 %3120
    %v3122 = vsel %vm284, %v3118, -inf
    %3123 = vmax.xlane.f32.xlu0 %v3122
    %v3124 = vpop.xlane.xlu0 %3123
    %v3125 = vsub.f32 %v3117, %v3121
    %v3126 = vsub.f32 %v3118, %v3124
    %v3127 = vmul.f32 %v3125, 1.442695
    %v3128 = vpow.pop %v3127
    %v3129 = vmul.f32 %v3126, 1.442695
    %v3130 = vpow.pop %v3129
    %v3131 = vsel %vm284, %v3128, 0.0
    %3132 = vadd.xlane.f32.xlu0 %v3131
    %v3133 = vpop.xlane.xlu0 %3132
    %v3134 = vsel %vm284, %v3130, 0.0
    %3135 = vadd.xlane.f32.xlu0 %v3134
    %v3136 = vpop.xlane.xlu0 %3135
    %v3137 = vrcp.pop %v3133
    %v3138 = vrcp.pop %v3136
    %v3139 = vmul.f32 %v3128, %v3137
    %v3140 = vmul.f32 %v3130, %v3138
    %3141 = vrot.lane.b32.xlu0 %v2814, 56
    %v3142 = vpop.permute.xlu0 %3141
    %3143 = vrot.lane.b32.xlu0 %v2819, 56
    %v3144 = vpop.permute.xlu0 %3143
    %v3148 = vsel %vm284, %v3139, 0
    %v3151 = vsel %vm284, %v3140, 0
    %3153 = vmatprep.subr.mxu0 0.0
    %3154 = vmatpush1.msra.mxu0 %v3142
    %3155 = vmatprep.subr.mxu0 0.0
    %3156 = vmatpush1.msra.mxu0 %v3144
    %3157 = vmatprep.subr.mxu0 0.0
    %3158 = vmatpush1.msra.mxu0 0.0
    %3159 = vmatprep.subr.mxu0 0.0
    %3160 = vmatpush1.msra.mxu0 0.0
    %3161 = vmatprep.subr.mxu0 0.0
    %3162 = vmatpush1.msra.mxu0 0.0
    %3163 = vmatprep.subr.mxu0 0.0
    %3164 = vmatpush1.msra.mxu0 0.0
    %3165 = vmatprep.subr.mxu0 0.0
    %3166 = vmatpush1.msra.mxu0 0.0
    %3167 = vmatprep.subr.mxu0 0.0
    %3168 = vmatpush1.msra.mxu0 0.0
    %3169 = vmatprep.subr.mxu0 0.0
    %3170 = vmatpush1.msra.mxu0 0.0
    %3171 = vmatprep.subr.mxu0 0.0
    %3172 = vmatpush1.msra.mxu0 0.0
    %3173 = vmatprep.subr.mxu0 0.0
    %3174 = vmatpush1.msra.mxu0 0.0
    %3175 = vmatprep.subr.mxu0 0.0
    %3176 = vmatpush1.msra.mxu0 0.0
    %3177 = vmatprep.subr.mxu0 0.0
    %3178 = vmatpush1.msra.mxu0 0.0
    %3179 = vmatprep.subr.mxu0 0.0
    %3180 = vmatpush1.msra.mxu0 0.0
    %3181 = vmatprep.subr.mxu0 0.0
    %3182 = vmatpush1.msra.mxu0 0.0
    %3183 = vmatprep.subr.mxu0 0.0
    %3184 = vmatpush1.msra.mxu0 0.0
    %3185 = vmatprep.subr.mxu0 0.0
    %3186 = vmatpush1.msra.mxu0 0.0
    %3187 = vmatprep.subr.mxu0 0.0
    %3188 = vmatpush1.msra.mxu0 0.0
    %3189 = vmatprep.subr.mxu0 0.0
    %3190 = vmatpush1.msra.mxu0 0.0
    %3191 = vmatprep.subr.mxu0 0.0
    %3192 = vmatpush1.msra.mxu0 0.0
    %3193 = vmatprep.subr.mxu0 0.0
    %3194 = vmatpush1.msra.mxu0 0.0
    %3195 = vmatprep.subr.mxu0 0.0
    %3196 = vmatpush1.msra.mxu0 0.0
    %3197 = vmatprep.subr.mxu0 0.0
    %3198 = vmatpush1.msra.mxu0 0.0
    %3199 = vmatprep.subr.mxu0 0.0
    %3200 = vmatpush1.msra.mxu0 0.0
    %3201 = vmatprep.subr.mxu0 0.0
    %3202 = vmatpush1.msra.mxu0 0.0
    %3203 = vmatprep.subr.mxu0 0.0
    %3204 = vmatpush1.msra.mxu0 0.0
    %3205 = vmatprep.subr.mxu0 0.0
    %3206 = vmatpush1.msra.mxu0 0.0
    %3207 = vmatprep.subr.mxu0 0.0
    %3208 = vmatpush1.msra.mxu0 0.0
    %3209 = vmatprep.subr.mxu0 0.0
    %3210 = vmatpush1.msra.mxu0 0.0
    %3211 = vmatprep.subr.mxu0 0.0
    %3212 = vmatpush1.msra.mxu0 0.0
    %3213 = vmatprep.subr.mxu0 0.0
    %3214 = vmatpush1.msra.mxu0 0.0
    %3215 = vmatprep.subr.mxu0 0.0
    %3216 = vmatpush1.msra.mxu0 0.0
    %3217 = vmatprep.mubr.f32.mxu0 0.0
    %3218 = vmatmul.mubr.f32.gmra.mrb[0].mxu0 %v3148
    %v3219 = vpop.f32.mrb[0].mxu0
    %v3220 = vadd.f32 0.0, %v3219
    %v3221 = vpop.f32.mrb[0].mxu0
    %3222 = vmatprep.mubr.f32.mxu0 0.0
    %3223 = vmatmul.mubr.f32.gmra.mrb[0].mxu0 %v3151
    %v3224 = vpop.f32.mrb[0].mxu0
    %v3225 = vadd.f32 0.0, %v3224
    %v3226 = vpop.f32.mrb[0].mxu0
    %3227 = vdwg.mxu0
    %3228 = vrot.lane.b32.xlu0 %v2814, 112
    %v3229 = vpop.permute.xlu0 %3228
    %3230 = vrot.lane.b32.xlu0 %v2819, 112
    %v3231 = vpop.permute.xlu0 %3230
    %3232 = vrot.lane.b32.xlu0 %v2814, 80
    %v3233 = vpop.permute.xlu0 %3232
    %3234 = vrot.lane.b32.xlu0 %v2819, 80
    %v3235 = vpop.permute.xlu0 %3234
    %v3236 = vsel %vm196, %v3229, 0
    %v3238 = vsel %vm196, %v3231, 0
    %v3240 = vsel %vm196, %v3233, 0
    %v3242 = vsel %vm196, %v3235, 0
    %3244 = vmatprep.subr.mxu0 0.0
    %3245 = vmatpush1.xpose.msra.mxu0 %v3240
    %3246 = vmatprep.subr.mxu0 0.0
    %3247 = vmatpush1.xpose.msra.mxu0 %v3242
    %3248 = vmatprep.subr.mxu0 0.0
    %3249 = vmatpush1.xpose.msra.mxu0 0.0
    %3250 = vmatprep.subr.mxu0 0.0
    %3251 = vmatpush1.xpose.msra.mxu0 0.0
    %3252 = vmatprep.subr.mxu0 0.0
    %3253 = vmatpush1.xpose.msra.mxu0 0.0
    %3254 = vmatprep.subr.mxu0 0.0
    %3255 = vmatpush1.xpose.msra.mxu0 0.0
    %3256 = vmatprep.subr.mxu0 0.0
    %3257 = vmatpush1.xpose.msra.mxu0 0.0
    %3258 = vmatprep.subr.mxu0 0.0
    %3259 = vmatpush1.xpose.msra.mxu0 0.0
    %3260 = vmatprep.subr.mxu0 0.0
    %3261 = vmatpush1.xpose.msra.mxu0 0.0
    %3262 = vmatprep.subr.mxu0 0.0
    %3263 = vmatpush1.xpose.msra.mxu0 0.0
    %3264 = vmatprep.subr.mxu0 0.0
    %3265 = vmatpush1.xpose.msra.mxu0 0.0
    %3266 = vmatprep.subr.mxu0 0.0
    %3267 = vmatpush1.xpose.msra.mxu0 0.0
    %3268 = vmatprep.subr.mxu0 0.0
    %3269 = vmatpush1.xpose.msra.mxu0 0.0
    %3270 = vmatprep.subr.mxu0 0.0
    %3271 = vmatpush1.xpose.msra.mxu0 0.0
    %3272 = vmatprep.subr.mxu0 0.0
    %3273 = vmatpush1.xpose.msra.mxu0 0.0
    %3274 = vmatprep.subr.mxu0 0.0
    %3275 = vmatpush1.xpose.msra.mxu0 0.0
    %3276 = vmatprep.subr.mxu0 0.0
    %3277 = vmatpush1.xpose.msra.mxu0 0.0
    %3278 = vmatprep.subr.mxu0 0.0
    %3279 = vmatpush1.xpose.msra.mxu0 0.0
    %3280 = vmatprep.subr.mxu0 0.0
    %3281 = vmatpush1.xpose.msra.mxu0 0.0
    %3282 = vmatprep.subr.mxu0 0.0
    %3283 = vmatpush1.xpose.msra.mxu0 0.0
    %3284 = vmatprep.subr.mxu0 0.0
    %3285 = vmatpush1.xpose.msra.mxu0 0.0
    %3286 = vmatprep.subr.mxu0 0.0
    %3287 = vmatpush1.xpose.msra.mxu0 0.0
    %3288 = vmatprep.subr.mxu0 0.0
    %3289 = vmatpush1.xpose.msra.mxu0 0.0
    %3290 = vmatprep.subr.mxu0 0.0
    %3291 = vmatpush1.xpose.msra.mxu0 0.0
    %3292 = vmatprep.subr.mxu0 0.0
    %3293 = vmatpush1.xpose.msra.mxu0 0.0
    %3294 = vmatprep.subr.mxu0 0.0
    %3295 = vmatpush1.xpose.msra.mxu0 0.0
    %3296 = vmatprep.subr.mxu0 0.0
    %3297 = vmatpush1.xpose.msra.mxu0 0.0
    %3298 = vmatprep.subr.mxu0 0.0
    %3299 = vmatpush1.xpose.msra.mxu0 0.0
    %3300 = vmatprep.subr.mxu0 0.0
    %3301 = vmatpush1.xpose.msra.mxu0 0.0
    %3302 = vmatprep.subr.mxu0 0.0
    %3303 = vmatpush1.xpose.msra.mxu0 0.0
    %3304 = vmatprep.subr.mxu0 0.0
    %3305 = vmatpush1.xpose.msra.mxu0 0.0
    %3306 = vmatprep.subr.mxu0 0.0
    %3307 = vmatpush1.xpose.msra.mxu0 0.0
    %3308 = vmatprep.mubr.f32.mxu0 0.0
    %3309 = vmatmul.mubr.f32.gmra.mrb[0].mxu0 %v3236
    %v3310 = vpop.f32.mrb[0].mxu0
    %v3311 = vadd.f32 0.0, %v3310
    %v3312 = vpop.f32.mrb[0].mxu0
    %3313 = vmatprep.mubr.f32.mxu0 0.0
    %3314 = vmatmul.mubr.f32.gmra.mrb[0].mxu0 %v3238
    %v3315 = vpop.f32.mrb[0].mxu0
    %v3316 = vadd.f32 0.0, %v3315
    %v3317 = vpop.f32.mrb[0].mxu0
    %3318 = vdwg.mxu0
    %v3319 = vmul.f32 %v3311, 0.35355338
    %v3320 = vmul.f32 %v3316, 0.35355338
    %v3321 = vadd.f32 %v3319, %v56
    %v3322 = vadd.f32 %v3320, %v57
    %v3323 = vsel %vm284, %v3321, -inf
    %3324 = vmax.xlane.f32.xlu0 %v3323
    %v3325 = vpop.xlane.xlu0 %3324
    %v3326 = vsel %vm284, %v3322, -inf
    %3327 = vmax.xlane.f32.xlu0 %v3326
    %v3328 = vpop.xlane.xlu0 %3327
    %v3329 = vsub.f32 %v3321, %v3325
    %v3330 = vsub.f32 %v3322, %v3328
    %v3331 = vmul.f32 %v3329, 1.442695
    %v3332 = vpow.pop %v3331
    %v3333 = vmul.f32 %v3330, 1.442695
    %v3334 = vpow.pop %v3333
    %v3335 = vsel %vm284, %v3332, 0.0
    %3336 = vadd.xlane.f32.xlu0 %v3335
    %v3337 = vpop.xlane.xlu0 %3336
    %v3338 = vsel %vm284, %v3334, 0.0
    %3339 = vadd.xlane.f32.xlu0 %v3338
    %v3340 = vpop.xlane.xlu0 %3339
    %v3341 = vrcp.pop %v3337
    %v3342 = vrcp.pop %v3340
    %v3343 = vmul.f32 %v3332, %v3341
    %v3344 = vmul.f32 %v3334, %v3342
    %3345 = vrot.lane.b32.xlu0 %v2814, 48
    %v3346 = vpop.permute.xlu0 %3345
    %3347 = vrot.lane.b32.xlu0 %v2819, 48
    %v3348 = vpop.permute.xlu0 %3347
    %v3352 = vsel %vm284, %v3343, 0
    %v3355 = vsel %vm284, %v3344, 0
    %3357 = vmatprep.subr.mxu0 0.0
    %3358 = vmatpush1.msra.mxu0 %v3346
    %3359 = vmatprep.subr.mxu0 0.0
    %3360 = vmatpush1.msra.mxu0 %v3348
    %3361 = vmatprep.subr.mxu0 0.0
    %3362 = vmatpush1.msra.mxu0 0.0
    %3363 = vmatprep.subr.mxu0 0.0
    %3364 = vmatpush1.msra.mxu0 0.0
    %3365 = vmatprep.subr.mxu0 0.0
    %3366 = vmatpush1.msra.mxu0 0.0
    %3367 = vmatprep.subr.mxu0 0.0
    %3368 = vmatpush1.msra.mxu0 0.0
    %3369 = vmatprep.subr.mxu0 0.0
    %3370 = vmatpush1.msra.mxu0 0.0
    %3371 = vmatprep.subr.mxu0 0.0
    %3372 = vmatpush1.msra.mxu0 0.0
    %3373 = vmatprep.subr.mxu0 0.0
    %3374 = vmatpush1.msra.mxu0 0.0
    %3375 = vmatprep.subr.mxu0 0.0
    %3376 = vmatpush1.msra.mxu0 0.0
    %3377 = vmatprep.subr.mxu0 0.0
    %3378 = vmatpush1.msra.mxu0 0.0
    %3379 = vmatprep.subr.mxu0 0.0
    %3380 = vmatpush1.msra.mxu0 0.0
    %3381 = vmatprep.subr.mxu0 0.0
    %3382 = vmatpush1.msra.mxu0 0.0
    %3383 = vmatprep.subr.mxu0 0.0
    %3384 = vmatpush1.msra.mxu0 0.0
    %3385 = vmatprep.subr.mxu0 0.0
    %3386 = vmatpush1.msra.mxu0 0.0
    %3387 = vmatprep.subr.mxu0 0.0
    %3388 = vmatpush1.msra.mxu0 0.0
    %3389 = vmatprep.subr.mxu0 0.0
    %3390 = vmatpush1.msra.mxu0 0.0
    %3391 = vmatprep.subr.mxu0 0.0
    %3392 = vmatpush1.msra.mxu0 0.0
    %3393 = vmatprep.subr.mxu0 0.0
    %3394 = vmatpush1.msra.mxu0 0.0
    %3395 = vmatprep.subr.mxu0 0.0
    %3396 = vmatpush1.msra.mxu0 0.0
    %3397 = vmatprep.subr.mxu0 0.0
    %3398 = vmatpush1.msra.mxu0 0.0
    %3399 = vmatprep.subr.mxu0 0.0
    %3400 = vmatpush1.msra.mxu0 0.0
    %3401 = vmatprep.subr.mxu0 0.0
    %3402 = vmatpush1.msra.mxu0 0.0
    %3403 = vmatprep.subr.mxu0 0.0
    %3404 = vmatpush1.msra.mxu0 0.0
    %3405 = vmatprep.subr.mxu0 0.0
    %3406 = vmatpush1.msra.mxu0 0.0
    %3407 = vmatprep.subr.mxu0 0.0
    %3408 = vmatpush1.msra.mxu0 0.0
    %3409 = vmatprep.subr.mxu0 0.0
    %3410 = vmatpush1.msra.mxu0 0.0
    %3411 = vmatprep.subr.mxu0 0.0
    %3412 = vmatpush1.msra.mxu0 0.0
    %3413 = vmatprep.subr.mxu0 0.0
    %3414 = vmatpush1.msra.mxu0 0.0
    %3415 = vmatprep.subr.mxu0 0.0
    %3416 = vmatpush1.msra.mxu0 0.0
    %3417 = vmatprep.subr.mxu0 0.0
    %3418 = vmatpush1.msra.mxu0 0.0
    %3419 = vmatprep.subr.mxu0 0.0
    %3420 = vmatpush1.msra.mxu0 0.0
    %3421 = vmatprep.mubr.f32.mxu0 0.0
    %3422 = vmatmul.mubr.f32.gmra.mrb[0].mxu0 %v3352
    %v3423 = vpop.f32.mrb[0].mxu0
    %v3424 = vadd.f32 0.0, %v3423
    %v3425 = vpop.f32.mrb[0].mxu0
    %3426 = vmatprep.mubr.f32.mxu0 0.0
    %3427 = vmatmul.mubr.f32.gmra.mrb[0].mxu0 %v3355
    %v3428 = vpop.f32.mrb[0].mxu0
    %v3429 = vadd.f32 0.0, %v3428
    %v3430 = vpop.f32.mrb[0].mxu0
    %3431 = vdwg.mxu0
    %3432 = vrot.lane.b32.xlu0 %v2814, 104
    %v3433 = vpop.permute.xlu0 %3432
    %3434 = vrot.lane.b32.xlu0 %v2819, 104
    %v3435 = vpop.permute.xlu0 %3434
    %3436 = vrot.lane.b32.xlu0 %v2814, 72
    %v3437 = vpop.permute.xlu0 %3436
    %3438 = vrot.lane.b32.xlu0 %v2819, 72
    %v3439 = vpop.permute.xlu0 %3438
    %v3440 = vsel %vm196, %v3433, 0
    %v3442 = vsel %vm196, %v3435, 0
    %v3444 = vsel %vm196, %v3437, 0
    %v3446 = vsel %vm196, %v3439, 0
    %3448 = vmatprep.subr.mxu0 0.0
    %3449 = vmatpush1.xpose.msra.mxu0 %v3444
    %3450 = vmatprep.subr.mxu0 0.0
    %3451 = vmatpush1.xpose.msra.mxu0 %v3446
    %3452 = vmatprep.subr.mxu0 0.0
    %3453 = vmatpush1.xpose.msra.mxu0 0.0
    %3454 = vmatprep.subr.mxu0 0.0
    %3455 = vmatpush1.xpose.msra.mxu0 0.0
    %3456 = vmatprep.subr.mxu0 0.0
    %3457 = vmatpush1.xpose.msra.mxu0 0.0
    %3458 = vmatprep.subr.mxu0 0.0
    %3459 = vmatpush1.xpose.msra.mxu0 0.0
    %3460 = vmatprep.subr.mxu0 0.0
    %3461 = vmatpush1.xpose.msra.mxu0 0.0
    %3462 = vmatprep.subr.mxu0 0.0
    %3463 = vmatpush1.xpose.msra.mxu0 0.0
    %3464 = vmatprep.subr.mxu0 0.0
    %3465 = vmatpush1.xpose.msra.mxu0 0.0
    %3466 = vmatprep.subr.mxu0 0.0
    %3467 = vmatpush1.xpose.msra.mxu0 0.0
    %3468 = vmatprep.subr.mxu0 0.0
    %3469 = vmatpush1.xpose.msra.mxu0 0.0
    %3470 = vmatprep.subr.mxu0 0.0
    %3471 = vmatpush1.xpose.msra.mxu0 0.0
    %3472 = vmatprep.subr.mxu0 0.0
    %3473 = vmatpush1.xpose.msra.mxu0 0.0
    %3474 = vmatprep.subr.mxu0 0.0
    %3475 = vmatpush1.xpose.msra.mxu0 0.0
    %3476 = vmatprep.subr.mxu0 0.0
    %3477 = vmatpush1.xpose.msra.mxu0 0.0
    %3478 = vmatprep.subr.mxu0 0.0
    %3479 = vmatpush1.xpose.msra.mxu0 0.0
    %3480 = vmatprep.subr.mxu0 0.0
    %3481 = vmatpush1.xpose.msra.mxu0 0.0
    %3482 = vmatprep.subr.mxu0 0.0
    %3483 = vmatpush1.xpose.msra.mxu0 0.0
    %3484 = vmatprep.subr.mxu0 0.0
    %3485 = vmatpush1.xpose.msra.mxu0 0.0
    %3486 = vmatprep.subr.mxu0 0.0
    %3487 = vmatpush1.xpose.msra.mxu0 0.0
    %3488 = vmatprep.subr.mxu0 0.0
    %3489 = vmatpush1.xpose.msra.mxu0 0.0
    %3490 = vmatprep.subr.mxu0 0.0
    %3491 = vmatpush1.xpose.msra.mxu0 0.0
    %3492 = vmatprep.subr.mxu0 0.0
    %3493 = vmatpush1.xpose.msra.mxu0 0.0
    %3494 = vmatprep.subr.mxu0 0.0
    %3495 = vmatpush1.xpose.msra.mxu0 0.0
    %3496 = vmatprep.subr.mxu0 0.0
    %3497 = vmatpush1.xpose.msra.mxu0 0.0
    %3498 = vmatprep.subr.mxu0 0.0
    %3499 = vmatpush1.xpose.msra.mxu0 0.0
    %3500 = vmatprep.subr.mxu0 0.0
    %3501 = vmatpush1.xpose.msra.mxu0 0.0
    %3502 = vmatprep.subr.mxu0 0.0
    %3503 = vmatpush1.xpose.msra.mxu0 0.0
    %3504 = vmatprep.subr.mxu0 0.0
    %3505 = vmatpush1.xpose.msra.mxu0 0.0
    %3506 = vmatprep.subr.mxu0 0.0
    %3507 = vmatpush1.xpose.msra.mxu0 0.0
    %3508 = vmatprep.subr.mxu0 0.0
    %3509 = vmatpush1.xpose.msra.mxu0 0.0
    %3510 = vmatprep.subr.mxu0 0.0
    %3511 = vmatpush1.xpose.msra.mxu0 0.0
    %3512 = vmatprep.mubr.f32.mxu0 0.0
    %3513 = vmatmul.mubr.f32.gmra.mrb[0].mxu0 %v3440
    %v3514 = vpop.f32.mrb[0].mxu0
    %v3515 = vadd.f32 0.0, %v3514
    %v3516 = vpop.f32.mrb[0].mxu0
    %3517 = vmatprep.mubr.f32.mxu0 0.0
    %3518 = vmatmul.mubr.f32.gmra.mrb[0].mxu0 %v3442
    %v3519 = vpop.f32.mrb[0].mxu0
    %v3520 = vadd.f32 0.0, %v3519
    %v3521 = vpop.f32.mrb[0].mxu0
    %3522 = vdwg.mxu0
    %v3523 = vmul.f32 %v3515, 0.35355338
    %v3524 = vmul.f32 %v3520, 0.35355338
    %v3525 = vadd.f32 %v3523, %v56
    %v3526 = vadd.f32 %v3524, %v57
    %v3527 = vsel %vm284, %v3525, -inf
    %3528 = vmax.xlane.f32.xlu0 %v3527
    %v3529 = vpop.xlane.xlu0 %3528
    %v3530 = vsel %vm284, %v3526, -inf
    %3531 = vmax.xlane.f32.xlu0 %v3530
    %v3532 = vpop.xlane.xlu0 %3531
    %v3533 = vsub.f32 %v3525, %v3529
    %v3534 = vsub.f32 %v3526, %v3532
    %v3535 = vmul.f32 %v3533, 1.442695
    %v3536 = vpow.pop %v3535
    %v3537 = vmul.f32 %v3534, 1.442695
    %v3538 = vpow.pop %v3537
    %v3539 = vsel %vm284, %v3536, 0.0
    %3540 = vadd.xlane.f32.xlu0 %v3539
    %v3541 = vpop.xlane.xlu0 %3540
    %v3542 = vsel %vm284, %v3538, 0.0
    %3543 = vadd.xlane.f32.xlu0 %v3542
    %v3544 = vpop.xlane.xlu0 %3543
    %v3545 = vrcp.pop %v3541
    %v3546 = vrcp.pop %v3544
    %v3547 = vmul.f32 %v3536, %v3545
    %v3548 = vmul.f32 %v3538, %v3546
    %3549 = vrot.lane.b32.xlu0 %v2814, 40
    %v3550 = vpop.permute.xlu0 %3549
    %3551 = vrot.lane.b32.xlu0 %v2819, 40
    %v3552 = vpop.permute.xlu0 %3551
    %v3556 = vsel %vm284, %v3547, 0
    %v3559 = vsel %vm284, %v3548, 0
    %3561 = vmatprep.subr.mxu0 0.0
    %3562 = vmatpush1.msra.mxu0 %v3550
    %3563 = vmatprep.subr.mxu0 0.0
    %3564 = vmatpush1.msra.mxu0 %v3552
    %3565 = vmatprep.subr.mxu0 0.0
    %3566 = vmatpush1.msra.mxu0 0.0
    %3567 = vmatprep.subr.mxu0 0.0
    %3568 = vmatpush1.msra.mxu0 0.0
    %3569 = vmatprep.subr.mxu0 0.0
    %3570 = vmatpush1.msra.mxu0 0.0
    %3571 = vmatprep.subr.mxu0 0.0
    %3572 = vmatpush1.msra.mxu0 0.0
    %3573 = vmatprep.subr.mxu0 0.0
    %3574 = vmatpush1.msra.mxu0 0.0
    %3575 = vmatprep.subr.mxu0 0.0
    %3576 = vmatpush1.msra.mxu0 0.0
    %3577 = vmatprep.subr.mxu0 0.0
    %3578 = vmatpush1.msra.mxu0 0.0
    %3579 = vmatprep.subr.mxu0 0.0
    %3580 = vmatpush1.msra.mxu0 0.0
    %3581 = vmatprep.subr.mxu0 0.0
    %3582 = vmatpush1.msra.mxu0 0.0
    %3583 = vmatprep.subr.mxu0 0.0
    %3584 = vmatpush1.msra.mxu0 0.0
    %3585 = vmatprep.subr.mxu0 0.0
    %3586 = vmatpush1.msra.mxu0 0.0
    %3587 = vmatprep.subr.mxu0 0.0
    %3588 = vmatpush1.msra.mxu0 0.0
    %3589 = vmatprep.subr.mxu0 0.0
    %3590 = vmatpush1.msra.mxu0 0.0
    %3591 = vmatprep.subr.mxu0 0.0
    %3592 = vmatpush1.msra.mxu0 0.0
    %3593 = vmatprep.subr.mxu0 0.0
    %3594 = vmatpush1.msra.mxu0 0.0
    %3595 = vmatprep.subr.mxu0 0.0
    %3596 = vmatpush1.msra.mxu0 0.0
    %3597 = vmatprep.subr.mxu0 0.0
    %3598 = vmatpush1.msra.mxu0 0.0
    %3599 = vmatprep.subr.mxu0 0.0
    %3600 = vmatpush1.msra.mxu0 0.0
    %3601 = vmatprep.subr.mxu0 0.0
    %3602 = vmatpush1.msra.mxu0 0.0
    %3603 = vmatprep.subr.mxu0 0.0
    %3604 = vmatpush1.msra.mxu0 0.0
    %3605 = vmatprep.subr.mxu0 0.0
    %3606 = vmatpush1.msra.mxu0 0.0
    %3607 = vmatprep.subr.mxu0 0.0
    %3608 = vmatpush1.msra.mxu0 0.0
    %3609 = vmatprep.subr.mxu0 0.0
    %3610 = vmatpush1.msra.mxu0 0.0
    %3611 = vmatprep.subr.mxu0 0.0
    %3612 = vmatpush1.msra.mxu0 0.0
    %3613 = vmatprep.subr.mxu0 0.0
    %3614 = vmatpush1.msra.mxu0 0.0
    %3615 = vmatprep.subr.mxu0 0.0
    %3616 = vmatpush1.msra.mxu0 0.0
    %3617 = vmatprep.subr.mxu0 0.0
    %3618 = vmatpush1.msra.mxu0 0.0
    %3619 = vmatprep.subr.mxu0 0.0
    %3620 = vmatpush1.msra.mxu0 0.0
    %3621 = vmatprep.subr.mxu0 0.0
    %3622 = vmatpush1.msra.mxu0 0.0
    %3623 = vmatprep.subr.mxu0 0.0
    %3624 = vmatpush1.msra.mxu0 0.0
    %3625 = vmatprep.mubr.f32.mxu0 0.0
    %3626 = vmatmul.mubr.f32.gmra.mrb[0].mxu0 %v3556
    %v3627 = vpop.f32.mrb[0].mxu0
    %v3628 = vadd.f32 0.0, %v3627
    %v3629 = vpop.f32.mrb[0].mxu0
    %3630 = vmatprep.mubr.f32.mxu0 0.0
    %3631 = vmatmul.mubr.f32.gmra.mrb[0].mxu0 %v3559
    %v3632 = vpop.f32.mrb[0].mxu0
    %v3633 = vadd.f32 0.0, %v3632
    %v3634 = vpop.f32.mrb[0].mxu0
    %3635 = vdwg.mxu0
    %3638 = vrot.lane.b32.xlu0 %v3220, 8
    %v3639 = vpop.permute.xlu0 %3638
    %3640 = vrot.lane.b32.xlu0 %v3225, 8
    %v3641 = vpop.permute.xlu0 %3640
    %3646 = vrot.lane.b32.xlu0 %v3424, 16
    %v3647 = vpop.permute.xlu0 %3646
    %3648 = vrot.lane.b32.xlu0 %v3429, 16
    %v3649 = vpop.permute.xlu0 %3648
    %3654 = vrot.lane.b32.xlu0 %v3628, 24
    %v3655 = vpop.permute.xlu0 %3654
    %3656 = vrot.lane.b32.xlu0 %v3633, 24
    %v3657 = vpop.permute.xlu0 %3656
    %v3660 = vsel %vm196, %v3016, %v3639
    %v3661 = vsel %vm196, %v3021, %v3641
    %v3662 = vsel %vm284, %v3660, %v3647
    %v3663 = vsel %vm284, %v3661, %v3649
    %v3664 = vsel %vm1034, %v3662, %v3655
    %v3665 = vsel %vm1034, %v3663, %v3657
    %s3666 = scalar_lea.vmem %s6, 64
    %v3667 = vld [vmem:[%s3666] sm:$0xff]
    %v3668 = vld [vmem:[%s3666 + $0x8] sm:$0xff]
    %v3669 = vld [vmem:[%s3666 + $0x10] sm:$0xff]
    %v3670 = vld [vmem:[%s3666 + $0x18] sm:$0xff]
    %v3671 = vld [vmem:[%s7 + $0x2] sm:$0x1]
    %v3672 = vlaneseq
    %v3673 = vshrl.u32 %v3672, 7
    %v3674 = vsub.s32 0, %v3673
    %v3675 = vrot.slane %v3671, %v3674
    %v3677 = vsel %vm60, %v3664, 0
    %v3680 = vsel %vm60, %v3665, 0
    %3682 = vmatprep.subr.mxu0 0.0
    %3683 = vmatpush1.msra.mxu0 %v3667
    %3684 = vmatprep.subr.mxu0 0.0
    %3685 = vmatpush1.msra.mxu0 %v3668
    %3686 = vmatprep.subr.mxu0 0.0
    %3687 = vmatpush1.msra.mxu0 %v3669
    %3688 = vmatprep.subr.mxu0 0.0
    %3689 = vmatpush1.msra.mxu0 %v3670
    %3690 = vmatprep.subr.mxu0 0.0
    %3691 = vmatpush1.msra.mxu0 0.0
    %3692 = vmatprep.subr.mxu0 0.0
    %3693 = vmatpush1.msra.mxu0 0.0
    %3694 = vmatprep.subr.mxu0 0.0
    %3695 = vmatpush1.msra.mxu0 0.0
    %3696 = vmatprep.subr.mxu0 0.0
    %3697 = vmatpush1.msra.mxu0 0.0
    %3698 = vmatprep.subr.mxu0 0.0
    %3699 = vmatpush1.msra.mxu0 0.0
    %3700 = vmatprep.subr.mxu0 0.0
    %3701 = vmatpush1.msra.mxu0 0.0
    %3702 = vmatprep.subr.mxu0 0.0
    %3703 = vmatpush1.msra.mxu0 0.0
    %3704 = vmatprep.subr.mxu0 0.0
    %3705 = vmatpush1.msra.mxu0 0.0
    %3706 = vmatprep.subr.mxu0 0.0
    %3707 = vmatpush1.msra.mxu0 0.0
    %3708 = vmatprep.subr.mxu0 0.0
    %3709 = vmatpush1.msra.mxu0 0.0
    %3710 = vmatprep.subr.mxu0 0.0
    %3711 = vmatpush1.msra.mxu0 0.0
    %3712 = vmatprep.subr.mxu0 0.0
    %3713 = vmatpush1.msra.mxu0 0.0
    %3714 = vmatprep.subr.mxu0 0.0
    %3715 = vmatpush1.msra.mxu0 0.0
    %3716 = vmatprep.subr.mxu0 0.0
    %3717 = vmatpush1.msra.mxu0 0.0
    %3718 = vmatprep.subr.mxu0 0.0
    %3719 = vmatpush1.msra.mxu0 0.0
    %3720 = vmatprep.subr.mxu0 0.0
    %3721 = vmatpush1.msra.mxu0 0.0
    %3722 = vmatprep.subr.mxu0 0.0
    %3723 = vmatpush1.msra.mxu0 0.0
    %3724 = vmatprep.subr.mxu0 0.0
    %3725 = vmatpush1.msra.mxu0 0.0
    %3726 = vmatprep.subr.mxu0 0.0
    %3727 = vmatpush1.msra.mxu0 0.0
    %3728 = vmatprep.subr.mxu0 0.0
    %3729 = vmatpush1.msra.mxu0 0.0
    %3730 = vmatprep.subr.mxu0 0.0
    %3731 = vmatpush1.msra.mxu0 0.0
    %3732 = vmatprep.subr.mxu0 0.0
    %3733 = vmatpush1.msra.mxu0 0.0
    %3734 = vmatprep.subr.mxu0 0.0
    %3735 = vmatpush1.msra.mxu0 0.0
    %3736 = vmatprep.subr.mxu0 0.0
    %3737 = vmatpush1.msra.mxu0 0.0
    %3738 = vmatprep.subr.mxu0 0.0
    %3739 = vmatpush1.msra.mxu0 0.0
    %3740 = vmatprep.subr.mxu0 0.0
    %3741 = vmatpush1.msra.mxu0 0.0
    %3742 = vmatprep.subr.mxu0 0.0
    %3743 = vmatpush1.msra.mxu0 0.0
    %3744 = vmatprep.subr.mxu0 0.0
    %3745 = vmatpush1.msra.mxu0 0.0
    %3746 = vmatprep.mubr.f32.mxu0 0.0
    %3747 = vmatmul.mubr.f32.gmra.mrb[0].mxu0 %v3677
    %v3748 = vpop.f32.mrb[0].mxu0
    %v3749 = vadd.f32 %v3675, %v3748
    %v3750 = vpop.f32.mrb[0].mxu0
    %3751 = vmatprep.mubr.f32.mxu0 0.0
    %3752 = vmatmul.mubr.f32.gmra.mrb[0].mxu0 %v3680
    %v3753 = vpop.f32.mrb[0].mxu0
    %v3754 = vadd.f32 %v3675, %v3753
    %v3755 = vpop.f32.mrb[0].mxu0
    %3756 = vdwg.mxu0
    %v3757 = vadd.f32 %v2689, %v3749
    %v3758 = vadd.f32 %v2690, %v3754
    %v3759 = vld [vmem:[%s8 + $0x2] sm:$0x1]
    %v3760 = vld [vmem:[%s9 + $0x2] sm:$0x1]
    %v3761 = vsel %vm60, %v3757, 0.0
    %3762 = vadd.xlane.f32.xlu0 %v3761
    %v3763 = vpop.xlane.xlu0 %3762
    %v3764 = vsel %vm60, %v3758, 0.0
    %3765 = vadd.xlane.f32.xlu0 %v3764
    %v3766 = vpop.xlane.xlu0 %3765
    %v3767 = vmul.f32 %v3763, %v67
    %v3768 = vmul.f32 %v3766, %v67
    %v3769 = vsub.f32 %v3757, %v3767
    %v3770 = vsub.f32 %v3758, %v3768
    %v3771 = vmul.f32 %v3769, %v3769
    %v3772 = vmul.f32 %v3770, %v3770
    %v3773 = vsel %vm60, %v3771, 0.0
    %3774 = vadd.xlane.f32.xlu0 %v3773
    %v3775 = vpop.xlane.xlu0 %3774
    %v3776 = vsel %vm60, %v3772, 0.0
    %3777 = vadd.xlane.f32.xlu0 %v3776
    %v3778 = vpop.xlane.xlu0 %3777
    %v3779 = vmul.f32 %v3775, %v67
    %v3780 = vmul.f32 %v3778, %v67
    %v3781 = vadd.f32 %v3779, 1e-05
    %v3782 = vadd.f32 %v3780, 1e-05
    %v3783 = vrsqrt.pop %v3781
    %v3784 = vrsqrt.pop %v3782
    %v3785 = vmul.f32 %v3769, %v3783
    %v3786 = vmul.f32 %v3770, %v3784
    %v3787 = vlaneseq
    %v3788 = vshrl.u32 %v3787, 7
    %v3789 = vsub.s32 0, %v3788
    %v3790 = vrot.slane %v3759, %v3789
    %v3791 = vmul.f32 %v3785, %v3790
    %v3792 = vmul.f32 %v3786, %v3790
    %v3793 = vlaneseq
    %v3794 = vshrl.u32 %v3793, 7
    %v3795 = vsub.s32 0, %v3794
    %v3796 = vrot.slane %v3760, %v3795
    %v3797 = vadd.f32 %v3791, %v3796
    %v3798 = vadd.f32 %v3792, %v3796
    %s3799 = scalar_lea.vmem %s10, 64
    %v3800 = vld [vmem:[%s3799] sm:$0xff]
    %v3801 = vld [vmem:[%s3799 + $0x8] sm:$0xff]
    %v3802 = vld [vmem:[%s3799 + $0x10] sm:$0xff]
    %v3803 = vld [vmem:[%s3799 + $0x18] sm:$0xff]
    %v3804 = vld [vmem:[%s11 + $0x2] sm:$0x1]
    %v3805 = vlaneseq
    %v3806 = vshrl.u32 %v3805, 7
    %v3807 = vsub.s32 0, %v3806
    %v3808 = vrot.slane %v3804, %v3807
    %v3810 = vsel %vm60, %v3797, 0
    %v3813 = vsel %vm60, %v3798, 0
    %3815 = vmatprep.subr.mxu0 0.0
    %3816 = vmatpush1.msra.mxu0 %v3800
    %3817 = vmatprep.subr.mxu0 0.0
    %3818 = vmatpush1.msra.mxu0 %v3801
    %3819 = vmatprep.subr.mxu0 0.0
    %3820 = vmatpush1.msra.mxu0 %v3802
    %3821 = vmatprep.subr.mxu0 0.0
    %3822 = vmatpush1.msra.mxu0 %v3803
    %3823 = vmatprep.subr.mxu0 0.0
    %3824 = vmatpush1.msra.mxu0 0.0
    %3825 = vmatprep.subr.mxu0 0.0
    %3826 = vmatpush1.msra.mxu0 0.0
    %3827 = vmatprep.subr.mxu0 0.0
    %3828 = vmatpush1.msra.mxu0 0.0
    %3829 = vmatprep.subr.mxu0 0.0
    %3830 = vmatpush1.msra.mxu0 0.0
    %3831 = vmatprep.subr.mxu0 0.0
    %3832 = vmatpush1.msra.mxu0 0.0
    %3833 = vmatprep.subr.mxu0 0.0
    %3834 = vmatpush1.msra.mxu0 0.0
    %3835 = vmatprep.subr.mxu0 0.0
    %3836 = vmatpush1.msra.mxu0 0.0
    %3837 = vmatprep.subr.mxu0 0.0
    %3838 = vmatpush1.msra.mxu0 0.0
    %3839 = vmatprep.subr.mxu0 0.0
    %3840 = vmatpush1.msra.mxu0 0.0
    %3841 = vmatprep.subr.mxu0 0.0
    %3842 = vmatpush1.msra.mxu0 0.0
    %3843 = vmatprep.subr.mxu0 0.0
    %3844 = vmatpush1.msra.mxu0 0.0
    %3845 = vmatprep.subr.mxu0 0.0
    %3846 = vmatpush1.msra.mxu0 0.0
    %3847 = vmatprep.subr.mxu0 0.0
    %3848 = vmatpush1.msra.mxu0 0.0
    %3849 = vmatprep.subr.mxu0 0.0
    %3850 = vmatpush1.msra.mxu0 0.0
    %3851 = vmatprep.subr.mxu0 0.0
    %3852 = vmatpush1.msra.mxu0 0.0
    %3853 = vmatprep.subr.mxu0 0.0
    %3854 = vmatpush1.msra.mxu0 0.0
    %3855 = vmatprep.subr.mxu0 0.0
    %3856 = vmatpush1.msra.mxu0 0.0
    %3857 = vmatprep.subr.mxu0 0.0
    %3858 = vmatpush1.msra.mxu0 0.0
    %3859 = vmatprep.subr.mxu0 0.0
    %3860 = vmatpush1.msra.mxu0 0.0
    %3861 = vmatprep.subr.mxu0 0.0
    %3862 = vmatpush1.msra.mxu0 0.0
    %3863 = vmatprep.subr.mxu0 0.0
    %3864 = vmatpush1.msra.mxu0 0.0
    %3865 = vmatprep.subr.mxu0 0.0
    %3866 = vmatpush1.msra.mxu0 0.0
    %3867 = vmatprep.subr.mxu0 0.0
    %3868 = vmatpush1.msra.mxu0 0.0
    %3869 = vmatprep.subr.mxu0 0.0
    %3870 = vmatpush1.msra.mxu0 0.0
    %3871 = vmatprep.subr.mxu0 0.0
    %3872 = vmatpush1.msra.mxu0 0.0
    %3873 = vmatprep.subr.mxu0 0.0
    %3874 = vmatpush1.msra.mxu0 0.0
    %3875 = vmatprep.subr.mxu0 0.0
    %3876 = vmatpush1.msra.mxu0 0.0
    %3877 = vmatprep.subr.mxu0 0.0
    %3878 = vmatpush1.msra.mxu0 0.0
    %3879 = vmatprep.mubr.f32.mxu0 0.0
    %3880 = vmatmul.mubr.f32.gmra.mrb[0].mxu0 %v3810
    %v3881 = vpop.f32.mrb[0].mxu0
    %v3882 = vadd.f32 %v3808, %v3881
    %v3883 = vpop.f32.mrb[0].mxu0
    %3884 = vmatprep.mubr.f32.mxu0 0.0
    %3885 = vmatmul.mubr.f32.gmra.mrb[0].mxu0 %v3813
    %v3886 = vpop.f32.mrb[0].mxu0
    %v3887 = vadd.f32 %v3808, %v3886
    %v3888 = vpop.f32.mrb[0].mxu0
    %3889 = vdwg.mxu0
    %v3890 = vmul.f32 %v3882, 0.5
    %v3891 = vmul.f32 %v3887, 0.5
    %v3892 = vmul.f32 %v3882, 0.044715
    %v3893 = vmul.f32 %v3887, 0.044715
    %v3894 = vmul.f32 %v3892, %v3882
    %v3895 = vmul.f32 %v3893, %v3887
    %v3896 = vmul.f32 %v3894, %v3882
    %v3897 = vmul.f32 %v3895, %v3887
    %v3898 = vadd.f32 %v3882, %v3896
    %v3899 = vadd.f32 %v3887, %v3897
    %v3900 = vmul.f32 %v3898, 0.7978846
    %v3901 = vmul.f32 %v3899, 0.7978846
    %v3902 = vtanh.pop %v3900
    %v3903 = vtanh.pop %v3901
    %v3904 = vadd.f32 %v3902, 1.0
    %v3905 = vadd.f32 %v3903, 1.0
    %v3906 = vmul.f32 %v3890, %v3904
    %v3907 = vmul.f32 %v3891, %v3905
    %s3908 = scalar_lea.vmem %s12, 256
    %v3909 = vld [vmem:[%s3908] sm:$0xff]
    %v3910 = vld [vmem:[%s3908 + $0x8] sm:$0xff]
    %v3911 = vld [vmem:[%s3908 + $0x10] sm:$0xff]
    %v3912 = vld [vmem:[%s3908 + $0x18] sm:$0xff]
    %v3913 = vld [vmem:[%s3908 + $0x20] sm:$0xff]
    %v3914 = vld [vmem:[%s3908 + $0x28] sm:$0xff]
    %v3915 = vld [vmem:[%s3908 + $0x30] sm:$0xff]
    %v3916 = vld [vmem:[%s3908 + $0x38] sm:$0xff]
    %v3917 = vld [vmem:[%s3908 + $0x40] sm:$0xff]
    %v3918 = vld [vmem:[%s3908 + $0x48] sm:$0xff]
    %v3919 = vld [vmem:[%s3908 + $0x50] sm:$0xff]
    %v3920 = vld [vmem:[%s3908 + $0x58] sm:$0xff]
    %v3921 = vld [vmem:[%s3908 + $0x60] sm:$0xff]
    %v3922 = vld [vmem:[%s3908 + $0x68] sm:$0xff]
    %v3923 = vld [vmem:[%s3908 + $0x70] sm:$0xff]
    %v3924 = vld [vmem:[%s3908 + $0x78] sm:$0xff]
    %v3925 = vld [vmem:[%s13 + $0x2] sm:$0x1]
    %v3926 = vlaneseq
    %v3927 = vshrl.u32 %v3926, 7
    %v3928 = vsub.s32 0, %v3927
    %v3929 = vrot.slane %v3925, %v3928
    %3930 = vmatprep.subr.mxu0 0.0
    %3931 = vmatpush1.msra.mxu0 %v3909
    %3932 = vmatprep.subr.mxu0 0.0
    %3933 = vmatpush1.msra.mxu0 %v3910
    %3934 = vmatprep.subr.mxu0 0.0
    %3935 = vmatpush1.msra.mxu0 %v3911
    %3936 = vmatprep.subr.mxu0 0.0
    %3937 = vmatpush1.msra.mxu0 %v3912
    %3938 = vmatprep.subr.mxu0 0.0
    %3939 = vmatpush1.msra.mxu0 %v3913
    %3940 = vmatprep.subr.mxu0 0.0
    %3941 = vmatpush1.msra.mxu0 %v3914
    %3942 = vmatprep.subr.mxu0 0.0
    %3943 = vmatpush1.msra.mxu0 %v3915
    %3944 = vmatprep.subr.mxu0 0.0
    %3945 = vmatpush1.msra.mxu0 %v3916
    %3946 = vmatprep.subr.mxu0 0.0
    %3947 = vmatpush1.msra.mxu0 %v3917
    %3948 = vmatprep.subr.mxu0 0.0
    %3949 = vmatpush1.msra.mxu0 %v3918
    %3950 = vmatprep.subr.mxu0 0.0
    %3951 = vmatpush1.msra.mxu0 %v3919
    %3952 = vmatprep.subr.mxu0 0.0
    %3953 = vmatpush1.msra.mxu0 %v3920
    %3954 = vmatprep.subr.mxu0 0.0
    %3955 = vmatpush1.msra.mxu0 %v3921
    %3956 = vmatprep.subr.mxu0 0.0
    %3957 = vmatpush1.msra.mxu0 %v3922
    %3958 = vmatprep.subr.mxu0 0.0
    %3959 = vmatpush1.msra.mxu0 %v3923
    %3960 = vmatprep.subr.mxu0 0.0
    %3961 = vmatpush1.msra.mxu0 %v3924
    %3962 = vmatprep.subr.mxu0 0.0
    %3963 = vmatpush1.msra.mxu0 0.0
    %3964 = vmatprep.subr.mxu0 0.0
    %3965 = vmatpush1.msra.mxu0 0.0
    %3966 = vmatprep.subr.mxu0 0.0
    %3967 = vmatpush1.msra.mxu0 0.0
    %3968 = vmatprep.subr.mxu0 0.0
    %3969 = vmatpush1.msra.mxu0 0.0
    %3970 = vmatprep.subr.mxu0 0.0
    %3971 = vmatpush1.msra.mxu0 0.0
    %3972 = vmatprep.subr.mxu0 0.0
    %3973 = vmatpush1.msra.mxu0 0.0
    %3974 = vmatprep.subr.mxu0 0.0
    %3975 = vmatpush1.msra.mxu0 0.0
    %3976 = vmatprep.subr.mxu0 0.0
    %3977 = vmatpush1.msra.mxu0 0.0
    %3978 = vmatprep.subr.mxu0 0.0
    %3979 = vmatpush1.msra.mxu0 0.0
    %3980 = vmatprep.subr.mxu0 0.0
    %3981 = vmatpush1.msra.mxu0 0.0
    %3982 = vmatprep.subr.mxu0 0.0
    %3983 = vmatpush1.msra.mxu0 0.0
    %3984 = vmatprep.subr.mxu0 0.0
    %3985 = vmatpush1.msra.mxu0 0.0
    %3986 = vmatprep.subr.mxu0 0.0
    %3987 = vmatpush1.msra.mxu0 0.0
    %3988 = vmatprep.subr.mxu0 0.0
    %3989 = vmatpush1.msra.mxu0 0.0
    %3990 = vmatprep.subr.mxu0 0.0
    %3991 = vmatpush1.msra.mxu0 0.0
    %3992 = vmatprep.subr.mxu0 0.0
    %3993 = vmatpush1.msra.mxu0 0.0
    %3994 = vmatprep.mubr.f32.mxu0 0.0
    %3995 = vmatmul.mubr.f32.gmra.mrb[0].mxu0 %v3906
    %v3996 = vpop.f32.mrb[0].mxu0
    %v3997 = vadd.f32 %v3929, %v3996
    %v3998 = vpop.f32.mrb[0].mxu0
    %3999 = vmatprep.mubr.f32.mxu0 0.0
    %4000 = vmatmul.mubr.f32.gmra.mrb[0].mxu0 %v3907
    %v4001 = vpop.f32.mrb[0].mxu0
    %v4002 = vadd.f32 %v3929, %v4001
    %v4003 = vpop.f32.mrb[0].mxu0
    %4004 = vdwg.mxu0
    %v4005 = vadd.f32 %v3757, %v3997
    %v4006 = vadd.f32 %v3758, %v4002
    %v4007 = vld [vmem:[%s2 + $0x3] sm:$0x1]
    %v4008 = vld [vmem:[%s3 + $0x3] sm:$0x1]
    %v4009 = vsel %vm60, %v4005, 0.0
    %4010 = vadd.xlane.f32.xlu0 %v4009
    %v4011 = vpop.xlane.xlu0 %4010
    %v4012 = vsel %vm60, %v4006, 0.0
    %4013 = vadd.xlane.f32.xlu0 %v4012
    %v4014 = vpop.xlane.xlu0 %4013
    %v4015 = vmul.f32 %v4011, %v67
    %v4016 = vmul.f32 %v4014, %v67
    %v4017 = vsub.f32 %v4005, %v4015
    %v4018 = vsub.f32 %v4006, %v4016
    %v4019 = vmul.f32 %v4017, %v4017
    %v4020 = vmul.f32 %v4018, %v4018
    %v4021 = vsel %vm60, %v4019, 0.0
    %4022 = vadd.xlane.f32.xlu0 %v4021
    %v4023 = vpop.xlane.xlu0 %4022
    %v4024 = vsel %vm60, %v4020, 0.0
    %4025 = vadd.xlane.f32.xlu0 %v4024
    %v4026 = vpop.xlane.xlu0 %4025
    %v4027 = vmul.f32 %v4023, %v67
    %v4028 = vmul.f32 %v4026, %v67
    %v4029 = vadd.f32 %v4027, 1e-05
    %v4030 = vadd.f32 %v4028, 1e-05
    %v4031 = vrsqrt.pop %v4029
    %v4032 = vrsqrt.pop %v4030
    %v4033 = vmul.f32 %v4017, %v4031
    %v4034 = vmul.f32 %v4018, %v4032
    %v4035 = vlaneseq
    %v4036 = vshrl.u32 %v4035, 7
    %v4037 = vsub.s32 0, %v4036
    %v4038 = vrot.slane %v4007, %v4037
    %v4039 = vmul.f32 %v4033, %v4038
    %v4040 = vmul.f32 %v4034, %v4038
    %v4041 = vlaneseq
    %v4042 = vshrl.u32 %v4041, 7
    %v4043 = vsub.s32 0, %v4042
    %v4044 = vrot.slane %v4008, %v4043
    %v4045 = vadd.f32 %v4039, %v4044
    %v4046 = vadd.f32 %v4040, %v4044
    %s4047 = scalar_lea.vmem %s4, 96
    %v4048 = vld [vmem:[%s4047] sm:$0xff]
    %v4049 = vld [vmem:[%s4047 + $0x8] sm:$0xff]
    %v4050 = vld [vmem:[%s4047 + $0x10] sm:$0xff]
    %v4051 = vld [vmem:[%s4047 + $0x18] sm:$0xff]
    %v4052 = vld [vmem:[%s5 + $0x3] sm:$0x1]
    %v4053 = vlaneseq
    %v4054 = vshrl.u32 %v4053, 7
    %v4055 = vsub.s32 0, %v4054
    %v4056 = vrot.slane %v4052, %v4055
    %v4058 = vsel %vm60, %v4045, 0
    %v4061 = vsel %vm60, %v4046, 0
    %4063 = vmatprep.subr.mxu0 0.0
    %4064 = vmatpush1.msra.mxu0 %v4048
    %4065 = vmatprep.subr.mxu0 0.0
    %4066 = vmatpush1.msra.mxu0 %v4049
    %4067 = vmatprep.subr.mxu0 0.0
    %4068 = vmatpush1.msra.mxu0 %v4050
    %4069 = vmatprep.subr.mxu0 0.0
    %4070 = vmatpush1.msra.mxu0 %v4051
    %4071 = vmatprep.subr.mxu0 0.0
    %4072 = vmatpush1.msra.mxu0 0.0
    %4073 = vmatprep.subr.mxu0 0.0
    %4074 = vmatpush1.msra.mxu0 0.0
    %4075 = vmatprep.subr.mxu0 0.0
    %4076 = vmatpush1.msra.mxu0 0.0
    %4077 = vmatprep.subr.mxu0 0.0
    %4078 = vmatpush1.msra.mxu0 0.0
    %4079 = vmatprep.subr.mxu0 0.0
    %4080 = vmatpush1.msra.mxu0 0.0
    %4081 = vmatprep.subr.mxu0 0.0
    %4082 = vmatpush1.msra.mxu0 0.0
    %4083 = vmatprep.subr.mxu0 0.0
    %4084 = vmatpush1.msra.mxu0 0.0
    %4085 = vmatprep.subr.mxu0 0.0
    %4086 = vmatpush1.msra.mxu0 0.0
    %4087 = vmatprep.subr.mxu0 0.0
    %4088 = vmatpush1.msra.mxu0 0.0
    %4089 = vmatprep.subr.mxu0 0.0
    %4090 = vmatpush1.msra.mxu0 0.0
    %4091 = vmatprep.subr.mxu0 0.0
    %4092 = vmatpush1.msra.mxu0 0.0
    %4093 = vmatprep.subr.mxu0 0.0
    %4094 = vmatpush1.msra.mxu0 0.0
    %4095 = vmatprep.subr.mxu0 0.0
    %4096 = vmatpush1.msra.mxu0 0.0
    %4097 = vmatprep.subr.mxu0 0.0
    %4098 = vmatpush1.msra.mxu0 0.0
    %4099 = vmatprep.subr.mxu0 0.0
    %4100 = vmatpush1.msra.mxu0 0.0
    %4101 = vmatprep.subr.mxu0 0.0
    %4102 = vmatpush1.msra.mxu0 0.0
    %4103 = vmatprep.subr.mxu0 0.0
    %4104 = vmatpush1.msra.mxu0 0.0
    %4105 = vmatprep.subr.mxu0 0.0
    %4106 = vmatpush1.msra.mxu0 0.0
    %4107 = vmatprep.subr.mxu0 0.0
    %4108 = vmatpush1.msra.mxu0 0.0
    %4109 = vmatprep.subr.mxu0 0.0
    %4110 = vmatpush1.msra.mxu0 0.0
    %4111 = vmatprep.subr.mxu0 0.0
    %4112 = vmatpush1.msra.mxu0 0.0
    %4113 = vmatprep.subr.mxu0 0.0
    %4114 = vmatpush1.msra.mxu0 0.0
    %4115 = vmatprep.subr.mxu0 0.0
    %4116 = vmatpush1.msra.mxu0 0.0
    %4117 = vmatprep.subr.mxu0 0.0
    %4118 = vmatpush1.msra.mxu0 0.0
    %4119 = vmatprep.subr.mxu0 0.0
    %4120 = vmatpush1.msra.mxu0 0.0
    %4121 = vmatprep.subr.mxu0 0.0
    %4122 = vmatpush1.msra.mxu0 0.0
    %4123 = vmatprep.subr.mxu0 0.0
    %4124 = vmatpush1.msra.mxu0 0.0
    %4125 = vmatprep.subr.mxu0 0.0
    %4126 = vmatpush1.msra.mxu0 0.0
    %4127 = vmatprep.mubr.f32.mxu0 0.0
    %4128 = vmatmul.mubr.f32.gmra.mrb[0].mxu0 %v4058
    %v4129 = vpop.f32.mrb[0].mxu0
    %v4130 = vadd.f32 %v4056, %v4129
    %v4131 = vpop.f32.mrb[0].mxu0
    %4132 = vmatprep.mubr.f32.mxu0 0.0
    %4133 = vmatmul.mubr.f32.gmra.mrb[0].mxu0 %v4061
    %v4134 = vpop.f32.mrb[0].mxu0
    %v4135 = vadd.f32 %v4056, %v4134
    %v4136 = vpop.f32.mrb[0].mxu0
    %4137 = vdwg.mxu0
    %4140 = vrot.lane.b32.xlu0 %v4130, 96
    %v4141 = vpop.permute.xlu0 %4140
    %4142 = vrot.lane.b32.xlu0 %v4135, 96
    %v4143 = vpop.permute.xlu0 %4142
    %v4144 = vsel %vm196, %v4130, 0
    %v4146 = vsel %vm196, %v4135, 0
    %v4148 = vsel %vm196, %v4141, 0
    %v4150 = vsel %vm196, %v4143, 0
    %4152 = vmatprep.subr.mxu0 0.0
    %4153 = vmatpush1.xpose.msra.mxu0 %v4148
    %4154 = vmatprep.subr.mxu0 0.0
    %4155 = vmatpush1.xpose.msra.mxu0 %v4150
    %4156 = vmatprep.subr.mxu0 0.0
    %4157 = vmatpush1.xpose.msra.mxu0 0.0
    %4158 = vmatprep.subr.mxu0 0.0
    %4159 = vmatpush1.xpose.msra.mxu0 0.0
    %4160 = vmatprep.subr.mxu0 0.0
    %4161 = vmatpush1.xpose.msra.mxu0 0.0
    %4162 = vmatprep.subr.mxu0 0.0
    %4163 = vmatpush1.xpose.msra.mxu0 0.0
    %4164 = vmatprep.subr.mxu0 0.0
    %4165 = vmatpush1.xpose.msra.mxu0 0.0
    %4166 = vmatprep.subr.mxu0 0.0
    %4167 = vmatpush1.xpose.msra.mxu0 0.0
    %4168 = vmatprep.subr.mxu0 0.0
    %4169 = vmatpush1.xpose.msra.mxu0 0.0
    %4170 = vmatprep.subr.mxu0 0.0
    %4171 = vmatpush1.xpose.msra.mxu0 0.0
    %4172 = vmatprep.subr.mxu0 0.0
    %4173 = vmatpush1.xpose.msra.mxu0 0.0
    %4174 = vmatprep.subr.mxu0 0.0
    %4175 = vmatpush1.xpose.msra.mxu0 0.0
    %4176 = vmatprep.subr.mxu0 0.0
    %4177 = vmatpush1.xpose.msra.mxu0 0.0
    %4178 = vmatprep.subr.mxu0 0.0
    %4179 = vmatpush1.xpose.msra.mxu0 0.0
    %4180 = vmatprep.subr.mxu0 0.0
    %4181 = vmatpush1.xpose.msra.mxu0 0.0
    %4182 = vmatprep.subr.mxu0 0.0
    %4183 = vmatpush1.xpose.msra.mxu0 0.0
    %4184 = vmatprep.subr.mxu0 0.0
    %4185 = vmatpush1.xpose.msra.mxu0 0.0
    %4186 = vmatprep.subr.mxu0 0.0
    %4187 = vmatpush1.xpose.msra.mxu0 0.0
    %4188 = vmatprep.subr.mxu0 0.0
    %4189 = vmatpush1.xpose.msra.mxu0 0.0
    %4190 = vmatprep.subr.mxu0 0.0
    %4191 = vmatpush1.xpose.msra.mxu0 0.0
    %4192 = vmatprep.subr.mxu0 0.0
    %4193 = vmatpush1.xpose.msra.mxu0 0.0
    %4194 = vmatprep.subr.mxu0 0.0
    %4195 = vmatpush1.xpose.msra.mxu0 0.0
    %4196 = vmatprep.subr.mxu0 0.0
    %4197 = vmatpush1.xpose.msra.mxu0 0.0
    %4198 = vmatprep.subr.mxu0 0.0
    %4199 = vmatpush1.xpose.msra.mxu0 0.0
    %4200 = vmatprep.subr.mxu0 0.0
    %4201 = vmatpush1.xpose.msra.mxu0 0.0
    %4202 = vmatprep.subr.mxu0 0.0
    %4203 = vmatpush1.xpose.msra.mxu0 0.0
    %4204 = vmatprep.subr.mxu0 0.0
    %4205 = vmatpush1.xpose.msra.mxu0 0.0
    %4206 = vmatprep.subr.mxu0 0.0
    %4207 = vmatpush1.xpose.msra.mxu0 0.0
    %4208 = vmatprep.subr.mxu0 0.0
    %4209 = vmatpush1.xpose.msra.mxu0 0.0
    %4210 = vmatprep.subr.mxu0 0.0
    %4211 = vmatpush1.xpose.msra.mxu0 0.0
    %4212 = vmatprep.subr.mxu0 0.0
    %4213 = vmatpush1.xpose.msra.mxu0 0.0
    %4214 = vmatprep.subr.mxu0 0.0
    %4215 = vmatpush1.xpose.msra.mxu0 0.0
    %4216 = vmatprep.mubr.f32.mxu0 0.0
    %4217 = vmatmul.mubr.f32.gmra.mrb[0].mxu0 %v4144
    %v4218 = vpop.f32.mrb[0].mxu0
    %v4219 = vadd.f32 0.0, %v4218
    %v4220 = vpop.f32.mrb[0].mxu0
    %4221 = vmatprep.mubr.f32.mxu0 0.0
    %4222 = vmatmul.mubr.f32.gmra.mrb[0].mxu0 %v4146
    %v4223 = vpop.f32.mrb[0].mxu0
    %v4224 = vadd.f32 0.0, %v4223
    %v4225 = vpop.f32.mrb[0].mxu0
    %4226 = vdwg.mxu0
    %v4227 = vmul.f32 %v4219, 0.35355338
    %v4228 = vmul.f32 %v4224, 0.35355338
    %v4229 = vadd.f32 %v4227, %v56
    %v4230 = vadd.f32 %v4228, %v57
    %v4231 = vsel %vm284, %v4229, -inf
    %4232 = vmax.xlane.f32.xlu0 %v4231
    %v4233 = vpop.xlane.xlu0 %4232
    %v4234 = vsel %vm284, %v4230, -inf
    %4235 = vmax.xlane.f32.xlu0 %v4234
    %v4236 = vpop.xlane.xlu0 %4235
    %v4237 = vsub.f32 %v4229, %v4233
    %v4238 = vsub.f32 %v4230, %v4236
    %v4239 = vmul.f32 %v4237, 1.442695
    %v4240 = vpow.pop %v4239
    %v4241 = vmul.f32 %v4238, 1.442695
    %v4242 = vpow.pop %v4241
    %v4243 = vsel %vm284, %v4240, 0.0
    %4244 = vadd.xlane.f32.xlu0 %v4243
    %v4245 = vpop.xlane.xlu0 %4244
    %v4246 = vsel %vm284, %v4242, 0.0
    %4247 = vadd.xlane.f32.xlu0 %v4246
    %v4248 = vpop.xlane.xlu0 %4247
    %v4249 = vrcp.pop %v4245
    %v4250 = vrcp.pop %v4248
    %v4251 = vmul.f32 %v4240, %v4249
    %v4252 = vmul.f32 %v4242, %v4250
    %4253 = vrot.lane.b32.xlu0 %v4130, 64
    %v4254 = vpop.permute.xlu0 %4253
    %4255 = vrot.lane.b32.xlu0 %v4135, 64
    %v4256 = vpop.permute.xlu0 %4255
    %v4260 = vsel %vm284, %v4251, 0
    %v4263 = vsel %vm284, %v4252, 0
    %4265 = vmatprep.subr.mxu0 0.0
    %4266 = vmatpush1.msra.mxu0 %v4254
    %4267 = vmatprep.subr.mxu0 0.0
    %4268 = vmatpush1.msra.mxu0 %v4256
    %4269 = vmatprep.subr.mxu0 0.0
    %4270 = vmatpush1.msra.mxu0 0.0
    %4271 = vmatprep.subr.mxu0 0.0
    %4272 = vmatpush1.msra.mxu0 0.0
    %4273 = vmatprep.subr.mxu0 0.0
    %4274 = vmatpush1.msra.mxu0 0.0
    %4275 = vmatprep.subr.mxu0 0.0
    %4276 = vmatpush1.msra.mxu0 0.0
    %4277 = vmatprep.subr.mxu0 0.0
    %4278 = vmatpush1.msra.mxu0 0.0
    %4279 = vmatprep.subr.mxu0 0.0
    %4280 = vmatpush1.msra.mxu0 0.0
    %4281 = vmatprep.subr.mxu0 0.0
    %4282 = vmatpush1.msra.mxu0 0.0
    %4283 = vmatprep.subr.mxu0 0.0
    %4284 = vmatpush1.msra.mxu0 0.0
    %4285 = vmatprep.subr.mxu0 0.0
    %4286 = vmatpush1.msra.mxu0 0.0
    %4287 = vmatprep.subr.mxu0 0.0
    %4288 = vmatpush1.msra.mxu0 0.0
    %4289 = vmatprep.subr.mxu0 0.0
    %4290 = vmatpush1.msra.mxu0 0.0
    %4291 = vmatprep.subr.mxu0 0.0
    %4292 = vmatpush1.msra.mxu0 0.0
    %4293 = vmatprep.subr.mxu0 0.0
    %4294 = vmatpush1.msra.mxu0 0.0
    %4295 = vmatprep.subr.mxu0 0.0
    %4296 = vmatpush1.msra.mxu0 0.0
    %4297 = vmatprep.subr.mxu0 0.0
    %4298 = vmatpush1.msra.mxu0 0.0
    %4299 = vmatprep.subr.mxu0 0.0
    %4300 = vmatpush1.msra.mxu0 0.0
    %4301 = vmatprep.subr.mxu0 0.0
    %4302 = vmatpush1.msra.mxu0 0.0
    %4303 = vmatprep.subr.mxu0 0.0
    %4304 = vmatpush1.msra.mxu0 0.0
    %4305 = vmatprep.subr.mxu0 0.0
    %4306 = vmatpush1.msra.mxu0 0.0
    %4307 = vmatprep.subr.mxu0 0.0
    %4308 = vmatpush1.msra.mxu0 0.0
    %4309 = vmatprep.subr.mxu0 0.0
    %4310 = vmatpush1.msra.mxu0 0.0
    %4311 = vmatprep.subr.mxu0 0.0
    %4312 = vmatpush1.msra.mxu0 0.0
    %4313 = vmatprep.subr.mxu0 0.0
    %4314 = vmatpush1.msra.mxu0 0.0
    %4315 = vmatprep.subr.mxu0 0.0
    %4316 = vmatpush1.msra.mxu0 0.0
    %4317 = vmatprep.subr.mxu0 0.0
    %4318 = vmatpush1.msra.mxu0 0.0
    %4319 = vmatprep.subr.mxu0 0.0
    %4320 = vmatpush1.msra.mxu0 0.0
    %4321 = vmatprep.subr.mxu0 0.0
    %4322 = vmatpush1.msra.mxu0 0.0
    %4323 = vmatprep.subr.mxu0 0.0
    %4324 = vmatpush1.msra.mxu0 0.0
    %4325 = vmatprep.subr.mxu0 0.0
    %4326 = vmatpush1.msra.mxu0 0.0
    %4327 = vmatprep.subr.mxu0 0.0
    %4328 = vmatpush1.msra.mxu0 0.0
    %4329 = vmatprep.mubr.f32.mxu0 0.0
    %4330 = vmatmul.mubr.f32.gmra.mrb[0].mxu0 %v4260
    %v4331 = vpop.f32.mrb[0].mxu0
    %v4332 = vadd.f32 0.0, %v4331
    %v4333 = vpop.f32.mrb[0].mxu0
    %4334 = vmatprep.mubr.f32.mxu0 0.0
    %4335 = vmatmul.mubr.f32.gmra.mrb[0].mxu0 %v4263
    %v4336 = vpop.f32.mrb[0].mxu0
    %v4337 = vadd.f32 0.0, %v4336
    %v4338 = vpop.f32.mrb[0].mxu0
    %4339 = vdwg.mxu0
    %4340 = vrot.lane.b32.xlu0 %v4130, 120
    %v4341 = vpop.permute.xlu0 %4340
    %4342 = vrot.lane.b32.xlu0 %v4135, 120
    %v4343 = vpop.permute.xlu0 %4342
    %4344 = vrot.lane.b32.xlu0 %v4130, 88
    %v4345 = vpop.permute.xlu0 %4344
    %4346 = vrot.lane.b32.xlu0 %v4135, 88
    %v4347 = vpop.permute.xlu0 %4346
    %v4348 = vsel %vm196, %v4341, 0
    %v4350 = vsel %vm196, %v4343, 0
    %v4352 = vsel %vm196, %v4345, 0
    %v4354 = vsel %vm196, %v4347, 0
    %4356 = vmatprep.subr.mxu0 0.0
    %4357 = vmatpush1.xpose.msra.mxu0 %v4352
    %4358 = vmatprep.subr.mxu0 0.0
    %4359 = vmatpush1.xpose.msra.mxu0 %v4354
    %4360 = vmatprep.subr.mxu0 0.0
    %4361 = vmatpush1.xpose.msra.mxu0 0.0
    %4362 = vmatprep.subr.mxu0 0.0
    %4363 = vmatpush1.xpose.msra.mxu0 0.0
    %4364 = vmatprep.subr.mxu0 0.0
    %4365 = vmatpush1.xpose.msra.mxu0 0.0
    %4366 = vmatprep.subr.mxu0 0.0
    %4367 = vmatpush1.xpose.msra.mxu0 0.0
    %4368 = vmatprep.subr.mxu0 0.0
    %4369 = vmatpush1.xpose.msra.mxu0 0.0
    %4370 = vmatprep.subr.mxu0 0.0
    %4371 = vmatpush1.xpose.msra.mxu0 0.0
    %4372 = vmatprep.subr.mxu0 0.0
    %4373 = vmatpush1.xpose.msra.mxu0 0.0
    %4374 = vmatprep.subr.mxu0 0.0
    %4375 = vmatpush1.xpose.msra.mxu0 0.0
    %4376 = vmatprep.subr.mxu0 0.0
    %4377 = vmatpush1.xpose.msra.mxu0 0.0
    %4378 = vmatprep.subr.mxu0 0.0
    %4379 = vmatpush1.xpose.msra.mxu0 0.0
    %4380 = vmatprep.subr.mxu0 0.0
    %4381 = vmatpush1.xpose.msra.mxu0 0.0
    %4382 = vmatprep.subr.mxu0 0.0
    %4383 = vmatpush1.xpose.msra.mxu0 0.0
    %4384 = vmatprep.subr.mxu0 0.0
    %4385 = vmatpush1.xpose.msra.mxu0 0.0
    %4386 = vmatprep.subr.mxu0 0.0
    %4387 = vmatpush1.xpose.msra.mxu0 0.0
    %4388 = vmatprep.subr.mxu0 0.0
    %4389 = vmatpush1.xpose.msra.mxu0 0.0
    %4390 = vmatprep.subr.mxu0 0.0
    %4391 = vmatpush1.xpose.msra.mxu0 0.0
    %4392 = vmatprep.subr.mxu0 0.0
    %4393 = vmatpush1.xpose.msra.mxu0 0.0
    %4394 = vmatprep.subr.mxu0 0.0
    %4395 = vmatpush1.xpose.msra.mxu0 0.0
    %4396 = vmatprep.subr.mxu0 0.0
    %4397 = vmatpush1.xpose.msra.mxu0 0.0
    %4398 = vmatprep.subr.mxu0 0.0
    %4399 = vmatpush1.xpose.msra.mxu0 0.0
    %4400 = vmatprep.subr.mxu0 0.0
    %4401 = vmatpush1.xpose.msra.mxu0 0.0
    %4402 = vmatprep.subr.mxu0 0.0
    %4403 = vmatpush1.xpose.msra.mxu0 0.0
    %4404 = vmatprep.subr.mxu0 0.0
    %4405 = vmatpush1.xpose.msra.mxu0 0.0
    %4406 = vmatprep.subr.mxu0 0.0
    %4407 = vmatpush1.xpose.msra.mxu0 0.0
    %4408 = vmatprep.subr.mxu0 0.0
    %4409 = vmatpush1.xpose.msra.mxu0 0.0
    %4410 = vmatprep.subr.mxu0 0.0
    %4411 = vmatpush1.xpose.msra.mxu0 0.0
    %4412 = vmatprep.subr.mxu0 0.0
    %4413 = vmatpush1.xpose.msra.mxu0 0.0
    %4414 = vmatprep.subr.mxu0 0.0
    %4415 = vmatpush1.xpose.msra.mxu0 0.0
    %4416 = vmatprep.subr.mxu0 0.0
    %4417 = vmatpush1.xpose.msra.mxu0 0.0
    %4418 = vmatprep.subr.mxu0 0.0
    %4419 = vmatpush1.xpose.msra.mxu0 0.0
    %4420 = vmatprep.mubr.f32.mxu0 0.0
    %4421 = vmatmul.mubr.f32.gmra.mrb[0].mxu0 %v4348
    %v4422 = vpop.f32.mrb[0].mxu0
    %v4423 = vadd.f32 0.0, %v4422
    %v4424 = vpop.f32.mrb[0].mxu0
    %4425 = vmatprep.mubr.f32.mxu0 0.0
    %4426 = vmatmul.mubr.f32.gmra.mrb[0].mxu0 %v4350
    %v4427 = vpop.f32.mrb[0].mxu0
    %v4428 = vadd.f32 0.0, %v4427
    %v4429 = vpop.f32.mrb[0].mxu0
    %4430 = vdwg.mxu0
    %v4431 = vmul.f32 %v4423, 0.35355338
    %v4432 = vmul.f32 %v4428, 0.35355338
    %v4433 = vadd.f32 %v4431, %v56
    %v4434 = vadd.f32 %v4432, %v57
    %v4435 = vsel %vm284, %v4433, -inf
    %4436 = vmax.xlane.f32.xlu0 %v4435
    %v4437 = vpop.xlane.xlu0 %4436
    %v4438 = vsel %vm284, %v4434, -inf
    %4439 = vmax.xlane.f32.xlu0 %v4438
    %v4440 = vpop.xlane.xlu0 %4439
    %v4441 = vsub.f32 %v4433, %v4437
    %v4442 = vsub.f32 %v4434, %v4440
    %v4443 = vmul.f32 %v4441, 1.442695
    %v4444 = vpow.pop %v4443
    %v4445 = vmul.f32 %v4442, 1.442695
    %v4446 = vpow.pop %v4445
    %v4447 = vsel %vm284, %v4444, 0.0
    %4448 = vadd.xlane.f32.xlu0 %v4447
    %v4449 = vpop.xlane.xlu0 %4448
    %v4450 = vsel %vm284, %v4446, 0.0
    %4451 = vadd.xlane.f32.xlu0 %v4450
    %v4452 = vpop.xlane.xlu0 %4451
    %v4453 = vrcp.pop %v4449
    %v4454 = vrcp.pop %v4452
    %v4455 = vmul.f32 %v4444, %v4453
    %v4456 = vmul.f32 %v4446, %v4454
    %4457 = vrot.lane.b32.xlu0 %v4130, 56
    %v4458 = vpop.permute.xlu0 %4457
    %4459 = vrot.lane.b32.xlu0 %v4135, 56
    %v4460 = vpop.permute.xlu0 %4459
    %v4464 = vsel %vm284, %v4455, 0
    %v4467 = vsel %vm284, %v4456, 0
    %4469 = vmatprep.subr.mxu0 0.0
    %4470 = vmatpush1.msra.mxu0 %v4458
    %4471 = vmatprep.subr.mxu0 0.0
    %4472 = vmatpush1.msra.mxu0 %v4460
    %4473 = vmatprep.subr.mxu0 0.0
    %4474 = vmatpush1.msra.mxu0 0.0
    %4475 = vmatprep.subr.mxu0 0.0
    %4476 = vmatpush1.msra.mxu0 0.0
    %4477 = vmatprep.subr.mxu0 0.0
    %4478 = vmatpush1.msra.mxu0 0.0
    %4479 = vmatprep.subr.mxu0 0.0
    %4480 = vmatpush1.msra.mxu0 0.0
    %4481 = vmatprep.subr.mxu0 0.0
    %4482 = vmatpush1.msra.mxu0 0.0
    %4483 = vmatprep.subr.mxu0 0.0
    %4484 = vmatpush1.msra.mxu0 0.0
    %4485 = vmatprep.subr.mxu0 0.0
    %4486 = vmatpush1.msra.mxu0 0.0
    %4487 = vmatprep.subr.mxu0 0.0
    %4488 = vmatpush1.msra.mxu0 0.0
    %4489 = vmatprep.subr.mxu0 0.0
    %4490 = vmatpush1.msra.mxu0 0.0
    %4491 = vmatprep.subr.mxu0 0.0
    %4492 = vmatpush1.msra.mxu0 0.0
    %4493 = vmatprep.subr.mxu0 0.0
    %4494 = vmatpush1.msra.mxu0 0.0
    %4495 = vmatprep.subr.mxu0 0.0
    %4496 = vmatpush1.msra.mxu0 0.0
    %4497 = vmatprep.subr.mxu0 0.0
    %4498 = vmatpush1.msra.mxu0 0.0
    %4499 = vmatprep.subr.mxu0 0.0
    %4500 = vmatpush1.msra.mxu0 0.0
    %4501 = vmatprep.subr.mxu0 0.0
    %4502 = vmatpush1.msra.mxu0 0.0
    %4503 = vmatprep.subr.mxu0 0.0
    %4504 = vmatpush1.msra.mxu0 0.0
    %4505 = vmatprep.subr.mxu0 0.0
    %4506 = vmatpush1.msra.mxu0 0.0
    %4507 = vmatprep.subr.mxu0 0.0
    %4508 = vmatpush1.msra.mxu0 0.0
    %4509 = vmatprep.subr.mxu0 0.0
    %4510 = vmatpush1.msra.mxu0 0.0
    %4511 = vmatprep.subr.mxu0 0.0
    %4512 = vmatpush1.msra.mxu0 0.0
    %4513 = vmatprep.subr.mxu0 0.0
    %4514 = vmatpush1.msra.mxu0 0.0
    %4515 = vmatprep.subr.mxu0 0.0
    %4516 = vmatpush1.msra.mxu0 0.0
    %4517 = vmatprep.subr.mxu0 0.0
    %4518 = vmatpush1.msra.mxu0 0.0
    %4519 = vmatprep.subr.mxu0 0.0
    %4520 = vmatpush1.msra.mxu0 0.0
    %4521 = vmatprep.subr.mxu0 0.0
    %4522 = vmatpush1.msra.mxu0 0.0
    %4523 = vmatprep.subr.mxu0 0.0
    %4524 = vmatpush1.msra.mxu0 0.0
    %4525 = vmatprep.subr.mxu0 0.0
    %4526 = vmatpush1.msra.mxu0 0.0
    %4527 = vmatprep.subr.mxu0 0.0
    %4528 = vmatpush1.msra.mxu0 0.0
    %4529 = vmatprep.subr.mxu0 0.0
    %4530 = vmatpush1.msra.mxu0 0.0
    %4531 = vmatprep.subr.mxu0 0.0
    %4532 = vmatpush1.msra.mxu0 0.0
    %4533 = vmatprep.mubr.f32.mxu0 0.0
    %4534 = vmatmul.mubr.f32.gmra.mrb[0].mxu0 %v4464
    %v4535 = vpop.f32.mrb[0].mxu0
    %v4536 = vadd.f32 0.0, %v4535
    %v4537 = vpop.f32.mrb[0].mxu0
    %4538 = vmatprep.mubr.f32.mxu0 0.0
    %4539 = vmatmul.mubr.f32.gmra.mrb[0].mxu0 %v4467
    %v4540 = vpop.f32.mrb[0].mxu0
    %v4541 = vadd.f32 0.0, %v4540
    %v4542 = vpop.f32.mrb[0].mxu0
    %4543 = vdwg.mxu0
    %4544 = vrot.lane.b32.xlu0 %v4130, 112
    %v4545 = vpop.permute.xlu0 %4544
    %4546 = vrot.lane.b32.xlu0 %v4135, 112
    %v4547 = vpop.permute.xlu0 %4546
    %4548 = vrot.lane.b32.xlu0 %v4130, 80
    %v4549 = vpop.permute.xlu0 %4548
    %4550 = vrot.lane.b32.xlu0 %v4135, 80
    %v4551 = vpop.permute.xlu0 %4550
    %v4552 = vsel %vm196, %v4545, 0
    %v4554 = vsel %vm196, %v4547, 0
    %v4556 = vsel %vm196, %v4549, 0
    %v4558 = vsel %vm196, %v4551, 0
    %4560 = vmatprep.subr.mxu0 0.0
    %4561 = vmatpush1.xpose.msra.mxu0 %v4556
    %4562 = vmatprep.subr.mxu0 0.0
    %4563 = vmatpush1.xpose.msra.mxu0 %v4558
    %4564 = vmatprep.subr.mxu0 0.0
    %4565 = vmatpush1.xpose.msra.mxu0 0.0
    %4566 = vmatprep.subr.mxu0 0.0
    %4567 = vmatpush1.xpose.msra.mxu0 0.0
    %4568 = vmatprep.subr.mxu0 0.0
    %4569 = vmatpush1.xpose.msra.mxu0 0.0
    %4570 = vmatprep.subr.mxu0 0.0
    %4571 = vmatpush1.xpose.msra.mxu0 0.0
    %4572 = vmatprep.subr.mxu0 0.0
    %4573 = vmatpush1.xpose.msra.mxu0 0.0
    %4574 = vmatprep.subr.mxu0 0.0
    %4575 = vmatpush1.xpose.msra.mxu0 0.0
    %4576 = vmatprep.subr.mxu0 0.0
    %4577 = vmatpush1.xpose.msra.mxu0 0.0
    %4578 = vmatprep.subr.mxu0 0.0
    %4579 = vmatpush1.xpose.msra.mxu0 0.0
    %4580 = vmatprep.subr.mxu0 0.0
    %4581 = vmatpush1.xpose.msra.mxu0 0.0
    %4582 = vmatprep.subr.mxu0 0.0
    %4583 = vmatpush1.xpose.msra.mxu0 0.0
    %4584 = vmatprep.subr.mxu0 0.0
    %4585 = vmatpush1.xpose.msra.mxu0 0.0
    %4586 = vmatprep.subr.mxu0 0.0
    %4587 = vmatpush1.xpose.msra.mxu0 0.0
    %4588 = vmatprep.subr.mxu0 0.0
    %4589 = vmatpush1.xpose.msra.mxu0 0.0
    %4590 = vmatprep.subr.mxu0 0.0
    %4591 = vmatpush1.xpose.msra.mxu0 0.0
    %4592 = vmatprep.subr.mxu0 0.0
    %4593 = vmatpush1.xpose.msra.mxu0 0.0
    %4594 = vmatprep.subr.mxu0 0.0
    %4595 = vmatpush1.xpose.msra.mxu0 0.0
    %4596 = vmatprep.subr.mxu0 0.0
    %4597 = vmatpush1.xpose.msra.mxu0 0.0
    %4598 = vmatprep.subr.mxu0 0.0
    %4599 = vmatpush1.xpose.msra.mxu0 0.0
    %4600 = vmatprep.subr.mxu0 0.0
    %4601 = vmatpush1.xpose.msra.mxu0 0.0
    %4602 = vmatprep.subr.mxu0 0.0
    %4603 = vmatpush1.xpose.msra.mxu0 0.0
    %4604 = vmatprep.subr.mxu0 0.0
    %4605 = vmatpush1.xpose.msra.mxu0 0.0
    %4606 = vmatprep.subr.mxu0 0.0
    %4607 = vmatpush1.xpose.msra.mxu0 0.0
    %4608 = vmatprep.subr.mxu0 0.0
    %4609 = vmatpush1.xpose.msra.mxu0 0.0
    %4610 = vmatprep.subr.mxu0 0.0
    %4611 = vmatpush1.xpose.msra.mxu0 0.0
    %4612 = vmatprep.subr.mxu0 0.0
    %4613 = vmatpush1.xpose.msra.mxu0 0.0
    %4614 = vmatprep.subr.mxu0 0.0
    %4615 = vmatpush1.xpose.msra.mxu0 0.0
    %4616 = vmatprep.subr.mxu0 0.0
    %4617 = vmatpush1.xpose.msra.mxu0 0.0
    %4618 = vmatprep.subr.mxu0 0.0
    %4619 = vmatpush1.xpose.msra.mxu0 0.0
    %4620 = vmatprep.subr.mxu0 0.0
    %4621 = vmatpush1.xpose.msra.mxu0 0.0
    %4622 = vmatprep.subr.mxu0 0.0
    %4623 = vmatpush1.xpose.msra.mxu0 0.0
    %4624 = vmatprep.mubr.f32.mxu0 0.0
    %4625 = vmatmul.mubr.f32.gmra.mrb[0].mxu0 %v4552
    %v4626 = vpop.f32.mrb[0].mxu0
    %v4627 = vadd.f32 0.0, %v4626
    %v4628 = vpop.f32.mrb[0].mxu0
    %4629 = vmatprep.mubr.f32.mxu0 0.0
    %4630 = vmatmul.mubr.f32.gmra.mrb[0].mxu0 %v4554
    %v4631 = vpop.f32.mrb[0].mxu0
    %v4632 = vadd.f32 0.0, %v4631
    %v4633 = vpop.f32.mrb[0].mxu0
    %4634 = vdwg.mxu0
    %v4635 = vmul.f32 %v4627, 0.35355338
    %v4636 = vmul.f32 %v4632, 0.35355338
    %v4637 = vadd.f32 %v4635, %v56
    %v4638 = vadd.f32 %v4636, %v57
    %v4639 = vsel %vm284, %v4637, -inf
    %4640 = vmax.xlane.f32.xlu0 %v4639
    %v4641 = vpop.xlane.xlu0 %4640
    %v4642 = vsel %vm284, %v4638, -inf
    %4643 = vmax.xlane.f32.xlu0 %v4642
    %v4644 = vpop.xlane.xlu0 %4643
    %v4645 = vsub.f32 %v4637, %v4641
    %v4646 = vsub.f32 %v4638, %v4644
    %v4647 = vmul.f32 %v4645, 1.442695
    %v4648 = vpow.pop %v4647
    %v4649 = vmul.f32 %v4646, 1.442695
    %v4650 = vpow.pop %v4649
    %v4651 = vsel %vm284, %v4648, 0.0
    %4652 = vadd.xlane.f32.xlu0 %v4651
    %v4653 = vpop.xlane.xlu0 %4652
    %v4654 = vsel %vm284, %v4650, 0.0
    %4655 = vadd.xlane.f32.xlu0 %v4654
    %v4656 = vpop.xlane.xlu0 %4655
    %v4657 = vrcp.pop %v4653
    %v4658 = vrcp.pop %v4656
    %v4659 = vmul.f32 %v4648, %v4657
    %v4660 = vmul.f32 %v4650, %v4658
    %4661 = vrot.lane.b32.xlu0 %v4130, 48
    %v4662 = vpop.permute.xlu0 %4661
    %4663 = vrot.lane.b32.xlu0 %v4135, 48
    %v4664 = vpop.permute.xlu0 %4663
    %v4668 = vsel %vm284, %v4659, 0
    %v4671 = vsel %vm284, %v4660, 0
    %4673 = vmatprep.subr.mxu0 0.0
    %4674 = vmatpush1.msra.mxu0 %v4662
    %4675 = vmatprep.subr.mxu0 0.0
    %4676 = vmatpush1.msra.mxu0 %v4664
    %4677 = vmatprep.subr.mxu0 0.0
    %4678 = vmatpush1.msra.mxu0 0.0
    %4679 = vmatprep.subr.mxu0 0.0
    %4680 = vmatpush1.msra.mxu0 0.0
    %4681 = vmatprep.subr.mxu0 0.0
    %4682 = vmatpush1.msra.mxu0 0.0
    %4683 = vmatprep.subr.mxu0 0.0
    %4684 = vmatpush1.msra.mxu0 0.0
    %4685 = vmatprep.subr.mxu0 0.0
    %4686 = vmatpush1.msra.mxu0 0.0
    %4687 = vmatprep.subr.mxu0 0.0
    %4688 = vmatpush1.msra.mxu0 0.0
    %4689 = vmatprep.subr.mxu0 0.0
    %4690 = vmatpush1.msra.mxu0 0.0
    %4691 = vmatprep.subr.mxu0 0.0
    %4692 = vmatpush1.msra.mxu0 0.0
    %4693 = vmatprep.subr.mxu0 0.0
    %4694 = vmatpush1.msra.mxu0 0.0
    %4695 = vmatprep.subr.mxu0 0.0
    %4696 = vmatpush1.msra.mxu0 0.0
    %4697 = vmatprep.subr.mxu0 0.0
    %4698 = vmatpush1.msra.mxu0 0.0
    %4699 = vmatprep.subr.mxu0 0.0
    %4700 = vmatpush1.msra.mxu0 0.0
    %4701 = vmatprep.subr.mxu0 0.0
    %4702 = vmatpush1.msra.mxu0 0.0
    %4703 = vmatprep.subr.mxu0 0.0
    %4704 = vmatpush1.msra.mxu0 0.0
    %4705 = vmatprep.subr.mxu0 0.0
    %4706 = vmatpush1.msra.mxu0 0.0
    %4707 = vmatprep.subr.mxu0 0.0
    %4708 = vmatpush1.msra.mxu0 0.0
    %4709 = vmatprep.subr.mxu0 0.0
    %4710 = vmatpush1.msra.mxu0 0.0
    %4711 = vmatprep.subr.mxu0 0.0
    %4712 = vmatpush1.msra.mxu0 0.0
    %4713 = vmatprep.subr.mxu0 0.0
    %4714 = vmatpush1.msra.mxu0 0.0
    %4715 = vmatprep.subr.mxu0 0.0
    %4716 = vmatpush1.msra.mxu0 0.0
    %4717 = vmatprep.subr.mxu0 0.0
    %4718 = vmatpush1.msra.mxu0 0.0
    %4719 = vmatprep.subr.mxu0 0.0
    %4720 = vmatpush1.msra.mxu0 0.0
    %4721 = vmatprep.subr.mxu0 0.0
    %4722 = vmatpush1.msra.mxu0 0.0
    %4723 = vmatprep.subr.mxu0 0.0
    %4724 = vmatpush1.msra.mxu0 0.0
    %4725 = vmatprep.subr.mxu0 0.0
    %4726 = vmatpush1.msra.mxu0 0.0
    %4727 = vmatprep.subr.mxu0 0.0
    %4728 = vmatpush1.msra.mxu0 0.0
    %4729 = vmatprep.subr.mxu0 0.0
    %4730 = vmatpush1.msra.mxu0 0.0
    %4731 = vmatprep.subr.mxu0 0.0
    %4732 = vmatpush1.msra.mxu0 0.0
    %4733 = vmatprep.subr.mxu0 0.0
    %4734 = vmatpush1.msra.mxu0 0.0
    %4735 = vmatprep.subr.mxu0 0.0
    %4736 = vmatpush1.msra.mxu0 0.0
    %4737 = vmatprep.mubr.f32.mxu0 0.0
    %4738 = vmatmul.mubr.f32.gmra.mrb[0].mxu0 %v4668
    %v4739 = vpop.f32.mrb[0].mxu0
    %v4740 = vadd.f32 0.0, %v4739
    %v4741 = vpop.f32.mrb[0].mxu0
    %4742 = vmatprep.mubr.f32.mxu0 0.0
    %4743 = vmatmul.mubr.f32.gmra.mrb[0].mxu0 %v4671
    %v4744 = vpop.f32.mrb[0].mxu0
    %v4745 = vadd.f32 0.0, %v4744
    %v4746 = vpop.f32.mrb[0].mxu0
    %4747 = vdwg.mxu0
    %4748 = vrot.lane.b32.xlu0 %v4130, 104
    %v4749 = vpop.permute.xlu0 %4748
    %4750 = vrot.lane.b32.xlu0 %v4135, 104
    %v4751 = vpop.permute.xlu0 %4750
    %4752 = vrot.lane.b32.xlu0 %v4130, 72
    %v4753 = vpop.permute.xlu0 %4752
    %4754 = vrot.lane.b32.xlu0 %v4135, 72
    %v4755 = vpop.permute.xlu0 %4754
    %v4756 = vsel %vm196, %v4749, 0
    %v4758 = vsel %vm196, %v4751, 0
    %v4760 = vsel %vm196, %v4753, 0
    %v4762 = vsel %vm196, %v4755, 0
    %4764 = vmatprep.subr.mxu0 0.0
    %4765 = vmatpush1.xpose.msra.mxu0 %v4760
    %4766 = vmatprep.subr.mxu0 0.0
    %4767 = vmatpush1.xpose.msra.mxu0 %v4762
    %4768 = vmatprep.subr.mxu0 0.0
    %4769 = vmatpush1.xpose.msra.mxu0 0.0
    %4770 = vmatprep.subr.mxu0 0.0
    %4771 = vmatpush1.xpose.msra.mxu0 0.0
    %4772 = vmatprep.subr.mxu0 0.0
    %4773 = vmatpush1.xpose.msra.mxu0 0.0
    %4774 = vmatprep.subr.mxu0 0.0
    %4775 = vmatpush1.xpose.msra.mxu0 0.0
    %4776 = vmatprep.subr.mxu0 0.0
    %4777 = vmatpush1.xpose.msra.mxu0 0.0
    %4778 = vmatprep.subr.mxu0 0.0
    %4779 = vmatpush1.xpose.msra.mxu0 0.0
    %4780 = vmatprep.subr.mxu0 0.0
    %4781 = vmatpush1.xpose.msra.mxu0 0.0
    %4782 = vmatprep.subr.mxu0 0.0
    %4783 = vmatpush1.xpose.msra.mxu0 0.0
    %4784 = vmatprep.subr.mxu0 0.0
    %4785 = vmatpush1.xpose.msra.mxu0 0.0
    %4786 = vmatprep.subr.mxu0 0.0
    %4787 = vmatpush1.xpose.msra.mxu0 0.0
    %4788 = vmatprep.subr.mxu0 0.0
    %4789 = vmatpush1.xpose.msra.mxu0 0.0
    %4790 = vmatprep.subr.mxu0 0.0
    %4791 = vmatpush1.xpose.msra.mxu0 0.0
    %4792 = vmatprep.subr.mxu0 0.0
    %4793 = vmatpush1.xpose.msra.mxu0 0.0
    %4794 = vmatprep.subr.mxu0 0.0
    %4795 = vmatpush1.xpose.msra.mxu0 0.0
    %4796 = vmatprep.subr.mxu0 0.0
    %4797 = vmatpush1.xpose.msra.mxu0 0.0
    %4798 = vmatprep.subr.mxu0 0.0
    %4799 = vmatpush1.xpose.msra.mxu0 0.0
    %4800 = vmatprep.subr.mxu0 0.0
    %4801 = vmatpush1.xpose.msra.mxu0 0.0
    %4802 = vmatprep.subr.mxu0 0.0
    %4803 = vmatpush1.xpose.msra.mxu0 0.0
    %4804 = vmatprep.subr.mxu0 0.0
    %4805 = vmatpush1.xpose.msra.mxu0 0.0
    %4806 = vmatprep.subr.mxu0 0.0
    %4807 = vmatpush1.xpose.msra.mxu0 0.0
    %4808 = vmatprep.subr.mxu0 0.0
    %4809 = vmatpush1.xpose.msra.mxu0 0.0
    %4810 = vmatprep.subr.mxu0 0.0
    %4811 = vmatpush1.xpose.msra.mxu0 0.0
    %4812 = vmatprep.subr.mxu0 0.0
    %4813 = vmatpush1.xpose.msra.mxu0 0.0
    %4814 = vmatprep.subr.mxu0 0.0
    %4815 = vmatpush1.xpose.msra.mxu0 0.0
    %4816 = vmatprep.subr.mxu0 0.0
    %4817 = vmatpush1.xpose.msra.mxu0 0.0
    %4818 = vmatprep.subr.mxu0 0.0
    %4819 = vmatpush1.xpose.msra.mxu0 0.0
    %4820 = vmatprep.subr.mxu0 0.0
    %4821 = vmatpush1.xpose.msra.mxu0 0.0
    %4822 = vmatprep.subr.mxu0 0.0
    %4823 = vmatpush1.xpose.msra.mxu0 0.0
    %4824 = vmatprep.subr.mxu0 0.0
    %4825 = vmatpush1.xpose.msra.mxu0 0.0
    %4826 = vmatprep.subr.mxu0 0.0
    %4827 = vmatpush1.xpose.msra.mxu0 0.0
    %4828 = vmatprep.mubr.f32.mxu0 0.0
    %4829 = vmatmul.mubr.f32.gmra.mrb[0].mxu0 %v4756
    %v4830 = vpop.f32.mrb[0].mxu0
    %v4831 = vadd.f32 0.0, %v4830
    %v4832 = vpop.f32.mrb[0].mxu0
    %4833 = vmatprep.mubr.f32.mxu0 0.0
    %4834 = vmatmul.mubr.f32.gmra.mrb[0].mxu0 %v4758
    %v4835 = vpop.f32.mrb[0].mxu0
    %v4836 = vadd.f32 0.0, %v4835
    %v4837 = vpop.f32.mrb[0].mxu0
    %4838 = vdwg.mxu0
    %v4839 = vmul.f32 %v4831, 0.35355338
    %v4840 = vmul.f32 %v4836, 0.35355338
    %v4841 = vadd.f32 %v4839, %v56
    %v4842 = vadd.f32 %v4840, %v57
    %v4843 = vsel %vm284, %v4841, -inf
    %4844 = vmax.xlane.f32.xlu0 %v4843
    %v4845 = vpop.xlane.xlu0 %4844
    %v4846 = vsel %vm284, %v4842, -inf
    %4847 = vmax.xlane.f32.xlu0 %v4846
    %v4848 = vpop.xlane.xlu0 %4847
    %v4849 = vsub.f32 %v4841, %v4845
    %v4850 = vsub.f32 %v4842, %v4848
    %v4851 = vmul.f32 %v4849, 1.442695
    %v4852 = vpow.pop %v4851
    %v4853 = vmul.f32 %v4850, 1.442695
    %v4854 = vpow.pop %v4853
    %v4855 = vsel %vm284, %v4852, 0.0
    %4856 = vadd.xlane.f32.xlu0 %v4855
    %v4857 = vpop.xlane.xlu0 %4856
    %v4858 = vsel %vm284, %v4854, 0.0
    %4859 = vadd.xlane.f32.xlu0 %v4858
    %v4860 = vpop.xlane.xlu0 %4859
    %v4861 = vrcp.pop %v4857
    %v4862 = vrcp.pop %v4860
    %v4863 = vmul.f32 %v4852, %v4861
    %v4864 = vmul.f32 %v4854, %v4862
    %4865 = vrot.lane.b32.xlu0 %v4130, 40
    %v4866 = vpop.permute.xlu0 %4865
    %4867 = vrot.lane.b32.xlu0 %v4135, 40
    %v4868 = vpop.permute.xlu0 %4867
    %v4872 = vsel %vm284, %v4863, 0
    %v4875 = vsel %vm284, %v4864, 0
    %4877 = vmatprep.subr.mxu0 0.0
    %4878 = vmatpush1.msra.mxu0 %v4866
    %4879 = vmatprep.subr.mxu0 0.0
    %4880 = vmatpush1.msra.mxu0 %v4868
    %4881 = vmatprep.subr.mxu0 0.0
    %4882 = vmatpush1.msra.mxu0 0.0
    %4883 = vmatprep.subr.mxu0 0.0
    %4884 = vmatpush1.msra.mxu0 0.0
    %4885 = vmatprep.subr.mxu0 0.0
    %4886 = vmatpush1.msra.mxu0 0.0
    %4887 = vmatprep.subr.mxu0 0.0
    %4888 = vmatpush1.msra.mxu0 0.0
    %4889 = vmatprep.subr.mxu0 0.0
    %4890 = vmatpush1.msra.mxu0 0.0
    %4891 = vmatprep.subr.mxu0 0.0
    %4892 = vmatpush1.msra.mxu0 0.0
    %4893 = vmatprep.subr.mxu0 0.0
    %4894 = vmatpush1.msra.mxu0 0.0
    %4895 = vmatprep.subr.mxu0 0.0
    %4896 = vmatpush1.msra.mxu0 0.0
    %4897 = vmatprep.subr.mxu0 0.0
    %4898 = vmatpush1.msra.mxu0 0.0
    %4899 = vmatprep.subr.mxu0 0.0
    %4900 = vmatpush1.msra.mxu0 0.0
    %4901 = vmatprep.subr.mxu0 0.0
    %4902 = vmatpush1.msra.mxu0 0.0
    %4903 = vmatprep.subr.mxu0 0.0
    %4904 = vmatpush1.msra.mxu0 0.0
    %4905 = vmatprep.subr.mxu0 0.0
    %4906 = vmatpush1.msra.mxu0 0.0
    %4907 = vmatprep.subr.mxu0 0.0
    %4908 = vmatpush1.msra.mxu0 0.0
    %4909 = vmatprep.subr.mxu0 0.0
    %4910 = vmatpush1.msra.mxu0 0.0
    %4911 = vmatprep.subr.mxu0 0.0
    %4912 = vmatpush1.msra.mxu0 0.0
    %4913 = vmatprep.subr.mxu0 0.0
    %4914 = vmatpush1.msra.mxu0 0.0
    %4915 = vmatprep.subr.mxu0 0.0
    %4916 = vmatpush1.msra.mxu0 0.0
    %4917 = vmatprep.subr.mxu0 0.0
    %4918 = vmatpush1.msra.mxu0 0.0
    %4919 = vmatprep.subr.mxu0 0.0
    %4920 = vmatpush1.msra.mxu0 0.0
    %4921 = vmatprep.subr.mxu0 0.0
    %4922 = vmatpush1.msra.mxu0 0.0
    %4923 = vmatprep.subr.mxu0 0.0
    %4924 = vmatpush1.msra.mxu0 0.0
    %4925 = vmatprep.subr.mxu0 0.0
    %4926 = vmatpush1.msra.mxu0 0.0
    %4927 = vmatprep.subr.mxu0 0.0
    %4928 = vmatpush1.msra.mxu0 0.0
    %4929 = vmatprep.subr.mxu0 0.0
    %4930 = vmatpush1.msra.mxu0 0.0
    %4931 = vmatprep.subr.mxu0 0.0
    %4932 = vmatpush1.msra.mxu0 0.0
    %4933 = vmatprep.subr.mxu0 0.0
    %4934 = vmatpush1.msra.mxu0 0.0
    %4935 = vmatprep.subr.mxu0 0.0
    %4936 = vmatpush1.msra.mxu0 0.0
    %4937 = vmatprep.subr.mxu0 0.0
    %4938 = vmatpush1.msra.mxu0 0.0
    %4939 = vmatprep.subr.mxu0 0.0
    %4940 = vmatpush1.msra.mxu0 0.0
    %4941 = vmatprep.mubr.f32.mxu0 0.0
    %4942 = vmatmul.mubr.f32.gmra.mrb[0].mxu0 %v4872
    %v4943 = vpop.f32.mrb[0].mxu0
    %v4944 = vadd.f32 0.0, %v4943
    %v4945 = vpop.f32.mrb[0].mxu0
    %4946 = vmatprep.mubr.f32.mxu0 0.0
    %4947 = vmatmul.mubr.f32.gmra.mrb[0].mxu0 %v4875
    %v4948 = vpop.f32.mrb[0].mxu0
    %v4949 = vadd.f32 0.0, %v4948
    %v4950 = vpop.f32.mrb[0].mxu0
    %4951 = vdwg.mxu0
    %4954 = vrot.lane.b32.xlu0 %v4536, 8
    %v4955 = vpop.permute.xlu0 %4954
    %4956 = vrot.lane.b32.xlu0 %v4541, 8
    %v4957 = vpop.permute.xlu0 %4956
    %4962 = vrot.lane.b32.xlu0 %v4740, 16
    %v4963 = vpop.permute.xlu0 %4962
    %4964 = vrot.lane.b32.xlu0 %v4745, 16
    %v4965 = vpop.permute.xlu0 %4964
    %4970 = vrot.lane.b32.xlu0 %v4944, 24
    %v4971 = vpop.permute.xlu0 %4970
    %4972 = vrot.lane.b32.xlu0 %v4949, 24
    %v4973 = vpop.permute.xlu0 %4972
    %v4976 = vsel %vm196, %v4332, %v4955
    %v4977 = vsel %vm196, %v4337, %v4957
    %v4978 = vsel %vm284, %v4976, %v4963
    %v4979 = vsel %vm284, %v4977, %v4965
    %v4980 = vsel %vm1034, %v4978, %v4971
    %v4981 = vsel %vm1034, %v4979, %v4973
    %s4982 = scalar_lea.vmem %s6, 96
    %v4983 = vld [vmem:[%s4982] sm:$0xff]
    %v4984 = vld [vmem:[%s4982 + $0x8] sm:$0xff]
    %v4985 = vld [vmem:[%s4982 + $0x10] sm:$0xff]
    %v4986 = vld [vmem:[%s4982 + $0x18] sm:$0xff]
    %v4987 = vld [vmem:[%s7 + $0x3] sm:$0x1]
    %v4988 = vlaneseq
    %v4989 = vshrl.u32 %v4988, 7
    %v4990 = vsub.s32 0, %v4989
    %v4991 = vrot.slane %v4987, %v4990
    %v4993 = vsel %vm60, %v4980, 0
    %v4996 = vsel %vm60, %v4981, 0
    %4998 = vmatprep.subr.mxu0 0.0
    %4999 = vmatpush1.msra.mxu0 %v4983
    %5000 = vmatprep.subr.mxu0 0.0
    %5001 = vmatpush1.msra.mxu0 %v4984
    %5002 = vmatprep.subr.mxu0 0.0
    %5003 = vmatpush1.msra.mxu0 %v4985
    %5004 = vmatprep.subr.mxu0 0.0
    %5005 = vmatpush1.msra.mxu0 %v4986
    %5006 = vmatprep.subr.mxu0 0.0
    %5007 = vmatpush1.msra.mxu0 0.0
    %5008 = vmatprep.subr.mxu0 0.0
    %5009 = vmatpush1.msra.mxu0 0.0
    %5010 = vmatprep.subr.mxu0 0.0
    %5011 = vmatpush1.msra.mxu0 0.0
    %5012 = vmatprep.subr.mxu0 0.0
    %5013 = vmatpush1.msra.mxu0 0.0
    %5014 = vmatprep.subr.mxu0 0.0
    %5015 = vmatpush1.msra.mxu0 0.0
    %5016 = vmatprep.subr.mxu0 0.0
    %5017 = vmatpush1.msra.mxu0 0.0
    %5018 = vmatprep.subr.mxu0 0.0
    %5019 = vmatpush1.msra.mxu0 0.0
    %5020 = vmatprep.subr.mxu0 0.0
    %5021 = vmatpush1.msra.mxu0 0.0
    %5022 = vmatprep.subr.mxu0 0.0
    %5023 = vmatpush1.msra.mxu0 0.0
    %5024 = vmatprep.subr.mxu0 0.0
    %5025 = vmatpush1.msra.mxu0 0.0
    %5026 = vmatprep.subr.mxu0 0.0
    %5027 = vmatpush1.msra.mxu0 0.0
    %5028 = vmatprep.subr.mxu0 0.0
    %5029 = vmatpush1.msra.mxu0 0.0
    %5030 = vmatprep.subr.mxu0 0.0
    %5031 = vmatpush1.msra.mxu0 0.0
    %5032 = vmatprep.subr.mxu0 0.0
    %5033 = vmatpush1.msra.mxu0 0.0
    %5034 = vmatprep.subr.mxu0 0.0
    %5035 = vmatpush1.msra.mxu0 0.0
    %5036 = vmatprep.subr.mxu0 0.0
    %5037 = vmatpush1.msra.mxu0 0.0
    %5038 = vmatprep.subr.mxu0 0.0
    %5039 = vmatpush1.msra.mxu0 0.0
    %5040 = vmatprep.subr.mxu0 0.0
    %5041 = vmatpush1.msra.mxu0 0.0
    %5042 = vmatprep.subr.mxu0 0.0
    %5043 = vmatpush1.msra.mxu0 0.0
    %5044 = vmatprep.subr.mxu0 0.0
    %5045 = vmatpush1.msra.mxu0 0.0
    %5046 = vmatprep.subr.mxu0 0.0
    %5047 = vmatpush1.msra.mxu0 0.0
    %5048 = vmatprep.subr.mxu0 0.0
    %5049 = vmatpush1.msra.mxu0 0.0
    %5050 = vmatprep.subr.mxu0 0.0
    %5051 = vmatpush1.msra.mxu0 0.0
    %5052 = vmatprep.subr.mxu0 0.0
    %5053 = vmatpush1.msra.mxu0 0.0
    %5054 = vmatprep.subr.mxu0 0.0
    %5055 = vmatpush1.msra.mxu0 0.0
    %5056 = vmatprep.subr.mxu0 0.0
    %5057 = vmatpush1.msra.mxu0 0.0
    %5058 = vmatprep.subr.mxu0 0.0
    %5059 = vmatpush1.msra.mxu0 0.0
    %5060 = vmatprep.subr.mxu0 0.0
    %5061 = vmatpush1.msra.mxu0 0.0
    %5062 = vmatprep.mubr.f32.mxu0 0.0
    %5063 = vmatmul.mubr.f32.gmra.mrb[0].mxu0 %v4993
    %v5064 = vpop.f32.mrb[0].mxu0
    %v5065 = vadd.f32 %v4991, %v5064
    %v5066 = vpop.f32.mrb[0].mxu0
    %5067 = vmatprep.mubr.f32.mxu0 0.0
    %5068 = vmatmul.mubr.f32.gmra.mrb[0].mxu0 %v4996
    %v5069 = vpop.f32.mrb[0].mxu0
    %v5070 = vadd.f32 %v4991, %v5069
    %v5071 = vpop.f32.mrb[0].mxu0
    %5072 = vdwg.mxu0
    %v5073 = vadd.f32 %v4005, %v5065
    %v5074 = vadd.f32 %v4006, %v5070
    %v5075 = vld [vmem:[%s8 + $0x3] sm:$0x1]
    %v5076 = vld [vmem:[%s9 + $0x3] sm:$0x1]
    %v5077 = vsel %vm60, %v5073, 0.0
    %5078 = vadd.xlane.f32.xlu0 %v5077
    %v5079 = vpop.xlane.xlu0 %5078
    %v5080 = vsel %vm60, %v5074, 0.0
    %5081 = vadd.xlane.f32.xlu0 %v5080
    %v5082 = vpop.xlane.xlu0 %5081
    %v5083 = vmul.f32 %v5079, %v67
    %v5084 = vmul.f32 %v5082, %v67
    %v5085 = vsub.f32 %v5073, %v5083
    %v5086 = vsub.f32 %v5074, %v5084
    %v5087 = vmul.f32 %v5085, %v5085
    %v5088 = vmul.f32 %v5086, %v5086
    %v5089 = vsel %vm60, %v5087, 0.0
    %5090 = vadd.xlane.f32.xlu0 %v5089
    %v5091 = vpop.xlane.xlu0 %5090
    %v5092 = vsel %vm60, %v5088, 0.0
    %5093 = vadd.xlane.f32.xlu0 %v5092
    %v5094 = vpop.xlane.xlu0 %5093
    %v5095 = vmul.f32 %v5091, %v67
    %v5096 = vmul.f32 %v5094, %v67
    %v5097 = vadd.f32 %v5095, 1e-05
    %v5098 = vadd.f32 %v5096, 1e-05
    %v5099 = vrsqrt.pop %v5097
    %v5100 = vrsqrt.pop %v5098
    %v5101 = vmul.f32 %v5085, %v5099
    %v5102 = vmul.f32 %v5086, %v5100
    %v5103 = vlaneseq
    %v5104 = vshrl.u32 %v5103, 7
    %v5105 = vsub.s32 0, %v5104
    %v5106 = vrot.slane %v5075, %v5105
    %v5107 = vmul.f32 %v5101, %v5106
    %v5108 = vmul.f32 %v5102, %v5106
    %v5109 = vlaneseq
    %v5110 = vshrl.u32 %v5109, 7
    %v5111 = vsub.s32 0, %v5110
    %v5112 = vrot.slane %v5076, %v5111
    %v5113 = vadd.f32 %v5107, %v5112
    %v5114 = vadd.f32 %v5108, %v5112
    %s5115 = scalar_lea.vmem %s10, 96
    %v5116 = vld [vmem:[%s5115] sm:$0xff]
    %v5117 = vld [vmem:[%s5115 + $0x8] sm:$0xff]
    %v5118 = vld [vmem:[%s5115 + $0x10] sm:$0xff]
    %v5119 = vld [vmem:[%s5115 + $0x18] sm:$0xff]
    %v5120 = vld [vmem:[%s11 + $0x3] sm:$0x1]
    %v5121 = vlaneseq
    %v5122 = vshrl.u32 %v5121, 7
    %v5123 = vsub.s32 0, %v5122
    %v5124 = vrot.slane %v5120, %v5123
    %v5126 = vsel %vm60, %v5113, 0
    %v5129 = vsel %vm60, %v5114, 0
    %5131 = vmatprep.subr.mxu0 0.0
    %5132 = vmatpush1.msra.mxu0 %v5116
    %5133 = vmatprep.subr.mxu0 0.0
    %5134 = vmatpush1.msra.mxu0 %v5117
    %5135 = vmatprep.subr.mxu0 0.0
    %5136 = vmatpush1.msra.mxu0 %v5118
    %5137 = vmatprep.subr.mxu0 0.0
    %5138 = vmatpush1.msra.mxu0 %v5119
    %5139 = vmatprep.subr.mxu0 0.0
    %5140 = vmatpush1.msra.mxu0 0.0
    %5141 = vmatprep.subr.mxu0 0.0
    %5142 = vmatpush1.msra.mxu0 0.0
    %5143 = vmatprep.subr.mxu0 0.0
    %5144 = vmatpush1.msra.mxu0 0.0
    %5145 = vmatprep.subr.mxu0 0.0
    %5146 = vmatpush1.msra.mxu0 0.0
    %5147 = vmatprep.subr.mxu0 0.0
    %5148 = vmatpush1.msra.mxu0 0.0
    %5149 = vmatprep.subr.mxu0 0.0
    %5150 = vmatpush1.msra.mxu0 0.0
    %5151 = vmatprep.subr.mxu0 0.0
    %5152 = vmatpush1.msra.mxu0 0.0
    %5153 = vmatprep.subr.mxu0 0.0
    %5154 = vmatpush1.msra.mxu0 0.0
    %5155 = vmatprep.subr.mxu0 0.0
    %5156 = vmatpush1.msra.mxu0 0.0
    %5157 = vmatprep.subr.mxu0 0.0
    %5158 = vmatpush1.msra.mxu0 0.0
    %5159 = vmatprep.subr.mxu0 0.0
    %5160 = vmatpush1.msra.mxu0 0.0
    %5161 = vmatprep.subr.mxu0 0.0
    %5162 = vmatpush1.msra.mxu0 0.0
    %5163 = vmatprep.subr.mxu0 0.0
    %5164 = vmatpush1.msra.mxu0 0.0
    %5165 = vmatprep.subr.mxu0 0.0
    %5166 = vmatpush1.msra.mxu0 0.0
    %5167 = vmatprep.subr.mxu0 0.0
    %5168 = vmatpush1.msra.mxu0 0.0
    %5169 = vmatprep.subr.mxu0 0.0
    %5170 = vmatpush1.msra.mxu0 0.0
    %5171 = vmatprep.subr.mxu0 0.0
    %5172 = vmatpush1.msra.mxu0 0.0
    %5173 = vmatprep.subr.mxu0 0.0
    %5174 = vmatpush1.msra.mxu0 0.0
    %5175 = vmatprep.subr.mxu0 0.0
    %5176 = vmatpush1.msra.mxu0 0.0
    %5177 = vmatprep.subr.mxu0 0.0
    %5178 = vmatpush1.msra.mxu0 0.0
    %5179 = vmatprep.subr.mxu0 0.0
    %5180 = vmatpush1.msra.mxu0 0.0
    %5181 = vmatprep.subr.mxu0 0.0
    %5182 = vmatpush1.msra.mxu0 0.0
    %5183 = vmatprep.subr.mxu0 0.0
    %5184 = vmatpush1.msra.mxu0 0.0
    %5185 = vmatprep.subr.mxu0 0.0
    %5186 = vmatpush1.msra.mxu0 0.0
    %5187 = vmatprep.subr.mxu0 0.0
    %5188 = vmatpush1.msra.mxu0 0.0
    %5189 = vmatprep.subr.mxu0 0.0
    %5190 = vmatpush1.msra.mxu0 0.0
    %5191 = vmatprep.subr.mxu0 0.0
    %5192 = vmatpush1.msra.mxu0 0.0
    %5193 = vmatprep.subr.mxu0 0.0
    %5194 = vmatpush1.msra.mxu0 0.0
    %5195 = vmatprep.mubr.f32.mxu0 0.0
    %5196 = vmatmul.mubr.f32.gmra.mrb[0].mxu0 %v5126
    %v5197 = vpop.f32.mrb[0].mxu0
    %v5198 = vadd.f32 %v5124, %v5197
    %v5199 = vpop.f32.mrb[0].mxu0
    %5200 = vmatprep.mubr.f32.mxu0 0.0
    %5201 = vmatmul.mubr.f32.gmra.mrb[0].mxu0 %v5129
    %v5202 = vpop.f32.mrb[0].mxu0
    %v5203 = vadd.f32 %v5124, %v5202
    %v5204 = vpop.f32.mrb[0].mxu0
    %5205 = vdwg.mxu0
    %v5206 = vmul.f32 %v5198, 0.5
    %v5207 = vmul.f32 %v5203, 0.5
    %v5208 = vmul.f32 %v5198, 0.044715
    %v5209 = vmul.f32 %v5203, 0.044715
    %v5210 = vmul.f32 %v5208, %v5198
    %v5211 = vmul.f32 %v5209, %v5203
    %v5212 = vmul.f32 %v5210, %v5198
    %v5213 = vmul.f32 %v5211, %v5203
    %v5214 = vadd.f32 %v5198, %v5212
    %v5215 = vadd.f32 %v5203, %v5213
    %v5216 = vmul.f32 %v5214, 0.7978846
    %v5217 = vmul.f32 %v5215, 0.7978846
    %v5218 = vtanh.pop %v5216
    %v5219 = vtanh.pop %v5217
    %v5220 = vadd.f32 %v5218, 1.0
    %v5221 = vadd.f32 %v5219, 1.0
    %v5222 = vmul.f32 %v5206, %v5220
    %v5223 = vmul.f32 %v5207, %v5221
    %s5224 = scalar_lea.vmem %s12, 384
    %v5225 = vld [vmem:[%s5224] sm:$0xff]
    %v5226 = vld [vmem:[%s5224 + $0x8] sm:$0xff]
    %v5227 = vld [vmem:[%s5224 + $0x10] sm:$0xff]
    %v5228 = vld [vmem:[%s5224 + $0x18] sm:$0xff]
    %v5229 = vld [vmem:[%s5224 + $0x20] sm:$0xff]
    %v5230 = vld [vmem:[%s5224 + $0x28] sm:$0xff]
    %v5231 = vld [vmem:[%s5224 + $0x30] sm:$0xff]
    %v5232 = vld [vmem:[%s5224 + $0x38] sm:$0xff]
    %v5233 = vld [vmem:[%s5224 + $0x40] sm:$0xff]
    %v5234 = vld [vmem:[%s5224 + $0x48] sm:$0xff]
    %v5235 = vld [vmem:[%s5224 + $0x50] sm:$0xff]
    %v5236 = vld [vmem:[%s5224 + $0x58] sm:$0xff]
    %v5237 = vld [vmem:[%s5224 + $0x60] sm:$0xff]
    %v5238 = vld [vmem:[%s5224 + $0x68] sm:$0xff]
    %v5239 = vld [vmem:[%s5224 + $0x70] sm:$0xff]
    %v5240 = vld [vmem:[%s5224 + $0x78] sm:$0xff]
    %v5241 = vld [vmem:[%s13 + $0x3] sm:$0x1]
    %v5242 = vlaneseq
    %v5243 = vshrl.u32 %v5242, 7
    %v5244 = vsub.s32 0, %v5243
    %v5245 = vrot.slane %v5241, %v5244
    %5246 = vmatprep.subr.mxu0 0.0
    %5247 = vmatpush1.msra.mxu0 %v5225
    %5248 = vmatprep.subr.mxu0 0.0
    %5249 = vmatpush1.msra.mxu0 %v5226
    %5250 = vmatprep.subr.mxu0 0.0
    %5251 = vmatpush1.msra.mxu0 %v5227
    %5252 = vmatprep.subr.mxu0 0.0
    %5253 = vmatpush1.msra.mxu0 %v5228
    %5254 = vmatprep.subr.mxu0 0.0
    %5255 = vmatpush1.msra.mxu0 %v5229
    %5256 = vmatprep.subr.mxu0 0.0
    %5257 = vmatpush1.msra.mxu0 %v5230
    %5258 = vmatprep.subr.mxu0 0.0
    %5259 = vmatpush1.msra.mxu0 %v5231
    %5260 = vmatprep.subr.mxu0 0.0
    %5261 = vmatpush1.msra.mxu0 %v5232
    %5262 = vmatprep.subr.mxu0 0.0
    %5263 = vmatpush1.msra.mxu0 %v5233
    %5264 = vmatprep.subr.mxu0 0.0
    %5265 = vmatpush1.msra.mxu0 %v5234
    %5266 = vmatprep.subr.mxu0 0.0
    %5267 = vmatpush1.msra.mxu0 %v5235
    %5268 = vmatprep.subr.mxu0 0.0
    %5269 = vmatpush1.msra.mxu0 %v5236
    %5270 = vmatprep.subr.mxu0 0.0
    %5271 = vmatpush1.msra.mxu0 %v5237
    %5272 = vmatprep.subr.mxu0 0.0
    %5273 = vmatpush1.msra.mxu0 %v5238
    %5274 = vmatprep.subr.mxu0 0.0
    %5275 = vmatpush1.msra.mxu0 %v5239
    %5276 = vmatprep.subr.mxu0 0.0
    %5277 = vmatpush1.msra.mxu0 %v5240
    %5278 = vmatprep.subr.mxu0 0.0
    %5279 = vmatpush1.msra.mxu0 0.0
    %5280 = vmatprep.subr.mxu0 0.0
    %5281 = vmatpush1.msra.mxu0 0.0
    %5282 = vmatprep.subr.mxu0 0.0
    %5283 = vmatpush1.msra.mxu0 0.0
    %5284 = vmatprep.subr.mxu0 0.0
    %5285 = vmatpush1.msra.mxu0 0.0
    %5286 = vmatprep.subr.mxu0 0.0
    %5287 = vmatpush1.msra.mxu0 0.0
    %5288 = vmatprep.subr.mxu0 0.0
    %5289 = vmatpush1.msra.mxu0 0.0
    %5290 = vmatprep.subr.mxu0 0.0
    %5291 = vmatpush1.msra.mxu0 0.0
    %5292 = vmatprep.subr.mxu0 0.0
    %5293 = vmatpush1.msra.mxu0 0.0
    %5294 = vmatprep.subr.mxu0 0.0
    %5295 = vmatpush1.msra.mxu0 0.0
    %5296 = vmatprep.subr.mxu0 0.0
    %5297 = vmatpush1.msra.mxu0 0.0
    %5298 = vmatprep.subr.mxu0 0.0
    %5299 = vmatpush1.msra.mxu0 0.0
    %5300 = vmatprep.subr.mxu0 0.0
    %5301 = vmatpush1.msra.mxu0 0.0
    %5302 = vmatprep.subr.mxu0 0.0
    %5303 = vmatpush1.msra.mxu0 0.0
    %5304 = vmatprep.subr.mxu0 0.0
    %5305 = vmatpush1.msra.mxu0 0.0
    %5306 = vmatprep.subr.mxu0 0.0
    %5307 = vmatpush1.msra.mxu0 0.0
    %5308 = vmatprep.subr.mxu0 0.0
    %5309 = vmatpush1.msra.mxu0 0.0
    %5310 = vmatprep.mubr.f32.mxu0 0.0
    %5311 = vmatmul.mubr.f32.gmra.mrb[0].mxu0 %v5222
    %v5312 = vpop.f32.mrb[0].mxu0
    %v5313 = vadd.f32 %v5245, %v5312
    %v5314 = vpop.f32.mrb[0].mxu0
    %5315 = vmatprep.mubr.f32.mxu0 0.0
    %5316 = vmatmul.mubr.f32.gmra.mrb[0].mxu0 %v5223
    %v5317 = vpop.f32.mrb[0].mxu0
    %v5318 = vadd.f32 %v5245, %v5317
    %v5319 = vpop.f32.mrb[0].mxu0
    %5320 = vdwg.mxu0
    %v5321 = vadd.f32 %v5073, %v5313
    %v5322 = vadd.f32 %v5074, %v5318
    %v5323 = vld [vmem:[%s2 + $0x4] sm:$0x1]
    %v5324 = vld [vmem:[%s3 + $0x4] sm:$0x1]
    %v5325 = vsel %vm60, %v5321, 0.0
    %5326 = vadd.xlane.f32.xlu0 %v5325
    %v5327 = vpop.xlane.xlu0 %5326
    %v5328 = vsel %vm60, %v5322, 0.0
    %5329 = vadd.xlane.f32.xlu0 %v5328
    %v5330 = vpop.xlane.xlu0 %5329
    %v5331 = vmul.f32 %v5327, %v67
    %v5332 = vmul.f32 %v5330, %v67
    %v5333 = vsub.f32 %v5321, %v5331
    %v5334 = vsub.f32 %v5322, %v5332
    %v5335 = vmul.f32 %v5333, %v5333
    %v5336 = vmul.f32 %v5334, %v5334
    %v5337 = vsel %vm60, %v5335, 0.0
    %5338 = vadd.xlane.f32.xlu0 %v5337
    %v5339 = vpop.xlane.xlu0 %5338
    %v5340 = vsel %vm60, %v5336, 0.0
    %5341 = vadd.xlane.f32.xlu0 %v5340
    %v5342 = vpop.xlane.xlu0 %5341
    %v5343 = vmul.f32 %v5339, %v67
    %v5344 = vmul.f32 %v5342, %v67
    %v5345 = vadd.f32 %v5343, 1e-05
    %v5346 = vadd.f32 %v5344, 1e-05
    %v5347 = vrsqrt.pop %v5345
    %v5348 = vrsqrt.pop %v5346
    %v5349 = vmul.f32 %v5333, %v5347
    %v5350 = vmul.f32 %v5334, %v5348
    %v5351 = vlaneseq
    %v5352 = vshrl.u32 %v5351, 7
    %v5353 = vsub.s32 0, %v5352
    %v5354 = vrot.slane %v5323, %v5353
    %v5355 = vmul.f32 %v5349, %v5354
    %v5356 = vmul.f32 %v5350, %v5354
    %v5357 = vlaneseq
    %v5358 = vshrl.u32 %v5357, 7
    %v5359 = vsub.s32 0, %v5358
    %v5360 = vrot.slane %v5324, %v5359
    %v5361 = vadd.f32 %v5355, %v5360
    %v5362 = vadd.f32 %v5356, %v5360
    %s5363 = scalar_lea.vmem %s4, 128
    %v5364 = vld [vmem:[%s5363] sm:$0xff]
    %v5365 = vld [vmem:[%s5363 + $0x8] sm:$0xff]
    %v5366 = vld [vmem:[%s5363 + $0x10] sm:$0xff]
    %v5367 = vld [vmem:[%s5363 + $0x18] sm:$0xff]
    %v5368 = vld [vmem:[%s5 + $0x4] sm:$0x1]
    %v5369 = vlaneseq
    %v5370 = vshrl.u32 %v5369, 7
    %v5371 = vsub.s32 0, %v5370
    %v5372 = vrot.slane %v5368, %v5371
    %v5374 = vsel %vm60, %v5361, 0
    %v5377 = vsel %vm60, %v5362, 0
    %5379 = vmatprep.subr.mxu0 0.0
    %5380 = vmatpush1.msra.mxu0 %v5364
    %5381 = vmatprep.subr.mxu0 0.0
    %5382 = vmatpush1.msra.mxu0 %v5365
    %5383 = vmatprep.subr.mxu0 0.0
    %5384 = vmatpush1.msra.mxu0 %v5366
    %5385 = vmatprep.subr.mxu0 0.0
    %5386 = vmatpush1.msra.mxu0 %v5367
    %5387 = vmatprep.subr.mxu0 0.0
    %5388 = vmatpush1.msra.mxu0 0.0
    %5389 = vmatprep.subr.mxu0 0.0
    %5390 = vmatpush1.msra.mxu0 0.0
    %5391 = vmatprep.subr.mxu0 0.0
    %5392 = vmatpush1.msra.mxu0 0.0
    %5393 = vmatprep.subr.mxu0 0.0
    %5394 = vmatpush1.msra.mxu0 0.0
    %5395 = vmatprep.subr.mxu0 0.0
    %5396 = vmatpush1.msra.mxu0 0.0
    %5397 = vmatprep.subr.mxu0 0.0
    %5398 = vmatpush1.msra.mxu0 0.0
    %5399 = vmatprep.subr.mxu0 0.0
    %5400 = vmatpush1.msra.mxu0 0.0
    %5401 = vmatprep.subr.mxu0 0.0
    %5402 = vmatpush1.msra.mxu0 0.0
    %5403 = vmatprep.subr.mxu0 0.0
    %5404 = vmatpush1.msra.mxu0 0.0
    %5405 = vmatprep.subr.mxu0 0.0
    %5406 = vmatpush1.msra.mxu0 0.0
    %5407 = vmatprep.subr.mxu0 0.0
    %5408 = vmatpush1.msra.mxu0 0.0
    %5409 = vmatprep.subr.mxu0 0.0
    %5410 = vmatpush1.msra.mxu0 0.0
    %5411 = vmatprep.subr.mxu0 0.0
    %5412 = vmatpush1.msra.mxu0 0.0
    %5413 = vmatprep.subr.mxu0 0.0
    %5414 = vmatpush1.msra.mxu0 0.0
    %5415 = vmatprep.subr.mxu0 0.0
    %5416 = vmatpush1.msra.mxu0 0.0
    %5417 = vmatprep.subr.mxu0 0.0
    %5418 = vmatpush1.msra.mxu0 0.0
    %5419 = vmatprep.subr.mxu0 0.0
    %5420 = vmatpush1.msra.mxu0 0.0
    %5421 = vmatprep.subr.mxu0 0.0
    %5422 = vmatpush1.msra.mxu0 0.0
    %5423 = vmatprep.subr.mxu0 0.0
    %5424 = vmatpush1.msra.mxu0 0.0
    %5425 = vmatprep.subr.mxu0 0.0
    %5426 = vmatpush1.msra.mxu0 0.0
    %5427 = vmatprep.subr.mxu0 0.0
    %5428 = vmatpush1.msra.mxu0 0.0
    %5429 = vmatprep.subr.mxu0 0.0
    %5430 = vmatpush1.msra.mxu0 0.0
    %5431 = vmatprep.subr.mxu0 0.0
    %5432 = vmatpush1.msra.mxu0 0.0
    %5433 = vmatprep.subr.mxu0 0.0
    %5434 = vmatpush1.msra.mxu0 0.0
    %5435 = vmatprep.subr.mxu0 0.0
    %5436 = vmatpush1.msra.mxu0 0.0
    %5437 = vmatprep.subr.mxu0 0.0
    %5438 = vmatpush1.msra.mxu0 0.0
    %5439 = vmatprep.subr.mxu0 0.0
    %5440 = vmatpush1.msra.mxu0 0.0
    %5441 = vmatprep.subr.mxu0 0.0
    %5442 = vmatpush1.msra.mxu0 0.0
    %5443 = vmatprep.mubr.f32.mxu0 0.0
    %5444 = vmatmul.mubr.f32.gmra.mrb[0].mxu0 %v5374
    %v5445 = vpop.f32.mrb[0].mxu0
    %v5446 = vadd.f32 %v5372, %v5445
    %v5447 = vpop.f32.mrb[0].mxu0
    %5448 = vmatprep.mubr.f32.mxu0 0.0
    %5449 = vmatmul.mubr.f32.gmra.mrb[0].mxu0 %v5377
    %v5450 = vpop.f32.mrb[0].mxu0
    %v5451 = vadd.f32 %v5372, %v5450
    %v5452 = vpop.f32.mrb[0].mxu0
    %5453 = vdwg.mxu0
    %5456 = vrot.lane.b32.xlu0 %v5446, 96
    %v5457 = vpop.permute.xlu0 %5456
    %5458 = vrot.lane.b32.xlu0 %v5451, 96
    %v5459 = vpop.permute.xlu0 %5458
    %v5460 = vsel %vm196, %v5446, 0
    %v5462 = vsel %vm196, %v5451, 0
    %v5464 = vsel %vm196, %v5457, 0
    %v5466 = vsel %vm196, %v5459, 0
    %5468 = vmatprep.subr.mxu0 0.0
    %5469 = vmatpush1.xpose.msra.mxu0 %v5464
    %5470 = vmatprep.subr.mxu0 0.0
    %5471 = vmatpush1.xpose.msra.mxu0 %v5466
    %5472 = vmatprep.subr.mxu0 0.0
    %5473 = vmatpush1.xpose.msra.mxu0 0.0
    %5474 = vmatprep.subr.mxu0 0.0
    %5475 = vmatpush1.xpose.msra.mxu0 0.0
    %5476 = vmatprep.subr.mxu0 0.0
    %5477 = vmatpush1.xpose.msra.mxu0 0.0
    %5478 = vmatprep.subr.mxu0 0.0
    %5479 = vmatpush1.xpose.msra.mxu0 0.0
    %5480 = vmatprep.subr.mxu0 0.0
    %5481 = vmatpush1.xpose.msra.mxu0 0.0
    %5482 = vmatprep.subr.mxu0 0.0
    %5483 = vmatpush1.xpose.msra.mxu0 0.0
    %5484 = vmatprep.subr.mxu0 0.0
    %5485 = vmatpush1.xpose.msra.mxu0 0.0
    %5486 = vmatprep.subr.mxu0 0.0
    %5487 = vmatpush1.xpose.msra.mxu0 0.0
    %5488 = vmatprep.subr.mxu0 0.0
    %5489 = vmatpush1.xpose.msra.mxu0 0.0
    %5490 = vmatprep.subr.mxu0 0.0
    %5491 = vmatpush1.xpose.msra.mxu0 0.0
    %5492 = vmatprep.subr.mxu0 0.0
    %5493 = vmatpush1.xpose.msra.mxu0 0.0
    %5494 = vmatprep.subr.mxu0 0.0
    %5495 = vmatpush1.xpose.msra.mxu0 0.0
    %5496 = vmatprep.subr.mxu0 0.0
    %5497 = vmatpush1.xpose.msra.mxu0 0.0
    %5498 = vmatprep.subr.mxu0 0.0
    %5499 = vmatpush1.xpose.msra.mxu0 0.0
    %5500 = vmatprep.subr.mxu0 0.0
    %5501 = vmatpush1.xpose.msra.mxu0 0.0
    %5502 = vmatprep.subr.mxu0 0.0
    %5503 = vmatpush1.xpose.msra.mxu0 0.0
    %5504 = vmatprep.subr.mxu0 0.0
    %5505 = vmatpush1.xpose.msra.mxu0 0.0
    %5506 = vmatprep.subr.mxu0 0.0
    %5507 = vmatpush1.xpose.msra.mxu0 0.0
    %5508 = vmatprep.subr.mxu0 0.0
    %5509 = vmatpush1.xpose.msra.mxu0 0.0
    %5510 = vmatprep.subr.mxu0 0.0
    %5511 = vmatpush1.xpose.msra.mxu0 0.0
    %5512 = vmatprep.subr.mxu0 0.0
    %5513 = vmatpush1.xpose.msra.mxu0 0.0
    %5514 = vmatprep.subr.mxu0 0.0
    %5515 = vmatpush1.xpose.msra.mxu0 0.0
    %5516 = vmatprep.subr.mxu0 0.0
    %5517 = vmatpush1.xpose.msra.mxu0 0.0
    %5518 = vmatprep.subr.mxu0 0.0
    %5519 = vmatpush1.xpose.msra.mxu0 0.0
    %5520 = vmatprep.subr.mxu0 0.0
    %5521 = vmatpush1.xpose.msra.mxu0 0.0
    %5522 = vmatprep.subr.mxu0 0.0
    %5523 = vmatpush1.xpose.msra.mxu0 0.0
    %5524 = vmatprep.subr.mxu0 0.0
    %5525 = vmatpush1.xpose.msra.mxu0 0.0
    %5526 = vmatprep.subr.mxu0 0.0
    %5527 = vmatpush1.xpose.msra.mxu0 0.0
    %5528 = vmatprep.subr.mxu0 0.0
    %5529 = vmatpush1.xpose.msra.mxu0 0.0
    %5530 = vmatprep.subr.mxu0 0.0
    %5531 = vmatpush1.xpose.msra.mxu0 0.0
    %5532 = vmatprep.mubr.f32.mxu0 0.0
    %5533 = vmatmul.mubr.f32.gmra.mrb[0].mxu0 %v5460
    %v5534 = vpop.f32.mrb[0].mxu0
    %v5535 = vadd.f32 0.0, %v5534
    %v5536 = vpop.f32.mrb[0].mxu0
    %5537 = vmatprep.mubr.f32.mxu0 0.0
    %5538 = vmatmul.mubr.f32.gmra.mrb[0].mxu0 %v5462
    %v5539 = vpop.f32.mrb[0].mxu0
    %v5540 = vadd.f32 0.0, %v5539
    %v5541 = vpop.f32.mrb[0].mxu0
    %5542 = vdwg.mxu0
    %v5543 = vmul.f32 %v5535, 0.35355338
    %v5544 = vmul.f32 %v5540, 0.35355338
    %v5545 = vadd.f32 %v5543, %v56
    %v5546 = vadd.f32 %v5544, %v57
    %v5547 = vsel %vm284, %v5545, -inf
    %5548 = vmax.xlane.f32.xlu0 %v5547
    %v5549 = vpop.xlane.xlu0 %5548
    %v5550 = vsel %vm284, %v5546, -inf
    %5551 = vmax.xlane.f32.xlu0 %v5550
    %v5552 = vpop.xlane.xlu0 %5551
    %v5553 = vsub.f32 %v5545, %v5549
    %v5554 = vsub.f32 %v5546, %v5552
    %v5555 = vmul.f32 %v5553, 1.442695
    %v5556 = vpow.pop %v5555
    %v5557 = vmul.f32 %v5554, 1.442695
    %v5558 = vpow.pop %v5557
    %v5559 = vsel %vm284, %v5556, 0.0
    %5560 = vadd.xlane.f32.xlu0 %v5559
    %v5561 = vpop.xlane.xlu0 %5560
    %v5562 = vsel %vm284, %v5558, 0.0
    %5563 = vadd.xlane.f32.xlu0 %v5562
    %v5564 = vpop.xlane.xlu0 %5563
    %v5565 = vrcp.pop %v5561
    %v5566 = vrcp.pop %v5564
    %v5567 = vmul.f32 %v5556, %v5565
    %v5568 = vmul.f32 %v5558, %v5566
    %5569 = vrot.lane.b32.xlu0 %v5446, 64
    %v5570 = vpop.permute.xlu0 %5569
    %5571 = vrot.lane.b32.xlu0 %v5451, 64
    %v5572 = vpop.permute.xlu0 %5571
    %v5576 = vsel %vm284, %v5567, 0
    %v5579 = vsel %vm284, %v5568, 0
    %5581 = vmatprep.subr.mxu0 0.0
    %5582 = vmatpush1.msra.mxu0 %v5570
    %5583 = vmatprep.subr.mxu0 0.0
    %5584 = vmatpush1.msra.mxu0 %v5572
    %5585 = vmatprep.subr.mxu0 0.0
    %5586 = vmatpush1.msra.mxu0 0.0
    %5587 = vmatprep.subr.mxu0 0.0
    %5588 = vmatpush1.msra.mxu0 0.0
    %5589 = vmatprep.subr.mxu0 0.0
    %5590 = vmatpush1.msra.mxu0 0.0
    %5591 = vmatprep.subr.mxu0 0.0
    %5592 = vmatpush1.msra.mxu0 0.0
    %5593 = vmatprep.subr.mxu0 0.0
    %5594 = vmatpush1.msra.mxu0 0.0
    %5595 = vmatprep.subr.mxu0 0.0
    %5596 = vmatpush1.msra.mxu0 0.0
    %5597 = vmatprep.subr.mxu0 0.0
    %5598 = vmatpush1.msra.mxu0 0.0
    %5599 = vmatprep.subr.mxu0 0.0
    %5600 = vmatpush1.msra.mxu0 0.0
    %5601 = vmatprep.subr.mxu0 0.0
    %5602 = vmatpush1.msra.mxu0 0.0
    %5603 = vmatprep.subr.mxu0 0.0
    %5604 = vmatpush1.msra.mxu0 0.0
    %5605 = vmatprep.subr.mxu0 0.0
    %5606 = vmatpush1.msra.mxu0 0.0
    %5607 = vmatprep.subr.mxu0 0.0
    %5608 = vmatpush1.msra.mxu0 0.0
    %5609 = vmatprep.subr.mxu0 0.0
    %5610 = vmatpush1.msra.mxu0 0.0
    %5611 = vmatprep.subr.mxu0 0.0
    %5612 = vmatpush1.msra.mxu0 0.0
    %5613 = vmatprep.subr.mxu0 0.0
    %5614 = vmatpush1.msra.mxu0 0.0
    %5615 = vmatprep.subr.mxu0 0.0
    %5616 = vmatpush1.msra.mxu0 0.0
    %5617 = vmatprep.subr.mxu0 0.0
    %5618 = vmatpush1.msra.mxu0 0.0
    %5619 = vmatprep.subr.mxu0 0.0
    %5620 = vmatpush1.msra.mxu0 0.0
    %5621 = vmatprep.subr.mxu0 0.0
    %5622 = vmatpush1.msra.mxu0 0.0
    %5623 = vmatprep.subr.mxu0 0.0
    %5624 = vmatpush1.msra.mxu0 0.0
    %5625 = vmatprep.subr.mxu0 0.0
    %5626 = vmatpush1.msra.mxu0 0.0
    %5627 = vmatprep.subr.mxu0 0.0
    %5628 = vmatpush1.msra.mxu0 0.0
    %5629 = vmatprep.subr.mxu0 0.0
    %5630 = vmatpush1.msra.mxu0 0.0
    %5631 = vmatprep.subr.mxu0 0.0
    %5632 = vmatpush1.msra.mxu0 0.0
    %5633 = vmatprep.subr.mxu0 0.0
    %5634 = vmatpush1.msra.mxu0 0.0
    %5635 = vmatprep.subr.mxu0 0.0
    %5636 = vmatpush1.msra.mxu0 0.0
    %5637 = vmatprep.subr.mxu0 0.0
    %5638 = vmatpush1.msra.mxu0 0.0
    %5639 = vmatprep.subr.mxu0 0.0
    %5640 = vmatpush1.msra.mxu0 0.0
    %5641 = vmatprep.subr.mxu0 0.0
    %5642 = vmatpush1.msra.mxu0 0.0
    %5643 = vmatprep.subr.mxu0 0.0
    %5644 = vmatpush1.msra.mxu0 0.0
    %5645 = vmatprep.mubr.f32.mxu0 0.0
    %5646 = vmatmul.mubr.f32.gmra.mrb[0].mxu0 %v5576
    %v5647 = vpop.f32.mrb[0].mxu0
    %v5648 = vadd.f32 0.0, %v5647
    %v5649 = vpop.f32.mrb[0].mxu0
    %5650 = vmatprep.mubr.f32.mxu0 0.0
    %5651 = vmatmul.mubr.f32.gmra.mrb[0].mxu0 %v5579
    %v5652 = vpop.f32.mrb[0].mxu0
    %v5653 = vadd.f32 0.0, %v5652
    %v5654 = vpop.f32.mrb[0].mxu0
    %5655 = vdwg.mxu0
    %5656 = vrot.lane.b32.xlu0 %v5446, 120
    %v5657 = vpop.permute.xlu0 %5656
    %5658 = vrot.lane.b32.xlu0 %v5451, 120
    %v5659 = vpop.permute.xlu0 %5658
    %5660 = vrot.lane.b32.xlu0 %v5446, 88
    %v5661 = vpop.permute.xlu0 %5660
    %5662 = vrot.lane.b32.xlu0 %v5451, 88
    %v5663 = vpop.permute.xlu0 %5662
    %v5664 = vsel %vm196, %v5657, 0
    %v5666 = vsel %vm196, %v5659, 0
    %v5668 = vsel %vm196, %v5661, 0
    %v5670 = vsel %vm196, %v5663, 0
    %5672 = vmatprep.subr.mxu0 0.0
    %5673 = vmatpush1.xpose.msra.mxu0 %v5668
    %5674 = vmatprep.subr.mxu0 0.0
    %5675 = vmatpush1.xpose.msra.mxu0 %v5670
    %5676 = vmatprep.subr.mxu0 0.0
    %5677 = vmatpush1.xpose.msra.mxu0 0.0
    %5678 = vmatprep.subr.mxu0 0.0
    %5679 = vmatpush1.xpose.msra.mxu0 0.0
    %5680 = vmatprep.subr.mxu0 0.0
    %5681 = vmatpush1.xpose.msra.mxu0 0.0
    %5682 = vmatprep.subr.mxu0 0.0
    %5683 = vmatpush1.xpose.msra.mxu0 0.0
    %5684 = vmatprep.subr.mxu0 0.0
    %5685 = vmatpush1.xpose.msra.mxu0 0.0
    %5686 = vmatprep.subr.mxu0 0.0
    %5687 = vmatpush1.xpose.msra.mxu0 0.0
    %5688 = vmatprep.subr.mxu0 0.0
    %5689 = vmatpush1.xpose.msra.mxu0 0.0
    %5690 = vmatprep.subr.mxu0 0.0
    %5691 = vmatpush1.xpose.msra.mxu0 0.0
    %5692 = vmatprep.subr.mxu0 0.0
    %5693 = vmatpush1.xpose.msra.mxu0 0.0
    %5694 = vmatprep.subr.mxu0 0.0
    %5695 = vmatpush1.xpose.msra.mxu0 0.0
    %5696 = vmatprep.subr.mxu0 0.0
    %5697 = vmatpush1.xpose.msra.mxu0 0.0
    %5698 = vmatprep.subr.mxu0 0.0
    %5699 = vmatpush1.xpose.msra.mxu0 0.0
    %5700 = vmatprep.subr.mxu0 0.0
    %5701 = vmatpush1.xpose.msra.mxu0 0.0
    %5702 = vmatprep.subr.mxu0 0.0
    %5703 = vmatpush1.xpose.msra.mxu0 0.0
    %5704 = vmatprep.subr.mxu0 0.0
    %5705 = vmatpush1.xpose.msra.mxu0 0.0
    %5706 = vmatprep.subr.mxu0 0.0
    %5707 = vmatpush1.xpose.msra.mxu0 0.0
    %5708 = vmatprep.subr.mxu0 0.0
    %5709 = vmatpush1.xpose.msra.mxu0 0.0
    %5710 = vmatprep.subr.mxu0 0.0
    %5711 = vmatpush1.xpose.msra.mxu0 0.0
    %5712 = vmatprep.subr.mxu0 0.0
    %5713 = vmatpush1.xpose.msra.mxu0 0.0
    %5714 = vmatprep.subr.mxu0 0.0
    %5715 = vmatpush1.xpose.msra.mxu0 0.0
    %5716 = vmatprep.subr.mxu0 0.0
    %5717 = vmatpush1.xpose.msra.mxu0 0.0
    %5718 = vmatprep.subr.mxu0 0.0
    %5719 = vmatpush1.xpose.msra.mxu0 0.0
    %5720 = vmatprep.subr.mxu0 0.0
    %5721 = vmatpush1.xpose.msra.mxu0 0.0
    %5722 = vmatprep.subr.mxu0 0.0
    %5723 = vmatpush1.xpose.msra.mxu0 0.0
    %5724 = vmatprep.subr.mxu0 0.0
    %5725 = vmatpush1.xpose.msra.mxu0 0.0
    %5726 = vmatprep.subr.mxu0 0.0
    %5727 = vmatpush1.xpose.msra.mxu0 0.0
    %5728 = vmatprep.subr.mxu0 0.0
    %5729 = vmatpush1.xpose.msra.mxu0 0.0
    %5730 = vmatprep.subr.mxu0 0.0
    %5731 = vmatpush1.xpose.msra.mxu0 0.0
    %5732 = vmatprep.subr.mxu0 0.0
    %5733 = vmatpush1.xpose.msra.mxu0 0.0
    %5734 = vmatprep.subr.mxu0 0.0
    %5735 = vmatpush1.xpose.msra.mxu0 0.0
    %5736 = vmatprep.mubr.f32.mxu0 0.0
    %5737 = vmatmul.mubr.f32.gmra.mrb[0].mxu0 %v5664
    %v5738 = vpop.f32.mrb[0].mxu0
    %v5739 = vadd.f32 0.0, %v5738
    %v5740 = vpop.f32.mrb[0].mxu0
    %5741 = vmatprep.mubr.f32.mxu0 0.0
    %5742 = vmatmul.mubr.f32.gmra.mrb[0].mxu0 %v5666
    %v5743 = vpop.f32.mrb[0].mxu0
    %v5744 = vadd.f32 0.0, %v5743
    %v5745 = vpop.f32.mrb[0].mxu0
    %5746 = vdwg.mxu0
    %v5747 = vmul.f32 %v5739, 0.35355338
    %v5748 = vmul.f32 %v5744, 0.35355338
    %v5749 = vadd.f32 %v5747, %v56
    %v5750 = vadd.f32 %v5748, %v57
    %v5751 = vsel %vm284, %v5749, -inf
    %5752 = vmax.xlane.f32.xlu0 %v5751
    %v5753 = vpop.xlane.xlu0 %5752
    %v5754 = vsel %vm284, %v5750, -inf
    %5755 = vmax.xlane.f32.xlu0 %v5754
    %v5756 = vpop.xlane.xlu0 %5755
    %v5757 = vsub.f32 %v5749, %v5753
    %v5758 = vsub.f32 %v5750, %v5756
    %v5759 = vmul.f32 %v5757, 1.442695
    %v5760 = vpow.pop %v5759
    %v5761 = vmul.f32 %v5758, 1.442695
    %v5762 = vpow.pop %v5761
    %v5763 = vsel %vm284, %v5760, 0.0
    %5764 = vadd.xlane.f32.xlu0 %v5763
    %v5765 = vpop.xlane.xlu0 %5764
    %v5766 = vsel %vm284, %v5762, 0.0
    %5767 = vadd.xlane.f32.xlu0 %v5766
    %v5768 = vpop.xlane.xlu0 %5767
    %v5769 = vrcp.pop %v5765
    %v5770 = vrcp.pop %v5768
    %v5771 = vmul.f32 %v5760, %v5769
    %v5772 = vmul.f32 %v5762, %v5770
    %5773 = vrot.lane.b32.xlu0 %v5446, 56
    %v5774 = vpop.permute.xlu0 %5773
    %5775 = vrot.lane.b32.xlu0 %v5451, 56
    %v5776 = vpop.permute.xlu0 %5775
    %v5780 = vsel %vm284, %v5771, 0
    %v5783 = vsel %vm284, %v5772, 0
    %5785 = vmatprep.subr.mxu0 0.0
    %5786 = vmatpush1.msra.mxu0 %v5774
    %5787 = vmatprep.subr.mxu0 0.0
    %5788 = vmatpush1.msra.mxu0 %v5776
    %5789 = vmatprep.subr.mxu0 0.0
    %5790 = vmatpush1.msra.mxu0 0.0
    %5791 = vmatprep.subr.mxu0 0.0
    %5792 = vmatpush1.msra.mxu0 0.0
    %5793 = vmatprep.subr.mxu0 0.0
    %5794 = vmatpush1.msra.mxu0 0.0
    %5795 = vmatprep.subr.mxu0 0.0
    %5796 = vmatpush1.msra.mxu0 0.0
    %5797 = vmatprep.subr.mxu0 0.0
    %5798 = vmatpush1.msra.mxu0 0.0
    %5799 = vmatprep.subr.mxu0 0.0
    %5800 = vmatpush1.msra.mxu0 0.0
    %5801 = vmatprep.subr.mxu0 0.0
    %5802 = vmatpush1.msra.mxu0 0.0
    %5803 = vmatprep.subr.mxu0 0.0
    %5804 = vmatpush1.msra.mxu0 0.0
    %5805 = vmatprep.subr.mxu0 0.0
    %5806 = vmatpush1.msra.mxu0 0.0
    %5807 = vmatprep.subr.mxu0 0.0
    %5808 = vmatpush1.msra.mxu0 0.0
    %5809 = vmatprep.subr.mxu0 0.0
    %5810 = vmatpush1.msra.mxu0 0.0
    %5811 = vmatprep.subr.mxu0 0.0
    %5812 = vmatpush1.msra.mxu0 0.0
    %5813 = vmatprep.subr.mxu0 0.0
    %5814 = vmatpush1.msra.mxu0 0.0
    %5815 = vmatprep.subr.mxu0 0.0
    %5816 = vmatpush1.msra.mxu0 0.0
    %5817 = vmatprep.subr.mxu0 0.0
    %5818 = vmatpush1.msra.mxu0 0.0
    %5819 = vmatprep.subr.mxu0 0.0
    %5820 = vmatpush1.msra.mxu0 0.0
    %5821 = vmatprep.subr.mxu0 0.0
    %5822 = vmatpush1.msra.mxu0 0.0
    %5823 = vmatprep.subr.mxu0 0.0
    %5824 = vmatpush1.msra.mxu0 0.0
    %5825 = vmatprep.subr.mxu0 0.0
    %5826 = vmatpush1.msra.mxu0 0.0
    %5827 = vmatprep.subr.mxu0 0.0
    %5828 = vmatpush1.msra.mxu0 0.0
    %5829 = vmatprep.subr.mxu0 0.0
    %5830 = vmatpush1.msra.mxu0 0.0
    %5831 = vmatprep.subr.mxu0 0.0
    %5832 = vmatpush1.msra.mxu0 0.0
    %5833 = vmatprep.subr.mxu0 0.0
    %5834 = vmatpush1.msra.mxu0 0.0
    %5835 = vmatprep.subr.mxu0 0.0
    %5836 = vmatpush1.msra.mxu0 0.0
    %5837 = vmatprep.subr.mxu0 0.0
    %5838 = vmatpush1.msra.mxu0 0.0
    %5839 = vmatprep.subr.mxu0 0.0
    %5840 = vmatpush1.msra.mxu0 0.0
    %5841 = vmatprep.subr.mxu0 0.0
    %5842 = vmatpush1.msra.mxu0 0.0
    %5843 = vmatprep.subr.mxu0 0.0
    %5844 = vmatpush1.msra.mxu0 0.0
    %5845 = vmatprep.subr.mxu0 0.0
    %5846 = vmatpush1.msra.mxu0 0.0
    %5847 = vmatprep.subr.mxu0 0.0
    %5848 = vmatpush1.msra.mxu0 0.0
    %5849 = vmatprep.mubr.f32.mxu0 0.0
    %5850 = vmatmul.mubr.f32.gmra.mrb[0].mxu0 %v5780
    %v5851 = vpop.f32.mrb[0].mxu0
    %v5852 = vadd.f32 0.0, %v5851
    %v5853 = vpop.f32.mrb[0].mxu0
    %5854 = vmatprep.mubr.f32.mxu0 0.0
    %5855 = vmatmul.mubr.f32.gmra.mrb[0].mxu0 %v5783
    %v5856 = vpop.f32.mrb[0].mxu0
    %v5857 = vadd.f32 0.0, %v5856
    %v5858 = vpop.f32.mrb[0].mxu0
    %5859 = vdwg.mxu0
    %5860 = vrot.lane.b32.xlu0 %v5446, 112
    %v5861 = vpop.permute.xlu0 %5860
    %5862 = vrot.lane.b32.xlu0 %v5451, 112
    %v5863 = vpop.permute.xlu0 %5862
    %5864 = vrot.lane.b32.xlu0 %v5446, 80
    %v5865 = vpop.permute.xlu0 %5864
    %5866 = vrot.lane.b32.xlu0 %v5451, 80
    %v5867 = vpop.permute.xlu0 %5866
    %v5868 = vsel %vm196, %v5861, 0
    %v5870 = vsel %vm196, %v5863, 0
    %v5872 = vsel %vm196, %v5865, 0
    %v5874 = vsel %vm196, %v5867, 0
    %5876 = vmatprep.subr.mxu0 0.0
    %5877 = vmatpush1.xpose.msra.mxu0 %v5872
    %5878 = vmatprep.subr.mxu0 0.0
    %5879 = vmatpush1.xpose.msra.mxu0 %v5874
    %5880 = vmatprep.subr.mxu0 0.0
    %5881 = vmatpush1.xpose.msra.mxu0 0.0
    %5882 = vmatprep.subr.mxu0 0.0
    %5883 = vmatpush1.xpose.msra.mxu0 0.0
    %5884 = vmatprep.subr.mxu0 0.0
    %5885 = vmatpush1.xpose.msra.mxu0 0.0
    %5886 = vmatprep.subr.mxu0 0.0
    %5887 = vmatpush1.xpose.msra.mxu0 0.0
    %5888 = vmatprep.subr.mxu0 0.0
    %5889 = vmatpush1.xpose.msra.mxu0 0.0
    %5890 = vmatprep.subr.mxu0 0.0
    %5891 = vmatpush1.xpose.msra.mxu0 0.0
    %5892 = vmatprep.subr.mxu0 0.0
    %5893 = vmatpush1.xpose.msra.mxu0 0.0
    %5894 = vmatprep.subr.mxu0 0.0
    %5895 = vmatpush1.xpose.msra.mxu0 0.0
    %5896 = vmatprep.subr.mxu0 0.0
    %5897 = vmatpush1.xpose.msra.mxu0 0.0
    %5898 = vmatprep.subr.mxu0 0.0
    %5899 = vmatpush1.xpose.msra.mxu0 0.0
    %5900 = vmatprep.subr.mxu0 0.0
    %5901 = vmatpush1.xpose.msra.mxu0 0.0
    %5902 = vmatprep.subr.mxu0 0.0
    %5903 = vmatpush1.xpose.msra.mxu0 0.0
    %5904 = vmatprep.subr.mxu0 0.0
    %5905 = vmatpush1.xpose.msra.mxu0 0.0
    %5906 = vmatprep.subr.mxu0 0.0
    %5907 = vmatpush1.xpose.msra.mxu0 0.0
    %5908 = vmatprep.subr.mxu0 0.0
    %5909 = vmatpush1.xpose.msra.mxu0 0.0
    %5910 = vmatprep.subr.mxu0 0.0
    %5911 = vmatpush1.xpose.msra.mxu0 0.0
    %5912 = vmatprep.subr.mxu0 0.0
    %5913 = vmatpush1.xpose.msra.mxu0 0.0
    %5914 = vmatprep.subr.mxu0 0.0
    %5915 = vmatpush1.xpose.msra.mxu0 0.0
    %5916 = vmatprep.subr.mxu0 0.0
    %5917 = vmatpush1.xpose.msra.mxu0 0.0
    %5918 = vmatprep.subr.mxu0 0.0
    %5919 = vmatpush1.xpose.msra.mxu0 0.0
    %5920 = vmatprep.subr.mxu0 0.0
    %5921 = vmatpush1.xpose.msra.mxu0 0.0
    %5922 = vmatprep.subr.mxu0 0.0
    %5923 = vmatpush1.xpose.msra.mxu0 0.0
    %5924 = vmatprep.subr.mxu0 0.0
    %5925 = vmatpush1.xpose.msra.mxu0 0.0
    %5926 = vmatprep.subr.mxu0 0.0
    %5927 = vmatpush1.xpose.msra.mxu0 0.0
    %5928 = vmatprep.subr.mxu0 0.0
    %5929 = vmatpush1.xpose.msra.mxu0 0.0
    %5930 = vmatprep.subr.mxu0 0.0
    %5931 = vmatpush1.xpose.msra.mxu0 0.0
    %5932 = vmatprep.subr.mxu0 0.0
    %5933 = vmatpush1.xpose.msra.mxu0 0.0
    %5934 = vmatprep.subr.mxu0 0.0
    %5935 = vmatpush1.xpose.msra.mxu0 0.0
    %5936 = vmatprep.subr.mxu0 0.0
    %5937 = vmatpush1.xpose.msra.mxu0 0.0
    %5938 = vmatprep.subr.mxu0 0.0
    %5939 = vmatpush1.xpose.msra.mxu0 0.0
    %5940 = vmatprep.mubr.f32.mxu0 0.0
    %5941 = vmatmul.mubr.f32.gmra.mrb[0].mxu0 %v5868
    %v5942 = vpop.f32.mrb[0].mxu0
    %v5943 = vadd.f32 0.0, %v5942
    %v5944 = vpop.f32.mrb[0].mxu0
    %5945 = vmatprep.mubr.f32.mxu0 0.0
    %5946 = vmatmul.mubr.f32.gmra.mrb[0].mxu0 %v5870
    %v5947 = vpop.f32.mrb[0].mxu0
    %v5948 = vadd.f32 0.0, %v5947
    %v5949 = vpop.f32.mrb[0].mxu0
    %5950 = vdwg.mxu0
    %v5951 = vmul.f32 %v5943, 0.35355338
    %v5952 = vmul.f32 %v5948, 0.35355338
    %v5953 = vadd.f32 %v5951, %v56
    %v5954 = vadd.f32 %v5952, %v57
    %v5955 = vsel %vm284, %v5953, -inf
    %5956 = vmax.xlane.f32.xlu0 %v5955
    %v5957 = vpop.xlane.xlu0 %5956
    %v5958 = vsel %vm284, %v5954, -inf
    %5959 = vmax.xlane.f32.xlu0 %v5958
    %v5960 = vpop.xlane.xlu0 %5959
    %v5961 = vsub.f32 %v5953, %v5957
    %v5962 = vsub.f32 %v5954, %v5960
    %v5963 = vmul.f32 %v5961, 1.442695
    %v5964 = vpow.pop %v5963
    %v5965 = vmul.f32 %v5962, 1.442695
    %v5966 = vpow.pop %v5965
    %v5967 = vsel %vm284, %v5964, 0.0
    %5968 = vadd.xlane.f32.xlu0 %v5967
    %v5969 = vpop.xlane.xlu0 %5968
    %v5970 = vsel %vm284, %v5966, 0.0
    %5971 = vadd.xlane.f32.xlu0 %v5970
    %v5972 = vpop.xlane.xlu0 %5971
    %v5973 = vrcp.pop %v5969
    %v5974 = vrcp.pop %v5972
    %v5975 = vmul.f32 %v5964, %v5973
    %v5976 = vmul.f32 %v5966, %v5974
    %5977 = vrot.lane.b32.xlu0 %v5446, 48
    %v5978 = vpop.permute.xlu0 %5977
    %5979 = vrot.lane.b32.xlu0 %v5451, 48
    %v5980 = vpop.permute.xlu0 %5979
    %v5984 = vsel %vm284, %v5975, 0
    %v5987 = vsel %vm284, %v5976, 0
    %5989 = vmatprep.subr.mxu0 0.0
    %5990 = vmatpush1.msra.mxu0 %v5978
    %5991 = vmatprep.subr.mxu0 0.0
    %5992 = vmatpush1.msra.mxu0 %v5980
    %5993 = vmatprep.subr.mxu0 0.0
    %5994 = vmatpush1.msra.mxu0 0.0
    %5995 = vmatprep.subr.mxu0 0.0
    %5996 = vmatpush1.msra.mxu0 0.0
    %5997 = vmatprep.subr.mxu0 0.0
    %5998 = vmatpush1.msra.mxu0 0.0
    %5999 = vmatprep.subr.mxu0 0.0
    %6000 = vmatpush1.msra.mxu0 0.0
    %6001 = vmatprep.subr.mxu0 0.0
    %6002 = vmatpush1.msra.mxu0 0.0
    %6003 = vmatprep.subr.mxu0 0.0
    %6004 = vmatpush1.msra.mxu0 0.0
    %6005 = vmatprep.subr.mxu0 0.0
    %6006 = vmatpush1.msra.mxu0 0.0
    %6007 = vmatprep.subr.mxu0 0.0
    %6008 = vmatpush1.msra.mxu0 0.0
    %6009 = vmatprep.subr.mxu0 0.0
    %6010 = vmatpush1.msra.mxu0 0.0
    %6011 = vmatprep.subr.mxu0 0.0
    %6012 = vmatpush1.msra.mxu0 0.0
    %6013 = vmatprep.subr.mxu0 0.0
    %6014 = vmatpush1.msra.mxu0 0.0
    %6015 = vmatprep.subr.mxu0 0.0
    %6016 = vmatpush1.msra.mxu0 0.0
    %6017 = vmatprep.subr.mxu0 0.0
    %6018 = vmatpush1.msra.mxu0 0.0
    %6019 = vmatprep.subr.mxu0 0.0
    %6020 = vmatpush1.msra.mxu0 0.0
    %6021 = vmatprep.subr.mxu0 0.0
    %6022 = vmatpush1.msra.mxu0 0.0
    %6023 = vmatprep.subr.mxu0 0.0
    %6024 = vmatpush1.msra.mxu0 0.0
    %6025 = vmatprep.subr.mxu0 0.0
    %6026 = vmatpush1.msra.mxu0 0.0
    %6027 = vmatprep.subr.mxu0 0.0
    %6028 = vmatpush1.msra.mxu0 0.0
    %6029 = vmatprep.subr.mxu0 0.0
    %6030 = vmatpush1.msra.mxu0 0.0
    %6031 = vmatprep.subr.mxu0 0.0
    %6032 = vmatpush1.msra.mxu0 0.0
    %6033 = vmatprep.subr.mxu0 0.0
    %6034 = vmatpush1.msra.mxu0 0.0
    %6035 = vmatprep.subr.mxu0 0.0
    %6036 = vmatpush1.msra.mxu0 0.0
    %6037 = vmatprep.subr.mxu0 0.0
    %6038 = vmatpush1.msra.mxu0 0.0
    %6039 = vmatprep.subr.mxu0 0.0
    %6040 = vmatpush1.msra.mxu0 0.0
    %6041 = vmatprep.subr.mxu0 0.0
    %6042 = vmatpush1.msra.mxu0 0.0
    %6043 = vmatprep.subr.mxu0 0.0
    %6044 = vmatpush1.msra.mxu0 0.0
    %6045 = vmatprep.subr.mxu0 0.0
    %6046 = vmatpush1.msra.mxu0 0.0
    %6047 = vmatprep.subr.mxu0 0.0
    %6048 = vmatpush1.msra.mxu0 0.0
    %6049 = vmatprep.subr.mxu0 0.0
    %6050 = vmatpush1.msra.mxu0 0.0
    %6051 = vmatprep.subr.mxu0 0.0
    %6052 = vmatpush1.msra.mxu0 0.0
    %6053 = vmatprep.mubr.f32.mxu0 0.0
    %6054 = vmatmul.mubr.f32.gmra.mrb[0].mxu0 %v5984
    %v6055 = vpop.f32.mrb[0].mxu0
    %v6056 = vadd.f32 0.0, %v6055
    %v6057 = vpop.f32.mrb[0].mxu0
    %6058 = vmatprep.mubr.f32.mxu0 0.0
    %6059 = vmatmul.mubr.f32.gmra.mrb[0].mxu0 %v5987
    %v6060 = vpop.f32.mrb[0].mxu0
    %v6061 = vadd.f32 0.0, %v6060
    %v6062 = vpop.f32.mrb[0].mxu0
    %6063 = vdwg.mxu0
    %6064 = vrot.lane.b32.xlu0 %v5446, 104
    %v6065 = vpop.permute.xlu0 %6064
    %6066 = vrot.lane.b32.xlu0 %v5451, 104
    %v6067 = vpop.permute.xlu0 %6066
    %6068 = vrot.lane.b32.xlu0 %v5446, 72
    %v6069 = vpop.permute.xlu0 %6068
    %6070 = vrot.lane.b32.xlu0 %v5451, 72
    %v6071 = vpop.permute.xlu0 %6070
    %v6072 = vsel %vm196, %v6065, 0
    %v6074 = vsel %vm196, %v6067, 0
    %v6076 = vsel %vm196, %v6069, 0
    %v6078 = vsel %vm196, %v6071, 0
    %6080 = vmatprep.subr.mxu0 0.0
    %6081 = vmatpush1.xpose.msra.mxu0 %v6076
    %6082 = vmatprep.subr.mxu0 0.0
    %6083 = vmatpush1.xpose.msra.mxu0 %v6078
    %6084 = vmatprep.subr.mxu0 0.0
    %6085 = vmatpush1.xpose.msra.mxu0 0.0
    %6086 = vmatprep.subr.mxu0 0.0
    %6087 = vmatpush1.xpose.msra.mxu0 0.0
    %6088 = vmatprep.subr.mxu0 0.0
    %6089 = vmatpush1.xpose.msra.mxu0 0.0
    %6090 = vmatprep.subr.mxu0 0.0
    %6091 = vmatpush1.xpose.msra.mxu0 0.0
    %6092 = vmatprep.subr.mxu0 0.0
    %6093 = vmatpush1.xpose.msra.mxu0 0.0
    %6094 = vmatprep.subr.mxu0 0.0
    %6095 = vmatpush1.xpose.msra.mxu0 0.0
    %6096 = vmatprep.subr.mxu0 0.0
    %6097 = vmatpush1.xpose.msra.mxu0 0.0
    %6098 = vmatprep.subr.mxu0 0.0
    %6099 = vmatpush1.xpose.msra.mxu0 0.0
    %6100 = vmatprep.subr.mxu0 0.0
    %6101 = vmatpush1.xpose.msra.mxu0 0.0
    %6102 = vmatprep.subr.mxu0 0.0
    %6103 = vmatpush1.xpose.msra.mxu0 0.0
    %6104 = vmatprep.subr.mxu0 0.0
    %6105 = vmatpush1.xpose.msra.mxu0 0.0
    %6106 = vmatprep.subr.mxu0 0.0
    %6107 = vmatpush1.xpose.msra.mxu0 0.0
    %6108 = vmatprep.subr.mxu0 0.0
    %6109 = vmatpush1.xpose.msra.mxu0 0.0
    %6110 = vmatprep.subr.mxu0 0.0
    %6111 = vmatpush1.xpose.msra.mxu0 0.0
    %6112 = vmatprep.subr.mxu0 0.0
    %6113 = vmatpush1.xpose.msra.mxu0 0.0
    %6114 = vmatprep.subr.mxu0 0.0
    %6115 = vmatpush1.xpose.msra.mxu0 0.0
    %6116 = vmatprep.subr.mxu0 0.0
    %6117 = vmatpush1.xpose.msra.mxu0 0.0
    %6118 = vmatprep.subr.mxu0 0.0
    %6119 = vmatpush1.xpose.msra.mxu0 0.0
    %6120 = vmatprep.subr.mxu0 0.0
    %6121 = vmatpush1.xpose.msra.mxu0 0.0
    %6122 = vmatprep.subr.mxu0 0.0
    %6123 = vmatpush1.xpose.msra.mxu0 0.0
    %6124 = vmatprep.subr.mxu0 0.0
    %6125 = vmatpush1.xpose.msra.mxu0 0.0
    %6126 = vmatprep.subr.mxu0 0.0
    %6127 = vmatpush1.xpose.msra.mxu0 0.0
    %6128 = vmatprep.subr.mxu0 0.0
    %6129 = vmatpush1.xpose.msra.mxu0 0.0
    %6130 = vmatprep.subr.mxu0 0.0
    %6131 = vmatpush1.xpose.msra.mxu0 0.0
    %6132 = vmatprep.subr.mxu0 0.0
    %6133 = vmatpush1.xpose.msra.mxu0 0.0
    %6134 = vmatprep.subr.mxu0 0.0
    %6135 = vmatpush1.xpose.msra.mxu0 0.0
    %6136 = vmatprep.subr.mxu0 0.0
    %6137 = vmatpush1.xpose.msra.mxu0 0.0
    %6138 = vmatprep.subr.mxu0 0.0
    %6139 = vmatpush1.xpose.msra.mxu0 0.0
    %6140 = vmatprep.subr.mxu0 0.0
    %6141 = vmatpush1.xpose.msra.mxu0 0.0
    %6142 = vmatprep.subr.mxu0 0.0
    %6143 = vmatpush1.xpose.msra.mxu0 0.0
    %6144 = vmatprep.mubr.f32.mxu0 0.0
    %6145 = vmatmul.mubr.f32.gmra.mrb[0].mxu0 %v6072
    %v6146 = vpop.f32.mrb[0].mxu0
    %v6147 = vadd.f32 0.0, %v6146
    %v6148 = vpop.f32.mrb[0].mxu0
    %6149 = vmatprep.mubr.f32.mxu0 0.0
    %6150 = vmatmul.mubr.f32.gmra.mrb[0].mxu0 %v6074
    %v6151 = vpop.f32.mrb[0].mxu0
    %v6152 = vadd.f32 0.0, %v6151
    %v6153 = vpop.f32.mrb[0].mxu0
    %6154 = vdwg.mxu0
    %v6155 = vmul.f32 %v6147, 0.35355338
    %v6156 = vmul.f32 %v6152, 0.35355338
    %v6157 = vadd.f32 %v6155, %v56
    %v6158 = vadd.f32 %v6156, %v57
    %v6159 = vsel %vm284, %v6157, -inf
    %6160 = vmax.xlane.f32.xlu0 %v6159
    %v6161 = vpop.xlane.xlu0 %6160
    %v6162 = vsel %vm284, %v6158, -inf
    %6163 = vmax.xlane.f32.xlu0 %v6162
    %v6164 = vpop.xlane.xlu0 %6163
    %v6165 = vsub.f32 %v6157, %v6161
    %v6166 = vsub.f32 %v6158, %v6164
    %v6167 = vmul.f32 %v6165, 1.442695
    %v6168 = vpow.pop %v6167
    %v6169 = vmul.f32 %v6166, 1.442695
    %v6170 = vpow.pop %v6169
    %v6171 = vsel %vm284, %v6168, 0.0
    %6172 = vadd.xlane.f32.xlu0 %v6171
    %v6173 = vpop.xlane.xlu0 %6172
    %v6174 = vsel %vm284, %v6170, 0.0
    %6175 = vadd.xlane.f32.xlu0 %v6174
    %v6176 = vpop.xlane.xlu0 %6175
    %v6177 = vrcp.pop %v6173
    %v6178 = vrcp.pop %v6176
    %v6179 = vmul.f32 %v6168, %v6177
    %v6180 = vmul.f32 %v6170, %v6178
    %6181 = vrot.lane.b32.xlu0 %v5446, 40
    %v6182 = vpop.permute.xlu0 %6181
    %6183 = vrot.lane.b32.xlu0 %v5451, 40
    %v6184 = vpop.permute.xlu0 %6183
    %v6188 = vsel %vm284, %v6179, 0
    %v6191 = vsel %vm284, %v6180, 0
    %6193 = vmatprep.subr.mxu0 0.0
    %6194 = vmatpush1.msra.mxu0 %v6182
    %6195 = vmatprep.subr.mxu0 0.0
    %6196 = vmatpush1.msra.mxu0 %v6184
    %6197 = vmatprep.subr.mxu0 0.0
    %6198 = vmatpush1.msra.mxu0 0.0
    %6199 = vmatprep.subr.mxu0 0.0
    %6200 = vmatpush1.msra.mxu0 0.0
    %6201 = vmatprep.subr.mxu0 0.0
    %6202 = vmatpush1.msra.mxu0 0.0
    %6203 = vmatprep.subr.mxu0 0.0
    %6204 = vmatpush1.msra.mxu0 0.0
    %6205 = vmatprep.subr.mxu0 0.0
    %6206 = vmatpush1.msra.mxu0 0.0
    %6207 = vmatprep.subr.mxu0 0.0
    %6208 = vmatpush1.msra.mxu0 0.0
    %6209 = vmatprep.subr.mxu0 0.0
    %6210 = vmatpush1.msra.mxu0 0.0
    %6211 = vmatprep.subr.mxu0 0.0
    %6212 = vmatpush1.msra.mxu0 0.0
    %6213 = vmatprep.subr.mxu0 0.0
    %6214 = vmatpush1.msra.mxu0 0.0
    %6215 = vmatprep.subr.mxu0 0.0
    %6216 = vmatpush1.msra.mxu0 0.0
    %6217 = vmatprep.subr.mxu0 0.0
    %6218 = vmatpush1.msra.mxu0 0.0
    %6219 = vmatprep.subr.mxu0 0.0
    %6220 = vmatpush1.msra.mxu0 0.0
    %6221 = vmatprep.subr.mxu0 0.0
    %6222 = vmatpush1.msra.mxu0 0.0
    %6223 = vmatprep.subr.mxu0 0.0
    %6224 = vmatpush1.msra.mxu0 0.0
    %6225 = vmatprep.subr.mxu0 0.0
    %6226 = vmatpush1.msra.mxu0 0.0
    %6227 = vmatprep.subr.mxu0 0.0
    %6228 = vmatpush1.msra.mxu0 0.0
    %6229 = vmatprep.subr.mxu0 0.0
    %6230 = vmatpush1.msra.mxu0 0.0
    %6231 = vmatprep.subr.mxu0 0.0
    %6232 = vmatpush1.msra.mxu0 0.0
    %6233 = vmatprep.subr.mxu0 0.0
    %6234 = vmatpush1.msra.mxu0 0.0
    %6235 = vmatprep.subr.mxu0 0.0
    %6236 = vmatpush1.msra.mxu0 0.0
    %6237 = vmatprep.subr.mxu0 0.0
    %6238 = vmatpush1.msra.mxu0 0.0
    %6239 = vmatprep.subr.mxu0 0.0
    %6240 = vmatpush1.msra.mxu0 0.0
    %6241 = vmatprep.subr.mxu0 0.0
    %6242 = vmatpush1.msra.mxu0 0.0
    %6243 = vmatprep.subr.mxu0 0.0
    %6244 = vmatpush1.msra.mxu0 0.0
    %6245 = vmatprep.subr.mxu0 0.0
    %6246 = vmatpush1.msra.mxu0 0.0
    %6247 = vmatprep.subr.mxu0 0.0
    %6248 = vmatpush1.msra.mxu0 0.0
    %6249 = vmatprep.subr.mxu0 0.0
    %6250 = vmatpush1.msra.mxu0 0.0
    %6251 = vmatprep.subr.mxu0 0.0
    %6252 = vmatpush1.msra.mxu0 0.0
    %6253 = vmatprep.subr.mxu0 0.0
    %6254 = vmatpush1.msra.mxu0 0.0
    %6255 = vmatprep.subr.mxu0 0.0
    %6256 = vmatpush1.msra.mxu0 0.0
    %6257 = vmatprep.mubr.f32.mxu0 0.0
    %6258 = vmatmul.mubr.f32.gmra.mrb[0].mxu0 %v6188
    %v6259 = vpop.f32.mrb[0].mxu0
    %v6260 = vadd.f32 0.0, %v6259
    %v6261 = vpop.f32.mrb[0].mxu0
    %6262 = vmatprep.mubr.f32.mxu0 0.0
    %6263 = vmatmul.mubr.f32.gmra.mrb[0].mxu0 %v6191
    %v6264 = vpop.f32.mrb[0].mxu0
    %v6265 = vadd.f32 0.0, %v6264
    %v6266 = vpop.f32.mrb[0].mxu0
    %6267 = vdwg.mxu0
    %6270 = vrot.lane.b32.xlu0 %v5852, 8
    %v6271 = vpop.permute.xlu0 %6270
    %6272 = vrot.lane.b32.xlu0 %v5857, 8
    %v6273 = vpop.permute.xlu0 %6272
    %6278 = vrot.lane.b32.xlu0 %v6056, 16
    %v6279 = vpop.permute.xlu0 %6278
    %6280 = vrot.lane.b32.xlu0 %v6061, 16
    %v6281 = vpop.permute.xlu0 %6280
    %6286 = vrot.lane.b32.xlu0 %v6260, 24
    %v6287 = vpop.permute.xlu0 %6286
    %6288 = vrot.lane.b32.xlu0 %v6265, 24
    %v6289 = vpop.permute.xlu0 %6288
    %v6292 = vsel %vm196, %v5648, %v6271
    %v6293 = vsel %vm196, %v5653, %v6273
    %v6294 = vsel %vm284, %v6292, %v6279
    %v6295 = vsel %vm284, %v6293, %v6281
    %v6296 = vsel %vm1034, %v6294, %v6287
    %v6297 = vsel %vm1034, %v6295, %v6289
    %s6298 = scalar_lea.vmem %s6, 128
    %v6299 = vld [vmem:[%s6298] sm:$0xff]
    %v6300 = vld [vmem:[%s6298 + $0x8] sm:$0xff]
    %v6301 = vld [vmem:[%s6298 + $0x10] sm:$0xff]
    %v6302 = vld [vmem:[%s6298 + $0x18] sm:$0xff]
    %v6303 = vld [vmem:[%s7 + $0x4] sm:$0x1]
    %v6304 = vlaneseq
    %v6305 = vshrl.u32 %v6304, 7
    %v6306 = vsub.s32 0, %v6305
    %v6307 = vrot.slane %v6303, %v6306
    %v6309 = vsel %vm60, %v6296, 0
    %v6312 = vsel %vm60, %v6297, 0
    %6314 = vmatprep.subr.mxu0 0.0
    %6315 = vmatpush1.msra.mxu0 %v6299
    %6316 = vmatprep.subr.mxu0 0.0
    %6317 = vmatpush1.msra.mxu0 %v6300
    %6318 = vmatprep.subr.mxu0 0.0
    %6319 = vmatpush1.msra.mxu0 %v6301
    %6320 = vmatprep.subr.mxu0 0.0
    %6321 = vmatpush1.msra.mxu0 %v6302
    %6322 = vmatprep.subr.mxu0 0.0
    %6323 = vmatpush1.msra.mxu0 0.0
    %6324 = vmatprep.subr.mxu0 0.0
    %6325 = vmatpush1.msra.mxu0 0.0
    %6326 = vmatprep.subr.mxu0 0.0
    %6327 = vmatpush1.msra.mxu0 0.0
    %6328 = vmatprep.subr.mxu0 0.0
    %6329 = vmatpush1.msra.mxu0 0.0
    %6330 = vmatprep.subr.mxu0 0.0
    %6331 = vmatpush1.msra.mxu0 0.0
    %6332 = vmatprep.subr.mxu0 0.0
    %6333 = vmatpush1.msra.mxu0 0.0
    %6334 = vmatprep.subr.mxu0 0.0
    %6335 = vmatpush1.msra.mxu0 0.0
    %6336 = vmatprep.subr.mxu0 0.0
    %6337 = vmatpush1.msra.mxu0 0.0
    %6338 = vmatprep.subr.mxu0 0.0
    %6339 = vmatpush1.msra.mxu0 0.0
    %6340 = vmatprep.subr.mxu0 0.0
    %6341 = vmatpush1.msra.mxu0 0.0
    %6342 = vmatprep.subr.mxu0 0.0
    %6343 = vmatpush1.msra.mxu0 0.0
    %6344 = vmatprep.subr.mxu0 0.0
    %6345 = vmatpush1.msra.mxu0 0.0
    %6346 = vmatprep.subr.mxu0 0.0
    %6347 = vmatpush1.msra.mxu0 0.0
    %6348 = vmatprep.subr.mxu0 0.0
    %6349 = vmatpush1.msra.mxu0 0.0
    %6350 = vmatprep.subr.mxu0 0.0
    %6351 = vmatpush1.msra.mxu0 0.0
    %6352 = vmatprep.subr.mxu0 0.0
    %6353 = vmatpush1.msra.mxu0 0.0
    %6354 = vmatprep.subr.mxu0 0.0
    %6355 = vmatpush1.msra.mxu0 0.0
    %6356 = vmatprep.subr.mxu0 0.0
    %6357 = vmatpush1.msra.mxu0 0.0
    %6358 = vmatprep.subr.mxu0 0.0
    %6359 = vmatpush1.msra.mxu0 0.0
    %6360 = vmatprep.subr.mxu0 0.0
    %6361 = vmatpush1.msra.mxu0 0.0
    %6362 = vmatprep.subr.mxu0 0.0
    %6363 = vmatpush1.msra.mxu0 0.0
    %6364 = vmatprep.subr.mxu0 0.0
    %6365 = vmatpush1.msra.mxu0 0.0
    %6366 = vmatprep.subr.mxu0 0.0
    %6367 = vmatpush1.msra.mxu0 0.0
    %6368 = vmatprep.subr.mxu0 0.0
    %6369 = vmatpush1.msra.mxu0 0.0
    %6370 = vmatprep.subr.mxu0 0.0
    %6371 = vmatpush1.msra.mxu0 0.0
    %6372 = vmatprep.subr.mxu0 0.0
    %6373 = vmatpush1.msra.mxu0 0.0
    %6374 = vmatprep.subr.mxu0 0.0
    %6375 = vmatpush1.msra.mxu0 0.0
    %6376 = vmatprep.subr.mxu0 0.0
    %6377 = vmatpush1.msra.mxu0 0.0
    %6378 = vmatprep.mubr.f32.mxu0 0.0
    %6379 = vmatmul.mubr.f32.gmra.mrb[0].mxu0 %v6309
    %v6380 = vpop.f32.mrb[0].mxu0
    %v6381 = vadd.f32 %v6307, %v6380
    %v6382 = vpop.f32.mrb[0].mxu0
    %6383 = vmatprep.mubr.f32.mxu0 0.0
    %6384 = vmatmul.mubr.f32.gmra.mrb[0].mxu0 %v6312
    %v6385 = vpop.f32.mrb[0].mxu0
    %v6386 = vadd.f32 %v6307, %v6385
    %v6387 = vpop.f32.mrb[0].mxu0
    %6388 = vdwg.mxu0
    %v6389 = vadd.f32 %v5321, %v6381
    %v6390 = vadd.f32 %v5322, %v6386
    %v6391 = vld [vmem:[%s8 + $0x4] sm:$0x1]
    %v6392 = vld [vmem:[%s9 + $0x4] sm:$0x1]
    %v6393 = vsel %vm60, %v6389, 0.0
    %6394 = vadd.xlane.f32.xlu0 %v6393
    %v6395 = vpop.xlane.xlu0 %6394
    %v6396 = vsel %vm60, %v6390, 0.0
    %6397 = vadd.xlane.f32.xlu0 %v6396
    %v6398 = vpop.xlane.xlu0 %6397
    %v6399 = vmul.f32 %v6395, %v67
    %v6400 = vmul.f32 %v6398, %v67
    %v6401 = vsub.f32 %v6389, %v6399
    %v6402 = vsub.f32 %v6390, %v6400
    %v6403 = vmul.f32 %v6401, %v6401
    %v6404 = vmul.f32 %v6402, %v6402
    %v6405 = vsel %vm60, %v6403, 0.0
    %6406 = vadd.xlane.f32.xlu0 %v6405
    %v6407 = vpop.xlane.xlu0 %6406
    %v6408 = vsel %vm60, %v6404, 0.0
    %6409 = vadd.xlane.f32.xlu0 %v6408
    %v6410 = vpop.xlane.xlu0 %6409
    %v6411 = vmul.f32 %v6407, %v67
    %v6412 = vmul.f32 %v6410, %v67
    %v6413 = vadd.f32 %v6411, 1e-05
    %v6414 = vadd.f32 %v6412, 1e-05
    %v6415 = vrsqrt.pop %v6413
    %v6416 = vrsqrt.pop %v6414
    %v6417 = vmul.f32 %v6401, %v6415
    %v6418 = vmul.f32 %v6402, %v6416
    %v6419 = vlaneseq
    %v6420 = vshrl.u32 %v6419, 7
    %v6421 = vsub.s32 0, %v6420
    %v6422 = vrot.slane %v6391, %v6421
    %v6423 = vmul.f32 %v6417, %v6422
    %v6424 = vmul.f32 %v6418, %v6422
    %v6425 = vlaneseq
    %v6426 = vshrl.u32 %v6425, 7
    %v6427 = vsub.s32 0, %v6426
    %v6428 = vrot.slane %v6392, %v6427
    %v6429 = vadd.f32 %v6423, %v6428
    %v6430 = vadd.f32 %v6424, %v6428
    %s6431 = scalar_lea.vmem %s10, 128
    %v6432 = vld [vmem:[%s6431] sm:$0xff]
    %v6433 = vld [vmem:[%s6431 + $0x8] sm:$0xff]
    %v6434 = vld [vmem:[%s6431 + $0x10] sm:$0xff]
    %v6435 = vld [vmem:[%s6431 + $0x18] sm:$0xff]
    %v6436 = vld [vmem:[%s11 + $0x4] sm:$0x1]
    %v6437 = vlaneseq
    %v6438 = vshrl.u32 %v6437, 7
    %v6439 = vsub.s32 0, %v6438
    %v6440 = vrot.slane %v6436, %v6439
    %v6442 = vsel %vm60, %v6429, 0
    %v6445 = vsel %vm60, %v6430, 0
    %6447 = vmatprep.subr.mxu0 0.0
    %6448 = vmatpush1.msra.mxu0 %v6432
    %6449 = vmatprep.subr.mxu0 0.0
    %6450 = vmatpush1.msra.mxu0 %v6433
    %6451 = vmatprep.subr.mxu0 0.0
    %6452 = vmatpush1.msra.mxu0 %v6434
    %6453 = vmatprep.subr.mxu0 0.0
    %6454 = vmatpush1.msra.mxu0 %v6435
    %6455 = vmatprep.subr.mxu0 0.0
    %6456 = vmatpush1.msra.mxu0 0.0
    %6457 = vmatprep.subr.mxu0 0.0
    %6458 = vmatpush1.msra.mxu0 0.0
    %6459 = vmatprep.subr.mxu0 0.0
    %6460 = vmatpush1.msra.mxu0 0.0
    %6461 = vmatprep.subr.mxu0 0.0
    %6462 = vmatpush1.msra.mxu0 0.0
    %6463 = vmatprep.subr.mxu0 0.0
    %6464 = vmatpush1.msra.mxu0 0.0
    %6465 = vmatprep.subr.mxu0 0.0
    %6466 = vmatpush1.msra.mxu0 0.0
    %6467 = vmatprep.subr.mxu0 0.0
    %6468 = vmatpush1.msra.mxu0 0.0
    %6469 = vmatprep.subr.mxu0 0.0
    %6470 = vmatpush1.msra.mxu0 0.0
    %6471 = vmatprep.subr.mxu0 0.0
    %6472 = vmatpush1.msra.mxu0 0.0
    %6473 = vmatprep.subr.mxu0 0.0
    %6474 = vmatpush1.msra.mxu0 0.0
    %6475 = vmatprep.subr.mxu0 0.0
    %6476 = vmatpush1.msra.mxu0 0.0
    %6477 = vmatprep.subr.mxu0 0.0
    %6478 = vmatpush1.msra.mxu0 0.0
    %6479 = vmatprep.subr.mxu0 0.0
    %6480 = vmatpush1.msra.mxu0 0.0
    %6481 = vmatprep.subr.mxu0 0.0
    %6482 = vmatpush1.msra.mxu0 0.0
    %6483 = vmatprep.subr.mxu0 0.0
    %6484 = vmatpush1.msra.mxu0 0.0
    %6485 = vmatprep.subr.mxu0 0.0
    %6486 = vmatpush1.msra.mxu0 0.0
    %6487 = vmatprep.subr.mxu0 0.0
    %6488 = vmatpush1.msra.mxu0 0.0
    %6489 = vmatprep.subr.mxu0 0.0
    %6490 = vmatpush1.msra.mxu0 0.0
    %6491 = vmatprep.subr.mxu0 0.0
    %6492 = vmatpush1.msra.mxu0 0.0
    %6493 = vmatprep.subr.mxu0 0.0
    %6494 = vmatpush1.msra.mxu0 0.0
    %6495 = vmatprep.subr.mxu0 0.0
    %6496 = vmatpush1.msra.mxu0 0.0
    %6497 = vmatprep.subr.mxu0 0.0
    %6498 = vmatpush1.msra.mxu0 0.0
    %6499 = vmatprep.subr.mxu0 0.0
    %6500 = vmatpush1.msra.mxu0 0.0
    %6501 = vmatprep.subr.mxu0 0.0
    %6502 = vmatpush1.msra.mxu0 0.0
    %6503 = vmatprep.subr.mxu0 0.0
    %6504 = vmatpush1.msra.mxu0 0.0
    %6505 = vmatprep.subr.mxu0 0.0
    %6506 = vmatpush1.msra.mxu0 0.0
    %6507 = vmatprep.subr.mxu0 0.0
    %6508 = vmatpush1.msra.mxu0 0.0
    %6509 = vmatprep.subr.mxu0 0.0
    %6510 = vmatpush1.msra.mxu0 0.0
    %6511 = vmatprep.mubr.f32.mxu0 0.0
    %6512 = vmatmul.mubr.f32.gmra.mrb[0].mxu0 %v6442
    %v6513 = vpop.f32.mrb[0].mxu0
    %v6514 = vadd.f32 %v6440, %v6513
    %v6515 = vpop.f32.mrb[0].mxu0
    %6516 = vmatprep.mubr.f32.mxu0 0.0
    %6517 = vmatmul.mubr.f32.gmra.mrb[0].mxu0 %v6445
    %v6518 = vpop.f32.mrb[0].mxu0
    %v6519 = vadd.f32 %v6440, %v6518
    %v6520 = vpop.f32.mrb[0].mxu0
    %6521 = vdwg.mxu0
    %v6522 = vmul.f32 %v6514, 0.5
    %v6523 = vmul.f32 %v6519, 0.5
    %v6524 = vmul.f32 %v6514, 0.044715
    %v6525 = vmul.f32 %v6519, 0.044715
    %v6526 = vmul.f32 %v6524, %v6514
    %v6527 = vmul.f32 %v6525, %v6519
    %v6528 = vmul.f32 %v6526, %v6514
    %v6529 = vmul.f32 %v6527, %v6519
    %v6530 = vadd.f32 %v6514, %v6528
    %v6531 = vadd.f32 %v6519, %v6529
    %v6532 = vmul.f32 %v6530, 0.7978846
    %v6533 = vmul.f32 %v6531, 0.7978846
    %v6534 = vtanh.pop %v6532
    %v6535 = vtanh.pop %v6533
    %v6536 = vadd.f32 %v6534, 1.0
    %v6537 = vadd.f32 %v6535, 1.0
    %v6538 = vmul.f32 %v6522, %v6536
    %v6539 = vmul.f32 %v6523, %v6537
    %s6540 = scalar_lea.vmem %s12, 512
    %v6541 = vld [vmem:[%s6540] sm:$0xff]
    %v6542 = vld [vmem:[%s6540 + $0x8] sm:$0xff]
    %v6543 = vld [vmem:[%s6540 + $0x10] sm:$0xff]
    %v6544 = vld [vmem:[%s6540 + $0x18] sm:$0xff]
    %v6545 = vld [vmem:[%s6540 + $0x20] sm:$0xff]
    %v6546 = vld [vmem:[%s6540 + $0x28] sm:$0xff]
    %v6547 = vld [vmem:[%s6540 + $0x30] sm:$0xff]
    %v6548 = vld [vmem:[%s6540 + $0x38] sm:$0xff]
    %v6549 = vld [vmem:[%s6540 + $0x40] sm:$0xff]
    %v6550 = vld [vmem:[%s6540 + $0x48] sm:$0xff]
    %v6551 = vld [vmem:[%s6540 + $0x50] sm:$0xff]
    %v6552 = vld [vmem:[%s6540 + $0x58] sm:$0xff]
    %v6553 = vld [vmem:[%s6540 + $0x60] sm:$0xff]
    %v6554 = vld [vmem:[%s6540 + $0x68] sm:$0xff]
    %v6555 = vld [vmem:[%s6540 + $0x70] sm:$0xff]
    %v6556 = vld [vmem:[%s6540 + $0x78] sm:$0xff]
    %v6557 = vld [vmem:[%s13 + $0x4] sm:$0x1]
    %v6558 = vlaneseq
    %v6559 = vshrl.u32 %v6558, 7
    %v6560 = vsub.s32 0, %v6559
    %v6561 = vrot.slane %v6557, %v6560
    %6562 = vmatprep.subr.mxu0 0.0
    %6563 = vmatpush1.msra.mxu0 %v6541
    %6564 = vmatprep.subr.mxu0 0.0
    %6565 = vmatpush1.msra.mxu0 %v6542
    %6566 = vmatprep.subr.mxu0 0.0
    %6567 = vmatpush1.msra.mxu0 %v6543
    %6568 = vmatprep.subr.mxu0 0.0
    %6569 = vmatpush1.msra.mxu0 %v6544
    %6570 = vmatprep.subr.mxu0 0.0
    %6571 = vmatpush1.msra.mxu0 %v6545
    %6572 = vmatprep.subr.mxu0 0.0
    %6573 = vmatpush1.msra.mxu0 %v6546
    %6574 = vmatprep.subr.mxu0 0.0
    %6575 = vmatpush1.msra.mxu0 %v6547
    %6576 = vmatprep.subr.mxu0 0.0
    %6577 = vmatpush1.msra.mxu0 %v6548
    %6578 = vmatprep.subr.mxu0 0.0
    %6579 = vmatpush1.msra.mxu0 %v6549
    %6580 = vmatprep.subr.mxu0 0.0
    %6581 = vmatpush1.msra.mxu0 %v6550
    %6582 = vmatprep.subr.mxu0 0.0
    %6583 = vmatpush1.msra.mxu0 %v6551
    %6584 = vmatprep.subr.mxu0 0.0
    %6585 = vmatpush1.msra.mxu0 %v6552
    %6586 = vmatprep.subr.mxu0 0.0
    %6587 = vmatpush1.msra.mxu0 %v6553
    %6588 = vmatprep.subr.mxu0 0.0
    %6589 = vmatpush1.msra.mxu0 %v6554
    %6590 = vmatprep.subr.mxu0 0.0
    %6591 = vmatpush1.msra.mxu0 %v6555
    %6592 = vmatprep.subr.mxu0 0.0
    %6593 = vmatpush1.msra.mxu0 %v6556
    %6594 = vmatprep.subr.mxu0 0.0
    %6595 = vmatpush1.msra.mxu0 0.0
    %6596 = vmatprep.subr.mxu0 0.0
    %6597 = vmatpush1.msra.mxu0 0.0
    %6598 = vmatprep.subr.mxu0 0.0
    %6599 = vmatpush1.msra.mxu0 0.0
    %6600 = vmatprep.subr.mxu0 0.0
    %6601 = vmatpush1.msra.mxu0 0.0
    %6602 = vmatprep.subr.mxu0 0.0
    %6603 = vmatpush1.msra.mxu0 0.0
    %6604 = vmatprep.subr.mxu0 0.0
    %6605 = vmatpush1.msra.mxu0 0.0
    %6606 = vmatprep.subr.mxu0 0.0
    %6607 = vmatpush1.msra.mxu0 0.0
    %6608 = vmatprep.subr.mxu0 0.0
    %6609 = vmatpush1.msra.mxu0 0.0
    %6610 = vmatprep.subr.mxu0 0.0
    %6611 = vmatpush1.msra.mxu0 0.0
    %6612 = vmatprep.subr.mxu0 0.0
    %6613 = vmatpush1.msra.mxu0 0.0
    %6614 = vmatprep.subr.mxu0 0.0
    %6615 = vmatpush1.msra.mxu0 0.0
    %6616 = vmatprep.subr.mxu0 0.0
    %6617 = vmatpush1.msra.mxu0 0.0
    %6618 = vmatprep.subr.mxu0 0.0
    %6619 = vmatpush1.msra.mxu0 0.0
    %6620 = vmatprep.subr.mxu0 0.0
    %6621 = vmatpush1.msra.mxu0 0.0
    %6622 = vmatprep.subr.mxu0 0.0
    %6623 = vmatpush1.msra.mxu0 0.0
    %6624 = vmatprep.subr.mxu0 0.0
    %6625 = vmatpush1.msra.mxu0 0.0
    %6626 = vmatprep.mubr.f32.mxu0 0.0
    %6627 = vmatmul.mubr.f32.gmra.mrb[0].mxu0 %v6538
    %v6628 = vpop.f32.mrb[0].mxu0
    %v6629 = vadd.f32 %v6561, %v6628
    %v6630 = vpop.f32.mrb[0].mxu0
    %6631 = vmatprep.mubr.f32.mxu0 0.0
    %6632 = vmatmul.mubr.f32.gmra.mrb[0].mxu0 %v6539
    %v6633 = vpop.f32.mrb[0].mxu0
    %v6634 = vadd.f32 %v6561, %v6633
    %v6635 = vpop.f32.mrb[0].mxu0
    %6636 = vdwg.mxu0
    %v6637 = vadd.f32 %v6389, %v6629
    %v6638 = vadd.f32 %v6390, %v6634
    %v6639 = vld [vmem:[%s2 + $0x5] sm:$0x1]
    %v6640 = vld [vmem:[%s3 + $0x5] sm:$0x1]
    %v6641 = vsel %vm60, %v6637, 0.0
    %6642 = vadd.xlane.f32.xlu0 %v6641
    %v6643 = vpop.xlane.xlu0 %6642
    %v6644 = vsel %vm60, %v6638, 0.0
    %6645 = vadd.xlane.f32.xlu0 %v6644
    %v6646 = vpop.xlane.xlu0 %6645
    %v6647 = vmul.f32 %v6643, %v67
    %v6648 = vmul.f32 %v6646, %v67
    %v6649 = vsub.f32 %v6637, %v6647
    %v6650 = vsub.f32 %v6638, %v6648
    %v6651 = vmul.f32 %v6649, %v6649
    %v6652 = vmul.f32 %v6650, %v6650
    %v6653 = vsel %vm60, %v6651, 0.0
    %6654 = vadd.xlane.f32.xlu0 %v6653
    %v6655 = vpop.xlane.xlu0 %6654
    %v6656 = vsel %vm60, %v6652, 0.0
    %6657 = vadd.xlane.f32.xlu0 %v6656
    %v6658 = vpop.xlane.xlu0 %6657
    %v6659 = vmul.f32 %v6655, %v67
    %v6660 = vmul.f32 %v6658, %v67
    %v6661 = vadd.f32 %v6659, 1e-05
    %v6662 = vadd.f32 %v6660, 1e-05
    %v6663 = vrsqrt.pop %v6661
    %v6664 = vrsqrt.pop %v6662
    %v6665 = vmul.f32 %v6649, %v6663
    %v6666 = vmul.f32 %v6650, %v6664
    %v6667 = vlaneseq
    %v6668 = vshrl.u32 %v6667, 7
    %v6669 = vsub.s32 0, %v6668
    %v6670 = vrot.slane %v6639, %v6669
    %v6671 = vmul.f32 %v6665, %v6670
    %v6672 = vmul.f32 %v6666, %v6670
    %v6673 = vlaneseq
    %v6674 = vshrl.u32 %v6673, 7
    %v6675 = vsub.s32 0, %v6674
    %v6676 = vrot.slane %v6640, %v6675
    %v6677 = vadd.f32 %v6671, %v6676
    %v6678 = vadd.f32 %v6672, %v6676
    %s6679 = scalar_lea.vmem %s4, 160
    %v6680 = vld [vmem:[%s6679] sm:$0xff]
    %v6681 = vld [vmem:[%s6679 + $0x8] sm:$0xff]
    %v6682 = vld [vmem:[%s6679 + $0x10] sm:$0xff]
    %v6683 = vld [vmem:[%s6679 + $0x18] sm:$0xff]
    %v6684 = vld [vmem:[%s5 + $0x5] sm:$0x1]
    %v6685 = vlaneseq
    %v6686 = vshrl.u32 %v6685, 7
    %v6687 = vsub.s32 0, %v6686
    %v6688 = vrot.slane %v6684, %v6687
    %v6690 = vsel %vm60, %v6677, 0
    %v6693 = vsel %vm60, %v6678, 0
    %6695 = vmatprep.subr.mxu0 0.0
    %6696 = vmatpush1.msra.mxu0 %v6680
    %6697 = vmatprep.subr.mxu0 0.0
    %6698 = vmatpush1.msra.mxu0 %v6681
    %6699 = vmatprep.subr.mxu0 0.0
    %6700 = vmatpush1.msra.mxu0 %v6682
    %6701 = vmatprep.subr.mxu0 0.0
    %6702 = vmatpush1.msra.mxu0 %v6683
    %6703 = vmatprep.subr.mxu0 0.0
    %6704 = vmatpush1.msra.mxu0 0.0
    %6705 = vmatprep.subr.mxu0 0.0
    %6706 = vmatpush1.msra.mxu0 0.0
    %6707 = vmatprep.subr.mxu0 0.0
    %6708 = vmatpush1.msra.mxu0 0.0
    %6709 = vmatprep.subr.mxu0 0.0
    %6710 = vmatpush1.msra.mxu0 0.0
    %6711 = vmatprep.subr.mxu0 0.0
    %6712 = vmatpush1.msra.mxu0 0.0
    %6713 = vmatprep.subr.mxu0 0.0
    %6714 = vmatpush1.msra.mxu0 0.0
    %6715 = vmatprep.subr.mxu0 0.0
    %6716 = vmatpush1.msra.mxu0 0.0
    %6717 = vmatprep.subr.mxu0 0.0
    %6718 = vmatpush1.msra.mxu0 0.0
    %6719 = vmatprep.subr.mxu0 0.0
    %6720 = vmatpush1.msra.mxu0 0.0
    %6721 = vmatprep.subr.mxu0 0.0
    %6722 = vmatpush1.msra.mxu0 0.0
    %6723 = vmatprep.subr.mxu0 0.0
    %6724 = vmatpush1.msra.mxu0 0.0
    %6725 = vmatprep.subr.mxu0 0.0
    %6726 = vmatpush1.msra.mxu0 0.0
    %6727 = vmatprep.subr.mxu0 0.0
    %6728 = vmatpush1.msra.mxu0 0.0
    %6729 = vmatprep.subr.mxu0 0.0
    %6730 = vmatpush1.msra.mxu0 0.0
    %6731 = vmatprep.subr.mxu0 0.0
    %6732 = vmatpush1.msra.mxu0 0.0
    %6733 = vmatprep.subr.mxu0 0.0
    %6734 = vmatpush1.msra.mxu0 0.0
    %6735 = vmatprep.subr.mxu0 0.0
    %6736 = vmatpush1.msra.mxu0 0.0
    %6737 = vmatprep.subr.mxu0 0.0
    %6738 = vmatpush1.msra.mxu0 0.0
    %6739 = vmatprep.subr.mxu0 0.0
    %6740 = vmatpush1.msra.mxu0 0.0
    %6741 = vmatprep.subr.mxu0 0.0
    %6742 = vmatpush1.msra.mxu0 0.0
    %6743 = vmatprep.subr.mxu0 0.0
    %6744 = vmatpush1.msra.mxu0 0.0
    %6745 = vmatprep.subr.mxu0 0.0
    %6746 = vmatpush1.msra.mxu0 0.0
    %6747 = vmatprep.subr.mxu0 0.0
    %6748 = vmatpush1.msra.mxu0 0.0
    %6749 = vmatprep.subr.mxu0 0.0
    %6750 = vmatpush1.msra.mxu0 0.0
    %6751 = vmatprep.subr.mxu0 0.0
    %6752 = vmatpush1.msra.mxu0 0.0
    %6753 = vmatprep.subr.mxu0 0.0
    %6754 = vmatpush1.msra.mxu0 0.0
    %6755 = vmatprep.subr.mxu0 0.0
    %6756 = vmatpush1.msra.mxu0 0.0
    %6757 = vmatprep.subr.mxu0 0.0
    %6758 = vmatpush1.msra.mxu0 0.0
    %6759 = vmatprep.mubr.f32.mxu0 0.0
    %6760 = vmatmul.mubr.f32.gmra.mrb[0].mxu0 %v6690
    %v6761 = vpop.f32.mrb[0].mxu0
    %v6762 = vadd.f32 %v6688, %v6761
    %v6763 = vpop.f32.mrb[0].mxu0
    %6764 = vmatprep.mubr.f32.mxu0 0.0
    %6765 = vmatmul.mubr.f32.gmra.mrb[0].mxu0 %v6693
    %v6766 = vpop.f32.mrb[0].mxu0
    %v6767 = vadd.f32 %v6688, %v6766
    %v6768 = vpop.f32.mrb[0].mxu0
    %6769 = vdwg.mxu0
    %6772 = vrot.lane.b32.xlu0 %v6762, 96
    %v6773 = vpop.permute.xlu0 %6772
    %6774 = vrot.lane.b32.xlu0 %v6767, 96
    %v6775 = vpop.permute.xlu0 %6774
    %v6776 = vsel %vm196, %v6762, 0
    %v6778 = vsel %vm196, %v6767, 0
    %v6780 = vsel %vm196, %v6773, 0
    %v6782 = vsel %vm196, %v6775, 0
    %6784 = vmatprep.subr.mxu0 0.0
    %6785 = vmatpush1.xpose.msra.mxu0 %v6780
    %6786 = vmatprep.subr.mxu0 0.0
    %6787 = vmatpush1.xpose.msra.mxu0 %v6782
    %6788 = vmatprep.subr.mxu0 0.0
    %6789 = vmatpush1.xpose.msra.mxu0 0.0
    %6790 = vmatprep.subr.mxu0 0.0
    %6791 = vmatpush1.xpose.msra.mxu0 0.0
    %6792 = vmatprep.subr.mxu0 0.0
    %6793 = vmatpush1.xpose.msra.mxu0 0.0
    %6794 = vmatprep.subr.mxu0 0.0
    %6795 = vmatpush1.xpose.msra.mxu0 0.0
    %6796 = vmatprep.subr.mxu0 0.0
    %6797 = vmatpush1.xpose.msra.mxu0 0.0
    %6798 = vmatprep.subr.mxu0 0.0
    %6799 = vmatpush1.xpose.msra.mxu0 0.0
    %6800 = vmatprep.subr.mxu0 0.0
    %6801 = vmatpush1.xpose.msra.mxu0 0.0
    %6802 = vmatprep.subr.mxu0 0.0
    %6803 = vmatpush1.xpose.msra.mxu0 0.0
    %6804 = vmatprep.subr.mxu0 0.0
    %6805 = vmatpush1.xpose.msra.mxu0 0.0
    %6806 = vmatprep.subr.mxu0 0.0
    %6807 = vmatpush1.xpose.msra.mxu0 0.0
    %6808 = vmatprep.subr.mxu0 0.0
    %6809 = vmatpush1.xpose.msra.mxu0 0.0
    %6810 = vmatprep.subr.mxu0 0.0
    %6811 = vmatpush1.xpose.msra.mxu0 0.0
    %6812 = vmatprep.subr.mxu0 0.0
    %6813 = vmatpush1.xpose.msra.mxu0 0.0
    %6814 = vmatprep.subr.mxu0 0.0
    %6815 = vmatpush1.xpose.msra.mxu0 0.0
    %6816 = vmatprep.subr.mxu0 0.0
    %6817 = vmatpush1.xpose.msra.mxu0 0.0
    %6818 = vmatprep.subr.mxu0 0.0
    %6819 = vmatpush1.xpose.msra.mxu0 0.0
    %6820 = vmatprep.subr.mxu0 0.0
    %6821 = vmatpush1.xpose.msra.mxu0 0.0
    %6822 = vmatprep.subr.mxu0 0.0
    %6823 = vmatpush1.xpose.msra.mxu0 0.0
    %6824 = vmatprep.subr.mxu0 0.0
    %6825 = vmatpush1.xpose.msra.mxu0 0.0
    %6826 = vmatprep.subr.mxu0 0.0
    %6827 = vmatpush1.xpose.msra.mxu0 0.0
    %6828 = vmatprep.subr.mxu0 0.0
    %6829 = vmatpush1.xpose.msra.mxu0 0.0
    %6830 = vmatprep.subr.mxu0 0.0
    %6831 = vmatpush1.xpose.msra.mxu0 0.0
    %6832 = vmatprep.subr.mxu0 0.0
    %6833 = vmatpush1.xpose.msra.mxu0 0.0
    %6834 = vmatprep.subr.mxu0 0.0
    %6835 = vmatpush1.xpose.msra.mxu0 0.0
    %6836 = vmatprep.subr.mxu0 0.0
    %6837 = vmatpush1.xpose.msra.mxu0 0.0
    %6838 = vmatprep.subr.mxu0 0.0
    %6839 = vmatpush1.xpose.msra.mxu0 0.0
    %6840 = vmatprep.subr.mxu0 0.0
    %6841 = vmatpush1.xpose.msra.mxu0 0.0
    %6842 = vmatprep.subr.mxu0 0.0
    %6843 = vmatpush1.xpose.msra.mxu0 0.0
    %6844 = vmatprep.subr.mxu0 0.0
    %6845 = vmatpush1.xpose.msra.mxu0 0.0
    %6846 = vmatprep.subr.mxu0 0.0
    %6847 = vmatpush1.xpose.msra.mxu0 0.0
    %6848 = vmatprep.mubr.f32.mxu0 0.0
    %6849 = vmatmul.mubr.f32.gmra.mrb[0].mxu0 %v6776
    %v6850 = vpop.f32.mrb[0].mxu0
    %v6851 = vadd.f32 0.0, %v6850
    %v6852 = vpop.f32.mrb[0].mxu0
    %6853 = vmatprep.mubr.f32.mxu0 0.0
    %6854 = vmatmul.mubr.f32.gmra.mrb[0].mxu0 %v6778
    %v6855 = vpop.f32.mrb[0].mxu0
    %v6856 = vadd.f32 0.0, %v6855
    %v6857 = vpop.f32.mrb[0].mxu0
    %6858 = vdwg.mxu0
    %v6859 = vmul.f32 %v6851, 0.35355338
    %v6860 = vmul.f32 %v6856, 0.35355338
    %v6861 = vadd.f32 %v6859, %v56
    %v6862 = vadd.f32 %v6860, %v57
    %v6863 = vsel %vm284, %v6861, -inf
    %6864 = vmax.xlane.f32.xlu0 %v6863
    %v6865 = vpop.xlane.xlu0 %6864
    %v6866 = vsel %vm284, %v6862, -inf
    %6867 = vmax.xlane.f32.xlu0 %v6866
    %v6868 = vpop.xlane.xlu0 %6867
    %v6869 = vsub.f32 %v6861, %v6865
    %v6870 = vsub.f32 %v6862, %v6868
    %v6871 = vmul.f32 %v6869, 1.442695
    %v6872 = vpow.pop %v6871
    %v6873 = vmul.f32 %v6870, 1.442695
    %v6874 = vpow.pop %v6873
    %v6875 = vsel %vm284, %v6872, 0.0
    %6876 = vadd.xlane.f32.xlu0 %v6875
    %v6877 = vpop.xlane.xlu0 %6876
    %v6878 = vsel %vm284, %v6874, 0.0
    %6879 = vadd.xlane.f32.xlu0 %v6878
    %v6880 = vpop.xlane.xlu0 %6879
    %v6881 = vrcp.pop %v6877
    %v6882 = vrcp.pop %v6880
    %v6883 = vmul.f32 %v6872, %v6881
    %v6884 = vmul.f32 %v6874, %v6882
    %6885 = vrot.lane.b32.xlu0 %v6762, 64
    %v6886 = vpop.permute.xlu0 %6885
    %6887 = vrot.lane.b32.xlu0 %v6767, 64
    %v6888 = vpop.permute.xlu0 %6887
    %v6892 = vsel %vm284, %v6883, 0
    %v6895 = vsel %vm284, %v6884, 0
    %6897 = vmatprep.subr.mxu0 0.0
    %6898 = vmatpush1.msra.mxu0 %v6886
    %6899 = vmatprep.subr.mxu0 0.0
    %6900 = vmatpush1.msra.mxu0 %v6888
    %6901 = vmatprep.subr.mxu0 0.0
    %6902 = vmatpush1.msra.mxu0 0.0
    %6903 = vmatprep.subr.mxu0 0.0
    %6904 = vmatpush1.msra.mxu0 0.0
    %6905 = vmatprep.subr.mxu0 0.0
    %6906 = vmatpush1.msra.mxu0 0.0
    %6907 = vmatprep.subr.mxu0 0.0
    %6908 = vmatpush1.msra.mxu0 0.0
    %6909 = vmatprep.subr.mxu0 0.0
    %6910 = vmatpush1.msra.mxu0 0.0
    %6911 = vmatprep.subr.mxu0 0.0
    %6912 = vmatpush1.msra.mxu0 0.0
    %6913 = vmatprep.subr.mxu0 0.0
    %6914 = vmatpush1.msra.mxu0 0.0
    %6915 = vmatprep.subr.mxu0 0.0
    %6916 = vmatpush1.msra.mxu0 0.0
    %6917 = vmatprep.subr.mxu0 0.0
    %6918 = vmatpush1.msra.mxu0 0.0
    %6919 = vmatprep.subr.mxu0 0.0
    %6920 = vmatpush1.msra.mxu0 0.0
    %6921 = vmatprep.subr.mxu0 0.0
    %6922 = vmatpush1.msra.mxu0 0.0
    %6923 = vmatprep.subr.mxu0 0.0
    %6924 = vmatpush1.msra.mxu0 0.0
    %6925 = vmatprep.subr.mxu0 0.0
    %6926 = vmatpush1.msra.mxu0 0.0
    %6927 = vmatprep.subr.mxu0 0.0
    %6928 = vmatpush1.msra.mxu0 0.0
    %6929 = vmatprep.subr.mxu0 0.0
    %6930 = vmatpush1.msra.mxu0 0.0
    %6931 = vmatprep.subr.mxu0 0.0
    %6932 = vmatpush1.msra.mxu0 0.0
    %6933 = vmatprep.subr.mxu0 0.0
    %6934 = vmatpush1.msra.mxu0 0.0
    %6935 = vmatprep.subr.mxu0 0.0
    %6936 = vmatpush1.msra.mxu0 0.0
    %6937 = vmatprep.subr.mxu0 0.0
    %6938 = vmatpush1.msra.mxu0 0.0
    %6939 = vmatprep.subr.mxu0 0.0
    %6940 = vmatpush1.msra.mxu0 0.0
    %6941 = vmatprep.subr.mxu0 0.0
    %6942 = vmatpush1.msra.mxu0 0.0
    %6943 = vmatprep.subr.mxu0 0.0
    %6944 = vmatpush1.msra.mxu0 0.0
    %6945 = vmatprep.subr.mxu0 0.0
    %6946 = vmatpush1.msra.mxu0 0.0
    %6947 = vmatprep.subr.mxu0 0.0
    %6948 = vmatpush1.msra.mxu0 0.0
    %6949 = vmatprep.subr.mxu0 0.0
    %6950 = vmatpush1.msra.mxu0 0.0
    %6951 = vmatprep.subr.mxu0 0.0
    %6952 = vmatpush1.msra.mxu0 0.0
    %6953 = vmatprep.subr.mxu0 0.0
    %6954 = vmatpush1.msra.mxu0 0.0
    %6955 = vmatprep.subr.mxu0 0.0
    %6956 = vmatpush1.msra.mxu0 0.0
    %6957 = vmatprep.subr.mxu0 0.0
    %6958 = vmatpush1.msra.mxu0 0.0
    %6959 = vmatprep.subr.mxu0 0.0
    %6960 = vmatpush1.msra.mxu0 0.0
    %6961 = vmatprep.mubr.f32.mxu0 0.0
    %6962 = vmatmul.mubr.f32.gmra.mrb[0].mxu0 %v6892
    %v6963 = vpop.f32.mrb[0].mxu0
    %v6964 = vadd.f32 0.0, %v6963
    %v6965 = vpop.f32.mrb[0].mxu0
    %6966 = vmatprep.mubr.f32.mxu0 0.0
    %6967 = vmatmul.mubr.f32.gmra.mrb[0].mxu0 %v6895
    %v6968 = vpop.f32.mrb[0].mxu0
    %v6969 = vadd.f32 0.0, %v6968
    %v6970 = vpop.f32.mrb[0].mxu0
    %6971 = vdwg.mxu0
    %6972 = vrot.lane.b32.xlu0 %v6762, 120
    %v6973 = vpop.permute.xlu0 %6972
    %6974 = vrot.lane.b32.xlu0 %v6767, 120
    %v6975 = vpop.permute.xlu0 %6974
    %6976 = vrot.lane.b32.xlu0 %v6762, 88
    %v6977 = vpop.permute.xlu0 %6976
    %6978 = vrot.lane.b32.xlu0 %v6767, 88
    %v6979 = vpop.permute.xlu0 %6978
    %v6980 = vsel %vm196, %v6973, 0
    %v6982 = vsel %vm196, %v6975, 0
    %v6984 = vsel %vm196, %v6977, 0
    %v6986 = vsel %vm196, %v6979, 0
    %6988 = vmatprep.subr.mxu0 0.0
    %6989 = vmatpush1.xpose.msra.mxu0 %v6984
    %6990 = vmatprep.subr.mxu0 0.0
    %6991 = vmatpush1.xpose.msra.mxu0 %v6986
    %6992 = vmatprep.subr.mxu0 0.0
    %6993 = vmatpush1.xpose.msra.mxu0 0.0
    %6994 = vmatprep.subr.mxu0 0.0
    %6995 = vmatpush1.xpose.msra.mxu0 0.0
    %6996 = vmatprep.subr.mxu0 0.0
    %6997 = vmatpush1.xpose.msra.mxu0 0.0
    %6998 = vmatprep.subr.mxu0 0.0
    %6999 = vmatpush1.xpose.msra.mxu0 0.0
    %7000 = vmatprep.subr.mxu0 0.0
    %7001 = vmatpush1.xpose.msra.mxu0 0.0
    %7002 = vmatprep.subr.mxu0 0.0
    %7003 = vmatpush1.xpose.msra.mxu0 0.0
    %7004 = vmatprep.subr.mxu0 0.0
    %7005 = vmatpush1.xpose.msra.mxu0 0.0
    %7006 = vmatprep.subr.mxu0 0.0
    %7007 = vmatpush1.xpose.msra.mxu0 0.0
    %7008 = vmatprep.subr.mxu0 0.0
    %7009 = vmatpush1.xpose.msra.mxu0 0.0
    %7010 = vmatprep.subr.mxu0 0.0
    %7011 = vmatpush1.xpose.msra.mxu0 0.0
    %7012 = vmatprep.subr.mxu0 0.0
    %7013 = vmatpush1.xpose.msra.mxu0 0.0
    %7014 = vmatprep.subr.mxu0 0.0
    %7015 = vmatpush1.xpose.msra.mxu0 0.0
    %7016 = vmatprep.subr.mxu0 0.0
    %7017 = vmatpush1.xpose.msra.mxu0 0.0
    %7018 = vmatprep.subr.mxu0 0.0
    %7019 = vmatpush1.xpose.msra.mxu0 0.0
    %7020 = vmatprep.subr.mxu0 0.0
    %7021 = vmatpush1.xpose.msra.mxu0 0.0
    %7022 = vmatprep.subr.mxu0 0.0
    %7023 = vmatpush1.xpose.msra.mxu0 0.0
    %7024 = vmatprep.subr.mxu0 0.0
    %7025 = vmatpush1.xpose.msra.mxu0 0.0
    %7026 = vmatprep.subr.mxu0 0.0
    %7027 = vmatpush1.xpose.msra.mxu0 0.0
    %7028 = vmatprep.subr.mxu0 0.0
    %7029 = vmatpush1.xpose.msra.mxu0 0.0
    %7030 = vmatprep.subr.mxu0 0.0
    %7031 = vmatpush1.xpose.msra.mxu0 0.0
    %7032 = vmatprep.subr.mxu0 0.0
    %7033 = vmatpush1.xpose.msra.mxu0 0.0
    %7034 = vmatprep.subr.mxu0 0.0
    %7035 = vmatpush1.xpose.msra.mxu0 0.0
    %7036 = vmatprep.subr.mxu0 0.0
    %7037 = vmatpush1.xpose.msra.mxu0 0.0
    %7038 = vmatprep.subr.mxu0 0.0
    %7039 = vmatpush1.xpose.msra.mxu0 0.0
    %7040 = vmatprep.subr.mxu0 0.0
    %7041 = vmatpush1.xpose.msra.mxu0 0.0
    %7042 = vmatprep.subr.mxu0 0.0
    %7043 = vmatpush1.xpose.msra.mxu0 0.0
    %7044 = vmatprep.subr.mxu0 0.0
    %7045 = vmatpush1.xpose.msra.mxu0 0.0
    %7046 = vmatprep.subr.mxu0 0.0
    %7047 = vmatpush1.xpose.msra.mxu0 0.0
    %7048 = vmatprep.subr.mxu0 0.0
    %7049 = vmatpush1.xpose.msra.mxu0 0.0
    %7050 = vmatprep.subr.mxu0 0.0
    %7051 = vmatpush1.xpose.msra.mxu0 0.0
    %7052 = vmatprep.mubr.f32.mxu0 0.0
    %7053 = vmatmul.mubr.f32.gmra.mrb[0].mxu0 %v6980
    %v7054 = vpop.f32.mrb[0].mxu0
    %v7055 = vadd.f32 0.0, %v7054
    %v7056 = vpop.f32.mrb[0].mxu0
    %7057 = vmatprep.mubr.f32.mxu0 0.0
    %7058 = vmatmul.mubr.f32.gmra.mrb[0].mxu0 %v6982
    %v7059 = vpop.f32.mrb[0].mxu0
    %v7060 = vadd.f32 0.0, %v7059
    %v7061 = vpop.f32.mrb[0].mxu0
    %7062 = vdwg.mxu0
    %v7063 = vmul.f32 %v7055, 0.35355338
    %v7064 = vmul.f32 %v7060, 0.35355338
    %v7065 = vadd.f32 %v7063, %v56
    %v7066 = vadd.f32 %v7064, %v57
    %v7067 = vsel %vm284, %v7065, -inf
    %7068 = vmax.xlane.f32.xlu0 %v7067
    %v7069 = vpop.xlane.xlu0 %7068
    %v7070 = vsel %vm284, %v7066, -inf
    %7071 = vmax.xlane.f32.xlu0 %v7070
    %v7072 = vpop.xlane.xlu0 %7071
    %v7073 = vsub.f32 %v7065, %v7069
    %v7074 = vsub.f32 %v7066, %v7072
    %v7075 = vmul.f32 %v7073, 1.442695
    %v7076 = vpow.pop %v7075
    %v7077 = vmul.f32 %v7074, 1.442695
    %v7078 = vpow.pop %v7077
    %v7079 = vsel %vm284, %v7076, 0.0
    %7080 = vadd.xlane.f32.xlu0 %v7079
    %v7081 = vpop.xlane.xlu0 %7080
    %v7082 = vsel %vm284, %v7078, 0.0
    %7083 = vadd.xlane.f32.xlu0 %v7082
    %v7084 = vpop.xlane.xlu0 %7083
    %v7085 = vrcp.pop %v7081
    %v7086 = vrcp.pop %v7084
    %v7087 = vmul.f32 %v7076, %v7085
    %v7088 = vmul.f32 %v7078, %v7086
    %7089 = vrot.lane.b32.xlu0 %v6762, 56
    %v7090 = vpop.permute.xlu0 %7089
    %7091 = vrot.lane.b32.xlu0 %v6767, 56
    %v7092 = vpop.permute.xlu0 %7091
    %v7096 = vsel %vm284, %v7087, 0
    %v7099 = vsel %vm284, %v7088, 0
    %7101 = vmatprep.subr.mxu0 0.0
    %7102 = vmatpush1.msra.mxu0 %v7090
    %7103 = vmatprep.subr.mxu0 0.0
    %7104 = vmatpush1.msra.mxu0 %v7092
    %7105 = vmatprep.subr.mxu0 0.0
    %7106 = vmatpush1.msra.mxu0 0.0
    %7107 = vmatprep.subr.mxu0 0.0
    %7108 = vmatpush1.msra.mxu0 0.0
    %7109 = vmatprep.subr.mxu0 0.0
    %7110 = vmatpush1.msra.mxu0 0.0
    %7111 = vmatprep.subr.mxu0 0.0
    %7112 = vmatpush1.msra.mxu0 0.0
    %7113 = vmatprep.subr.mxu0 0.0
    %7114 = vmatpush1.msra.mxu0 0.0
    %7115 = vmatprep.subr.mxu0 0.0
    %7116 = vmatpush1.msra.mxu0 0.0
    %7117 = vmatprep.subr.mxu0 0.0
    %7118 = vmatpush1.msra.mxu0 0.0
    %7119 = vmatprep.subr.mxu0 0.0
    %7120 = vmatpush1.msra.mxu0 0.0
    %7121 = vmatprep.subr.mxu0 0.0
    %7122 = vmatpush1.msra.mxu0 0.0
    %7123 = vmatprep.subr.mxu0 0.0
    %7124 = vmatpush1.msra.mxu0 0.0
    %7125 = vmatprep.subr.mxu0 0.0
    %7126 = vmatpush1.msra.mxu0 0.0
    %7127 = vmatprep.subr.mxu0 0.0
    %7128 = vmatpush1.msra.mxu0 0.0
    %7129 = vmatprep.subr.mxu0 0.0
    %7130 = vmatpush1.msra.mxu0 0.0
    %7131 = vmatprep.subr.mxu0 0.0
    %7132 = vmatpush1.msra.mxu0 0.0
    %7133 = vmatprep.subr.mxu0 0.0
    %7134 = vmatpush1.msra.mxu0 0.0
    %7135 = vmatprep.subr.mxu0 0.0
    %7136 = vmatpush1.msra.mxu0 0.0
    %7137 = vmatprep.subr.mxu0 0.0
    %7138 = vmatpush1.msra.mxu0 0.0
    %7139 = vmatprep.subr.mxu0 0.0
    %7140 = vmatpush1.msra.mxu0 0.0
    %7141 = vmatprep.subr.mxu0 0.0
    %7142 = vmatpush1.msra.mxu0 0.0
    %7143 = vmatprep.subr.mxu0 0.0
    %7144 = vmatpush1.msra.mxu0 0.0
    %7145 = vmatprep.subr.mxu0 0.0
    %7146 = vmatpush1.msra.mxu0 0.0
    %7147 = vmatprep.subr.mxu0 0.0
    %7148 = vmatpush1.msra.mxu0 0.0
    %7149 = vmatprep.subr.mxu0 0.0
    %7150 = vmatpush1.msra.mxu0 0.0
    %7151 = vmatprep.subr.mxu0 0.0
    %7152 = vmatpush1.msra.mxu0 0.0
    %7153 = vmatprep.subr.mxu0 0.0
    %7154 = vmatpush1.msra.mxu0 0.0
    %7155 = vmatprep.subr.mxu0 0.0
    %7156 = vmatpush1.msra.mxu0 0.0
    %7157 = vmatprep.subr.mxu0 0.0
    %7158 = vmatpush1.msra.mxu0 0.0
    %7159 = vmatprep.subr.mxu0 0.0
    %7160 = vmatpush1.msra.mxu0 0.0
    %7161 = vmatprep.subr.mxu0 0.0
    %7162 = vmatpush1.msra.mxu0 0.0
    %7163 = vmatprep.subr.mxu0 0.0
    %7164 = vmatpush1.msra.mxu0 0.0
    %7165 = vmatprep.mubr.f32.mxu0 0.0
    %7166 = vmatmul.mubr.f32.gmra.mrb[0].mxu0 %v7096
    %v7167 = vpop.f32.mrb[0].mxu0
    %v7168 = vadd.f32 0.0, %v7167
    %v7169 = vpop.f32.mrb[0].mxu0
    %7170 = vmatprep.mubr.f32.mxu0 0.0
    %7171 = vmatmul.mubr.f32.gmra.mrb[0].mxu0 %v7099
    %v7172 = vpop.f32.mrb[0].mxu0
    %v7173 = vadd.f32 0.0, %v7172
    %v7174 = vpop.f32.mrb[0].mxu0
    %7175 = vdwg.mxu0
    %7176 = vrot.lane.b32.xlu0 %v6762, 112
    %v7177 = vpop.permute.xlu0 %7176
    %7178 = vrot.lane.b32.xlu0 %v6767, 112
    %v7179 = vpop.permute.xlu0 %7178
    %7180 = vrot.lane.b32.xlu0 %v6762, 80
    %v7181 = vpop.permute.xlu0 %7180
    %7182 = vrot.lane.b32.xlu0 %v6767, 80
    %v7183 = vpop.permute.xlu0 %7182
    %v7184 = vsel %vm196, %v7177, 0
    %v7186 = vsel %vm196, %v7179, 0
    %v7188 = vsel %vm196, %v7181, 0
    %v7190 = vsel %vm196, %v7183, 0
    %7192 = vmatprep.subr.mxu0 0.0
    %7193 = vmatpush1.xpose.msra.mxu0 %v7188
    %7194 = vmatprep.subr.mxu0 0.0
    %7195 = vmatpush1.xpose.msra.mxu0 %v7190
    %7196 = vmatprep.subr.mxu0 0.0
    %7197 = vmatpush1.xpose.msra.mxu0 0.0
    %7198 = vmatprep.subr.mxu0 0.0
    %7199 = vmatpush1.xpose.msra.mxu0 0.0
    %7200 = vmatprep.subr.mxu0 0.0
    %7201 = vmatpush1.xpose.msra.mxu0 0.0
    %7202 = vmatprep.subr.mxu0 0.0
    %7203 = vmatpush1.xpose.msra.mxu0 0.0
    %7204 = vmatprep.subr.mxu0 0.0
    %7205 = vmatpush1.xpose.msra.mxu0 0.0
    %7206 = vmatprep.subr.mxu0 0.0
    %7207 = vmatpush1.xpose.msra.mxu0 0.0
    %7208 = vmatprep.subr.mxu0 0.0
    %7209 = vmatpush1.xpose.msra.mxu0 0.0
    %7210 = vmatprep.subr.mxu0 0.0
    %7211 = vmatpush1.xpose.msra.mxu0 0.0
    %7212 = vmatprep.subr.mxu0 0.0
    %7213 = vmatpush1.xpose.msra.mxu0 0.0
    %7214 = vmatprep.subr.mxu0 0.0
    %7215 = vmatpush1.xpose.msra.mxu0 0.0
    %7216 = vmatprep.subr.mxu0 0.0
    %7217 = vmatpush1.xpose.msra.mxu0 0.0
    %7218 = vmatprep.subr.mxu0 0.0
    %7219 = vmatpush1.xpose.msra.mxu0 0.0
    %7220 = vmatprep.subr.mxu0 0.0
    %7221 = vmatpush1.xpose.msra.mxu0 0.0
    %7222 = vmatprep.subr.mxu0 0.0
    %7223 = vmatpush1.xpose.msra.mxu0 0.0
    %7224 = vmatprep.subr.mxu0 0.0
    %7225 = vmatpush1.xpose.msra.mxu0 0.0
    %7226 = vmatprep.subr.mxu0 0.0
    %7227 = vmatpush1.xpose.msra.mxu0 0.0
    %7228 = vmatprep.subr.mxu0 0.0
    %7229 = vmatpush1.xpose.msra.mxu0 0.0
    %7230 = vmatprep.subr.mxu0 0.0
    %7231 = vmatpush1.xpose.msra.mxu0 0.0
    %7232 = vmatprep.subr.mxu0 0.0
    %7233 = vmatpush1.xpose.msra.mxu0 0.0
    %7234 = vmatprep.subr.mxu0 0.0
    %7235 = vmatpush1.xpose.msra.mxu0 0.0
    %7236 = vmatprep.subr.mxu0 0.0
    %7237 = vmatpush1.xpose.msra.mxu0 0.0
    %7238 = vmatprep.subr.mxu0 0.0
    %7239 = vmatpush1.xpose.msra.mxu0 0.0
    %7240 = vmatprep.subr.mxu0 0.0
    %7241 = vmatpush1.xpose.msra.mxu0 0.0
    %7242 = vmatprep.subr.mxu0 0.0
    %7243 = vmatpush1.xpose.msra.mxu0 0.0
    %7244 = vmatprep.subr.mxu0 0.0
    %7245 = vmatpush1.xpose.msra.mxu0 0.0
    %7246 = vmatprep.subr.mxu0 0.0
    %7247 = vmatpush1.xpose.msra.mxu0 0.0
    %7248 = vmatprep.subr.mxu0 0.0
    %7249 = vmatpush1.xpose.msra.mxu0 0.0
    %7250 = vmatprep.subr.mxu0 0.0
    %7251 = vmatpush1.xpose.msra.mxu0 0.0
    %7252 = vmatprep.subr.mxu0 0.0
    %7253 = vmatpush1.xpose.msra.mxu0 0.0
    %7254 = vmatprep.subr.mxu0 0.0
    %7255 = vmatpush1.xpose.msra.mxu0 0.0
    %7256 = vmatprep.mubr.f32.mxu0 0.0
    %7257 = vmatmul.mubr.f32.gmra.mrb[0].mxu0 %v7184
    %v7258 = vpop.f32.mrb[0].mxu0
    %v7259 = vadd.f32 0.0, %v7258
    %v7260 = vpop.f32.mrb[0].mxu0
    %7261 = vmatprep.mubr.f32.mxu0 0.0
    %7262 = vmatmul.mubr.f32.gmra.mrb[0].mxu0 %v7186
    %v7263 = vpop.f32.mrb[0].mxu0
    %v7264 = vadd.f32 0.0, %v7263
    %v7265 = vpop.f32.mrb[0].mxu0
    %7266 = vdwg.mxu0
    %v7267 = vmul.f32 %v7259, 0.35355338
    %v7268 = vmul.f32 %v7264, 0.35355338
    %v7269 = vadd.f32 %v7267, %v56
    %v7270 = vadd.f32 %v7268, %v57
    %v7271 = vsel %vm284, %v7269, -inf
    %7272 = vmax.xlane.f32.xlu0 %v7271
    %v7273 = vpop.xlane.xlu0 %7272
    %v7274 = vsel %vm284, %v7270, -inf
    %7275 = vmax.xlane.f32.xlu0 %v7274
    %v7276 = vpop.xlane.xlu0 %7275
    %v7277 = vsub.f32 %v7269, %v7273
    %v7278 = vsub.f32 %v7270, %v7276
    %v7279 = vmul.f32 %v7277, 1.442695
    %v7280 = vpow.pop %v7279
    %v7281 = vmul.f32 %v7278, 1.442695
    %v7282 = vpow.pop %v7281
    %v7283 = vsel %vm284, %v7280, 0.0
    %7284 = vadd.xlane.f32.xlu0 %v7283
    %v7285 = vpop.xlane.xlu0 %7284
    %v7286 = vsel %vm284, %v7282, 0.0
    %7287 = vadd.xlane.f32.xlu0 %v7286
    %v7288 = vpop.xlane.xlu0 %7287
    %v7289 = vrcp.pop %v7285
    %v7290 = vrcp.pop %v7288
    %v7291 = vmul.f32 %v7280, %v7289
    %v7292 = vmul.f32 %v7282, %v7290
    %7293 = vrot.lane.b32.xlu0 %v6762, 48
    %v7294 = vpop.permute.xlu0 %7293
    %7295 = vrot.lane.b32.xlu0 %v6767, 48
    %v7296 = vpop.permute.xlu0 %7295
    %v7300 = vsel %vm284, %v7291, 0
    %v7303 = vsel %vm284, %v7292, 0
    %7305 = vmatprep.subr.mxu0 0.0
    %7306 = vmatpush1.msra.mxu0 %v7294
    %7307 = vmatprep.subr.mxu0 0.0
    %7308 = vmatpush1.msra.mxu0 %v7296
    %7309 = vmatprep.subr.mxu0 0.0
    %7310 = vmatpush1.msra.mxu0 0.0
    %7311 = vmatprep.subr.mxu0 0.0
    %7312 = vmatpush1.msra.mxu0 0.0
    %7313 = vmatprep.subr.mxu0 0.0
    %7314 = vmatpush1.msra.mxu0 0.0
    %7315 = vmatprep.subr.mxu0 0.0
    %7316 = vmatpush1.msra.mxu0 0.0
    %7317 = vmatprep.subr.mxu0 0.0
    %7318 = vmatpush1.msra.mxu0 0.0
    %7319 = vmatprep.subr.mxu0 0.0
    %7320 = vmatpush1.msra.mxu0 0.0
    %7321 = vmatprep.subr.mxu0 0.0
    %7322 = vmatpush1.msra.mxu0 0.0
    %7323 = vmatprep.subr.mxu0 0.0
    %7324 = vmatpush1.msra.mxu0 0.0
    %7325 = vmatprep.subr.mxu0 0.0
    %7326 = vmatpush1.msra.mxu0 0.0
    %7327 = vmatprep.subr.mxu0 0.0
    %7328 = vmatpush1.msra.mxu0 0.0
    %7329 = vmatprep.subr.mxu0 0.0
    %7330 = vmatpush1.msra.mxu0 0.0
    %7331 = vmatprep.subr.mxu0 0.0
    %7332 = vmatpush1.msra.mxu0 0.0
    %7333 = vmatprep.subr.mxu0 0.0
    %7334 = vmatpush1.msra.mxu0 0.0
    %7335 = vmatprep.subr.mxu0 0.0
    %7336 = vmatpush1.msra.mxu0 0.0
    %7337 = vmatprep.subr.mxu0 0.0
    %7338 = vmatpush1.msra.mxu0 0.0
    %7339 = vmatprep.subr.mxu0 0.0
    %7340 = vmatpush1.msra.mxu0 0.0
    %7341 = vmatprep.subr.mxu0 0.0
    %7342 = vmatpush1.msra.mxu0 0.0
    %7343 = vmatprep.subr.mxu0 0.0
    %7344 = vmatpush1.msra.mxu0 0.0
    %7345 = vmatprep.subr.mxu0 0.0
    %7346 = vmatpush1.msra.mxu0 0.0
    %7347 = vmatprep.subr.mxu0 0.0
    %7348 = vmatpush1.msra.mxu0 0.0
    %7349 = vmatprep.subr.mxu0 0.0
    %7350 = vmatpush1.msra.mxu0 0.0
    %7351 = vmatprep.subr.mxu0 0.0
    %7352 = vmatpush1.msra.mxu0 0.0
    %7353 = vmatprep.subr.mxu0 0.0
    %7354 = vmatpush1.msra.mxu0 0.0
    %7355 = vmatprep.subr.mxu0 0.0
    %7356 = vmatpush1.msra.mxu0 0.0
    %7357 = vmatprep.subr.mxu0 0.0
    %7358 = vmatpush1.msra.mxu0 0.0
    %7359 = vmatprep.subr.mxu0 0.0
    %7360 = vmatpush1.msra.mxu0 0.0
    %7361 = vmatprep.subr.mxu0 0.0
    %7362 = vmatpush1.msra.mxu0 0.0
    %7363 = vmatprep.subr.mxu0 0.0
    %7364 = vmatpush1.msra.mxu0 0.0
    %7365 = vmatprep.subr.mxu0 0.0
    %7366 = vmatpush1.msra.mxu0 0.0
    %7367 = vmatprep.subr.mxu0 0.0
    %7368 = vmatpush1.msra.mxu0 0.0
    %7369 = vmatprep.mubr.f32.mxu0 0.0
    %7370 = vmatmul.mubr.f32.gmra.mrb[0].mxu0 %v7300
    %v7371 = vpop.f32.mrb[0].mxu0
    %v7372 = vadd.f32 0.0, %v7371
    %v7373 = vpop.f32.mrb[0].mxu0
    %7374 = vmatprep.mubr.f32.mxu0 0.0
    %7375 = vmatmul.mubr.f32.gmra.mrb[0].mxu0 %v7303
    %v7376 = vpop.f32.mrb[0].mxu0
    %v7377 = vadd.f32 0.0, %v7376
    %v7378 = vpop.f32.mrb[0].mxu0
    %7379 = vdwg.mxu0
    %7380 = vrot.lane.b32.xlu0 %v6762, 104
    %v7381 = vpop.permute.xlu0 %7380
    %7382 = vrot.lane.b32.xlu0 %v6767, 104
    %v7383 = vpop.permute.xlu0 %7382
    %7384 = vrot.lane.b32.xlu0 %v6762, 72
    %v7385 = vpop.permute.xlu0 %7384
    %7386 = vrot.lane.b32.xlu0 %v6767, 72
    %v7387 = vpop.permute.xlu0 %7386
    %v7388 = vsel %vm196, %v7381, 0
    %v7390 = vsel %vm196, %v7383, 0
    %v7392 = vsel %vm196, %v7385, 0
    %v7394 = vsel %vm196, %v7387, 0
    %7396 = vmatprep.subr.mxu0 0.0
    %7397 = vmatpush1.xpose.msra.mxu0 %v7392
    %7398 = vmatprep.subr.mxu0 0.0
    %7399 = vmatpush1.xpose.msra.mxu0 %v7394
    %7400 = vmatprep.subr.mxu0 0.0
    %7401 = vmatpush1.xpose.msra.mxu0 0.0
    %7402 = vmatprep.subr.mxu0 0.0
    %7403 = vmatpush1.xpose.msra.mxu0 0.0
    %7404 = vmatprep.subr.mxu0 0.0
    %7405 = vmatpush1.xpose.msra.mxu0 0.0
    %7406 = vmatprep.subr.mxu0 0.0
    %7407 = vmatpush1.xpose.msra.mxu0 0.0
    %7408 = vmatprep.subr.mxu0 0.0
    %7409 = vmatpush1.xpose.msra.mxu0 0.0
    %7410 = vmatprep.subr.mxu0 0.0
    %7411 = vmatpush1.xpose.msra.mxu0 0.0
    %7412 = vmatprep.subr.mxu0 0.0
    %7413 = vmatpush1.xpose.msra.mxu0 0.0
    %7414 = vmatprep.subr.mxu0 0.0
    %7415 = vmatpush1.xpose.msra.mxu0 0.0
    %7416 = vmatprep.subr.mxu0 0.0
    %7417 = vmatpush1.xpose.msra.mxu0 0.0
    %7418 = vmatprep.subr.mxu0 0.0
    %7419 = vmatpush1.xpose.msra.mxu0 0.0
    %7420 = vmatprep.subr.mxu0 0.0
    %7421 = vmatpush1.xpose.msra.mxu0 0.0
    %7422 = vmatprep.subr.mxu0 0.0
    %7423 = vmatpush1.xpose.msra.mxu0 0.0
    %7424 = vmatprep.subr.mxu0 0.0
    %7425 = vmatpush1.xpose.msra.mxu0 0.0
    %7426 = vmatprep.subr.mxu0 0.0
    %7427 = vmatpush1.xpose.msra.mxu0 0.0
    %7428 = vmatprep.subr.mxu0 0.0
    %7429 = vmatpush1.xpose.msra.mxu0 0.0
    %7430 = vmatprep.subr.mxu0 0.0
    %7431 = vmatpush1.xpose.msra.mxu0 0.0
    %7432 = vmatprep.subr.mxu0 0.0
    %7433 = vmatpush1.xpose.msra.mxu0 0.0
    %7434 = vmatprep.subr.mxu0 0.0
    %7435 = vmatpush1.xpose.msra.mxu0 0.0
    %7436 = vmatprep.subr.mxu0 0.0
    %7437 = vmatpush1.xpose.msra.mxu0 0.0
    %7438 = vmatprep.subr.mxu0 0.0
    %7439 = vmatpush1.xpose.msra.mxu0 0.0
    %7440 = vmatprep.subr.mxu0 0.0
    %7441 = vmatpush1.xpose.msra.mxu0 0.0
    %7442 = vmatprep.subr.mxu0 0.0
    %7443 = vmatpush1.xpose.msra.mxu0 0.0
    %7444 = vmatprep.subr.mxu0 0.0
    %7445 = vmatpush1.xpose.msra.mxu0 0.0
    %7446 = vmatprep.subr.mxu0 0.0
    %7447 = vmatpush1.xpose.msra.mxu0 0.0
    %7448 = vmatprep.subr.mxu0 0.0
    %7449 = vmatpush1.xpose.msra.mxu0 0.0
    %7450 = vmatprep.subr.mxu0 0.0
    %7451 = vmatpush1.xpose.msra.mxu0 0.0
    %7452 = vmatprep.subr.mxu0 0.0
    %7453 = vmatpush1.xpose.msra.mxu0 0.0
    %7454 = vmatprep.subr.mxu0 0.0
    %7455 = vmatpush1.xpose.msra.mxu0 0.0
    %7456 = vmatprep.subr.mxu0 0.0
    %7457 = vmatpush1.xpose.msra.mxu0 0.0
    %7458 = vmatprep.subr.mxu0 0.0
    %7459 = vmatpush1.xpose.msra.mxu0 0.0
    %7460 = vmatprep.mubr.f32.mxu0 0.0
    %7461 = vmatmul.mubr.f32.gmra.mrb[0].mxu0 %v7388
    %v7462 = vpop.f32.mrb[0].mxu0
    %v7463 = vadd.f32 0.0, %v7462
    %v7464 = vpop.f32.mrb[0].mxu0
    %7465 = vmatprep.mubr.f32.mxu0 0.0
    %7466 = vmatmul.mubr.f32.gmra.mrb[0].mxu0 %v7390
    %v7467 = vpop.f32.mrb[0].mxu0
    %v7468 = vadd.f32 0.0, %v7467
    %v7469 = vpop.f32.mrb[0].mxu0
    %7470 = vdwg.mxu0
    %v7471 = vmul.f32 %v7463, 0.35355338
    %v7472 = vmul.f32 %v7468, 0.35355338
    %v7473 = vadd.f32 %v7471, %v56
    %v7474 = vadd.f32 %v7472, %v57
    %v7475 = vsel %vm284, %v7473, -inf
    %7476 = vmax.xlane.f32.xlu0 %v7475
    %v7477 = vpop.xlane.xlu0 %7476
    %v7478 = vsel %vm284, %v7474, -inf
    %7479 = vmax.xlane.f32.xlu0 %v7478
    %v7480 = vpop.xlane.xlu0 %7479
    %v7481 = vsub.f32 %v7473, %v7477
    %v7482 = vsub.f32 %v7474, %v7480
    %v7483 = vmul.f32 %v7481, 1.442695
    %v7484 = vpow.pop %v7483
    %v7485 = vmul.f32 %v7482, 1.442695
    %v7486 = vpow.pop %v7485
    %v7487 = vsel %vm284, %v7484, 0.0
    %7488 = vadd.xlane.f32.xlu0 %v7487
    %v7489 = vpop.xlane.xlu0 %7488
    %v7490 = vsel %vm284, %v7486, 0.0
    %7491 = vadd.xlane.f32.xlu0 %v7490
    %v7492 = vpop.xlane.xlu0 %7491
    %v7493 = vrcp.pop %v7489
    %v7494 = vrcp.pop %v7492
    %v7495 = vmul.f32 %v7484, %v7493
    %v7496 = vmul.f32 %v7486, %v7494
    %7497 = vrot.lane.b32.xlu0 %v6762, 40
    %v7498 = vpop.permute.xlu0 %7497
    %7499 = vrot.lane.b32.xlu0 %v6767, 40
    %v7500 = vpop.permute.xlu0 %7499
    %v7504 = vsel %vm284, %v7495, 0
    %v7507 = vsel %vm284, %v7496, 0
    %7509 = vmatprep.subr.mxu0 0.0
    %7510 = vmatpush1.msra.mxu0 %v7498
    %7511 = vmatprep.subr.mxu0 0.0
    %7512 = vmatpush1.msra.mxu0 %v7500
    %7513 = vmatprep.subr.mxu0 0.0
    %7514 = vmatpush1.msra.mxu0 0.0
    %7515 = vmatprep.subr.mxu0 0.0
    %7516 = vmatpush1.msra.mxu0 0.0
    %7517 = vmatprep.subr.mxu0 0.0
    %7518 = vmatpush1.msra.mxu0 0.0
    %7519 = vmatprep.subr.mxu0 0.0
    %7520 = vmatpush1.msra.mxu0 0.0
    %7521 = vmatprep.subr.mxu0 0.0
    %7522 = vmatpush1.msra.mxu0 0.0
    %7523 = vmatprep.subr.mxu0 0.0
    %7524 = vmatpush1.msra.mxu0 0.0
    %7525 = vmatprep.subr.mxu0 0.0
    %7526 = vmatpush1.msra.mxu0 0.0
    %7527 = vmatprep.subr.mxu0 0.0
    %7528 = vmatpush1.msra.mxu0 0.0
    %7529 = vmatprep.subr.mxu0 0.0
    %7530 = vmatpush1.msra.mxu0 0.0
    %7531 = vmatprep.subr.mxu0 0.0
    %7532 = vmatpush1.msra.mxu0 0.0
    %7533 = vmatprep.subr.mxu0 0.0
    %7534 = vmatpush1.msra.mxu0 0.0
    %7535 = vmatprep.subr.mxu0 0.0
    %7536 = vmatpush1.msra.mxu0 0.0
    %7537 = vmatprep.subr.mxu0 0.0
    %7538 = vmatpush1.msra.mxu0 0.0
    %7539 = vmatprep.subr.mxu0 0.0
    %7540 = vmatpush1.msra.mxu0 0.0
    %7541 = vmatprep.subr.mxu0 0.0
    %7542 = vmatpush1.msra.mxu0 0.0
    %7543 = vmatprep.subr.mxu0 0.0
    %7544 = vmatpush1.msra.mxu0 0.0
    %7545 = vmatprep.subr.mxu0 0.0
    %7546 = vmatpush1.msra.mxu0 0.0
    %7547 = vmatprep.subr.mxu0 0.0
    %7548 = vmatpush1.msra.mxu0 0.0
    %7549 = vmatprep.subr.mxu0 0.0
    %7550 = vmatpush1.msra.mxu0 0.0
    %7551 = vmatprep.subr.mxu0 0.0
    %7552 = vmatpush1.msra.mxu0 0.0
    %7553 = vmatprep.subr.mxu0 0.0
    %7554 = vmatpush1.msra.mxu0 0.0
    %7555 = vmatprep.subr.mxu0 0.0
    %7556 = vmatpush1.msra.mxu0 0.0
    %7557 = vmatprep.subr.mxu0 0.0
    %7558 = vmatpush1.msra.mxu0 0.0
    %7559 = vmatprep.subr.mxu0 0.0
    %7560 = vmatpush1.msra.mxu0 0.0
    %7561 = vmatprep.subr.mxu0 0.0
    %7562 = vmatpush1.msra.mxu0 0.0
    %7563 = vmatprep.subr.mxu0 0.0
    %7564 = vmatpush1.msra.mxu0 0.0
    %7565 = vmatprep.subr.mxu0 0.0
    %7566 = vmatpush1.msra.mxu0 0.0
    %7567 = vmatprep.subr.mxu0 0.0
    %7568 = vmatpush1.msra.mxu0 0.0
    %7569 = vmatprep.subr.mxu0 0.0
    %7570 = vmatpush1.msra.mxu0 0.0
    %7571 = vmatprep.subr.mxu0 0.0
    %7572 = vmatpush1.msra.mxu0 0.0
    %7573 = vmatprep.mubr.f32.mxu0 0.0
    %7574 = vmatmul.mubr.f32.gmra.mrb[0].mxu0 %v7504
    %v7575 = vpop.f32.mrb[0].mxu0
    %v7576 = vadd.f32 0.0, %v7575
    %v7577 = vpop.f32.mrb[0].mxu0
    %7578 = vmatprep.mubr.f32.mxu0 0.0
    %7579 = vmatmul.mubr.f32.gmra.mrb[0].mxu0 %v7507
    %v7580 = vpop.f32.mrb[0].mxu0
    %v7581 = vadd.f32 0.0, %v7580
    %v7582 = vpop.f32.mrb[0].mxu0
    %7583 = vdwg.mxu0
    %7586 = vrot.lane.b32.xlu0 %v7168, 8
    %v7587 = vpop.permute.xlu0 %7586
    %7588 = vrot.lane.b32.xlu0 %v7173, 8
    %v7589 = vpop.permute.xlu0 %7588
    %7594 = vrot.lane.b32.xlu0 %v7372, 16
    %v7595 = vpop.permute.xlu0 %7594
    %7596 = vrot.lane.b32.xlu0 %v7377, 16
    %v7597 = vpop.permute.xlu0 %7596
    %7602 = vrot.lane.b32.xlu0 %v7576, 24
    %v7603 = vpop.permute.xlu0 %7602
    %7604 = vrot.lane.b32.xlu0 %v7581, 24
    %v7605 = vpop.permute.xlu0 %7604
    %v7608 = vsel %vm196, %v6964, %v7587
    %v7609 = vsel %vm196, %v6969, %v7589
    %v7610 = vsel %vm284, %v7608, %v7595
    %v7611 = vsel %vm284, %v7609, %v7597
    %v7612 = vsel %vm1034, %v7610, %v7603
    %v7613 = vsel %vm1034, %v7611, %v7605
    %s7614 = scalar_lea.vmem %s6, 160
    %v7615 = vld [vmem:[%s7614] sm:$0xff]
    %v7616 = vld [vmem:[%s7614 + $0x8] sm:$0xff]
    %v7617 = vld [vmem:[%s7614 + $0x10] sm:$0xff]
    %v7618 = vld [vmem:[%s7614 + $0x18] sm:$0xff]
    %v7619 = vld [vmem:[%s7 + $0x5] sm:$0x1]
    %v7620 = vlaneseq
    %v7621 = vshrl.u32 %v7620, 7
    %v7622 = vsub.s32 0, %v7621
    %v7623 = vrot.slane %v7619, %v7622
    %v7625 = vsel %vm60, %v7612, 0
    %v7628 = vsel %vm60, %v7613, 0
    %7630 = vmatprep.subr.mxu0 0.0
    %7631 = vmatpush1.msra.mxu0 %v7615
    %7632 = vmatprep.subr.mxu0 0.0
    %7633 = vmatpush1.msra.mxu0 %v7616
    %7634 = vmatprep.subr.mxu0 0.0
    %7635 = vmatpush1.msra.mxu0 %v7617
    %7636 = vmatprep.subr.mxu0 0.0
    %7637 = vmatpush1.msra.mxu0 %v7618
    %7638 = vmatprep.subr.mxu0 0.0
    %7639 = vmatpush1.msra.mxu0 0.0
    %7640 = vmatprep.subr.mxu0 0.0
    %7641 = vmatpush1.msra.mxu0 0.0
    %7642 = vmatprep.subr.mxu0 0.0
    %7643 = vmatpush1.msra.mxu0 0.0
    %7644 = vmatprep.subr.mxu0 0.0
    %7645 = vmatpush1.msra.mxu0 0.0
    %7646 = vmatprep.subr.mxu0 0.0
    %7647 = vmatpush1.msra.mxu0 0.0
    %7648 = vmatprep.subr.mxu0 0.0
    %7649 = vmatpush1.msra.mxu0 0.0
    %7650 = vmatprep.subr.mxu0 0.0
    %7651 = vmatpush1.msra.mxu0 0.0
    %7652 = vmatprep.subr.mxu0 0.0
    %7653 = vmatpush1.msra.mxu0 0.0
    %7654 = vmatprep.subr.mxu0 0.0
    %7655 = vmatpush1.msra.mxu0 0.0
    %7656 = vmatprep.subr.mxu0 0.0
    %7657 = vmatpush1.msra.mxu0 0.0
    %7658 = vmatprep.subr.mxu0 0.0
    %7659 = vmatpush1.msra.mxu0 0.0
    %7660 = vmatprep.subr.mxu0 0.0
    %7661 = vmatpush1.msra.mxu0 0.0
    %7662 = vmatprep.subr.mxu0 0.0
    %7663 = vmatpush1.msra.mxu0 0.0
    %7664 = vmatprep.subr.mxu0 0.0
    %7665 = vmatpush1.msra.mxu0 0.0
    %7666 = vmatprep.subr.mxu0 0.0
    %7667 = vmatpush1.msra.mxu0 0.0
    %7668 = vmatprep.subr.mxu0 0.0
    %7669 = vmatpush1.msra.mxu0 0.0
    %7670 = vmatprep.subr.mxu0 0.0
    %7671 = vmatpush1.msra.mxu0 0.0
    %7672 = vmatprep.subr.mxu0 0.0
    %7673 = vmatpush1.msra.mxu0 0.0
    %7674 = vmatprep.subr.mxu0 0.0
    %7675 = vmatpush1.msra.mxu0 0.0
    %7676 = vmatprep.subr.mxu0 0.0
    %7677 = vmatpush1.msra.mxu0 0.0
    %7678 = vmatprep.subr.mxu0 0.0
    %7679 = vmatpush1.msra.mxu0 0.0
    %7680 = vmatprep.subr.mxu0 0.0
    %7681 = vmatpush1.msra.mxu0 0.0
    %7682 = vmatprep.subr.mxu0 0.0
    %7683 = vmatpush1.msra.mxu0 0.0
    %7684 = vmatprep.subr.mxu0 0.0
    %7685 = vmatpush1.msra.mxu0 0.0
    %7686 = vmatprep.subr.mxu0 0.0
    %7687 = vmatpush1.msra.mxu0 0.0
    %7688 = vmatprep.subr.mxu0 0.0
    %7689 = vmatpush1.msra.mxu0 0.0
    %7690 = vmatprep.subr.mxu0 0.0
    %7691 = vmatpush1.msra.mxu0 0.0
    %7692 = vmatprep.subr.mxu0 0.0
    %7693 = vmatpush1.msra.mxu0 0.0
    %7694 = vmatprep.mubr.f32.mxu0 0.0
    %7695 = vmatmul.mubr.f32.gmra.mrb[0].mxu0 %v7625
    %v7696 = vpop.f32.mrb[0].mxu0
    %v7697 = vadd.f32 %v7623, %v7696
    %v7698 = vpop.f32.mrb[0].mxu0
    %7699 = vmatprep.mubr.f32.mxu0 0.0
    %7700 = vmatmul.mubr.f32.gmra.mrb[0].mxu0 %v7628
    %v7701 = vpop.f32.mrb[0].mxu0
    %v7702 = vadd.f32 %v7623, %v7701
    %v7703 = vpop.f32.mrb[0].mxu0
    %7704 = vdwg.mxu0
    %v7705 = vadd.f32 %v6637, %v7697
    %v7706 = vadd.f32 %v6638, %v7702
    %v7707 = vld [vmem:[%s8 + $0x5] sm:$0x1]
    %v7708 = vld [vmem:[%s9 + $0x5] sm:$0x1]
    %v7709 = vsel %vm60, %v7705, 0.0
    %7710 = vadd.xlane.f32.xlu0 %v7709
    %v7711 = vpop.xlane.xlu0 %7710
    %v7712 = vsel %vm60, %v7706, 0.0
    %7713 = vadd.xlane.f32.xlu0 %v7712
    %v7714 = vpop.xlane.xlu0 %7713
    %v7715 = vmul.f32 %v7711, %v67
    %v7716 = vmul.f32 %v7714, %v67
    %v7717 = vsub.f32 %v7705, %v7715
    %v7718 = vsub.f32 %v7706, %v7716
    %v7719 = vmul.f32 %v7717, %v7717
    %v7720 = vmul.f32 %v7718, %v7718
    %v7721 = vsel %vm60, %v7719, 0.0
    %7722 = vadd.xlane.f32.xlu0 %v7721
    %v7723 = vpop.xlane.xlu0 %7722
    %v7724 = vsel %vm60, %v7720, 0.0
    %7725 = vadd.xlane.f32.xlu0 %v7724
    %v7726 = vpop.xlane.xlu0 %7725
    %v7727 = vmul.f32 %v7723, %v67
    %v7728 = vmul.f32 %v7726, %v67
    %v7729 = vadd.f32 %v7727, 1e-05
    %v7730 = vadd.f32 %v7728, 1e-05
    %v7731 = vrsqrt.pop %v7729
    %v7732 = vrsqrt.pop %v7730
    %v7733 = vmul.f32 %v7717, %v7731
    %v7734 = vmul.f32 %v7718, %v7732
    %v7735 = vlaneseq
    %v7736 = vshrl.u32 %v7735, 7
    %v7737 = vsub.s32 0, %v7736
    %v7738 = vrot.slane %v7707, %v7737
    %v7739 = vmul.f32 %v7733, %v7738
    %v7740 = vmul.f32 %v7734, %v7738
    %v7741 = vlaneseq
    %v7742 = vshrl.u32 %v7741, 7
    %v7743 = vsub.s32 0, %v7742
    %v7744 = vrot.slane %v7708, %v7743
    %v7745 = vadd.f32 %v7739, %v7744
    %v7746 = vadd.f32 %v7740, %v7744
    %s7747 = scalar_lea.vmem %s10, 160
    %v7748 = vld [vmem:[%s7747] sm:$0xff]
    %v7749 = vld [vmem:[%s7747 + $0x8] sm:$0xff]
    %v7750 = vld [vmem:[%s7747 + $0x10] sm:$0xff]
    %v7751 = vld [vmem:[%s7747 + $0x18] sm:$0xff]
    %v7752 = vld [vmem:[%s11 + $0x5] sm:$0x1]
    %v7753 = vlaneseq
    %v7754 = vshrl.u32 %v7753, 7
    %v7755 = vsub.s32 0, %v7754
    %v7756 = vrot.slane %v7752, %v7755
    %v7758 = vsel %vm60, %v7745, 0
    %v7761 = vsel %vm60, %v7746, 0
    %7763 = vmatprep.subr.mxu0 0.0
    %7764 = vmatpush1.msra.mxu0 %v7748
    %7765 = vmatprep.subr.mxu0 0.0
    %7766 = vmatpush1.msra.mxu0 %v7749
    %7767 = vmatprep.subr.mxu0 0.0
    %7768 = vmatpush1.msra.mxu0 %v7750
    %7769 = vmatprep.subr.mxu0 0.0
    %7770 = vmatpush1.msra.mxu0 %v7751
    %7771 = vmatprep.subr.mxu0 0.0
    %7772 = vmatpush1.msra.mxu0 0.0
    %7773 = vmatprep.subr.mxu0 0.0
    %7774 = vmatpush1.msra.mxu0 0.0
    %7775 = vmatprep.subr.mxu0 0.0
    %7776 = vmatpush1.msra.mxu0 0.0
    %7777 = vmatprep.subr.mxu0 0.0
    %7778 = vmatpush1.msra.mxu0 0.0
    %7779 = vmatprep.subr.mxu0 0.0
    %7780 = vmatpush1.msra.mxu0 0.0
    %7781 = vmatprep.subr.mxu0 0.0
    %7782 = vmatpush1.msra.mxu0 0.0
    %7783 = vmatprep.subr.mxu0 0.0
    %7784 = vmatpush1.msra.mxu0 0.0
    %7785 = vmatprep.subr.mxu0 0.0
    %7786 = vmatpush1.msra.mxu0 0.0
    %7787 = vmatprep.subr.mxu0 0.0
    %7788 = vmatpush1.msra.mxu0 0.0
    %7789 = vmatprep.subr.mxu0 0.0
    %7790 = vmatpush1.msra.mxu0 0.0
    %7791 = vmatprep.subr.mxu0 0.0
    %7792 = vmatpush1.msra.mxu0 0.0
    %7793 = vmatprep.subr.mxu0 0.0
    %7794 = vmatpush1.msra.mxu0 0.0
    %7795 = vmatprep.subr.mxu0 0.0
    %7796 = vmatpush1.msra.mxu0 0.0
    %7797 = vmatprep.subr.mxu0 0.0
    %7798 = vmatpush1.msra.mxu0 0.0
    %7799 = vmatprep.subr.mxu0 0.0
    %7800 = vmatpush1.msra.mxu0 0.0
    %7801 = vmatprep.subr.mxu0 0.0
    %7802 = vmatpush1.msra.mxu0 0.0
    %7803 = vmatprep.subr.mxu0 0.0
    %7804 = vmatpush1.msra.mxu0 0.0
    %7805 = vmatprep.subr.mxu0 0.0
    %7806 = vmatpush1.msra.mxu0 0.0
    %7807 = vmatprep.subr.mxu0 0.0
    %7808 = vmatpush1.msra.mxu0 0.0
    %7809 = vmatprep.subr.mxu0 0.0
    %7810 = vmatpush1.msra.mxu0 0.0
    %7811 = vmatprep.subr.mxu0 0.0
    %7812 = vmatpush1.msra.mxu0 0.0
    %7813 = vmatprep.subr.mxu0 0.0
    %7814 = vmatpush1.msra.mxu0 0.0
    %7815 = vmatprep.subr.mxu0 0.0
    %7816 = vmatpush1.msra.mxu0 0.0
    %7817 = vmatprep.subr.mxu0 0.0
    %7818 = vmatpush1.msra.mxu0 0.0
    %7819 = vmatprep.subr.mxu0 0.0
    %7820 = vmatpush1.msra.mxu0 0.0
    %7821 = vmatprep.subr.mxu0 0.0
    %7822 = vmatpush1.msra.mxu0 0.0
    %7823 = vmatprep.subr.mxu0 0.0
    %7824 = vmatpush1.msra.mxu0 0.0
    %7825 = vmatprep.subr.mxu0 0.0
    %7826 = vmatpush1.msra.mxu0 0.0
    %7827 = vmatprep.mubr.f32.mxu0 0.0
    %7828 = vmatmul.mubr.f32.gmra.mrb[0].mxu0 %v7758
    %v7829 = vpop.f32.mrb[0].mxu0
    %v7830 = vadd.f32 %v7756, %v7829
    %v7831 = vpop.f32.mrb[0].mxu0
    %7832 = vmatprep.mubr.f32.mxu0 0.0
    %7833 = vmatmul.mubr.f32.gmra.mrb[0].mxu0 %v7761
    %v7834 = vpop.f32.mrb[0].mxu0
    %v7835 = vadd.f32 %v7756, %v7834
    %v7836 = vpop.f32.mrb[0].mxu0
    %7837 = vdwg.mxu0
    %v7838 = vmul.f32 %v7830, 0.5
    %v7839 = vmul.f32 %v7835, 0.5
    %v7840 = vmul.f32 %v7830, 0.044715
    %v7841 = vmul.f32 %v7835, 0.044715
    %v7842 = vmul.f32 %v7840, %v7830
    %v7843 = vmul.f32 %v7841, %v7835
    %v7844 = vmul.f32 %v7842, %v7830
    %v7845 = vmul.f32 %v7843, %v7835
    %v7846 = vadd.f32 %v7830, %v7844
    %v7847 = vadd.f32 %v7835, %v7845
    %v7848 = vmul.f32 %v7846, 0.7978846
    %v7849 = vmul.f32 %v7847, 0.7978846
    %v7850 = vtanh.pop %v7848
    %v7851 = vtanh.pop %v7849
    %v7852 = vadd.f32 %v7850, 1.0
    %v7853 = vadd.f32 %v7851, 1.0
    %v7854 = vmul.f32 %v7838, %v7852
    %v7855 = vmul.f32 %v7839, %v7853
    %s7856 = scalar_lea.vmem %s12, 640
    %v7857 = vld [vmem:[%s7856] sm:$0xff]
    %v7858 = vld [vmem:[%s7856 + $0x8] sm:$0xff]
    %v7859 = vld [vmem:[%s7856 + $0x10] sm:$0xff]
    %v7860 = vld [vmem:[%s7856 + $0x18] sm:$0xff]
    %v7861 = vld [vmem:[%s7856 + $0x20] sm:$0xff]
    %v7862 = vld [vmem:[%s7856 + $0x28] sm:$0xff]
    %v7863 = vld [vmem:[%s7856 + $0x30] sm:$0xff]
    %v7864 = vld [vmem:[%s7856 + $0x38] sm:$0xff]
    %v7865 = vld [vmem:[%s7856 + $0x40] sm:$0xff]
    %v7866 = vld [vmem:[%s7856 + $0x48] sm:$0xff]
    %v7867 = vld [vmem:[%s7856 + $0x50] sm:$0xff]
    %v7868 = vld [vmem:[%s7856 + $0x58] sm:$0xff]
    %v7869 = vld [vmem:[%s7856 + $0x60] sm:$0xff]
    %v7870 = vld [vmem:[%s7856 + $0x68] sm:$0xff]
    %v7871 = vld [vmem:[%s7856 + $0x70] sm:$0xff]
    %v7872 = vld [vmem:[%s7856 + $0x78] sm:$0xff]
    %v7873 = vld [vmem:[%s13 + $0x5] sm:$0x1]
    %v7874 = vlaneseq
    %v7875 = vshrl.u32 %v7874, 7
    %v7876 = vsub.s32 0, %v7875
    %v7877 = vrot.slane %v7873, %v7876
    %7878 = vmatprep.subr.mxu0 0.0
    %7879 = vmatpush1.msra.mxu0 %v7857
    %7880 = vmatprep.subr.mxu0 0.0
    %7881 = vmatpush1.msra.mxu0 %v7858
    %7882 = vmatprep.subr.mxu0 0.0
    %7883 = vmatpush1.msra.mxu0 %v7859
    %7884 = vmatprep.subr.mxu0 0.0
    %7885 = vmatpush1.msra.mxu0 %v7860
    %7886 = vmatprep.subr.mxu0 0.0
    %7887 = vmatpush1.msra.mxu0 %v7861
    %7888 = vmatprep.subr.mxu0 0.0
    %7889 = vmatpush1.msra.mxu0 %v7862
    %7890 = vmatprep.subr.mxu0 0.0
    %7891 = vmatpush1.msra.mxu0 %v7863
    %7892 = vmatprep.subr.mxu0 0.0
    %7893 = vmatpush1.msra.mxu0 %v7864
    %7894 = vmatprep.subr.mxu0 0.0
    %7895 = vmatpush1.msra.mxu0 %v7865
    %7896 = vmatprep.subr.mxu0 0.0
    %7897 = vmatpush1.msra.mxu0 %v7866
    %7898 = vmatprep.subr.mxu0 0.0
    %7899 = vmatpush1.msra.mxu0 %v7867
    %7900 = vmatprep.subr.mxu0 0.0
    %7901 = vmatpush1.msra.mxu0 %v7868
    %7902 = vmatprep.subr.mxu0 0.0
    %7903 = vmatpush1.msra.mxu0 %v7869
    %7904 = vmatprep.subr.mxu0 0.0
    %7905 = vmatpush1.msra.mxu0 %v7870
    %7906 = vmatprep.subr.mxu0 0.0
    %7907 = vmatpush1.msra.mxu0 %v7871
    %7908 = vmatprep.subr.mxu0 0.0
    %7909 = vmatpush1.msra.mxu0 %v7872
    %7910 = vmatprep.subr.mxu0 0.0
    %7911 = vmatpush1.msra.mxu0 0.0
    %7912 = vmatprep.subr.mxu0 0.0
    %7913 = vmatpush1.msra.mxu0 0.0
    %7914 = vmatprep.subr.mxu0 0.0
    %7915 = vmatpush1.msra.mxu0 0.0
    %7916 = vmatprep.subr.mxu0 0.0
    %7917 = vmatpush1.msra.mxu0 0.0
    %7918 = vmatprep.subr.mxu0 0.0
    %7919 = vmatpush1.msra.mxu0 0.0
    %7920 = vmatprep.subr.mxu0 0.0
    %7921 = vmatpush1.msra.mxu0 0.0
    %7922 = vmatprep.subr.mxu0 0.0
    %7923 = vmatpush1.msra.mxu0 0.0
    %7924 = vmatprep.subr.mxu0 0.0
    %7925 = vmatpush1.msra.mxu0 0.0
    %7926 = vmatprep.subr.mxu0 0.0
    %7927 = vmatpush1.msra.mxu0 0.0
    %7928 = vmatprep.subr.mxu0 0.0
    %7929 = vmatpush1.msra.mxu0 0.0
    %7930 = vmatprep.subr.mxu0 0.0
    %7931 = vmatpush1.msra.mxu0 0.0
    %7932 = vmatprep.subr.mxu0 0.0
    %7933 = vmatpush1.msra.mxu0 0.0
    %7934 = vmatprep.subr.mxu0 0.0
    %7935 = vmatpush1.msra.mxu0 0.0
    %7936 = vmatprep.subr.mxu0 0.0
    %7937 = vmatpush1.msra.mxu0 0.0
    %7938 = vmatprep.subr.mxu0 0.0
    %7939 = vmatpush1.msra.mxu0 0.0
    %7940 = vmatprep.subr.mxu0 0.0
    %7941 = vmatpush1.msra.mxu0 0.0
    %7942 = vmatprep.mubr.f32.mxu0 0.0
    %7943 = vmatmul.mubr.f32.gmra.mrb[0].mxu0 %v7854
    %v7944 = vpop.f32.mrb[0].mxu0
    %v7945 = vadd.f32 %v7877, %v7944
    %v7946 = vpop.f32.mrb[0].mxu0
    %7947 = vmatprep.mubr.f32.mxu0 0.0
    %7948 = vmatmul.mubr.f32.gmra.mrb[0].mxu0 %v7855
    %v7949 = vpop.f32.mrb[0].mxu0
    %v7950 = vadd.f32 %v7877, %v7949
    %v7951 = vpop.f32.mrb[0].mxu0
    %7952 = vdwg.mxu0
    %v7953 = vadd.f32 %v7705, %v7945
    %v7954 = vadd.f32 %v7706, %v7950
    %v7955 = vld [vmem:[%s14] sm:$0x1]
    %v7956 = vld [vmem:[%s15] sm:$0x1]
    %v7957 = vsel %vm60, %v7953, 0.0
    %7958 = vadd.xlane.f32.xlu0 %v7957
    %v7959 = vpop.xlane.xlu0 %7958
    %v7960 = vsel %vm60, %v7954, 0.0
    %7961 = vadd.xlane.f32.xlu0 %v7960
    %v7962 = vpop.xlane.xlu0 %7961
    %v7963 = vmul.f32 %v7959, %v67
    %v7964 = vmul.f32 %v7962, %v67
    %v7965 = vsub.f32 %v7953, %v7963
    %v7966 = vsub.f32 %v7954, %v7964
    %v7967 = vmul.f32 %v7965, %v7965
    %v7968 = vmul.f32 %v7966, %v7966
    %v7969 = vsel %vm60, %v7967, 0.0
    %7970 = vadd.xlane.f32.xlu0 %v7969
    %v7971 = vpop.xlane.xlu0 %7970
    %v7972 = vsel %vm60, %v7968, 0.0
    %7973 = vadd.xlane.f32.xlu0 %v7972
    %v7974 = vpop.xlane.xlu0 %7973
    %v7975 = vmul.f32 %v7971, %v67
    %v7976 = vmul.f32 %v7974, %v67
    %v7977 = vadd.f32 %v7975, 1e-05
    %v7978 = vadd.f32 %v7976, 1e-05
    %v7979 = vrsqrt.pop %v7977
    %v7980 = vrsqrt.pop %v7978
    %v7981 = vmul.f32 %v7965, %v7979
    %v7982 = vmul.f32 %v7966, %v7980
    %v7984 = vlaneseq
    %v7985 = vshrl.u32 %v7984, 7
    %v7986 = vsub.s32 0, %v7985
    %v7987 = vrot.slane %v7955, %v7986
    %v7989 = vmul.f32 %v7981, %v7987
    %v7990 = vmul.f32 %v7982, %v7987
    %v7992 = vlaneseq
    %v7993 = vshrl.u32 %v7992, 7
    %v7994 = vsub.s32 0, %v7993
    %v7995 = vrot.slane %v7956, %v7994
    %v7997 = vadd.f32 %v7989, %v7995
    %v7998 = vadd.f32 %v7990, %v7995
    %7999 = vst.msk [vmem:[#allocation2] sm:$0xff] %vm60, %v7997
    %8000 = vst.msk [vmem:[#allocation2 + $0x8] sm:$0xff] %vm60, %v7998
    // Predicated region
    $region66: #{gpt_node2_forward.1} parent=1 // pred_check
      _
    $region67: #{gpt_node2_forward.1} parent=1 // pred_check_branch
      %8002 = sbr.rel (0) target = $region69
    $region68: #{gpt_node2_forward.1} parent=1 // pred_region
      %s8004 = ssub.s32 256, 256
      %8005 = vsyncadd [#allocation3], %s8004
      %s8006 = sshll.u32 [#allocation2], 4
      %s8007 = int_to_ptr.vmem [resolvable:$true] %s8006
      %8012 = dma.vmem_to_hbm [thread:$0]  %s8007, 256, %s16, [#allocation3], 128, 128, 8
    $region69: #{gpt_node2_forward.1} parent=1 // pred_fallthru
      _
    // Predicated region
    $region70: #{gpt_node2_forward.1} parent=1 // pred_check
      _
    $region71: #{gpt_node2_forward.1} parent=1 // pred_check_branch
      %8014 = sbr.rel (0) target = $region73
    $region72: #{gpt_node2_forward.1} parent=1 // pred_region
      %8015 = dma.done [#allocation3], 256
    $region73: #{gpt_node2_forward.1} parent=1 // pred_fallthru
      _
    %8016 = vsyncpa [#allocation3], 1

</llo_original>
